<compile_context>
chip_gen: v7x
topology: tpu7x:2x2x1
jax: 0.10.0
libtpu: 0.0.40
codegen_flags: <defaults>
</compile_context>

<pallas_src>
import functools

import jax
import jax.numpy as jnp
from jax.experimental import pallas as pl
from jax.experimental.pallas import tpu as pltpu


# ----------------------------- helpers ------------------------------------- #
def _rup(x, m):
    return (x + m - 1) // m * m


def _pick_tm(M, target=1024):
    """Largest tile (multiple of 8, divisor of M) <= target, preferring >=2 grid steps."""
    tgt = min(target, M if M < 16 else max(8, M // 2))
    for cand in (1024, 512, 256, 128, 64, 32, 16, 8):
        if cand <= tgt and M % cand == 0:
            return cand
    return M


# ----------------------------- Pallas kernels ------------------------------ #
def _pw_kernel(a_ref, w_ref, b_ref, o_ref):
    # 1x1 conv (folded BN) + SiLU:  silu(a @ w + b)
    acc = jnp.dot(a_ref[...], w_ref[...], preferred_element_type=jnp.float32)
    y = acc + b_ref[...]
    o_ref[...] = (y * jax.nn.sigmoid(y)).astype(o_ref.dtype)


def _pw2_kernel(a1_ref, a2_ref, w1_ref, w2_ref, b_ref, o_ref):
    # cv3 with the channel-concat fused:  silu(a1 @ w1 + a2 @ w2 + b)
    acc = jnp.dot(a1_ref[...], w1_ref[...], preferred_element_type=jnp.float32)
    acc = acc + jnp.dot(a2_ref[...], w2_ref[...], preferred_element_type=jnp.float32)
    y = acc + b_ref[...]
    o_ref[...] = (y * jax.nn.sigmoid(y)).astype(o_ref.dtype)


def _make_conv3x3_kernel(H, W, cin_p, cout_p, add_residual):
    def kernel(*refs):
        if add_residual:
            xp_ref, w_ref, b_ref, r_ref, o_ref = refs
        else:
            xp_ref, w_ref, b_ref, o_ref = refs
        acc = jnp.zeros((H * W, cout_p), jnp.float32)
        for kh in range(3):
            for kw in range(3):
                patch = xp_ref[0, kh:kh + H, kw:kw + W, :].reshape(H * W, cin_p)
                acc = acc + jnp.dot(patch, w_ref[kh * 3 + kw],
                                    preferred_element_type=jnp.float32)
        y = acc + b_ref[...]
        y = y * jax.nn.sigmoid(y)          # SiLU
        if add_residual:
            y = y + r_ref[...].astype(jnp.float32)
        o_ref[...] = y.astype(o_ref.dtype)
    return kernel


# ----------------------------- pallas_call wrappers ------------------------ #
def _pw_call(kernel, inputs, in_specs, M, cout_p, out_dtype, tm):
    return pl.pallas_call(
        kernel,
        out_shape=jax.ShapeDtypeStruct((M, cout_p), out_dtype),
        grid_spec=pltpu.PrefetchScalarGridSpec(
            num_scalar_prefetch=0,
            grid=(M // tm,),
            in_specs=in_specs,
            out_specs=pl.BlockSpec((tm, cout_p), lambda i: (i, 0)),
        ),
        compiler_params=pltpu.CompilerParams(dimension_semantics=("parallel",)),
    )(*inputs)


def pw_conv_bn_silu(a, w, b, out_dtype=jnp.bfloat16, tm=None):
    M, cin_p = a.shape
    cout_p = w.shape[1]
    tm = _pick_tm(M) if tm is None else tm
    in_specs = [
        pl.BlockSpec((tm, cin_p), lambda i: (i, 0)),
        pl.BlockSpec((cin_p, cout_p), lambda i: (0, 0)),
        pl.BlockSpec((1, cout_p), lambda i: (0, 0)),
    ]
    return _pw_call(_pw_kernel, (a, w, b), in_specs, M, cout_p, out_dtype, tm)


def pw2_conv_bn_silu(a1, a2, w1, w2, b, out_dtype=jnp.float32, tm=None):
    M, cin_p1 = a1.shape
    cin_p2 = a2.shape[1]
    cout_p = w1.shape[1]
    tm = _pick_tm(M) if tm is None else tm
    in_specs = [
        pl.BlockSpec((tm, cin_p1), lambda i: (i, 0)),
        pl.BlockSpec((tm, cin_p2), lambda i: (i, 0)),
        pl.BlockSpec((cin_p1, cout_p), lambda i: (0, 0)),
        pl.BlockSpec((cin_p2, cout_p), lambda i: (0, 0)),
        pl.BlockSpec((1, cout_p), lambda i: (0, 0)),
    ]
    return _pw_call(_pw2_kernel, (a1, a2, w1, w2, b), in_specs, M, cout_p, out_dtype, tm)


def conv3x3_bn_silu(a_flat, w9, b, residual=None, *, N, H, W, out_dtype=jnp.bfloat16):
    cin_p = a_flat.shape[-1]
    cout_p = w9.shape[-1]
    # Free-ish reshape (major-dim split) + small spatial halo pad; no im2col.
    xp = jnp.pad(a_flat.reshape(N, H, W, cin_p), ((0, 0), (1, 1), (1, 1), (0, 0)))
    add_res = residual is not None
    kernel = _make_conv3x3_kernel(H, W, cin_p, cout_p, add_res)
    in_specs = [
        pl.BlockSpec((1, H + 2, W + 2, cin_p), lambda n: (n, 0, 0, 0)),
        pl.BlockSpec((9, cin_p, cout_p), lambda n: (0, 0, 0)),
        pl.BlockSpec((1, cout_p), lambda n: (0, 0)),
    ]
    args = [xp, w9, b]
    if add_res:
        in_specs.append(pl.BlockSpec((H * W, cout_p), lambda n: (n, 0)))
        args.append(residual)
    return pl.pallas_call(
        kernel,
        out_shape=jax.ShapeDtypeStruct((N * H * W, cout_p), out_dtype),
        grid_spec=pltpu.PrefetchScalarGridSpec(
            num_scalar_prefetch=0,
            grid=(N,),
            in_specs=in_specs,
            out_specs=pl.BlockSpec((H * W, cout_p), lambda n: (n, 0)),
        ),
        compiler_params=pltpu.CompilerParams(dimension_semantics=("parallel",)),
    )(*args)


# ----------------------------- parameter folding --------------------------- #
def _fold_scale_bias(gamma, beta, mean, var, eps):
    scale = gamma / jnp.sqrt(var + eps)
    bias = beta - mean * scale
    return scale, bias


def fold_conv_params(weight, gamma, beta, mean, var, cin_p, cout_p, eps=1e-5):
    """Fold BN scale into conv weights, zero-pad channels to lane-dense widths."""
    scale, bias = _fold_scale_bias(gamma, beta, mean, var, eps)
    cout, cin, kh, kw = weight.shape
    wf = weight * scale[:, None, None, None]
    if kh == 1 and kw == 1:
        w2 = jnp.transpose(wf[:, :, 0, 0], (1, 0))                  # (cin, cout)
        wp = jnp.zeros((cin_p, cout_p), jnp.float32).at[:cin, :cout].set(w2)
    else:
        w2 = jnp.transpose(wf, (2, 3, 1, 0)).reshape(kh * kw, cin, cout)
        wp = jnp.zeros((kh * kw, cin_p, cout_p), jnp.float32).at[:, :cin, :cout].set(w2)
    bp = jnp.zeros((1, cout_p), jnp.float32).at[0, :cout].set(bias)
    return wp.astype(jnp.bfloat16), bp


def fold_cv3_params(weight, gamma, beta, mean, var, c_, cp_, cout_p, eps=1e-5):
    """Split cv3's (c2, 2*c_) 1x1 weight into the two concat halves (concat fused away)."""
    scale, bias = _fold_scale_bias(gamma, beta, mean, var, eps)
    cout = weight.shape[0]
    wf = weight[:, :, 0, 0] * scale[:, None]                        # (cout, 2*c_)
    wa = jnp.transpose(wf[:, :c_], (1, 0))
    wb = jnp.transpose(wf[:, c_:], (1, 0))
    wap = jnp.zeros((cp_, cout_p), jnp.float32).at[:c_, :cout].set(wa)
    wbp = jnp.zeros((cp_, cout_p), jnp.float32).at[:c_, :cout].set(wb)
    bp = jnp.zeros((1, cout_p), jnp.float32).at[0, :cout].set(bias)
    return wap.astype(jnp.bfloat16), wbp.astype(jnp.bfloat16), bp


# ----------------------------- C3 forward ----------------------------------- #
def _to_internal(x_nchw, cp):
    N, C, H, W = x_nchw.shape
    x = jnp.transpose(x_nchw, (0, 2, 3, 1))                         # NHWC (module boundary)
    x = jnp.pad(x, ((0, 0), (0, 0), (0, 0), (0, cp - C)))
    return x.astype(jnp.bfloat16).reshape(N * H * W, cp)


def _from_internal(y_flat, N, H, W, c2):
    y = y_flat.reshape(N, H, W, -1)[:, :, :, :c2]
    return jnp.transpose(y, (0, 3, 1, 2))                           # back to NCHW


def c3_forward(x_nchw, params, n=1, shortcut=True, eps=1e-5):
    N, c1, H, W = x_nchw.shape
    c2 = params["cv3"][0].shape[0]
    c_ = params["cv1"][0].shape[0]
    cp1, cp_, cp2 = _rup(c1, 128), _rup(c_, 128), _rup(c2, 128)

    # Fold BN into weights & pad to lane-dense widths (one-time, host/XLA side).
    w_cv1, b_cv1 = fold_conv_params(*params["cv1"], cp1, cp_, eps)
    w_cv2, b_cv2 = fold_conv_params(*params["cv2"], cp1, cp_, eps)
    w_cv3a, w_cv3b, b_cv3 = fold_cv3_params(*params["cv3"], c_, cp_, cp2, eps)
    bneck = [(fold_conv_params(*params[f"m{i}_cv1"], cp_, cp_, eps),
              fold_conv_params(*params[f"m{i}_cv2"], cp_, cp_, eps)) for i in range(n)]

    a = _to_internal(x_nchw, cp1)                                   # (M, cp1) bf16
    y1 = pw_conv_bn_silu(a, w_cv1, b_cv1)                           # C3.cv1 (1x1)
    y2 = pw_conv_bn_silu(a, w_cv2, b_cv2)                           # C3.cv2 (1x1)
    for (w_m1, b_m1), (w_m2, b_m2) in bneck:                        # Bottlenecks
        h = pw_conv_bn_silu(y1, w_m1, b_m1)                         # 1x1
        res = y1 if shortcut else None
        y1 = conv3x3_bn_silu(h, w_m2, b_m2, residual=res, N=N, H=H, W=W)  # 3x3 (+ add)
    out = pw2_conv_bn_silu(y1, y2, w_cv3a, w_cv3b, b_cv3,           # C3.cv3, concat fused
                           out_dtype=jnp.float32)
    return _from_internal(out, N, H, W, c2)


# ----------------------------- pure-JAX reference --------------------------- #
def _ref_conv(x, weight, gamma, beta, mean, var, k, eps=1e-5):
    p = k // 2
    y = jax.lax.conv_general_dilated(
        x, weight, window_strides=(1, 1), padding=[(p, p), (p, p)],
        dimension_numbers=("NCHW", "OIHW", "NCHW"))
    scale = gamma / jnp.sqrt(var + eps)
    y = y * scale[None, :, None, None] + (beta - mean * scale)[None, :, None, None]
    return y * jax.nn.sigmoid(y)


def _ref_c3(x, P, n=1, shortcut=True):
    y1 = _ref_conv(x, *P["cv1"], 1)
    y2 = _ref_conv(x, *P["cv2"], 1)
    for i in range(n):
        h = _ref_conv(y1, *P[f"m{i}_cv1"], 1)
        h = _ref_conv(h, *P[f"m{i}_cv2"], 3)
        y1 = y1 + h if shortcut else h
    return _ref_conv(jnp.concatenate([y1, y2], axis=1), *P["cv3"], 1)


# ----------------------------- test ----------------------------------------- #
if __name__ == "__main__":
    c1, c2, n = 4, 8, 1
    N, H, W = 2, 16, 16
    c_ = int(c2 * 0.5)

    keys = iter(jax.random.split(jax.random.PRNGKey(0), 64))

    def make_conv(cin, cout, k):
        w = 0.1 * jax.random.normal(next(keys), (cout, cin, k, k), jnp.float32)
        gamma = 1.0 + 0.05 * jax.random.normal(next(keys), (cout,), jnp.float32)
        beta = 0.05 * jax.random.normal(next(keys), (cout,), jnp.float32)
        mean = 0.1 * jax.random.normal(next(keys), (cout,), jnp.float32)
        var = 1.0 + 0.1 * jax.nn.softplus(jax.random.normal(next(keys), (cout,), jnp.float32))
        return (w, gamma, beta, mean, var)

    params = {
        "cv1": make_conv(c1, c_, 1),
        "cv2": make_conv(c1, c_, 1),
        "cv3": make_conv(2 * c_, c2, 1),
        "m0_cv1": make_conv(c_, c_, 1),
        "m0_cv2": make_conv(c_, c_, 3),
    }

    x = jax.random.normal(next(keys), (N, c1, H, W), jnp.float32)

    fwd = jax.jit(functools.partial(c3_forward, n=n, shortcut=True))
    out = fwd(x, params)
    jax.block_until_ready(out)
    assert out.shape == (N, c2, H, W), out.shape

    ref = _ref_c3(x, params, n=n, shortcut=True)
    err = float(jnp.max(jnp.abs(out - ref)))
    assert err < 5e-2, f"max abs err {err}"
    print("KERNEL_OK")
</pallas_src>

<mosaic_0001>
module attributes {stable_mosaic.version = 11 : i64} {
  func.func @_pw_kernel(%arg0: i32, %arg1: memref<256x128xbf16, #tpu.memory_space<vmem>>, %arg2: memref<128x128xbf16, #tpu.memory_space<vmem>>, %arg3: memref<1x128xf32, #tpu.memory_space<vmem>>, %arg4: memref<256x128xbf16, #tpu.memory_space<vmem>>) attributes {dimension_semantics = [#tpu.dimension_semantics<parallel>], iteration_bounds = array<i64: 2>, scalar_prefetch = 0 : i64, scratch_operands = 0 : i64, tpu.core_type = #tpu.core_type<tc>, window_params = [{transform_indices = @transform_0, window_bounds = array<i64: 256, 128>}, {pipeline_mode = #tpu.pipeline_mode<synchronous>, transform_indices = @transform_1, window_bounds = array<i64: 128, 128>}, {pipeline_mode = #tpu.pipeline_mode<synchronous>, transform_indices = @transform_2, window_bounds = array<i64: 1, 128>}, {transform_indices = @transform_3, window_bounds = array<i64: 256, 128>}]} {
    %c0 = arith.constant 0 : index
    %c0_0 = arith.constant 0 : index
    %0 = vector.load %arg1[%c0, %c0_0] : memref<256x128xbf16, #tpu.memory_space<vmem>>, vector<256x128xbf16>
    %c0_1 = arith.constant 0 : index
    %c0_2 = arith.constant 0 : index
    %1 = vector.load %arg2[%c0_1, %c0_2] : memref<128x128xbf16, #tpu.memory_space<vmem>>, vector<128x128xbf16>
    %cst = arith.constant dense<0.000000e+00> : vector<256x128xf32>
    %2 = tpu.matmul %0, %1, %cst {dimension_numbers = #tpu.dot_dimension_numbers<[1], [0], [0], [1], [0, 0, 1, 1], [], []>} : vector<256x128xbf16>, vector<128x128xbf16>, vector<256x128xf32> -> vector<256x128xf32>
    %c0_3 = arith.constant 0 : index
    %c0_4 = arith.constant 0 : index
    %3 = vector.load %arg3[%c0_3, %c0_4] : memref<1x128xf32, #tpu.memory_space<vmem>>, vector<1x128xf32>
    %4 = vector.broadcast %3 : vector<1x128xf32> to vector<256x128xf32>
    %5 = arith.addf %2, %4 : vector<256x128xf32>
    %6 = arith.negf %5 : vector<256x128xf32>
    %7 = math.exp %6 : vector<256x128xf32>
    %cst_5 = arith.constant 1.000000e+00 : f32
    %8 = vector.broadcast %cst_5 : f32 to vector<256x128xf32>
    %9 = arith.addf %8, %7 : vector<256x128xf32>
    %10 = arith.divf %8, %9 : vector<256x128xf32>
    %11 = arith.mulf %5, %10 : vector<256x128xf32>
    %12 = arith.truncf %11 : vector<256x128xf32> to vector<256x128xbf16>
    %c0_6 = arith.constant 0 : index
    %c0_7 = arith.constant 0 : index
    %13 = vector.load %arg4[%c0_6, %c0_7] : memref<256x128xbf16, #tpu.memory_space<vmem>>, vector<256x128xbf16>
    tpu.vector_store %arg4[%c0_6, %c0_7], %12 {strides = array<i32>} : memref<256x128xbf16, #tpu.memory_space<vmem>>, vector<256x128xbf16>,
    return
  }
  func.func @transform_0(%arg0: i32) -> (i32, i32) {
    %c0_i32 = arith.constant 0 : i32
    %c0_i32_0 = arith.constant 0 : i32
    return %arg0, %c0_i32 : i32, i32
  }
  func.func @transform_1(%arg0: i32) -> (i32, i32) {
    %c0_i32 = arith.constant 0 : i32
    %c0_i32_0 = arith.constant 0 : i32
    %c0_i32_1 = arith.constant 0 : i32
    return %c0_i32, %c0_i32_0 : i32, i32
  }
  func.func @transform_2(%arg0: i32) -> (i32, i32) {
    %c0_i32 = arith.constant 0 : i32
    %c0_i32_0 = arith.constant 0 : i32
    %c0_i32_1 = arith.constant 0 : i32
    return %c0_i32, %c0_i32_0 : i32, i32
  }
  func.func @transform_3(%arg0: i32) -> (i32, i32) {
    %c0_i32 = arith.constant 0 : i32
    %c0_i32_0 = arith.constant 0 : i32
    return %arg0, %c0_i32 : i32, i32
  }
}

module attributes {stable_mosaic.version = 11 : i64} {
  func.func @kernel(%arg0: i32, %arg1: memref<1x18x18x128xbf16, #tpu.memory_space<vmem>>, %arg2: memref<9x128x128xbf16, #tpu.memory_space<vmem>>, %arg3: memref<1x128xf32, #tpu.memory_space<vmem>>, %arg4: memref<256x128xbf16, #tpu.memory_space<vmem>>, %arg5: memref<256x128xbf16, #tpu.memory_space<vmem>>) attributes {dimension_semantics = [#tpu.dimension_semantics<parallel>], iteration_bounds = array<i64: 2>, scalar_prefetch = 0 : i64, scratch_operands = 0 : i64, tpu.core_type = #tpu.core_type<tc>, window_params = [{transform_indices = @transform_0, window_bounds = array<i64: 1, 18, 18, 128>}, {pipeline_mode = #tpu.pipeline_mode<synchronous>, transform_indices = @transform_1, window_bounds = array<i64: 9, 128, 128>}, {pipeline_mode = #tpu.pipeline_mode<synchronous>, transform_indices = @transform_2, window_bounds = array<i64: 1, 128>}, {transform_indices = @transform_3, window_bounds = array<i64: 256, 128>}, {transform_indices = @transform_4, window_bounds = array<i64: 256, 128>}]} {
    %cst = arith.constant 0.000000e+00 : f32
    %0 = vector.broadcast %cst : f32 to vector<256x128xf32>
    %c0 = arith.constant 0 : index
    %c0_0 = arith.constant 0 : index
    %c0_1 = arith.constant 0 : index
    %c0_2 = arith.constant 0 : index
    %1 = vector.load %arg1[%c0, %c0_0, %c0_1, %c0_2] : memref<1x18x18x128xbf16, #tpu.memory_space<vmem>>, vector<1x16x16x128xbf16>
    %2 = vector.shape_cast %1 : vector<1x16x16x128xbf16> to vector<16x16x128xbf16>
    %3 = vector.shape_cast %2 : vector<16x16x128xbf16> to vector<256x128xbf16>
    %c0_3 = arith.constant 0 : index
    %c0_4 = arith.constant 0 : index
    %c0_5 = arith.constant 0 : index
    %4 = vector.load %arg2[%c0_3, %c0_4, %c0_5] : memref<9x128x128xbf16, #tpu.memory_space<vmem>>, vector<1x128x128xbf16>
    %5 = vector.shape_cast %4 : vector<1x128x128xbf16> to vector<128x128xbf16>
    %cst_6 = arith.constant dense<0.000000e+00> : vector<256x128xf32>
    %6 = tpu.matmul %3, %5, %cst_6 {dimension_numbers = #tpu.dot_dimension_numbers<[1], [0], [0], [1], [0, 0, 1, 1], [], []>} : vector<256x128xbf16>, vector<128x128xbf16>, vector<256x128xf32> -> vector<256x128xf32>
    %7 = arith.addf %0, %6 : vector<256x128xf32>
    %c0_7 = arith.constant 0 : index
    %c0_8 = arith.constant 0 : index
    %c1 = arith.constant 1 : index
    %c0_9 = arith.constant 0 : index
    %8 = vector.load %arg1[%c0_7, %c0_8, %c1, %c0_9] : memref<1x18x18x128xbf16, #tpu.memory_space<vmem>>, vector<1x16x16x128xbf16>
    %9 = vector.shape_cast %8 : vector<1x16x16x128xbf16> to vector<16x16x128xbf16>
    %10 = vector.shape_cast %9 : vector<16x16x128xbf16> to vector<256x128xbf16>
    %c1_10 = arith.constant 1 : index
    %c0_11 = arith.constant 0 : index
    %c0_12 = arith.constant 0 : index
    %11 = vector.load %arg2[%c1_10, %c0_11, %c0_12] : memref<9x128x128xbf16, #tpu.memory_space<vmem>>, vector<1x128x128xbf16>
    %12 = vector.shape_cast %11 : vector<1x128x128xbf16> to vector<128x128xbf16>
    %cst_13 = arith.constant dense<0.000000e+00> : vector<256x128xf32>
    %13 = tpu.matmul %10, %12, %cst_13 {dimension_numbers = #tpu.dot_dimension_numbers<[1], [0], [0], [1], [0, 0, 1, 1], [], []>} : vector<256x128xbf16>, vector<128x128xbf16>, vector<256x128xf32> -> vector<256x128xf32>
    %14 = arith.addf %7, %13 : vector<256x128xf32>
    %c0_14 = arith.constant 0 : index
    %c0_15 = arith.constant 0 : index
    %c2 = arith.constant 2 : index
    %c0_16 = arith.constant 0 : index
    %15 = vector.load %arg1[%c0_14, %c0_15, %c2, %c0_16] : memref<1x18x18x128xbf16, #tpu.memory_space<vmem>>, vector<1x16x16x128xbf16>
    %16 = vector.shape_cast %15 : vector<1x16x16x128xbf16> to vector<16x16x128xbf16>
    %17 = vector.shape_cast %16 : vector<16x16x128xbf16> to vector<256x128xbf16>
    %c2_17 = arith.constant 2 : index
    %c0_18 = arith.constant 0 : index
    %c0_19 = arith.constant 0 : index
    %18 = vector.load %arg2[%c2_17, %c0_18, %c0_19] : memref<9x128x128xbf16, #tpu.memory_space<vmem>>, vector<1x128x128xbf16>
    %19 = vector.shape_cast %18 : vector<1x128x128xbf16> to vector<128x128xbf16>
    %cst_20 = arith.constant dense<0.000000e+00> : vector<256x128xf32>
    %20 = tpu.matmul %17, %19, %cst_20 {dimension_numbers = #tpu.dot_dimension_numbers<[1], [0], [0], [1], [0, 0, 1, 1], [], []>} : vector<256x128xbf16>, vector<128x128xbf16>, vector<256x128xf32> -> vector<256x128xf32>
    %21 = arith.addf %14, %20 : vector<256x128xf32>
    %c0_21 = arith.constant 0 : index
    %c1_22 = arith.constant 1 : index
    %c0_23 = arith.constant 0 : index
    %c0_24 = arith.constant 0 : index
    %22 = vector.load %arg1[%c0_21, %c1_22, %c0_23, %c0_24] : memref<1x18x18x128xbf16, #tpu.memory_space<vmem>>, vector<1x16x16x128xbf16>
    %23 = vector.shape_cast %22 : vector<1x16x16x128xbf16> to vector<16x16x128xbf16>
    %24 = vector.shape_cast %23 : vector<16x16x128xbf16> to vector<256x128xbf16>
    %c3 = arith.constant 3 : index
    %c0_25 = arith.constant 0 : index
    %c0_26 = arith.constant 0 : index
    %25 = vector.load %arg2[%c3, %c0_25, %c0_26] : memref<9x128x128xbf16, #tpu.memory_space<vmem>>, vector<1x128x128xbf16>
    %26 = vector.shape_cast %25 : vector<1x128x128xbf16> to vector<128x128xbf16>
    %cst_27 = arith.constant dense<0.000000e+00> : vector<256x128xf32>
    %27 = tpu.matmul %24, %26, %cst_27 {dimension_numbers = #tpu.dot_dimension_numbers<[1], [0], [0], [1], [0, 0, 1, 1], [], []>} : vector<256x128xbf16>, vector<128x128xbf16>, vector<256x128xf32> -> vector<256x128xf32>
    %28 = arith.addf %21, %27 : vector<256x128xf32>
    %c0_28 = arith.constant 0 : index
    %c1_29 = arith.constant 1 : index
    %c1_30 = arith.constant 1 : index
    %c0_31 = arith.constant 0 : index
    %29 = vector.load %arg1[%c0_28, %c1_29, %c1_30, %c0_31] : memref<1x18x18x128xbf16, #tpu.memory_space<vmem>>, vector<1x16x16x128xbf16>
    %30 = vector.shape_cast %29 : vector<1x16x16x128xbf16> to vector<16x16x128xbf16>
    %31 = vector.shape_cast %30 : vector<16x16x128xbf16> to vector<256x128xbf16>
    %c4 = arith.constant 4 : index
    %c0_32 = arith.constant 0 : index
    %c0_33 = arith.constant 0 : index
    %32 = vector.load %arg2[%c4, %c0_32, %c0_33] : memref<9x128x128xbf16, #tpu.memory_space<vmem>>, vector<1x128x128xbf16>
    %33 = vector.shape_cast %32 : vector<1x128x128xbf16> to vector<128x128xbf16>
    %cst_34 = arith.constant dense<0.000000e+00> : vector<256x128xf32>
    %34 = tpu.matmul %31, %33, %cst_34 {dimension_numbers = #tpu.dot_dimension_numbers<[1], [0], [0], [1], [0, 0, 1, 1], [], []>} : vector<256x128xbf16>, vector<128x128xbf16>, vector<256x128xf32> -> vector<256x128xf32>
    %35 = arith.addf %28, %34 : vector<256x128xf32>
    %c0_35 = arith.constant 0 : index
    %c1_36 = arith.constant 1 : index
    %c2_37 = arith.constant 2 : index
    %c0_38 = arith.constant 0 : index
    %36 = vector.load %arg1[%c0_35, %c1_36, %c2_37, %c0_38] : memref<1x18x18x128xbf16, #tpu.memory_space<vmem>>, vector<1x16x16x128xbf16>
    %37 = vector.shape_cast %36 : vector<1x16x16x128xbf16> to vector<16x16x128xbf16>
    %38 = vector.shape_cast %37 : vector<16x16x128xbf16> to vector<256x128xbf16>
    %c5 = arith.constant 5 : index
    %c0_39 = arith.constant 0 : index
    %c0_40 = arith.constant 0 : index
    %39 = vector.load %arg2[%c5, %c0_39, %c0_40] : memref<9x128x128xbf16, #tpu.memory_space<vmem>>, vector<1x128x128xbf16>
    %40 = vector.shape_cast %39 : vector<1x128x128xbf16> to vector<128x128xbf16>
    %cst_41 = arith.constant dense<0.000000e+00> : vector<256x128xf32>
    %41 = tpu.matmul %38, %40, %cst_41 {dimension_numbers = #tpu.dot_dimension_numbers<[1], [0], [0], [1], [0, 0, 1, 1], [], []>} : vector<256x128xbf16>, vector<128x128xbf16>, vector<256x128xf32> -> vector<256x128xf32>
    %42 = arith.addf %35, %41 : vector<256x128xf32>
    %c0_42 = arith.constant 0 : index
    %c2_43 = arith.constant 2 : index
    %c0_44 = arith.constant 0 : index
    %c0_45 = arith.constant 0 : index
    %43 = vector.load %arg1[%c0_42, %c2_43, %c0_44, %c0_45] : memref<1x18x18x128xbf16, #tpu.memory_space<vmem>>, vector<1x16x16x128xbf16>
    %44 = vector.shape_cast %43 : vector<1x16x16x128xbf16> to vector<16x16x128xbf16>
    %45 = vector.shape_cast %44 : vector<16x16x128xbf16> to vector<256x128xbf16>
    %c6 = arith.constant 6 : index
    %c0_46 = arith.constant 0 : index
    %c0_47 = arith.constant 0 : index
    %46 = vector.load %arg2[%c6, %c0_46, %c0_47] : memref<9x128x128xbf16, #tpu.memory_space<vmem>>, vector<1x128x128xbf16>
    %47 = vector.shape_cast %46 : vector<1x128x128xbf16> to vector<128x128xbf16>
    %cst_48 = arith.constant dense<0.000000e+00> : vector<256x128xf32>
    %48 = tpu.matmul %45, %47, %cst_48 {dimension_numbers = #tpu.dot_dimension_numbers<[1], [0], [0], [1], [0, 0, 1, 1], [], []>} : vector<256x128xbf16>, vector<128x128xbf16>, vector<256x128xf32> -> vector<256x128xf32>
    %49 = arith.addf %42, %48 : vector<256x128xf32>
    %c0_49 = arith.constant 0 : index
    %c2_50 = arith.constant 2 : index
    %c1_51 = arith.constant 1 : index
    %c0_52 = arith.constant 0 : index
    %50 = vector.load %arg1[%c0_49, %c2_50, %c1_51, %c0_52] : memref<1x18x18x128xbf16, #tpu.memory_space<vmem>>, vector<1x16x16x128xbf16>
    %51 = vector.shape_cast %50 : vector<1x16x16x128xbf16> to vector<16x16x128xbf16>
    %52 = vector.shape_cast %51 : vector<16x16x128xbf16> to vector<256x128xbf16>
    %c7 = arith.constant 7 : index
    %c0_53 = arith.constant 0 : index
    %c0_54 = arith.constant 0 : index
    %53 = vector.load %arg2[%c7, %c0_53, %c0_54] : memref<9x128x128xbf16, #tpu.memory_space<vmem>>, vector<1x128x128xbf16>
    %54 = vector.shape_cast %53 : vector<1x128x128xbf16> to vector<128x128xbf16>
    %cst_55 = arith.constant dense<0.000000e+00> : vector<256x128xf32>
    %55 = tpu.matmul %52, %54, %cst_55 {dimension_numbers = #tpu.dot_dimension_numbers<[1], [0], [0], [1], [0, 0, 1, 1], [], []>} : vector<256x128xbf16>, vector<128x128xbf16>, vector<256x128xf32> -> vector<256x128xf32>
    %56 = arith.addf %49, %55 : vector<256x128xf32>
    %c0_56 = arith.constant 0 : index
    %c2_57 = arith.constant 2 : index
    %c2_58 = arith.constant 2 : index
    %c0_59 = arith.constant 0 : index
    %57 = vector.load %arg1[%c0_56, %c2_57, %c2_58, %c0_59] : memref<1x18x18x128xbf16, #tpu.memory_space<vmem>>, vector<1x16x16x128xbf16>
    %58 = vector.shape_cast %57 : vector<1x16x16x128xbf16> to vector<16x16x128xbf16>
    %59 = vector.shape_cast %58 : vector<16x16x128xbf16> to vector<256x128xbf16>
    %c8 = arith.constant 8 : index
    %c0_60 = arith.constant 0 : index
    %c0_61 = arith.constant 0 : index
    %60 = vector.load %arg2[%c8, %c0_60, %c0_61] : memref<9x128x128xbf16, #tpu.memory_space<vmem>>, vector<1x128x128xbf16>
    %61 = vector.shape_cast %60 : vector<1x128x128xbf16> to vector<128x128xbf16>
    %cst_62 = arith.constant dense<0.000000e+00> : vector<256x128xf32>
    %62 = tpu.matmul %59, %61, %cst_62 {dimension_numbers = #tpu.dot_dimension_numbers<[1], [0], [0], [1], [0, 0, 1, 1], [], []>} : vector<256x128xbf16>, vector<128x128xbf16>, vector<256x128xf32> -> vector<256x128xf32>
    %63 = arith.addf %56, %62 : vector<256x128xf32>
    %c0_63 = arith.constant 0 : index
    %c0_64 = arith.constant 0 : index
    %64 = vector.load %arg3[%c0_63, %c0_64] : memref<1x128xf32, #tpu.memory_space<vmem>>, vector<1x128xf32>
    %65 = vector.broadcast %64 : vector<1x128xf32> to vector<256x128xf32>
    %66 = arith.addf %63, %65 : vector<256x128xf32>
    %67 = arith.negf %66 : vector<256x128xf32>
    %68 = math.exp %67 : vector<256x128xf32>
    %cst_65 = arith.constant 1.000000e+00 : f32
    %69 = vector.broadcast %cst_65 : f32 to vector<256x128xf32>
    %70 = arith.addf %69, %68 : vector<256x128xf32>
    %71 = arith.divf %69, %70 : vector<256x128xf32>
    %72 = arith.mulf %66, %71 : vector<256x128xf32>
    %c0_66 = arith.constant 0 : index
    %c0_67 = arith.constant 0 : index
    %73 = vector.load %arg4[%c0_66, %c0_67] : memref<256x128xbf16, #tpu.memory_space<vmem>>, vector<256x128xbf16>
    %74 = arith.extf %73 : vector<256x128xbf16> to vector<256x128xf32>
    %75 = arith.addf %72, %74 : vector<256x128xf32>
    %76 = arith.truncf %75 : vector<256x128xf32> to vector<256x128xbf16>
    %c0_68 = arith.constant 0 : index
    %c0_69 = arith.constant 0 : index
    %77 = vector.load %arg5[%c0_68, %c0_69] : memref<256x128xbf16, #tpu.memory_space<vmem>>, vector<256x128xbf16>
    tpu.vector_store %arg5[%c0_68, %c0_69], %76 {strides = array<i32>} : memref<256x128xbf16, #tpu.memory_space<vmem>>, vector<256x128xbf16>,
    return
  }
  func.func @transform_0(%arg0: i32) -> (i32, i32, i32, i32) {
    %c0_i32 = arith.constant 0 : i32
    %c0_i32_0 = arith.constant 0 : i32
    %c0_i32_1 = arith.constant 0 : i32
    %c0_i32_2 = arith.constant 0 : i32
    return %arg0, %c0_i32, %c0_i32_0, %c0_i32_1 : i32, i32, i32, i32
  }
  func.func @transform_1(%arg0: i32) -> (i32, i32, i32) {
    %c0_i32 = arith.constant 0 : i32
    %c0_i32_0 = arith.constant 0 : i32
    %c0_i32_1 = arith.constant 0 : i32
    %c0_i32_2 = arith.constant 0 : i32
    return %c0_i32, %c0_i32_0, %c0_i32_1 : i32, i32, i32
  }
  func.func @transform_2(%arg0: i32) -> (i32, i32) {
    %c0_i32 = arith.constant 0 : i32
    %c0_i32_0 = arith.constant 0 : i32
    %c0_i32_1 = arith.constant 0 : i32
    return %c0_i32, %c0_i32_0 : i32, i32
  }
  func.func @transform_3(%arg0: i32) -> (i32, i32) {
    %c0_i32 = arith.constant 0 : i32
    %c0_i32_0 = arith.constant 0 : i32
    return %arg0, %c0_i32 : i32, i32
  }
  func.func @transform_4(%arg0: i32) -> (i32, i32) {
    %c0_i32 = arith.constant 0 : i32
    %c0_i32_0 = arith.constant 0 : i32
    return %arg0, %c0_i32 : i32, i32
  }
}

module attributes {stable_mosaic.version = 11 : i64} {
  func.func @_pw2_kernel(%arg0: i32, %arg1: memref<256x128xbf16, #tpu.memory_space<vmem>>, %arg2: memref<256x128xbf16, #tpu.memory_space<vmem>>, %arg3: memref<128x128xbf16, #tpu.memory_space<vmem>>, %arg4: memref<128x128xbf16, #tpu.memory_space<vmem>>, %arg5: memref<1x128xf32, #tpu.memory_space<vmem>>, %arg6: memref<256x128xf32, #tpu.memory_space<vmem>>) attributes {dimension_semantics = [#tpu.dimension_semantics<parallel>], iteration_bounds = array<i64: 2>, scalar_prefetch = 0 : i64, scratch_operands = 0 : i64, tpu.core_type = #tpu.core_type<tc>, window_params = [{transform_indices = @transform_0, window_bounds = array<i64: 256, 128>}, {transform_indices = @transform_1, window_bounds = array<i64: 256, 128>}, {pipeline_mode = #tpu.pipeline_mode<synchronous>, transform_indices = @transform_2, window_bounds = array<i64: 128, 128>}, {pipeline_mode = #tpu.pipeline_mode<synchronous>, transform_indices = @transform_3, window_bounds = array<i64: 128, 128>}, {pipeline_mode = #tpu.pipeline_mode<synchronous>, transform_indices = @transform_4, window_bounds = array<i64: 1, 128>}, {transform_indices = @transform_5, window_bounds = array<i64: 256, 128>}]} {
    %c0 = arith.constant 0 : index
    %c0_0 = arith.constant 0 : index
    %0 = vector.load %arg1[%c0, %c0_0] : memref<256x128xbf16, #tpu.memory_space<vmem>>, vector<256x128xbf16>
    %c0_1 = arith.constant 0 : index
    %c0_2 = arith.constant 0 : index
    %1 = vector.load %arg3[%c0_1, %c0_2] : memref<128x128xbf16, #tpu.memory_space<vmem>>, vector<128x128xbf16>
    %cst = arith.constant dense<0.000000e+00> : vector<256x128xf32>
    %2 = tpu.matmul %0, %1, %cst {dimension_numbers = #tpu.dot_dimension_numbers<[1], [0], [0], [1], [0, 0, 1, 1], [], []>} : vector<256x128xbf16>, vector<128x128xbf16>, vector<256x128xf32> -> vector<256x128xf32>
    %c0_3 = arith.constant 0 : index
    %c0_4 = arith.constant 0 : index
    %3 = vector.load %arg2[%c0_3, %c0_4] : memref<256x128xbf16, #tpu.memory_space<vmem>>, vector<256x128xbf16>
    %c0_5 = arith.constant 0 : index
    %c0_6 = arith.constant 0 : index
    %4 = vector.load %arg4[%c0_5, %c0_6] : memref<128x128xbf16, #tpu.memory_space<vmem>>, vector<128x128xbf16>
    %cst_7 = arith.constant dense<0.000000e+00> : vector<256x128xf32>
    %5 = tpu.matmul %3, %4, %cst_7 {dimension_numbers = #tpu.dot_dimension_numbers<[1], [0], [0], [1], [0, 0, 1, 1], [], []>} : vector<256x128xbf16>, vector<128x128xbf16>, vector<256x128xf32> -> vector<256x128xf32>
    %6 = arith.addf %2, %5 : vector<256x128xf32>
    %c0_8 = arith.constant 0 : index
    %c0_9 = arith.constant 0 : index
    %7 = vector.load %arg5[%c0_8, %c0_9] : memref<1x128xf32, #tpu.memory_space<vmem>>, vector<1x128xf32>
    %8 = vector.broadcast %7 : vector<1x128xf32> to vector<256x128xf32>
    %9 = arith.addf %6, %8 : vector<256x128xf32>
    %10 = arith.negf %9 : vector<256x128xf32>
    %11 = math.exp %10 : vector<256x128xf32>
    %cst_10 = arith.constant 1.000000e+00 : f32
    %12 = vector.broadcast %cst_10 : f32 to vector<256x128xf32>
    %13 = arith.addf %12, %11 : vector<256x128xf32>
    %14 = arith.divf %12, %13 : vector<256x128xf32>
    %15 = arith.mulf %9, %14 : vector<256x128xf32>
    %c0_11 = arith.constant 0 : index
    %c0_12 = arith.constant 0 : index
    %16 = vector.load %arg6[%c0_11, %c0_12] : memref<256x128xf32, #tpu.memory_space<vmem>>, vector<256x128xf32>
    tpu.vector_store %arg6[%c0_11, %c0_12], %15 {strides = array<i32>} : memref<256x128xf32, #tpu.memory_space<vmem>>, vector<256x128xf32>,
    return
  }
  func.func @transform_0(%arg0: i32) -> (i32, i32) {
    %c0_i32 = arith.constant 0 : i32
    %c0_i32_0 = arith.constant 0 : i32
    return %arg0, %c0_i32 : i32, i32
  }
  func.func @transform_1(%arg0: i32) -> (i32, i32) {
    %c0_i32 = arith.constant 0 : i32
    %c0_i32_0 = arith.constant 0 : i32
    return %arg0, %c0_i32 : i32, i32
  }
  func.func @transform_2(%arg0: i32) -> (i32, i32) {
    %c0_i32 = arith.constant 0 : i32
    %c0_i32_0 = arith.constant 0 : i32
    %c0_i32_1 = arith.constant 0 : i32
    return %c0_i32, %c0_i32_0 : i32, i32
  }
  func.func @transform_3(%arg0: i32) -> (i32, i32) {
    %c0_i32 = arith.constant 0 : i32
    %c0_i32_0 = arith.constant 0 : i32
    %c0_i32_1 = arith.constant 0 : i32
    return %c0_i32, %c0_i32_0 : i32, i32
  }
  func.func @transform_4(%arg0: i32) -> (i32, i32) {
    %c0_i32 = arith.constant 0 : i32
    %c0_i32_0 = arith.constant 0 : i32
    %c0_i32_1 = arith.constant 0 : i32
    return %c0_i32, %c0_i32_0 : i32, i32
  }
  func.func @transform_5(%arg0: i32) -> (i32, i32) {
    %c0_i32 = arith.constant 0 : i32
    %c0_i32_0 = arith.constant 0 : i32
    return %arg0, %c0_i32 : i32, i32
  }
}

</mosaic_0001>

<llo_original>
// kernel: c3_forward.5
$region0: #{c3_forward.5}
  #allocation0 [shape = 'u32[]', space=smem, size = 0x4, offset = 0x4, fixed_abs, tag = 'smem constant byte address 0x4 - core index']
  #allocation1 [shape = 'u32[144,128]{1,0:T(1,128)}', space=vmem, size = 0x12000, scoped, tag = 'internal scratch']
  %s0 = inlined_call_operand.vmem [shape: bf16[512,128], index: 0, kind: input, shape index: {}]
  %s1 = inlined_call_operand.vmem [shape: bf16[128,128], index: 1, kind: input, shape index: {}]
  %s2 = inlined_call_operand.vmem [shape: f32[1,128], index: 2, kind: input, shape index: {}]
  %s3 = inlined_call_operand.vmem [shape: bf16[512,128], index: 3, kind: output, shape index: {}]
  %s4 = sld [smem:[#allocation0]]
  $region45: #{c3_forward.5} parent=0
    _
  %s6 = ssub.s32 1, %s4
  %s7 = scalar_select 0, %s6, %s4
  loop: start=0, step=1, limit=4
  $region2: #{c3_forward.5} parent=0 // loop_pre_header
    _
  $region3: #{c3_forward.5} parent=0 // loop_header
    %s9 = sphi 0, %s13
    %p10 = scmp.ge.s32.totalorder %s9, 4
    %s19 = sphi 0, %s21
    %s22 = sphi 0, %s19
    %s23 = sphi 0, %s22
    %s39 = sphi 0, %s23
    %s43 = sphi 0, %s43
    %s45 = sphi 0, %s43
    %s46 = sphi 0, %s45
    %s60 = sphi 0, %s46
    %s64 = sphi 0, %s64
    %s66 = sphi 0, %s64
    %s67 = sphi 0, %s66
    %s81 = sphi 0, %s67
    %s87 = sphi 0, %s89
    %s90 = sphi 0, %s87
    %s91 = sphi 0, %s90
    %s107 = sphi 0, %s91
  $region4: #{c3_forward.5} parent=0 // loop_header_branch
    %12 = sbr.rel (%p10) target = $region8
  $region5: #{c3_forward.5} parent=0 // loop_body
    %s14 = ssub.s32 %s9, 1
    %s15 = ssub.s32 %s9, 2
    %s16 = sadd.s32 %s9, 1
    %s17 = ssub.s32 %s9, %s16
    %p18 = scmp.eq.s32.totalorder %s17, 0
    %s20 = sadd.s32 %s19, 1
    %s21 = scalar_select %p18, %s19, %s20
    %p24 = pneg %p18
    %p25 = scmp.eq.s32.totalorder %s9, 1
    %p26 = por %p24, %p25
    %p27 = scmp.ne.s32.totalorder %s19, %s22
    %p28 = scmp.eq.s32.totalorder %s9, 0
    %p29 = por %p27, %p28
    %p30 = scmp.ne.s32.totalorder %s19, %s22
    %p31 = scmp.eq.s32.totalorder %s14, 1
    %p32 = por %p30, %p31
    %p33 = scmp.ne.s32.totalorder %s22, %s23
    %p34 = scmp.eq.s32.totalorder %s14, 0
    %p35 = por %p33, %p34
    %p36 = scmp.ne.s32.totalorder %s22, %s23
    %p37 = scmp.eq.s32.totalorder %s15, 1
    %p38 = por %p36, %p37
    %p40 = scmp.ne.s32.totalorder %s23, %s39
    %p41 = scmp.eq.s32.totalorder %s15, 0
    %p42 = por %p40, %p41
    %s44 = sadd.s32 %s43, 1
    %p47 = scmp.eq.s32.totalorder %s9, 1
    %p48 = scmp.ne.s32.totalorder %s43, %s45
    %p49 = scmp.eq.s32.totalorder %s9, 0
    %p50 = por %p48, %p49
    %p51 = scmp.ne.s32.totalorder %s43, %s45
    %p52 = scmp.eq.s32.totalorder %s14, 1
    %p53 = por %p51, %p52
    %p54 = scmp.ne.s32.totalorder %s45, %s46
    %p55 = scmp.eq.s32.totalorder %s14, 0
    %p56 = por %p54, %p55
    %p57 = scmp.ne.s32.totalorder %s45, %s46
    %p58 = scmp.eq.s32.totalorder %s15, 1
    %p59 = por %p57, %p58
    %p61 = scmp.ne.s32.totalorder %s46, %s60
    %p62 = scmp.eq.s32.totalorder %s15, 0
    %p63 = por %p61, %p62
    %s65 = sadd.s32 %s64, 1
    %p68 = scmp.eq.s32.totalorder %s9, 1
    %p69 = scmp.ne.s32.totalorder %s64, %s66
    %p70 = scmp.eq.s32.totalorder %s9, 0
    %p71 = por %p69, %p70
    %p72 = scmp.ne.s32.totalorder %s64, %s66
    %p73 = scmp.eq.s32.totalorder %s14, 1
    %p74 = por %p72, %p73
    %p75 = scmp.ne.s32.totalorder %s66, %s67
    %p76 = scmp.eq.s32.totalorder %s14, 0
    %p77 = por %p75, %p76
    %p78 = scmp.ne.s32.totalorder %s66, %s67
    %p79 = scmp.eq.s32.totalorder %s15, 1
    %p80 = por %p78, %p79
    %p82 = scmp.ne.s32.totalorder %s67, %s81
    %p83 = scmp.eq.s32.totalorder %s15, 0
    %p84 = por %p82, %p83
    %s85 = ssub.s32 %s9, %s16
    %p86 = scmp.eq.s32.totalorder %s85, 0
    %s88 = sadd.s32 %s87, 1
    %s89 = scalar_select %p86, %s87, %s88
    %p92 = pneg %p86
    %p93 = scmp.eq.s32.totalorder %s9, 1
    %p94 = por %p92, %p93
    %p95 = scmp.ne.s32.totalorder %s87, %s90
    %p96 = scmp.eq.s32.totalorder %s9, 0
    %p97 = por %p95, %p96
    %p98 = scmp.ne.s32.totalorder %s87, %s90
    %p99 = scmp.eq.s32.totalorder %s14, 1
    %p100 = por %p98, %p99
    %p101 = scmp.ne.s32.totalorder %s90, %s91
    %p102 = scmp.eq.s32.totalorder %s14, 0
    %p103 = por %p101, %p102
    %p104 = scmp.ne.s32.totalorder %s90, %s91
    %p105 = scmp.eq.s32.totalorder %s15, 1
    %p106 = por %p104, %p105
    %p108 = scmp.ne.s32.totalorder %s91, %s107
    %p109 = scmp.eq.s32.totalorder %s15, 0
    %p110 = por %p108, %p109
    %p111 = scmp.le.s32.totalorder 1, %s9
    %p112 = scmp.lt.s32.totalorder %s9, 3
    %p113 = pnand %p111, %p112
    %p114 = pneg %p113
    // Predicated region
    $region9: #{c3_forward.5} parent=5 // pred_check
      _
    $region10: #{c3_forward.5} parent=5 // pred_check_branch
      %116 = sbr.rel (%p113) target = $region12
    $region11: #{c3_forward.5} parent=5 // pred_region
      %s117 = ssub.s32 %s9, 1
      // Predicated region
      $region13: #{c3_forward.5} parent=11 // pred_check
        %p118 = pneg %p56
      $region14: #{c3_forward.5} parent=11 // pred_check_branch
        %120 = sbr.rel (%p118) target = $region16
      $region15: #{c3_forward.5} parent=11 // pred_region
        _
      $region16: #{c3_forward.5} parent=11 // pred_fallthru
        _
      // Predicated region
      $region17: #{c3_forward.5} parent=11 // pred_check
        %p121 = pneg %p77
      $region18: #{c3_forward.5} parent=11 // pred_check_branch
        %123 = sbr.rel (%p121) target = $region20
      $region19: #{c3_forward.5} parent=11 // pred_region
        _
      $region20: #{c3_forward.5} parent=11 // pred_fallthru
        _
    $region12: #{c3_forward.5} parent=5 // pred_fallthru
      _
    %p124 = scmp.lt.s32.totalorder %s9, 2
    // Predicated region
    $region21: #{c3_forward.5} parent=5 // pred_check
      %p125 = pneg %p124
    $region22: #{c3_forward.5} parent=5 // pred_check_branch
      %127 = sbr.rel (%p125) target = $region24
    $region23: #{c3_forward.5} parent=5 // pred_region
      // Predicated region
      $region25: #{c3_forward.5} parent=23 // pred_check
        %p128 = pneg %p29
      $region26: #{c3_forward.5} parent=23 // pred_check_branch
        %130 = sbr.rel (%p128) target = $region28
      $region27: #{c3_forward.5} parent=23 // pred_region
        %s131 = smul.u32 32, %s9
        %p132 = scmp.lt.s32.totalorder %s131, 63
        %s133 = scalar_select %p132, %s131, 63
        %s134 = smul.addr %s133, 4
        %s135 = scalar_lea.vmem %s0, %s134
        %s136 = smul.u32 32, %s9
      $region28: #{c3_forward.5} parent=23 // pred_fallthru
        _
    $region24: #{c3_forward.5} parent=5 // pred_fallthru
      _
    %p137 = scmp.le.s32.totalorder 1, %s9
    %p138 = scmp.lt.s32.totalorder %s9, 3
    %p139 = pnand %p137, %p138
    %p140 = pneg %p139
    // Predicated region
    $region29: #{c3_forward.5} parent=5 // pred_check
      _
    $region30: #{c3_forward.5} parent=5 // pred_check_branch
      %142 = sbr.rel (%p139) target = $region32
    $region31: #{c3_forward.5} parent=5 // pred_region
      %s143 = ssub.s32 %s9, 1
      %s144 = smul.u32 32, %s14
      %p145 = scmp.lt.s32.totalorder %s144, 63
      %s146 = scalar_select %p145, %s144, 63
      %s147 = smul.addr %s146, 4
      %s148 = scalar_lea.vmem %s0, %s147
      %p149 = pneg %p35
      %p150 = pneg %p32
      %p151 = pneg %p56
      %p152 = pneg %p53
      %p153 = pneg %p77
      %p154 = pneg %p74
      %p155 = pneg %p103
      %p156 = pneg %p100
      %s157 = smul.u32 32, %s14
      %p158 = scmp.lt.s32.totalorder %s157, 63
      %s159 = scalar_select %p158, %s157, 63
      %s160 = smul.addr %s159, 4
      %s161 = scalar_lea.vmem %s3, %s160
      %s162 = smul.u32 32, %s14
      %p163 = scmp.lt.s32.totalorder %s162, 63
      %s164 = scalar_select %p163, %s162, 63
      %s165 = smul.addr %s164, 4
      %s166 = scalar_lea.vmem %s0, %s165
      %s167 = smul.u32 32, %s14
      %s168 = smul.u32 32, %s14
      %p169 = scmp.lt.s32.totalorder %s168, 63
      %s170 = scalar_select %p169, %s168, 63
      %s171 = smul.addr %s170, 4
      %s172 = scalar_lea.vmem %s3, %s171
      %s173 = smul.u32 32, %s14
      %v175 = vld [vmem:[%s166] sm:$0xf]
      %v176 = vld [vmem:[%s166 + $0x4] sm:$0xf]
      %v177 = vld [vmem:[%s166 + $0x8] sm:$0xf]
      %v178 = vld [vmem:[%s166 + $0xc] sm:$0xf]
      %v179 = vld [vmem:[%s166 + $0x10] sm:$0xf]
      %v180 = vld [vmem:[%s166 + $0x14] sm:$0xf]
      %v181 = vld [vmem:[%s166 + $0x18] sm:$0xf]
      %v182 = vld [vmem:[%s166 + $0x1c] sm:$0xf]
      %v183 = vld [vmem:[%s166 + $0x20] sm:$0xf]
      %v184 = vld [vmem:[%s166 + $0x24] sm:$0xf]
      %v185 = vld [vmem:[%s166 + $0x28] sm:$0xf]
      %v186 = vld [vmem:[%s166 + $0x2c] sm:$0xf]
      %v187 = vld [vmem:[%s166 + $0x30] sm:$0xf]
      %v188 = vld [vmem:[%s166 + $0x34] sm:$0xf]
      %v189 = vld [vmem:[%s166 + $0x38] sm:$0xf]
      %v190 = vld [vmem:[%s166 + $0x3c] sm:$0xf]
      %v191 = vld [vmem:[%s166 + $0x40] sm:$0xf]
      %v192 = vld [vmem:[%s166 + $0x44] sm:$0xf]
      %v193 = vld [vmem:[%s166 + $0x48] sm:$0xf]
      %v194 = vld [vmem:[%s166 + $0x4c] sm:$0xf]
      %v195 = vld [vmem:[%s166 + $0x50] sm:$0xf]
      %v196 = vld [vmem:[%s166 + $0x54] sm:$0xf]
      %v197 = vld [vmem:[%s166 + $0x58] sm:$0xf]
      %v198 = vld [vmem:[%s166 + $0x5c] sm:$0xf]
      %v199 = vld [vmem:[%s166 + $0x60] sm:$0xf]
      %v200 = vld [vmem:[%s166 + $0x64] sm:$0xf]
      %v201 = vld [vmem:[%s166 + $0x68] sm:$0xf]
      %v202 = vld [vmem:[%s166 + $0x6c] sm:$0xf]
      %v203 = vld [vmem:[%s166 + $0x70] sm:$0xf]
      %v204 = vld [vmem:[%s166 + $0x74] sm:$0xf]
      %v205 = vld [vmem:[%s166 + $0x78] sm:$0xf]
      %v206 = vld [vmem:[%s166 + $0x7c] sm:$0xf]
      %v207 = vld [vmem:[%s1] sm:$0xf]
      %v208 = vld [vmem:[%s1 + $0x4] sm:$0xf]
      %v209 = vld [vmem:[%s1 + $0x8] sm:$0xf]
      %v210 = vld [vmem:[%s1 + $0xc] sm:$0xf]
      %v211 = vld [vmem:[%s1 + $0x10] sm:$0xf]
      %v212 = vld [vmem:[%s1 + $0x14] sm:$0xf]
      %v213 = vld [vmem:[%s1 + $0x18] sm:$0xf]
      %v214 = vld [vmem:[%s1 + $0x1c] sm:$0xf]
      %v215 = vld [vmem:[%s1 + $0x20] sm:$0xf]
      %v216 = vld [vmem:[%s1 + $0x24] sm:$0xf]
      %v217 = vld [vmem:[%s1 + $0x28] sm:$0xf]
      %v218 = vld [vmem:[%s1 + $0x2c] sm:$0xf]
      %v219 = vld [vmem:[%s1 + $0x30] sm:$0xf]
      %v220 = vld [vmem:[%s1 + $0x34] sm:$0xf]
      %v221 = vld [vmem:[%s1 + $0x38] sm:$0xf]
      %v222 = vld [vmem:[%s1 + $0x3c] sm:$0xf]
      %v223 = vld [vmem:[%s2] sm:$0x1]
      %v225 = vlaneseq
      %v226 = vshrl.u32 %v225, 7
      %v227 = vsub.s32 0, %v226
      %v228 = vrot.slane %v223, %v227
      %v262 = vunpack.c.l.b16 %v175
      %v263 = vunpack.c.l.b16 %v176
      %v264 = vunpack.c.l.b16 %v177
      %v265 = vunpack.c.l.b16 %v178
      %v266 = vunpack.c.l.b16 %v179
      %v267 = vunpack.c.l.b16 %v180
      %v268 = vunpack.c.l.b16 %v181
      %v269 = vunpack.c.l.b16 %v182
      %v270 = vunpack.c.l.b16 %v183
      %v271 = vunpack.c.l.b16 %v184
      %v272 = vunpack.c.l.b16 %v185
      %v273 = vunpack.c.l.b16 %v186
      %v274 = vunpack.c.l.b16 %v187
      %v275 = vunpack.c.l.b16 %v188
      %v276 = vunpack.c.l.b16 %v189
      %v277 = vunpack.c.l.b16 %v190
      %v278 = vunpack.c.l.b16 %v191
      %v279 = vunpack.c.l.b16 %v192
      %v280 = vunpack.c.l.b16 %v193
      %v281 = vunpack.c.l.b16 %v194
      %v282 = vunpack.c.l.b16 %v195
      %v283 = vunpack.c.l.b16 %v196
      %v284 = vunpack.c.l.b16 %v197
      %v285 = vunpack.c.l.b16 %v198
      %v286 = vunpack.c.l.b16 %v199
      %v287 = vunpack.c.l.b16 %v200
      %v288 = vunpack.c.l.b16 %v201
      %v289 = vunpack.c.l.b16 %v202
      %v290 = vunpack.c.l.b16 %v203
      %v291 = vunpack.c.l.b16 %v204
      %v292 = vunpack.c.l.b16 %v205
      %v293 = vunpack.c.l.b16 %v206
      %v294 = vpack.c.b16 %v263, %v262
      %v295 = vpack.c.b16 %v265, %v264
      %v296 = vpack.c.b16 %v267, %v266
      %v297 = vpack.c.b16 %v269, %v268
      %v298 = vpack.c.b16 %v271, %v270
      %v299 = vpack.c.b16 %v273, %v272
      %v300 = vpack.c.b16 %v275, %v274
      %v301 = vpack.c.b16 %v277, %v276
      %v302 = vpack.c.b16 %v279, %v278
      %v303 = vpack.c.b16 %v281, %v280
      %v304 = vpack.c.b16 %v283, %v282
      %v305 = vpack.c.b16 %v285, %v284
      %v306 = vpack.c.b16 %v287, %v286
      %v307 = vpack.c.b16 %v289, %v288
      %v308 = vpack.c.b16 %v291, %v290
      %v309 = vpack.c.b16 %v293, %v292
      %v342 = vunpack.c.l.b16 %v207
      %v343 = vunpack.c.l.b16 %v208
      %v344 = vunpack.c.l.b16 %v209
      %v345 = vunpack.c.l.b16 %v210
      %v346 = vunpack.c.l.b16 %v211
      %v347 = vunpack.c.l.b16 %v212
      %v348 = vunpack.c.l.b16 %v213
      %v349 = vunpack.c.l.b16 %v214
      %v350 = vunpack.c.l.b16 %v215
      %v351 = vunpack.c.l.b16 %v216
      %v352 = vunpack.c.l.b16 %v217
      %v353 = vunpack.c.l.b16 %v218
      %v354 = vunpack.c.l.b16 %v219
      %v355 = vunpack.c.l.b16 %v220
      %v356 = vunpack.c.l.b16 %v221
      %v357 = vunpack.c.l.b16 %v222
      %v358 = vpack.c.b16 %v343, %v342
      %v359 = vpack.c.b16 %v345, %v344
      %v360 = vpack.c.b16 %v347, %v346
      %v361 = vpack.c.b16 %v349, %v348
      %v362 = vpack.c.b16 %v351, %v350
      %v363 = vpack.c.b16 %v353, %v352
      %v364 = vpack.c.b16 %v355, %v354
      %v365 = vpack.c.b16 %v357, %v356
      %374 = vmatprep.subr.bf16.mxu0 0
      %375 = vmatpush1.bf16.msra.mxu0 %v358
      %376 = vmatprep.subr.bf16.mxu0 0
      %377 = vmatpush1.bf16.msra.mxu0 %v359
      %378 = vmatprep.subr.bf16.mxu0 0
      %379 = vmatpush1.bf16.msra.mxu0 %v360
      %380 = vmatprep.subr.bf16.mxu0 0
      %381 = vmatpush1.bf16.msra.mxu0 %v361
      %382 = vmatprep.subr.bf16.mxu0 0
      %383 = vmatpush1.bf16.msra.mxu0 %v362
      %384 = vmatprep.subr.bf16.mxu0 0
      %385 = vmatpush1.bf16.msra.mxu0 %v363
      %386 = vmatprep.subr.bf16.mxu0 0
      %387 = vmatpush1.bf16.msra.mxu0 %v364
      %388 = vmatprep.subr.bf16.mxu0 0
      %389 = vmatpush1.bf16.msra.mxu0 %v365
      %390 = vmatprep.subr.bf16.mxu0 0
      %391 = vmatpush1.bf16.msra.mxu0 0
      %392 = vmatprep.subr.bf16.mxu0 0
      %393 = vmatpush1.bf16.msra.mxu0 0
      %394 = vmatprep.subr.bf16.mxu0 0
      %395 = vmatpush1.bf16.msra.mxu0 0
      %396 = vmatprep.subr.bf16.mxu0 0
      %397 = vmatpush1.bf16.msra.mxu0 0
      %398 = vmatprep.subr.bf16.mxu0 0
      %399 = vmatpush1.bf16.msra.mxu0 0
      %400 = vmatprep.subr.bf16.mxu0 0
      %401 = vmatpush1.bf16.msra.mxu0 0
      %402 = vmatprep.subr.bf16.mxu0 0
      %403 = vmatpush1.bf16.msra.mxu0 0
      %404 = vmatprep.subr.bf16.mxu0 0
      %405 = vmatpush1.bf16.msra.mxu0 0
      %406 = vmatprep.mubr.bf16.mxu0 0
      %407 = vmatmul.mubr.bf16.gmra.mrb[0].mxu0 %v294
      %v408 = vpop.f32.mrb[0].mxu0
      %v409 = vadd.f32 %v228, %v408
      %v410 = vpop.f32.mrb[0].mxu0
      %v411 = vpop.f32.mrb[0].mxu0
      %v412 = vadd.f32 %v228, %v411
      %v413 = vpop.f32.mrb[0].mxu0
      %414 = vmatprep.mubr.bf16.mxu0 0
      %415 = vmatmul.mubr.bf16.gmra.mrb[0].mxu0 %v295
      %v416 = vpop.f32.mrb[0].mxu0
      %v417 = vadd.f32 %v228, %v416
      %v418 = vpop.f32.mrb[0].mxu0
      %v419 = vpop.f32.mrb[0].mxu0
      %v420 = vadd.f32 %v228, %v419
      %v421 = vpop.f32.mrb[0].mxu0
      %422 = vmatprep.mubr.bf16.mxu0 0
      %423 = vmatmul.mubr.bf16.gmra.mrb[0].mxu0 %v296
      %v424 = vpop.f32.mrb[0].mxu0
      %v425 = vadd.f32 %v228, %v424
      %v426 = vpop.f32.mrb[0].mxu0
      %v427 = vpop.f32.mrb[0].mxu0
      %v428 = vadd.f32 %v228, %v427
      %v429 = vpop.f32.mrb[0].mxu0
      %430 = vmatprep.mubr.bf16.mxu0 0
      %431 = vmatmul.mubr.bf16.gmra.mrb[0].mxu0 %v297
      %v432 = vpop.f32.mrb[0].mxu0
      %v433 = vadd.f32 %v228, %v432
      %v434 = vpop.f32.mrb[0].mxu0
      %v435 = vpop.f32.mrb[0].mxu0
      %v436 = vadd.f32 %v228, %v435
      %v437 = vpop.f32.mrb[0].mxu0
      %438 = vmatprep.mubr.bf16.mxu0 0
      %439 = vmatmul.mubr.bf16.gmra.mrb[0].mxu0 %v298
      %v440 = vpop.f32.mrb[0].mxu0
      %v441 = vadd.f32 %v228, %v440
      %v442 = vpop.f32.mrb[0].mxu0
      %v443 = vpop.f32.mrb[0].mxu0
      %v444 = vadd.f32 %v228, %v443
      %v445 = vpop.f32.mrb[0].mxu0
      %446 = vmatprep.mubr.bf16.mxu0 0
      %447 = vmatmul.mubr.bf16.gmra.mrb[0].mxu0 %v299
      %v448 = vpop.f32.mrb[0].mxu0
      %v449 = vadd.f32 %v228, %v448
      %v450 = vpop.f32.mrb[0].mxu0
      %v451 = vpop.f32.mrb[0].mxu0
      %v452 = vadd.f32 %v228, %v451
      %v453 = vpop.f32.mrb[0].mxu0
      %454 = vmatprep.mubr.bf16.mxu0 0
      %455 = vmatmul.mubr.bf16.gmra.mrb[0].mxu0 %v300
      %v456 = vpop.f32.mrb[0].mxu0
      %v457 = vadd.f32 %v228, %v456
      %v458 = vpop.f32.mrb[0].mxu0
      %v459 = vpop.f32.mrb[0].mxu0
      %v460 = vadd.f32 %v228, %v459
      %v461 = vpop.f32.mrb[0].mxu0
      %462 = vmatprep.mubr.bf16.mxu0 0
      %463 = vmatmul.mubr.bf16.gmra.mrb[0].mxu0 %v301
      %v464 = vpop.f32.mrb[0].mxu0
      %v465 = vadd.f32 %v228, %v464
      %v466 = vpop.f32.mrb[0].mxu0
      %v467 = vpop.f32.mrb[0].mxu0
      %v468 = vadd.f32 %v228, %v467
      %v469 = vpop.f32.mrb[0].mxu0
      %470 = vmatprep.mubr.bf16.mxu0 0
      %471 = vmatmul.mubr.bf16.gmra.mrb[0].mxu0 %v302
      %v472 = vpop.f32.mrb[0].mxu0
      %v473 = vadd.f32 %v228, %v472
      %v474 = vpop.f32.mrb[0].mxu0
      %v475 = vpop.f32.mrb[0].mxu0
      %v476 = vadd.f32 %v228, %v475
      %v477 = vpop.f32.mrb[0].mxu0
      %478 = vmatprep.mubr.bf16.mxu0 0
      %479 = vmatmul.mubr.bf16.gmra.mrb[0].mxu0 %v303
      %v480 = vpop.f32.mrb[0].mxu0
      %v481 = vadd.f32 %v228, %v480
      %v482 = vpop.f32.mrb[0].mxu0
      %v483 = vpop.f32.mrb[0].mxu0
      %v484 = vadd.f32 %v228, %v483
      %v485 = vpop.f32.mrb[0].mxu0
      %486 = vmatprep.mubr.bf16.mxu0 0
      %487 = vmatmul.mubr.bf16.gmra.mrb[0].mxu0 %v304
      %v488 = vpop.f32.mrb[0].mxu0
      %v489 = vadd.f32 %v228, %v488
      %v490 = vpop.f32.mrb[0].mxu0
      %v491 = vpop.f32.mrb[0].mxu0
      %v492 = vadd.f32 %v228, %v491
      %v493 = vpop.f32.mrb[0].mxu0
      %494 = vmatprep.mubr.bf16.mxu0 0
      %495 = vmatmul.mubr.bf16.gmra.mrb[0].mxu0 %v305
      %v496 = vpop.f32.mrb[0].mxu0
      %v497 = vadd.f32 %v228, %v496
      %v498 = vpop.f32.mrb[0].mxu0
      %v499 = vpop.f32.mrb[0].mxu0
      %v500 = vadd.f32 %v228, %v499
      %v501 = vpop.f32.mrb[0].mxu0
      %502 = vmatprep.mubr.bf16.mxu0 0
      %503 = vmatmul.mubr.bf16.gmra.mrb[0].mxu0 %v306
      %v504 = vpop.f32.mrb[0].mxu0
      %v505 = vadd.f32 %v228, %v504
      %v506 = vpop.f32.mrb[0].mxu0
      %v507 = vpop.f32.mrb[0].mxu0
      %v508 = vadd.f32 %v228, %v507
      %v509 = vpop.f32.mrb[0].mxu0
      %510 = vmatprep.mubr.bf16.mxu0 0
      %511 = vmatmul.mubr.bf16.gmra.mrb[0].mxu0 %v307
      %v512 = vpop.f32.mrb[0].mxu0
      %v513 = vadd.f32 %v228, %v512
      %v514 = vpop.f32.mrb[0].mxu0
      %v515 = vpop.f32.mrb[0].mxu0
      %v516 = vadd.f32 %v228, %v515
      %v517 = vpop.f32.mrb[0].mxu0
      %518 = vmatprep.mubr.bf16.mxu0 0
      %519 = vmatmul.mubr.bf16.gmra.mrb[0].mxu0 %v308
      %v520 = vpop.f32.mrb[0].mxu0
      %v521 = vadd.f32 %v228, %v520
      %v522 = vpop.f32.mrb[0].mxu0
      %v523 = vpop.f32.mrb[0].mxu0
      %v524 = vadd.f32 %v228, %v523
      %v525 = vpop.f32.mrb[0].mxu0
      %526 = vmatprep.mubr.bf16.mxu0 0
      %527 = vmatmul.mubr.bf16.gmra.mrb[0].mxu0 %v309
      %v528 = vpop.f32.mrb[0].mxu0
      %v529 = vadd.f32 %v228, %v528
      %v530 = vpop.f32.mrb[0].mxu0
      %v531 = vpop.f32.mrb[0].mxu0
      %v532 = vadd.f32 %v228, %v531
      %v533 = vpop.f32.mrb[0].mxu0
      %534 = vdwg.mxu0
      %v535 = vxor.u32 %v409, 2147483648
      %v536 = vxor.u32 %v412, 2147483648
      %v537 = vxor.u32 %v417, 2147483648
      %v538 = vxor.u32 %v420, 2147483648
      %v539 = vxor.u32 %v425, 2147483648
      %v540 = vxor.u32 %v428, 2147483648
      %v541 = vxor.u32 %v433, 2147483648
      %v542 = vxor.u32 %v436, 2147483648
      %v543 = vxor.u32 %v441, 2147483648
      %v544 = vxor.u32 %v444, 2147483648
      %v545 = vxor.u32 %v449, 2147483648
      %v546 = vxor.u32 %v452, 2147483648
      %v547 = vxor.u32 %v457, 2147483648
      %v548 = vxor.u32 %v460, 2147483648
      %v549 = vxor.u32 %v465, 2147483648
      %v550 = vxor.u32 %v468, 2147483648
      %v551 = vxor.u32 %v473, 2147483648
      %v552 = vxor.u32 %v476, 2147483648
      %v553 = vxor.u32 %v481, 2147483648
      %v554 = vxor.u32 %v484, 2147483648
      %v555 = vxor.u32 %v489, 2147483648
      %v556 = vxor.u32 %v492, 2147483648
      %v557 = vxor.u32 %v497, 2147483648
      %v558 = vxor.u32 %v500, 2147483648
      %v559 = vxor.u32 %v505, 2147483648
      %v560 = vxor.u32 %v508, 2147483648
      %v561 = vxor.u32 %v513, 2147483648
      %v562 = vxor.u32 %v516, 2147483648
      %v563 = vxor.u32 %v521, 2147483648
      %v564 = vxor.u32 %v524, 2147483648
      %v565 = vxor.u32 %v529, 2147483648
      %v566 = vxor.u32 %v532, 2147483648
      %v567 = vmul.f32 %v535, 1.442695
      %v568 = vpow.pop %v567
      %v569 = vmul.f32 %v536, 1.442695
      %v570 = vpow.pop %v569
      %v571 = vmul.f32 %v537, 1.442695
      %v572 = vpow.pop %v571
      %v573 = vmul.f32 %v538, 1.442695
      %v574 = vpow.pop %v573
      %v575 = vmul.f32 %v539, 1.442695
      %v576 = vpow.pop %v575
      %v577 = vmul.f32 %v540, 1.442695
      %v578 = vpow.pop %v577
      %v579 = vmul.f32 %v541, 1.442695
      %v580 = vpow.pop %v579
      %v581 = vmul.f32 %v542, 1.442695
      %v582 = vpow.pop %v581
      %v583 = vmul.f32 %v543, 1.442695
      %v584 = vpow.pop %v583
      %v585 = vmul.f32 %v544, 1.442695
      %v586 = vpow.pop %v585
      %v587 = vmul.f32 %v545, 1.442695
      %v588 = vpow.pop %v587
      %v589 = vmul.f32 %v546, 1.442695
      %v590 = vpow.pop %v589
      %v591 = vmul.f32 %v547, 1.442695
      %v592 = vpow.pop %v591
      %v593 = vmul.f32 %v548, 1.442695
      %v594 = vpow.pop %v593
      %v595 = vmul.f32 %v549, 1.442695
      %v596 = vpow.pop %v595
      %v597 = vmul.f32 %v550, 1.442695
      %v598 = vpow.pop %v597
      %v599 = vmul.f32 %v551, 1.442695
      %v600 = vpow.pop %v599
      %v601 = vmul.f32 %v552, 1.442695
      %v602 = vpow.pop %v601
      %v603 = vmul.f32 %v553, 1.442695
      %v604 = vpow.pop %v603
      %v605 = vmul.f32 %v554, 1.442695
      %v606 = vpow.pop %v605
      %v607 = vmul.f32 %v555, 1.442695
      %v608 = vpow.pop %v607
      %v609 = vmul.f32 %v556, 1.442695
      %v610 = vpow.pop %v609
      %v611 = vmul.f32 %v557, 1.442695
      %v612 = vpow.pop %v611
      %v613 = vmul.f32 %v558, 1.442695
      %v614 = vpow.pop %v613
      %v615 = vmul.f32 %v559, 1.442695
      %v616 = vpow.pop %v615
      %v617 = vmul.f32 %v560, 1.442695
      %v618 = vpow.pop %v617
      %v619 = vmul.f32 %v561, 1.442695
      %v620 = vpow.pop %v619
      %v621 = vmul.f32 %v562, 1.442695
      %v622 = vpow.pop %v621
      %v623 = vmul.f32 %v563, 1.442695
      %v624 = vpow.pop %v623
      %v625 = vmul.f32 %v564, 1.442695
      %v626 = vpow.pop %v625
      %v627 = vmul.f32 %v565, 1.442695
      %v628 = vpow.pop %v627
      %v629 = vmul.f32 %v566, 1.442695
      %v630 = vpow.pop %v629
      %v631 = vadd.f32 %v568, 1.0
      %v632 = vadd.f32 %v570, 1.0
      %v633 = vadd.f32 %v572, 1.0
      %v634 = vadd.f32 %v574, 1.0
      %v635 = vadd.f32 %v576, 1.0
      %v636 = vadd.f32 %v578, 1.0
      %v637 = vadd.f32 %v580, 1.0
      %v638 = vadd.f32 %v582, 1.0
      %v639 = vadd.f32 %v584, 1.0
      %v640 = vadd.f32 %v586, 1.0
      %v641 = vadd.f32 %v588, 1.0
      %v642 = vadd.f32 %v590, 1.0
      %v643 = vadd.f32 %v592, 1.0
      %v644 = vadd.f32 %v594, 1.0
      %v645 = vadd.f32 %v596, 1.0
      %v646 = vadd.f32 %v598, 1.0
      %v647 = vadd.f32 %v600, 1.0
      %v648 = vadd.f32 %v602, 1.0
      %v649 = vadd.f32 %v604, 1.0
      %v650 = vadd.f32 %v606, 1.0
      %v651 = vadd.f32 %v608, 1.0
      %v652 = vadd.f32 %v610, 1.0
      %v653 = vadd.f32 %v612, 1.0
      %v654 = vadd.f32 %v614, 1.0
      %v655 = vadd.f32 %v616, 1.0
      %v656 = vadd.f32 %v618, 1.0
      %v657 = vadd.f32 %v620, 1.0
      %v658 = vadd.f32 %v622, 1.0
      %v659 = vadd.f32 %v624, 1.0
      %v660 = vadd.f32 %v626, 1.0
      %v661 = vadd.f32 %v628, 1.0
      %v662 = vadd.f32 %v630, 1.0
      %v663 = vrcp.pop %v631
      %v664 = vmul.f32 1.0, %v663
      %v665 = vrcp.pop %v632
      %v666 = vmul.f32 1.0, %v665
      %v667 = vrcp.pop %v633
      %v668 = vmul.f32 1.0, %v667
      %v669 = vrcp.pop %v634
      %v670 = vmul.f32 1.0, %v669
      %v671 = vrcp.pop %v635
      %v672 = vmul.f32 1.0, %v671
      %v673 = vrcp.pop %v636
      %v674 = vmul.f32 1.0, %v673
      %v675 = vrcp.pop %v637
      %v676 = vmul.f32 1.0, %v675
      %v677 = vrcp.pop %v638
      %v678 = vmul.f32 1.0, %v677
      %v679 = vrcp.pop %v639
      %v680 = vmul.f32 1.0, %v679
      %v681 = vrcp.pop %v640
      %v682 = vmul.f32 1.0, %v681
      %v683 = vrcp.pop %v641
      %v684 = vmul.f32 1.0, %v683
      %v685 = vrcp.pop %v642
      %v686 = vmul.f32 1.0, %v685
      %v687 = vrcp.pop %v643
      %v688 = vmul.f32 1.0, %v687
      %v689 = vrcp.pop %v644
      %v690 = vmul.f32 1.0, %v689
      %v691 = vrcp.pop %v645
      %v692 = vmul.f32 1.0, %v691
      %v693 = vrcp.pop %v646
      %v694 = vmul.f32 1.0, %v693
      %v695 = vrcp.pop %v647
      %v696 = vmul.f32 1.0, %v695
      %v697 = vrcp.pop %v648
      %v698 = vmul.f32 1.0, %v697
      %v699 = vrcp.pop %v649
      %v700 = vmul.f32 1.0, %v699
      %v701 = vrcp.pop %v650
      %v702 = vmul.f32 1.0, %v701
      %v703 = vrcp.pop %v651
      %v704 = vmul.f32 1.0, %v703
      %v705 = vrcp.pop %v652
      %v706 = vmul.f32 1.0, %v705
      %v707 = vrcp.pop %v653
      %v708 = vmul.f32 1.0, %v707
      %v709 = vrcp.pop %v654
      %v710 = vmul.f32 1.0, %v709
      %v711 = vrcp.pop %v655
      %v712 = vmul.f32 1.0, %v711
      %v713 = vrcp.pop %v656
      %v714 = vmul.f32 1.0, %v713
      %v715 = vrcp.pop %v657
      %v716 = vmul.f32 1.0, %v715
      %v717 = vrcp.pop %v658
      %v718 = vmul.f32 1.0, %v717
      %v719 = vrcp.pop %v659
      %v720 = vmul.f32 1.0, %v719
      %v721 = vrcp.pop %v660
      %v722 = vmul.f32 1.0, %v721
      %v723 = vrcp.pop %v661
      %v724 = vmul.f32 1.0, %v723
      %v725 = vrcp.pop %v662
      %v726 = vmul.f32 1.0, %v725
      %v727 = vmul.f32 %v409, %v664
      %v728 = vmul.f32 %v412, %v666
      %v729 = vmul.f32 %v417, %v668
      %v730 = vmul.f32 %v420, %v670
      %v731 = vmul.f32 %v425, %v672
      %v732 = vmul.f32 %v428, %v674
      %v733 = vmul.f32 %v433, %v676
      %v734 = vmul.f32 %v436, %v678
      %v735 = vmul.f32 %v441, %v680
      %v736 = vmul.f32 %v444, %v682
      %v737 = vmul.f32 %v449, %v684
      %v738 = vmul.f32 %v452, %v686
      %v739 = vmul.f32 %v457, %v688
      %v740 = vmul.f32 %v460, %v690
      %v741 = vmul.f32 %v465, %v692
      %v742 = vmul.f32 %v468, %v694
      %v743 = vmul.f32 %v473, %v696
      %v744 = vmul.f32 %v476, %v698
      %v745 = vmul.f32 %v481, %v700
      %v746 = vmul.f32 %v484, %v702
      %v747 = vmul.f32 %v489, %v704
      %v748 = vmul.f32 %v492, %v706
      %v749 = vmul.f32 %v497, %v708
      %v750 = vmul.f32 %v500, %v710
      %v751 = vmul.f32 %v505, %v712
      %v752 = vmul.f32 %v508, %v714
      %v753 = vmul.f32 %v513, %v716
      %v754 = vmul.f32 %v516, %v718
      %v755 = vmul.f32 %v521, %v720
      %v756 = vmul.f32 %v524, %v722
      %v757 = vmul.f32 %v529, %v724
      %v758 = vmul.f32 %v532, %v726
      %v759 = vpack.c.bf16 %v728, %v727
      %v760 = vpack.c.bf16 %v730, %v729
      %v761 = vpack.c.bf16 %v732, %v731
      %v762 = vpack.c.bf16 %v734, %v733
      %v763 = vpack.c.bf16 %v736, %v735
      %v764 = vpack.c.bf16 %v738, %v737
      %v765 = vpack.c.bf16 %v740, %v739
      %v766 = vpack.c.bf16 %v742, %v741
      %v767 = vpack.c.bf16 %v744, %v743
      %v768 = vpack.c.bf16 %v746, %v745
      %v769 = vpack.c.bf16 %v748, %v747
      %v770 = vpack.c.bf16 %v750, %v749
      %v771 = vpack.c.bf16 %v752, %v751
      %v772 = vpack.c.bf16 %v754, %v753
      %v773 = vpack.c.bf16 %v756, %v755
      %v774 = vpack.c.bf16 %v758, %v757
      %v791 = vunpack.c.l.b16 %v759
      %v792 = vunpack.c.h.b16 %v759
      %v793 = vunpack.c.l.b16 %v760
      %v794 = vunpack.c.h.b16 %v760
      %v795 = vunpack.c.l.b16 %v761
      %v796 = vunpack.c.h.b16 %v761
      %v797 = vunpack.c.l.b16 %v762
      %v798 = vunpack.c.h.b16 %v762
      %v799 = vunpack.c.l.b16 %v763
      %v800 = vunpack.c.h.b16 %v763
      %v801 = vunpack.c.l.b16 %v764
      %v802 = vunpack.c.h.b16 %v764
      %v803 = vunpack.c.l.b16 %v765
      %v804 = vunpack.c.h.b16 %v765
      %v805 = vunpack.c.l.b16 %v766
      %v806 = vunpack.c.h.b16 %v766
      %v807 = vunpack.c.l.b16 %v767
      %v808 = vunpack.c.h.b16 %v767
      %v809 = vunpack.c.l.b16 %v768
      %v810 = vunpack.c.h.b16 %v768
      %v811 = vunpack.c.l.b16 %v769
      %v812 = vunpack.c.h.b16 %v769
      %v813 = vunpack.c.l.b16 %v770
      %v814 = vunpack.c.h.b16 %v770
      %v815 = vunpack.c.l.b16 %v771
      %v816 = vunpack.c.h.b16 %v771
      %v817 = vunpack.c.l.b16 %v772
      %v818 = vunpack.c.h.b16 %v772
      %v819 = vunpack.c.l.b16 %v773
      %v820 = vunpack.c.h.b16 %v773
      %v821 = vunpack.c.l.b16 %v774
      %v822 = vunpack.c.h.b16 %v774
      %v823 = vpack.c.b16 %v791, %v791
      %v824 = vpack.c.b16 %v792, %v792
      %v825 = vpack.c.b16 %v793, %v793
      %v826 = vpack.c.b16 %v794, %v794
      %v827 = vpack.c.b16 %v795, %v795
      %v828 = vpack.c.b16 %v796, %v796
      %v829 = vpack.c.b16 %v797, %v797
      %v830 = vpack.c.b16 %v798, %v798
      %v831 = vpack.c.b16 %v799, %v799
      %v832 = vpack.c.b16 %v800, %v800
      %v833 = vpack.c.b16 %v801, %v801
      %v834 = vpack.c.b16 %v802, %v802
      %v835 = vpack.c.b16 %v803, %v803
      %v836 = vpack.c.b16 %v804, %v804
      %v837 = vpack.c.b16 %v805, %v805
      %v838 = vpack.c.b16 %v806, %v806
      %v839 = vpack.c.b16 %v807, %v807
      %v840 = vpack.c.b16 %v808, %v808
      %v841 = vpack.c.b16 %v809, %v809
      %v842 = vpack.c.b16 %v810, %v810
      %v843 = vpack.c.b16 %v811, %v811
      %v844 = vpack.c.b16 %v812, %v812
      %v845 = vpack.c.b16 %v813, %v813
      %v846 = vpack.c.b16 %v814, %v814
      %v847 = vpack.c.b16 %v815, %v815
      %v848 = vpack.c.b16 %v816, %v816
      %v849 = vpack.c.b16 %v817, %v817
      %v850 = vpack.c.b16 %v818, %v818
      %v851 = vpack.c.b16 %v819, %v819
      %v852 = vpack.c.b16 %v820, %v820
      %v853 = vpack.c.b16 %v821, %v821
      %v854 = vpack.c.b16 %v822, %v822
      %887 = vst [vmem:[%s172] sm:$0xf] %v823
      %888 = vst [vmem:[%s172 + $0x4] sm:$0xf] %v824
      %889 = vst [vmem:[%s172 + $0x8] sm:$0xf] %v825
      %890 = vst [vmem:[%s172 + $0xc] sm:$0xf] %v826
      %891 = vst [vmem:[%s172 + $0x10] sm:$0xf] %v827
      %892 = vst [vmem:[%s172 + $0x14] sm:$0xf] %v828
      %893 = vst [vmem:[%s172 + $0x18] sm:$0xf] %v829
      %894 = vst [vmem:[%s172 + $0x1c] sm:$0xf] %v830
      %895 = vst [vmem:[%s172 + $0x20] sm:$0xf] %v831
      %896 = vst [vmem:[%s172 + $0x24] sm:$0xf] %v832
      %897 = vst [vmem:[%s172 + $0x28] sm:$0xf] %v833
      %898 = vst [vmem:[%s172 + $0x2c] sm:$0xf] %v834
      %899 = vst [vmem:[%s172 + $0x30] sm:$0xf] %v835
      %900 = vst [vmem:[%s172 + $0x34] sm:$0xf] %v836
      %901 = vst [vmem:[%s172 + $0x38] sm:$0xf] %v837
      %902 = vst [vmem:[%s172 + $0x3c] sm:$0xf] %v838
      %903 = vst [vmem:[%s172 + $0x40] sm:$0xf] %v839
      %904 = vst [vmem:[%s172 + $0x44] sm:$0xf] %v840
      %905 = vst [vmem:[%s172 + $0x48] sm:$0xf] %v841
      %906 = vst [vmem:[%s172 + $0x4c] sm:$0xf] %v842
      %907 = vst [vmem:[%s172 + $0x50] sm:$0xf] %v843
      %908 = vst [vmem:[%s172 + $0x54] sm:$0xf] %v844
      %909 = vst [vmem:[%s172 + $0x58] sm:$0xf] %v845
      %910 = vst [vmem:[%s172 + $0x5c] sm:$0xf] %v846
      %911 = vst [vmem:[%s172 + $0x60] sm:$0xf] %v847
      %912 = vst [vmem:[%s172 + $0x64] sm:$0xf] %v848
      %913 = vst [vmem:[%s172 + $0x68] sm:$0xf] %v849
      %914 = vst [vmem:[%s172 + $0x6c] sm:$0xf] %v850
      %915 = vst [vmem:[%s172 + $0x70] sm:$0xf] %v851
      %916 = vst [vmem:[%s172 + $0x74] sm:$0xf] %v852
      %917 = vst [vmem:[%s172 + $0x78] sm:$0xf] %v853
      %918 = vst [vmem:[%s172 + $0x7c] sm:$0xf] %v854
      %s919 = smul.u32 32, %s14
      %p920 = scmp.lt.s32.totalorder %s919, 63
      %s921 = scalar_select %p920, %s919, 63
      %s922 = smul.addr %s921, 4
      %s923 = scalar_lea.vmem %s3, %s922
      // Predicated region
      $region33: #{c3_forward.5} parent=31 // pred_check
        %p924 = pneg %p100
      $region34: #{c3_forward.5} parent=31 // pred_check_branch
        %926 = sbr.rel (%p924) target = $region36
      $region35: #{c3_forward.5} parent=31 // pred_region
        %s927 = smul.u32 32, %s14
      $region36: #{c3_forward.5} parent=31 // pred_fallthru
        _
    $region32: #{c3_forward.5} parent=5 // pred_fallthru
      _
    %p928 = scmp.le.s32.totalorder 2, %s9
    // Predicated region
    $region37: #{c3_forward.5} parent=5 // pred_check
      %p929 = pneg %p928
    $region38: #{c3_forward.5} parent=5 // pred_check_branch
      %931 = sbr.rel (%p929) target = $region40
    $region39: #{c3_forward.5} parent=5 // pred_region
      %s932 = ssub.s32 %s9, 2
      // Predicated region
      $region41: #{c3_forward.5} parent=39 // pred_check
        %p933 = pneg %p106
      $region42: #{c3_forward.5} parent=39 // pred_check_branch
        %935 = sbr.rel (%p933) target = $region44
      $region43: #{c3_forward.5} parent=39 // pred_region
        %s936 = smul.u32 32, %s15
        %p937 = scmp.lt.s32.totalorder %s936, 63
        %s938 = scalar_select %p937, %s936, 63
        %s939 = smul.addr %s938, 4
        %s940 = scalar_lea.vmem %s3, %s939
      $region44: #{c3_forward.5} parent=39 // pred_fallthru
        _
    $region40: #{c3_forward.5} parent=5 // pred_fallthru
      _
  $region6: #{c3_forward.5} parent=0 // loop_footer
    %s13 = sadd.s32 1, %s9
  $region7: #{c3_forward.5} parent=0 // loop_footer_branch
    %8 = sbr.rel target = $region3
  $region8: #{c3_forward.5} parent=0 // loop_exit
    _

// kernel: c3_forward.9
$region0: #{c3_forward.9}
  #allocation0 [shape = 'u32[]', space=smem, size = 0x4, offset = 0x4, fixed_abs, tag = 'smem constant byte address 0x4 - core index']
  #allocation1 [shape = 'u32[144,128]{1,0:T(1,128)}', space=vmem, size = 0x12000, scoped, tag = 'internal scratch']
  %s0 = inlined_call_operand.vmem [shape: bf16[512,128], index: 0, kind: input, shape index: {}]
  %s1 = inlined_call_operand.vmem [shape: bf16[512,128], index: 1, kind: input, shape index: {}]
  %s2 = inlined_call_operand.vmem [shape: bf16[128,128], index: 2, kind: input, shape index: {}]
  %s3 = inlined_call_operand.vmem [shape: bf16[128,128], index: 3, kind: input, shape index: {}]
  %s4 = inlined_call_operand.vmem [shape: f32[1,128], index: 4, kind: input, shape index: {}]
  %s5 = inlined_call_operand.vmem [shape: f32[512,128], index: 5, kind: output, shape index: {}]
  %s6 = sld [smem:[#allocation0]]
  $region53: #{c3_forward.9} parent=0
    _
  %s8 = ssub.s32 1, %s6
  %s9 = scalar_select 0, %s8, %s6
  loop: start=0, step=1, limit=4
  $region2: #{c3_forward.9} parent=0 // loop_pre_header
    _
  $region3: #{c3_forward.9} parent=0 // loop_header
    %s11 = sphi 0, %s15
    %p12 = scmp.ge.s32.totalorder %s11, 4
    %s21 = sphi 0, %s23
    %s24 = sphi 0, %s21
    %s25 = sphi 0, %s24
    %s41 = sphi 0, %s25
    %s47 = sphi 0, %s49
    %s50 = sphi 0, %s47
    %s51 = sphi 0, %s50
    %s67 = sphi 0, %s51
    %s71 = sphi 0, %s71
    %s73 = sphi 0, %s71
    %s74 = sphi 0, %s73
    %s88 = sphi 0, %s74
    %s92 = sphi 0, %s92
    %s94 = sphi 0, %s92
    %s95 = sphi 0, %s94
    %s109 = sphi 0, %s95
    %s113 = sphi 0, %s113
    %s115 = sphi 0, %s113
    %s116 = sphi 0, %s115
    %s130 = sphi 0, %s116
    %s136 = sphi 0, %s138
    %s139 = sphi 0, %s136
    %s140 = sphi 0, %s139
    %s156 = sphi 0, %s140
  $region4: #{c3_forward.9} parent=0 // loop_header_branch
    %14 = sbr.rel (%p12) target = $region8
  $region5: #{c3_forward.9} parent=0 // loop_body
    %s16 = ssub.s32 %s11, 1
    %s17 = ssub.s32 %s11, 2
    %s18 = sadd.s32 %s11, 1
    %s19 = ssub.s32 %s11, %s18
    %p20 = scmp.eq.s32.totalorder %s19, 0
    %s22 = sadd.s32 %s21, 1
    %s23 = scalar_select %p20, %s21, %s22
    %p26 = pneg %p20
    %p27 = scmp.eq.s32.totalorder %s11, 1
    %p28 = por %p26, %p27
    %p29 = scmp.ne.s32.totalorder %s21, %s24
    %p30 = scmp.eq.s32.totalorder %s11, 0
    %p31 = por %p29, %p30
    %p32 = scmp.ne.s32.totalorder %s21, %s24
    %p33 = scmp.eq.s32.totalorder %s16, 1
    %p34 = por %p32, %p33
    %p35 = scmp.ne.s32.totalorder %s24, %s25
    %p36 = scmp.eq.s32.totalorder %s16, 0
    %p37 = por %p35, %p36
    %p38 = scmp.ne.s32.totalorder %s24, %s25
    %p39 = scmp.eq.s32.totalorder %s17, 1
    %p40 = por %p38, %p39
    %p42 = scmp.ne.s32.totalorder %s25, %s41
    %p43 = scmp.eq.s32.totalorder %s17, 0
    %p44 = por %p42, %p43
    %s45 = ssub.s32 %s11, %s18
    %p46 = scmp.eq.s32.totalorder %s45, 0
    %s48 = sadd.s32 %s47, 1
    %s49 = scalar_select %p46, %s47, %s48
    %p52 = pneg %p46
    %p53 = scmp.eq.s32.totalorder %s11, 1
    %p54 = por %p52, %p53
    %p55 = scmp.ne.s32.totalorder %s47, %s50
    %p56 = scmp.eq.s32.totalorder %s11, 0
    %p57 = por %p55, %p56
    %p58 = scmp.ne.s32.totalorder %s47, %s50
    %p59 = scmp.eq.s32.totalorder %s16, 1
    %p60 = por %p58, %p59
    %p61 = scmp.ne.s32.totalorder %s50, %s51
    %p62 = scmp.eq.s32.totalorder %s16, 0
    %p63 = por %p61, %p62
    %p64 = scmp.ne.s32.totalorder %s50, %s51
    %p65 = scmp.eq.s32.totalorder %s17, 1
    %p66 = por %p64, %p65
    %p68 = scmp.ne.s32.totalorder %s51, %s67
    %p69 = scmp.eq.s32.totalorder %s17, 0
    %p70 = por %p68, %p69
    %s72 = sadd.s32 %s71, 1
    %p75 = scmp.eq.s32.totalorder %s11, 1
    %p76 = scmp.ne.s32.totalorder %s71, %s73
    %p77 = scmp.eq.s32.totalorder %s11, 0
    %p78 = por %p76, %p77
    %p79 = scmp.ne.s32.totalorder %s71, %s73
    %p80 = scmp.eq.s32.totalorder %s16, 1
    %p81 = por %p79, %p80
    %p82 = scmp.ne.s32.totalorder %s73, %s74
    %p83 = scmp.eq.s32.totalorder %s16, 0
    %p84 = por %p82, %p83
    %p85 = scmp.ne.s32.totalorder %s73, %s74
    %p86 = scmp.eq.s32.totalorder %s17, 1
    %p87 = por %p85, %p86
    %p89 = scmp.ne.s32.totalorder %s74, %s88
    %p90 = scmp.eq.s32.totalorder %s17, 0
    %p91 = por %p89, %p90
    %s93 = sadd.s32 %s92, 1
    %p96 = scmp.eq.s32.totalorder %s11, 1
    %p97 = scmp.ne.s32.totalorder %s92, %s94
    %p98 = scmp.eq.s32.totalorder %s11, 0
    %p99 = por %p97, %p98
    %p100 = scmp.ne.s32.totalorder %s92, %s94
    %p101 = scmp.eq.s32.totalorder %s16, 1
    %p102 = por %p100, %p101
    %p103 = scmp.ne.s32.totalorder %s94, %s95
    %p104 = scmp.eq.s32.totalorder %s16, 0
    %p105 = por %p103, %p104
    %p106 = scmp.ne.s32.totalorder %s94, %s95
    %p107 = scmp.eq.s32.totalorder %s17, 1
    %p108 = por %p106, %p107
    %p110 = scmp.ne.s32.totalorder %s95, %s109
    %p111 = scmp.eq.s32.totalorder %s17, 0
    %p112 = por %p110, %p111
    %s114 = sadd.s32 %s113, 1
    %p117 = scmp.eq.s32.totalorder %s11, 1
    %p118 = scmp.ne.s32.totalorder %s113, %s115
    %p119 = scmp.eq.s32.totalorder %s11, 0
    %p120 = por %p118, %p119
    %p121 = scmp.ne.s32.totalorder %s113, %s115
    %p122 = scmp.eq.s32.totalorder %s16, 1
    %p123 = por %p121, %p122
    %p124 = scmp.ne.s32.totalorder %s115, %s116
    %p125 = scmp.eq.s32.totalorder %s16, 0
    %p126 = por %p124, %p125
    %p127 = scmp.ne.s32.totalorder %s115, %s116
    %p128 = scmp.eq.s32.totalorder %s17, 1
    %p129 = por %p127, %p128
    %p131 = scmp.ne.s32.totalorder %s116, %s130
    %p132 = scmp.eq.s32.totalorder %s17, 0
    %p133 = por %p131, %p132
    %s134 = ssub.s32 %s11, %s18
    %p135 = scmp.eq.s32.totalorder %s134, 0
    %s137 = sadd.s32 %s136, 1
    %s138 = scalar_select %p135, %s136, %s137
    %p141 = pneg %p135
    %p142 = scmp.eq.s32.totalorder %s11, 1
    %p143 = por %p141, %p142
    %p144 = scmp.ne.s32.totalorder %s136, %s139
    %p145 = scmp.eq.s32.totalorder %s11, 0
    %p146 = por %p144, %p145
    %p147 = scmp.ne.s32.totalorder %s136, %s139
    %p148 = scmp.eq.s32.totalorder %s16, 1
    %p149 = por %p147, %p148
    %p150 = scmp.ne.s32.totalorder %s139, %s140
    %p151 = scmp.eq.s32.totalorder %s16, 0
    %p152 = por %p150, %p151
    %p153 = scmp.ne.s32.totalorder %s139, %s140
    %p154 = scmp.eq.s32.totalorder %s17, 1
    %p155 = por %p153, %p154
    %p157 = scmp.ne.s32.totalorder %s140, %s156
    %p158 = scmp.eq.s32.totalorder %s17, 0
    %p159 = por %p157, %p158
    %p160 = scmp.le.s32.totalorder 1, %s11
    %p161 = scmp.lt.s32.totalorder %s11, 3
    %p162 = pnand %p160, %p161
    %p163 = pneg %p162
    // Predicated region
    $region9: #{c3_forward.9} parent=5 // pred_check
      _
    $region10: #{c3_forward.9} parent=5 // pred_check_branch
      %165 = sbr.rel (%p162) target = $region12
    $region11: #{c3_forward.9} parent=5 // pred_region
      %s166 = ssub.s32 %s11, 1
      // Predicated region
      $region13: #{c3_forward.9} parent=11 // pred_check
        %p167 = pneg %p84
      $region14: #{c3_forward.9} parent=11 // pred_check_branch
        %169 = sbr.rel (%p167) target = $region16
      $region15: #{c3_forward.9} parent=11 // pred_region
        _
      $region16: #{c3_forward.9} parent=11 // pred_fallthru
        _
      // Predicated region
      $region17: #{c3_forward.9} parent=11 // pred_check
        %p170 = pneg %p105
      $region18: #{c3_forward.9} parent=11 // pred_check_branch
        %172 = sbr.rel (%p170) target = $region20
      $region19: #{c3_forward.9} parent=11 // pred_region
        _
      $region20: #{c3_forward.9} parent=11 // pred_fallthru
        _
      // Predicated region
      $region21: #{c3_forward.9} parent=11 // pred_check
        %p173 = pneg %p126
      $region22: #{c3_forward.9} parent=11 // pred_check_branch
        %175 = sbr.rel (%p173) target = $region24
      $region23: #{c3_forward.9} parent=11 // pred_region
        _
      $region24: #{c3_forward.9} parent=11 // pred_fallthru
        _
    $region12: #{c3_forward.9} parent=5 // pred_fallthru
      _
    %p176 = scmp.lt.s32.totalorder %s11, 2
    // Predicated region
    $region25: #{c3_forward.9} parent=5 // pred_check
      %p177 = pneg %p176
    $region26: #{c3_forward.9} parent=5 // pred_check_branch
      %179 = sbr.rel (%p177) target = $region28
    $region27: #{c3_forward.9} parent=5 // pred_region
      // Predicated region
      $region29: #{c3_forward.9} parent=27 // pred_check
        %p180 = pneg %p31
      $region30: #{c3_forward.9} parent=27 // pred_check_branch
        %182 = sbr.rel (%p180) target = $region32
      $region31: #{c3_forward.9} parent=27 // pred_region
        %s183 = smul.u32 32, %s11
        %p184 = scmp.lt.s32.totalorder %s183, 63
        %s185 = scalar_select %p184, %s183, 63
        %s186 = smul.addr %s185, 4
        %s187 = scalar_lea.vmem %s0, %s186
        %s188 = smul.u32 32, %s11
      $region32: #{c3_forward.9} parent=27 // pred_fallthru
        _
      // Predicated region
      $region33: #{c3_forward.9} parent=27 // pred_check
        %p189 = pneg %p57
      $region34: #{c3_forward.9} parent=27 // pred_check_branch
        %191 = sbr.rel (%p189) target = $region36
      $region35: #{c3_forward.9} parent=27 // pred_region
        %s192 = smul.u32 32, %s11
        %p193 = scmp.lt.s32.totalorder %s192, 63
        %s194 = scalar_select %p193, %s192, 63
        %s195 = smul.addr %s194, 4
        %s196 = scalar_lea.vmem %s1, %s195
        %s197 = smul.u32 32, %s11
      $region36: #{c3_forward.9} parent=27 // pred_fallthru
        _
    $region28: #{c3_forward.9} parent=5 // pred_fallthru
      _
    %p198 = scmp.le.s32.totalorder 1, %s11
    %p199 = scmp.lt.s32.totalorder %s11, 3
    %p200 = pnand %p198, %p199
    %p201 = pneg %p200
    // Predicated region
    $region37: #{c3_forward.9} parent=5 // pred_check
      _
    $region38: #{c3_forward.9} parent=5 // pred_check_branch
      %203 = sbr.rel (%p200) target = $region40
    $region39: #{c3_forward.9} parent=5 // pred_region
      %s204 = ssub.s32 %s11, 1
      %s205 = smul.u32 32, %s16
      %p206 = scmp.lt.s32.totalorder %s205, 63
      %s207 = scalar_select %p206, %s205, 63
      %s208 = smul.addr %s207, 4
      %s209 = scalar_lea.vmem %s0, %s208
      %p210 = pneg %p37
      %p211 = pneg %p34
      %s212 = smul.u32 32, %s16
      %p213 = scmp.lt.s32.totalorder %s212, 63
      %s214 = scalar_select %p213, %s212, 63
      %s215 = smul.addr %s214, 4
      %s216 = scalar_lea.vmem %s1, %s215
      %p217 = pneg %p63
      %p218 = pneg %p60
      %p219 = pneg %p84
      %p220 = pneg %p81
      %p221 = pneg %p105
      %p222 = pneg %p102
      %p223 = pneg %p126
      %p224 = pneg %p123
      %p225 = pneg %p152
      %p226 = pneg %p149
      %s227 = smul.u32 32, %s16
      %p228 = scmp.lt.s32.totalorder %s227, 63
      %s229 = scalar_select %p228, %s227, 63
      %s230 = smul.addr %s229, 8
      %s231 = scalar_lea.vmem %s5, %s230
      %s232 = smul.u32 32, %s16
      %p233 = scmp.lt.s32.totalorder %s232, 63
      %s234 = scalar_select %p233, %s232, 63
      %s235 = smul.addr %s234, 4
      %s236 = scalar_lea.vmem %s0, %s235
      %s237 = smul.u32 32, %s16
      %s238 = smul.u32 32, %s16
      %p239 = scmp.lt.s32.totalorder %s238, 63
      %s240 = scalar_select %p239, %s238, 63
      %s241 = smul.addr %s240, 4
      %s242 = scalar_lea.vmem %s1, %s241
      %s243 = smul.u32 32, %s16
      %s244 = smul.u32 32, %s16
      %p245 = scmp.lt.s32.totalorder %s244, 63
      %s246 = scalar_select %p245, %s244, 63
      %s247 = smul.addr %s246, 8
      %s248 = scalar_lea.vmem %s5, %s247
      %s249 = smul.u32 32, %s16
      %v251 = vld [vmem:[%s236] sm:$0xf]
      %v252 = vld [vmem:[%s236 + $0x4] sm:$0xf]
      %v253 = vld [vmem:[%s236 + $0x8] sm:$0xf]
      %v254 = vld [vmem:[%s236 + $0xc] sm:$0xf]
      %v255 = vld [vmem:[%s236 + $0x10] sm:$0xf]
      %v256 = vld [vmem:[%s236 + $0x14] sm:$0xf]
      %v257 = vld [vmem:[%s236 + $0x18] sm:$0xf]
      %v258 = vld [vmem:[%s236 + $0x1c] sm:$0xf]
      %v259 = vld [vmem:[%s236 + $0x20] sm:$0xf]
      %v260 = vld [vmem:[%s236 + $0x24] sm:$0xf]
      %v261 = vld [vmem:[%s236 + $0x28] sm:$0xf]
      %v262 = vld [vmem:[%s236 + $0x2c] sm:$0xf]
      %v263 = vld [vmem:[%s236 + $0x30] sm:$0xf]
      %v264 = vld [vmem:[%s236 + $0x34] sm:$0xf]
      %v265 = vld [vmem:[%s236 + $0x38] sm:$0xf]
      %v266 = vld [vmem:[%s236 + $0x3c] sm:$0xf]
      %v267 = vld [vmem:[%s236 + $0x40] sm:$0xf]
      %v268 = vld [vmem:[%s236 + $0x44] sm:$0xf]
      %v269 = vld [vmem:[%s236 + $0x48] sm:$0xf]
      %v270 = vld [vmem:[%s236 + $0x4c] sm:$0xf]
      %v271 = vld [vmem:[%s236 + $0x50] sm:$0xf]
      %v272 = vld [vmem:[%s236 + $0x54] sm:$0xf]
      %v273 = vld [vmem:[%s236 + $0x58] sm:$0xf]
      %v274 = vld [vmem:[%s236 + $0x5c] sm:$0xf]
      %v275 = vld [vmem:[%s236 + $0x60] sm:$0xf]
      %v276 = vld [vmem:[%s236 + $0x64] sm:$0xf]
      %v277 = vld [vmem:[%s236 + $0x68] sm:$0xf]
      %v278 = vld [vmem:[%s236 + $0x6c] sm:$0xf]
      %v279 = vld [vmem:[%s236 + $0x70] sm:$0xf]
      %v280 = vld [vmem:[%s236 + $0x74] sm:$0xf]
      %v281 = vld [vmem:[%s236 + $0x78] sm:$0xf]
      %v282 = vld [vmem:[%s236 + $0x7c] sm:$0xf]
      %v283 = vld [vmem:[%s2] sm:$0xf]
      %v284 = vld [vmem:[%s2 + $0x4] sm:$0xf]
      %v285 = vld [vmem:[%s2 + $0x8] sm:$0xf]
      %v286 = vld [vmem:[%s2 + $0xc] sm:$0xf]
      %v287 = vld [vmem:[%s2 + $0x10] sm:$0xf]
      %v288 = vld [vmem:[%s2 + $0x14] sm:$0xf]
      %v289 = vld [vmem:[%s2 + $0x18] sm:$0xf]
      %v290 = vld [vmem:[%s2 + $0x1c] sm:$0xf]
      %v291 = vld [vmem:[%s2 + $0x20] sm:$0xf]
      %v292 = vld [vmem:[%s2 + $0x24] sm:$0xf]
      %v293 = vld [vmem:[%s2 + $0x28] sm:$0xf]
      %v294 = vld [vmem:[%s2 + $0x2c] sm:$0xf]
      %v295 = vld [vmem:[%s2 + $0x30] sm:$0xf]
      %v296 = vld [vmem:[%s2 + $0x34] sm:$0xf]
      %v297 = vld [vmem:[%s2 + $0x38] sm:$0xf]
      %v298 = vld [vmem:[%s2 + $0x3c] sm:$0xf]
      %v299 = vld [vmem:[%s242] sm:$0xf]
      %v300 = vld [vmem:[%s242 + $0x4] sm:$0xf]
      %v301 = vld [vmem:[%s242 + $0x8] sm:$0xf]
      %v302 = vld [vmem:[%s242 + $0xc] sm:$0xf]
      %v303 = vld [vmem:[%s242 + $0x10] sm:$0xf]
      %v304 = vld [vmem:[%s242 + $0x14] sm:$0xf]
      %v305 = vld [vmem:[%s242 + $0x18] sm:$0xf]
      %v306 = vld [vmem:[%s242 + $0x1c] sm:$0xf]
      %v307 = vld [vmem:[%s242 + $0x20] sm:$0xf]
      %v308 = vld [vmem:[%s242 + $0x24] sm:$0xf]
      %v309 = vld [vmem:[%s242 + $0x28] sm:$0xf]
      %v310 = vld [vmem:[%s242 + $0x2c] sm:$0xf]
      %v311 = vld [vmem:[%s242 + $0x30] sm:$0xf]
      %v312 = vld [vmem:[%s242 + $0x34] sm:$0xf]
      %v313 = vld [vmem:[%s242 + $0x38] sm:$0xf]
      %v314 = vld [vmem:[%s242 + $0x3c] sm:$0xf]
      %v315 = vld [vmem:[%s242 + $0x40] sm:$0xf]
      %v316 = vld [vmem:[%s242 + $0x44] sm:$0xf]
      %v317 = vld [vmem:[%s242 + $0x48] sm:$0xf]
      %v318 = vld [vmem:[%s242 + $0x4c] sm:$0xf]
      %v319 = vld [vmem:[%s242 + $0x50] sm:$0xf]
      %v320 = vld [vmem:[%s242 + $0x54] sm:$0xf]
      %v321 = vld [vmem:[%s242 + $0x58] sm:$0xf]
      %v322 = vld [vmem:[%s242 + $0x5c] sm:$0xf]
      %v323 = vld [vmem:[%s242 + $0x60] sm:$0xf]
      %v324 = vld [vmem:[%s242 + $0x64] sm:$0xf]
      %v325 = vld [vmem:[%s242 + $0x68] sm:$0xf]
      %v326 = vld [vmem:[%s242 + $0x6c] sm:$0xf]
      %v327 = vld [vmem:[%s242 + $0x70] sm:$0xf]
      %v328 = vld [vmem:[%s242 + $0x74] sm:$0xf]
      %v329 = vld [vmem:[%s242 + $0x78] sm:$0xf]
      %v330 = vld [vmem:[%s242 + $0x7c] sm:$0xf]
      %v331 = vld [vmem:[%s3] sm:$0xf]
      %v332 = vld [vmem:[%s3 + $0x4] sm:$0xf]
      %v333 = vld [vmem:[%s3 + $0x8] sm:$0xf]
      %v334 = vld [vmem:[%s3 + $0xc] sm:$0xf]
      %v335 = vld [vmem:[%s3 + $0x10] sm:$0xf]
      %v336 = vld [vmem:[%s3 + $0x14] sm:$0xf]
      %v337 = vld [vmem:[%s3 + $0x18] sm:$0xf]
      %v338 = vld [vmem:[%s3 + $0x1c] sm:$0xf]
      %v339 = vld [vmem:[%s3 + $0x20] sm:$0xf]
      %v340 = vld [vmem:[%s3 + $0x24] sm:$0xf]
      %v341 = vld [vmem:[%s3 + $0x28] sm:$0xf]
      %v342 = vld [vmem:[%s3 + $0x2c] sm:$0xf]
      %v343 = vld [vmem:[%s3 + $0x30] sm:$0xf]
      %v344 = vld [vmem:[%s3 + $0x34] sm:$0xf]
      %v345 = vld [vmem:[%s3 + $0x38] sm:$0xf]
      %v346 = vld [vmem:[%s3 + $0x3c] sm:$0xf]
      %v379 = vunpack.c.l.b16 %v299
      %v380 = vunpack.c.l.b16 %v300
      %v381 = vunpack.c.l.b16 %v301
      %v382 = vunpack.c.l.b16 %v302
      %v383 = vunpack.c.l.b16 %v303
      %v384 = vunpack.c.l.b16 %v304
      %v385 = vunpack.c.l.b16 %v305
      %v386 = vunpack.c.l.b16 %v306
      %v387 = vunpack.c.l.b16 %v307
      %v388 = vunpack.c.l.b16 %v308
      %v389 = vunpack.c.l.b16 %v309
      %v390 = vunpack.c.l.b16 %v310
      %v391 = vunpack.c.l.b16 %v311
      %v392 = vunpack.c.l.b16 %v312
      %v393 = vunpack.c.l.b16 %v313
      %v394 = vunpack.c.l.b16 %v314
      %v395 = vunpack.c.l.b16 %v315
      %v396 = vunpack.c.l.b16 %v316
      %v397 = vunpack.c.l.b16 %v317
      %v398 = vunpack.c.l.b16 %v318
      %v399 = vunpack.c.l.b16 %v319
      %v400 = vunpack.c.l.b16 %v320
      %v401 = vunpack.c.l.b16 %v321
      %v402 = vunpack.c.l.b16 %v322
      %v403 = vunpack.c.l.b16 %v323
      %v404 = vunpack.c.l.b16 %v324
      %v405 = vunpack.c.l.b16 %v325
      %v406 = vunpack.c.l.b16 %v326
      %v407 = vunpack.c.l.b16 %v327
      %v408 = vunpack.c.l.b16 %v328
      %v409 = vunpack.c.l.b16 %v329
      %v410 = vunpack.c.l.b16 %v330
      %v411 = vpack.c.b16 %v380, %v379
      %v412 = vpack.c.b16 %v382, %v381
      %v413 = vpack.c.b16 %v384, %v383
      %v414 = vpack.c.b16 %v386, %v385
      %v415 = vpack.c.b16 %v388, %v387
      %v416 = vpack.c.b16 %v390, %v389
      %v417 = vpack.c.b16 %v392, %v391
      %v418 = vpack.c.b16 %v394, %v393
      %v419 = vpack.c.b16 %v396, %v395
      %v420 = vpack.c.b16 %v398, %v397
      %v421 = vpack.c.b16 %v400, %v399
      %v422 = vpack.c.b16 %v402, %v401
      %v423 = vpack.c.b16 %v404, %v403
      %v424 = vpack.c.b16 %v406, %v405
      %v425 = vpack.c.b16 %v408, %v407
      %v426 = vpack.c.b16 %v410, %v409
      %v459 = vunpack.c.l.b16 %v331
      %v460 = vunpack.c.l.b16 %v332
      %v461 = vunpack.c.l.b16 %v333
      %v462 = vunpack.c.l.b16 %v334
      %v463 = vunpack.c.l.b16 %v335
      %v464 = vunpack.c.l.b16 %v336
      %v465 = vunpack.c.l.b16 %v337
      %v466 = vunpack.c.l.b16 %v338
      %v467 = vunpack.c.l.b16 %v339
      %v468 = vunpack.c.l.b16 %v340
      %v469 = vunpack.c.l.b16 %v341
      %v470 = vunpack.c.l.b16 %v342
      %v471 = vunpack.c.l.b16 %v343
      %v472 = vunpack.c.l.b16 %v344
      %v473 = vunpack.c.l.b16 %v345
      %v474 = vunpack.c.l.b16 %v346
      %v475 = vpack.c.b16 %v460, %v459
      %v476 = vpack.c.b16 %v462, %v461
      %v477 = vpack.c.b16 %v464, %v463
      %v478 = vpack.c.b16 %v466, %v465
      %v479 = vpack.c.b16 %v468, %v467
      %v480 = vpack.c.b16 %v470, %v469
      %v481 = vpack.c.b16 %v472, %v471
      %v482 = vpack.c.b16 %v474, %v473
      %491 = vmatprep.subr.bf16.mxu0 0
      %492 = vmatpush1.bf16.msra.mxu0 %v475
      %493 = vmatprep.subr.bf16.mxu0 0
      %494 = vmatpush1.bf16.msra.mxu0 %v476
      %495 = vmatprep.subr.bf16.mxu0 0
      %496 = vmatpush1.bf16.msra.mxu0 %v477
      %497 = vmatprep.subr.bf16.mxu0 0
      %498 = vmatpush1.bf16.msra.mxu0 %v478
      %499 = vmatprep.subr.bf16.mxu0 0
      %500 = vmatpush1.bf16.msra.mxu0 %v479
      %501 = vmatprep.subr.bf16.mxu0 0
      %502 = vmatpush1.bf16.msra.mxu0 %v480
      %503 = vmatprep.subr.bf16.mxu0 0
      %504 = vmatpush1.bf16.msra.mxu0 %v481
      %505 = vmatprep.subr.bf16.mxu0 0
      %506 = vmatpush1.bf16.msra.mxu0 %v482
      %507 = vmatprep.subr.bf16.mxu0 0
      %508 = vmatpush1.bf16.msra.mxu0 0
      %509 = vmatprep.subr.bf16.mxu0 0
      %510 = vmatpush1.bf16.msra.mxu0 0
      %511 = vmatprep.subr.bf16.mxu0 0
      %512 = vmatpush1.bf16.msra.mxu0 0
      %513 = vmatprep.subr.bf16.mxu0 0
      %514 = vmatpush1.bf16.msra.mxu0 0
      %515 = vmatprep.subr.bf16.mxu0 0
      %516 = vmatpush1.bf16.msra.mxu0 0
      %517 = vmatprep.subr.bf16.mxu0 0
      %518 = vmatpush1.bf16.msra.mxu0 0
      %519 = vmatprep.subr.bf16.mxu0 0
      %520 = vmatpush1.bf16.msra.mxu0 0
      %521 = vmatprep.subr.bf16.mxu0 0
      %522 = vmatpush1.bf16.msra.mxu0 0
      %523 = vmatprep.mubr.bf16.mxu0 0
      %524 = vmatmul.mubr.bf16.gmra.mrb[0].mxu0 %v411
      %v525 = vpop.f32.mrb[0].mxu0
      %v526 = vadd.f32 0.0, %v525
      %v527 = vpop.f32.mrb[0].mxu0
      %v528 = vpop.f32.mrb[0].mxu0
      %v529 = vadd.f32 0.0, %v528
      %v530 = vpop.f32.mrb[0].mxu0
      %531 = vmatprep.mubr.bf16.mxu0 0
      %532 = vmatmul.mubr.bf16.gmra.mrb[0].mxu0 %v412
      %v533 = vpop.f32.mrb[0].mxu0
      %v534 = vadd.f32 0.0, %v533
      %v535 = vpop.f32.mrb[0].mxu0
      %v536 = vpop.f32.mrb[0].mxu0
      %v537 = vadd.f32 0.0, %v536
      %v538 = vpop.f32.mrb[0].mxu0
      %539 = vmatprep.mubr.bf16.mxu0 0
      %540 = vmatmul.mubr.bf16.gmra.mrb[0].mxu0 %v413
      %v541 = vpop.f32.mrb[0].mxu0
      %v542 = vadd.f32 0.0, %v541
      %v543 = vpop.f32.mrb[0].mxu0
      %v544 = vpop.f32.mrb[0].mxu0
      %v545 = vadd.f32 0.0, %v544
      %v546 = vpop.f32.mrb[0].mxu0
      %547 = vmatprep.mubr.bf16.mxu0 0
      %548 = vmatmul.mubr.bf16.gmra.mrb[0].mxu0 %v414
      %v549 = vpop.f32.mrb[0].mxu0
      %v550 = vadd.f32 0.0, %v549
      %v551 = vpop.f32.mrb[0].mxu0
      %v552 = vpop.f32.mrb[0].mxu0
      %v553 = vadd.f32 0.0, %v552
      %v554 = vpop.f32.mrb[0].mxu0
      %555 = vmatprep.mubr.bf16.mxu0 0
      %556 = vmatmul.mubr.bf16.gmra.mrb[0].mxu0 %v415
      %v557 = vpop.f32.mrb[0].mxu0
      %v558 = vadd.f32 0.0, %v557
      %v559 = vpop.f32.mrb[0].mxu0
      %v560 = vpop.f32.mrb[0].mxu0
      %v561 = vadd.f32 0.0, %v560
      %v562 = vpop.f32.mrb[0].mxu0
      %563 = vmatprep.mubr.bf16.mxu0 0
      %564 = vmatmul.mubr.bf16.gmra.mrb[0].mxu0 %v416
      %v565 = vpop.f32.mrb[0].mxu0
      %v566 = vadd.f32 0.0, %v565
      %v567 = vpop.f32.mrb[0].mxu0
      %v568 = vpop.f32.mrb[0].mxu0
      %v569 = vadd.f32 0.0, %v568
      %v570 = vpop.f32.mrb[0].mxu0
      %571 = vmatprep.mubr.bf16.mxu0 0
      %572 = vmatmul.mubr.bf16.gmra.mrb[0].mxu0 %v417
      %v573 = vpop.f32.mrb[0].mxu0
      %v574 = vadd.f32 0.0, %v573
      %v575 = vpop.f32.mrb[0].mxu0
      %v576 = vpop.f32.mrb[0].mxu0
      %v577 = vadd.f32 0.0, %v576
      %v578 = vpop.f32.mrb[0].mxu0
      %579 = vmatprep.mubr.bf16.mxu0 0
      %580 = vmatmul.mubr.bf16.gmra.mrb[0].mxu0 %v418
      %v581 = vpop.f32.mrb[0].mxu0
      %v582 = vadd.f32 0.0, %v581
      %v583 = vpop.f32.mrb[0].mxu0
      %v584 = vpop.f32.mrb[0].mxu0
      %v585 = vadd.f32 0.0, %v584
      %v586 = vpop.f32.mrb[0].mxu0
      %587 = vmatprep.mubr.bf16.mxu0 0
      %588 = vmatmul.mubr.bf16.gmra.mrb[0].mxu0 %v419
      %v589 = vpop.f32.mrb[0].mxu0
      %v590 = vadd.f32 0.0, %v589
      %v591 = vpop.f32.mrb[0].mxu0
      %v592 = vpop.f32.mrb[0].mxu0
      %v593 = vadd.f32 0.0, %v592
      %v594 = vpop.f32.mrb[0].mxu0
      %595 = vmatprep.mubr.bf16.mxu0 0
      %596 = vmatmul.mubr.bf16.gmra.mrb[0].mxu0 %v420
      %v597 = vpop.f32.mrb[0].mxu0
      %v598 = vadd.f32 0.0, %v597
      %v599 = vpop.f32.mrb[0].mxu0
      %v600 = vpop.f32.mrb[0].mxu0
      %v601 = vadd.f32 0.0, %v600
      %v602 = vpop.f32.mrb[0].mxu0
      %603 = vmatprep.mubr.bf16.mxu0 0
      %604 = vmatmul.mubr.bf16.gmra.mrb[0].mxu0 %v421
      %v605 = vpop.f32.mrb[0].mxu0
      %v606 = vadd.f32 0.0, %v605
      %v607 = vpop.f32.mrb[0].mxu0
      %v608 = vpop.f32.mrb[0].mxu0
      %v609 = vadd.f32 0.0, %v608
      %v610 = vpop.f32.mrb[0].mxu0
      %611 = vmatprep.mubr.bf16.mxu0 0
      %612 = vmatmul.mubr.bf16.gmra.mrb[0].mxu0 %v422
      %v613 = vpop.f32.mrb[0].mxu0
      %v614 = vadd.f32 0.0, %v613
      %v615 = vpop.f32.mrb[0].mxu0
      %v616 = vpop.f32.mrb[0].mxu0
      %v617 = vadd.f32 0.0, %v616
      %v618 = vpop.f32.mrb[0].mxu0
      %619 = vmatprep.mubr.bf16.mxu0 0
      %620 = vmatmul.mubr.bf16.gmra.mrb[0].mxu0 %v423
      %v621 = vpop.f32.mrb[0].mxu0
      %v622 = vadd.f32 0.0, %v621
      %v623 = vpop.f32.mrb[0].mxu0
      %v624 = vpop.f32.mrb[0].mxu0
      %v625 = vadd.f32 0.0, %v624
      %v626 = vpop.f32.mrb[0].mxu0
      %627 = vmatprep.mubr.bf16.mxu0 0
      %628 = vmatmul.mubr.bf16.gmra.mrb[0].mxu0 %v424
      %v629 = vpop.f32.mrb[0].mxu0
      %v630 = vadd.f32 0.0, %v629
      %v631 = vpop.f32.mrb[0].mxu0
      %v632 = vpop.f32.mrb[0].mxu0
      %v633 = vadd.f32 0.0, %v632
      %v634 = vpop.f32.mrb[0].mxu0
      %635 = vmatprep.mubr.bf16.mxu0 0
      %636 = vmatmul.mubr.bf16.gmra.mrb[0].mxu0 %v425
      %v637 = vpop.f32.mrb[0].mxu0
      %v638 = vadd.f32 0.0, %v637
      %v639 = vpop.f32.mrb[0].mxu0
      %v640 = vpop.f32.mrb[0].mxu0
      %v641 = vadd.f32 0.0, %v640
      %v642 = vpop.f32.mrb[0].mxu0
      %643 = vmatprep.mubr.bf16.mxu0 0
      %644 = vmatmul.mubr.bf16.gmra.mrb[0].mxu0 %v426
      %v645 = vpop.f32.mrb[0].mxu0
      %v646 = vadd.f32 0.0, %v645
      %v647 = vpop.f32.mrb[0].mxu0
      %v648 = vpop.f32.mrb[0].mxu0
      %v649 = vadd.f32 0.0, %v648
      %v650 = vpop.f32.mrb[0].mxu0
      %651 = vdwg.mxu0
      %v684 = vunpack.c.l.b16 %v251
      %v685 = vunpack.c.l.b16 %v252
      %v686 = vunpack.c.l.b16 %v253
      %v687 = vunpack.c.l.b16 %v254
      %v688 = vunpack.c.l.b16 %v255
      %v689 = vunpack.c.l.b16 %v256
      %v690 = vunpack.c.l.b16 %v257
      %v691 = vunpack.c.l.b16 %v258
      %v692 = vunpack.c.l.b16 %v259
      %v693 = vunpack.c.l.b16 %v260
      %v694 = vunpack.c.l.b16 %v261
      %v695 = vunpack.c.l.b16 %v262
      %v696 = vunpack.c.l.b16 %v263
      %v697 = vunpack.c.l.b16 %v264
      %v698 = vunpack.c.l.b16 %v265
      %v699 = vunpack.c.l.b16 %v266
      %v700 = vunpack.c.l.b16 %v267
      %v701 = vunpack.c.l.b16 %v268
      %v702 = vunpack.c.l.b16 %v269
      %v703 = vunpack.c.l.b16 %v270
      %v704 = vunpack.c.l.b16 %v271
      %v705 = vunpack.c.l.b16 %v272
      %v706 = vunpack.c.l.b16 %v273
      %v707 = vunpack.c.l.b16 %v274
      %v708 = vunpack.c.l.b16 %v275
      %v709 = vunpack.c.l.b16 %v276
      %v710 = vunpack.c.l.b16 %v277
      %v711 = vunpack.c.l.b16 %v278
      %v712 = vunpack.c.l.b16 %v279
      %v713 = vunpack.c.l.b16 %v280
      %v714 = vunpack.c.l.b16 %v281
      %v715 = vunpack.c.l.b16 %v282
      %v716 = vpack.c.b16 %v685, %v684
      %v717 = vpack.c.b16 %v687, %v686
      %v718 = vpack.c.b16 %v689, %v688
      %v719 = vpack.c.b16 %v691, %v690
      %v720 = vpack.c.b16 %v693, %v692
      %v721 = vpack.c.b16 %v695, %v694
      %v722 = vpack.c.b16 %v697, %v696
      %v723 = vpack.c.b16 %v699, %v698
      %v724 = vpack.c.b16 %v701, %v700
      %v725 = vpack.c.b16 %v703, %v702
      %v726 = vpack.c.b16 %v705, %v704
      %v727 = vpack.c.b16 %v707, %v706
      %v728 = vpack.c.b16 %v709, %v708
      %v729 = vpack.c.b16 %v711, %v710
      %v730 = vpack.c.b16 %v713, %v712
      %v731 = vpack.c.b16 %v715, %v714
      %v764 = vunpack.c.l.b16 %v283
      %v765 = vunpack.c.l.b16 %v284
      %v766 = vunpack.c.l.b16 %v285
      %v767 = vunpack.c.l.b16 %v286
      %v768 = vunpack.c.l.b16 %v287
      %v769 = vunpack.c.l.b16 %v288
      %v770 = vunpack.c.l.b16 %v289
      %v771 = vunpack.c.l.b16 %v290
      %v772 = vunpack.c.l.b16 %v291
      %v773 = vunpack.c.l.b16 %v292
      %v774 = vunpack.c.l.b16 %v293
      %v775 = vunpack.c.l.b16 %v294
      %v776 = vunpack.c.l.b16 %v295
      %v777 = vunpack.c.l.b16 %v296
      %v778 = vunpack.c.l.b16 %v297
      %v779 = vunpack.c.l.b16 %v298
      %v780 = vpack.c.b16 %v765, %v764
      %v781 = vpack.c.b16 %v767, %v766
      %v782 = vpack.c.b16 %v769, %v768
      %v783 = vpack.c.b16 %v771, %v770
      %v784 = vpack.c.b16 %v773, %v772
      %v785 = vpack.c.b16 %v775, %v774
      %v786 = vpack.c.b16 %v777, %v776
      %v787 = vpack.c.b16 %v779, %v778
      %796 = vmatprep.subr.bf16.mxu0 0
      %797 = vmatpush1.bf16.msra.mxu0 %v780
      %798 = vmatprep.subr.bf16.mxu0 0
      %799 = vmatpush1.bf16.msra.mxu0 %v781
      %800 = vmatprep.subr.bf16.mxu0 0
      %801 = vmatpush1.bf16.msra.mxu0 %v782
      %802 = vmatprep.subr.bf16.mxu0 0
      %803 = vmatpush1.bf16.msra.mxu0 %v783
      %804 = vmatprep.subr.bf16.mxu0 0
      %805 = vmatpush1.bf16.msra.mxu0 %v784
      %806 = vmatprep.subr.bf16.mxu0 0
      %807 = vmatpush1.bf16.msra.mxu0 %v785
      %808 = vmatprep.subr.bf16.mxu0 0
      %809 = vmatpush1.bf16.msra.mxu0 %v786
      %810 = vmatprep.subr.bf16.mxu0 0
      %811 = vmatpush1.bf16.msra.mxu0 %v787
      %812 = vmatprep.subr.bf16.mxu0 0
      %813 = vmatpush1.bf16.msra.mxu0 0
      %814 = vmatprep.subr.bf16.mxu0 0
      %815 = vmatpush1.bf16.msra.mxu0 0
      %816 = vmatprep.subr.bf16.mxu0 0
      %817 = vmatpush1.bf16.msra.mxu0 0
      %818 = vmatprep.subr.bf16.mxu0 0
      %819 = vmatpush1.bf16.msra.mxu0 0
      %820 = vmatprep.subr.bf16.mxu0 0
      %821 = vmatpush1.bf16.msra.mxu0 0
      %822 = vmatprep.subr.bf16.mxu0 0
      %823 = vmatpush1.bf16.msra.mxu0 0
      %824 = vmatprep.subr.bf16.mxu0 0
      %825 = vmatpush1.bf16.msra.mxu0 0
      %826 = vmatprep.subr.bf16.mxu0 0
      %827 = vmatpush1.bf16.msra.mxu0 0
      %828 = vmatprep.mubr.bf16.mxu0 0
      %829 = vmatmul.mubr.bf16.gmra.mrb[0].mxu0 %v716
      %v830 = vpop.f32.mrb[0].mxu0
      %v831 = vadd.f32 %v526, %v830
      %v832 = vpop.f32.mrb[0].mxu0
      %v833 = vpop.f32.mrb[0].mxu0
      %v834 = vadd.f32 %v529, %v833
      %v835 = vpop.f32.mrb[0].mxu0
      %836 = vmatprep.mubr.bf16.mxu0 0
      %837 = vmatmul.mubr.bf16.gmra.mrb[0].mxu0 %v717
      %v838 = vpop.f32.mrb[0].mxu0
      %v839 = vadd.f32 %v534, %v838
      %v840 = vpop.f32.mrb[0].mxu0
      %v841 = vpop.f32.mrb[0].mxu0
      %v842 = vadd.f32 %v537, %v841
      %v843 = vpop.f32.mrb[0].mxu0
      %844 = vmatprep.mubr.bf16.mxu0 0
      %845 = vmatmul.mubr.bf16.gmra.mrb[0].mxu0 %v718
      %v846 = vpop.f32.mrb[0].mxu0
      %v847 = vadd.f32 %v542, %v846
      %v848 = vpop.f32.mrb[0].mxu0
      %v849 = vpop.f32.mrb[0].mxu0
      %v850 = vadd.f32 %v545, %v849
      %v851 = vpop.f32.mrb[0].mxu0
      %852 = vmatprep.mubr.bf16.mxu0 0
      %853 = vmatmul.mubr.bf16.gmra.mrb[0].mxu0 %v719
      %v854 = vpop.f32.mrb[0].mxu0
      %v855 = vadd.f32 %v550, %v854
      %v856 = vpop.f32.mrb[0].mxu0
      %v857 = vpop.f32.mrb[0].mxu0
      %v858 = vadd.f32 %v553, %v857
      %v859 = vpop.f32.mrb[0].mxu0
      %860 = vmatprep.mubr.bf16.mxu0 0
      %861 = vmatmul.mubr.bf16.gmra.mrb[0].mxu0 %v720
      %v862 = vpop.f32.mrb[0].mxu0
      %v863 = vadd.f32 %v558, %v862
      %v864 = vpop.f32.mrb[0].mxu0
      %v865 = vpop.f32.mrb[0].mxu0
      %v866 = vadd.f32 %v561, %v865
      %v867 = vpop.f32.mrb[0].mxu0
      %868 = vmatprep.mubr.bf16.mxu0 0
      %869 = vmatmul.mubr.bf16.gmra.mrb[0].mxu0 %v721
      %v870 = vpop.f32.mrb[0].mxu0
      %v871 = vadd.f32 %v566, %v870
      %v872 = vpop.f32.mrb[0].mxu0
      %v873 = vpop.f32.mrb[0].mxu0
      %v874 = vadd.f32 %v569, %v873
      %v875 = vpop.f32.mrb[0].mxu0
      %876 = vmatprep.mubr.bf16.mxu0 0
      %877 = vmatmul.mubr.bf16.gmra.mrb[0].mxu0 %v722
      %v878 = vpop.f32.mrb[0].mxu0
      %v879 = vadd.f32 %v574, %v878
      %v880 = vpop.f32.mrb[0].mxu0
      %v881 = vpop.f32.mrb[0].mxu0
      %v882 = vadd.f32 %v577, %v881
      %v883 = vpop.f32.mrb[0].mxu0
      %884 = vmatprep.mubr.bf16.mxu0 0
      %885 = vmatmul.mubr.bf16.gmra.mrb[0].mxu0 %v723
      %v886 = vpop.f32.mrb[0].mxu0
      %v887 = vadd.f32 %v582, %v886
      %v888 = vpop.f32.mrb[0].mxu0
      %v889 = vpop.f32.mrb[0].mxu0
      %v890 = vadd.f32 %v585, %v889
      %v891 = vpop.f32.mrb[0].mxu0
      %892 = vmatprep.mubr.bf16.mxu0 0
      %893 = vmatmul.mubr.bf16.gmra.mrb[0].mxu0 %v724
      %v894 = vpop.f32.mrb[0].mxu0
      %v895 = vadd.f32 %v590, %v894
      %v896 = vpop.f32.mrb[0].mxu0
      %v897 = vpop.f32.mrb[0].mxu0
      %v898 = vadd.f32 %v593, %v897
      %v899 = vpop.f32.mrb[0].mxu0
      %900 = vmatprep.mubr.bf16.mxu0 0
      %901 = vmatmul.mubr.bf16.gmra.mrb[0].mxu0 %v725
      %v902 = vpop.f32.mrb[0].mxu0
      %v903 = vadd.f32 %v598, %v902
      %v904 = vpop.f32.mrb[0].mxu0
      %v905 = vpop.f32.mrb[0].mxu0
      %v906 = vadd.f32 %v601, %v905
      %v907 = vpop.f32.mrb[0].mxu0
      %908 = vmatprep.mubr.bf16.mxu0 0
      %909 = vmatmul.mubr.bf16.gmra.mrb[0].mxu0 %v726
      %v910 = vpop.f32.mrb[0].mxu0
      %v911 = vadd.f32 %v606, %v910
      %v912 = vpop.f32.mrb[0].mxu0
      %v913 = vpop.f32.mrb[0].mxu0
      %v914 = vadd.f32 %v609, %v913
      %v915 = vpop.f32.mrb[0].mxu0
      %916 = vmatprep.mubr.bf16.mxu0 0
      %917 = vmatmul.mubr.bf16.gmra.mrb[0].mxu0 %v727
      %v918 = vpop.f32.mrb[0].mxu0
      %v919 = vadd.f32 %v614, %v918
      %v920 = vpop.f32.mrb[0].mxu0
      %v921 = vpop.f32.mrb[0].mxu0
      %v922 = vadd.f32 %v617, %v921
      %v923 = vpop.f32.mrb[0].mxu0
      %924 = vmatprep.mubr.bf16.mxu0 0
      %925 = vmatmul.mubr.bf16.gmra.mrb[0].mxu0 %v728
      %v926 = vpop.f32.mrb[0].mxu0
      %v927 = vadd.f32 %v622, %v926
      %v928 = vpop.f32.mrb[0].mxu0
      %v929 = vpop.f32.mrb[0].mxu0
      %v930 = vadd.f32 %v625, %v929
      %v931 = vpop.f32.mrb[0].mxu0
      %932 = vmatprep.mubr.bf16.mxu0 0
      %933 = vmatmul.mubr.bf16.gmra.mrb[0].mxu0 %v729
      %v934 = vpop.f32.mrb[0].mxu0
      %v935 = vadd.f32 %v630, %v934
      %v936 = vpop.f32.mrb[0].mxu0
      %v937 = vpop.f32.mrb[0].mxu0
      %v938 = vadd.f32 %v633, %v937
      %v939 = vpop.f32.mrb[0].mxu0
      %940 = vmatprep.mubr.bf16.mxu0 0
      %941 = vmatmul.mubr.bf16.gmra.mrb[0].mxu0 %v730
      %v942 = vpop.f32.mrb[0].mxu0
      %v943 = vadd.f32 %v638, %v942
      %v944 = vpop.f32.mrb[0].mxu0
      %v945 = vpop.f32.mrb[0].mxu0
      %v946 = vadd.f32 %v641, %v945
      %v947 = vpop.f32.mrb[0].mxu0
      %948 = vmatprep.mubr.bf16.mxu0 0
      %949 = vmatmul.mubr.bf16.gmra.mrb[0].mxu0 %v731
      %v950 = vpop.f32.mrb[0].mxu0
      %v951 = vadd.f32 %v646, %v950
      %v952 = vpop.f32.mrb[0].mxu0
      %v953 = vpop.f32.mrb[0].mxu0
      %v954 = vadd.f32 %v649, %v953
      %v955 = vpop.f32.mrb[0].mxu0
      %956 = vdwg.mxu0
      %v957 = vld [vmem:[%s4] sm:$0x1]
      %v959 = vlaneseq
      %v960 = vshrl.u32 %v959, 7
      %v961 = vsub.s32 0, %v960
      %v962 = vrot.slane %v957, %v961
      %v964 = vadd.f32 %v831, %v962
      %v965 = vadd.f32 %v834, %v962
      %v966 = vadd.f32 %v839, %v962
      %v967 = vadd.f32 %v842, %v962
      %v968 = vadd.f32 %v847, %v962
      %v969 = vadd.f32 %v850, %v962
      %v970 = vadd.f32 %v855, %v962
      %v971 = vadd.f32 %v858, %v962
      %v972 = vadd.f32 %v863, %v962
      %v973 = vadd.f32 %v866, %v962
      %v974 = vadd.f32 %v871, %v962
      %v975 = vadd.f32 %v874, %v962
      %v976 = vadd.f32 %v879, %v962
      %v977 = vadd.f32 %v882, %v962
      %v978 = vadd.f32 %v887, %v962
      %v979 = vadd.f32 %v890, %v962
      %v980 = vadd.f32 %v895, %v962
      %v981 = vadd.f32 %v898, %v962
      %v982 = vadd.f32 %v903, %v962
      %v983 = vadd.f32 %v906, %v962
      %v984 = vadd.f32 %v911, %v962
      %v985 = vadd.f32 %v914, %v962
      %v986 = vadd.f32 %v919, %v962
      %v987 = vadd.f32 %v922, %v962
      %v988 = vadd.f32 %v927, %v962
      %v989 = vadd.f32 %v930, %v962
      %v990 = vadd.f32 %v935, %v962
      %v991 = vadd.f32 %v938, %v962
      %v992 = vadd.f32 %v943, %v962
      %v993 = vadd.f32 %v946, %v962
      %v994 = vadd.f32 %v951, %v962
      %v995 = vadd.f32 %v954, %v962
      %v996 = vxor.u32 %v964, 2147483648
      %v997 = vxor.u32 %v965, 2147483648
      %v998 = vxor.u32 %v966, 2147483648
      %v999 = vxor.u32 %v967, 2147483648
      %v1000 = vxor.u32 %v968, 2147483648
      %v1001 = vxor.u32 %v969, 2147483648
      %v1002 = vxor.u32 %v970, 2147483648
      %v1003 = vxor.u32 %v971, 2147483648
      %v1004 = vxor.u32 %v972, 2147483648
      %v1005 = vxor.u32 %v973, 2147483648
      %v1006 = vxor.u32 %v974, 2147483648
      %v1007 = vxor.u32 %v975, 2147483648
      %v1008 = vxor.u32 %v976, 2147483648
      %v1009 = vxor.u32 %v977, 2147483648
      %v1010 = vxor.u32 %v978, 2147483648
      %v1011 = vxor.u32 %v979, 2147483648
      %v1012 = vxor.u32 %v980, 2147483648
      %v1013 = vxor.u32 %v981, 2147483648
      %v1014 = vxor.u32 %v982, 2147483648
      %v1015 = vxor.u32 %v983, 2147483648
      %v1016 = vxor.u32 %v984, 2147483648
      %v1017 = vxor.u32 %v985, 2147483648
      %v1018 = vxor.u32 %v986, 2147483648
      %v1019 = vxor.u32 %v987, 2147483648
      %v1020 = vxor.u32 %v988, 2147483648
      %v1021 = vxor.u32 %v989, 2147483648
      %v1022 = vxor.u32 %v990, 2147483648
      %v1023 = vxor.u32 %v991, 2147483648
      %v1024 = vxor.u32 %v992, 2147483648
      %v1025 = vxor.u32 %v993, 2147483648
      %v1026 = vxor.u32 %v994, 2147483648
      %v1027 = vxor.u32 %v995, 2147483648
      %v1028 = vmul.f32 %v996, 1.442695
      %v1029 = vpow.pop %v1028
      %v1030 = vmul.f32 %v997, 1.442695
      %v1031 = vpow.pop %v1030
      %v1032 = vmul.f32 %v998, 1.442695
      %v1033 = vpow.pop %v1032
      %v1034 = vmul.f32 %v999, 1.442695
      %v1035 = vpow.pop %v1034
      %v1036 = vmul.f32 %v1000, 1.442695
      %v1037 = vpow.pop %v1036
      %v1038 = vmul.f32 %v1001, 1.442695
      %v1039 = vpow.pop %v1038
      %v1040 = vmul.f32 %v1002, 1.442695
      %v1041 = vpow.pop %v1040
      %v1042 = vmul.f32 %v1003, 1.442695
      %v1043 = vpow.pop %v1042
      %v1044 = vmul.f32 %v1004, 1.442695
      %v1045 = vpow.pop %v1044
      %v1046 = vmul.f32 %v1005, 1.442695
      %v1047 = vpow.pop %v1046
      %v1048 = vmul.f32 %v1006, 1.442695
      %v1049 = vpow.pop %v1048
      %v1050 = vmul.f32 %v1007, 1.442695
      %v1051 = vpow.pop %v1050
      %v1052 = vmul.f32 %v1008, 1.442695
      %v1053 = vpow.pop %v1052
      %v1054 = vmul.f32 %v1009, 1.442695
      %v1055 = vpow.pop %v1054
      %v1056 = vmul.f32 %v1010, 1.442695
      %v1057 = vpow.pop %v1056
      %v1058 = vmul.f32 %v1011, 1.442695
      %v1059 = vpow.pop %v1058
      %v1060 = vmul.f32 %v1012, 1.442695
      %v1061 = vpow.pop %v1060
      %v1062 = vmul.f32 %v1013, 1.442695
      %v1063 = vpow.pop %v1062
      %v1064 = vmul.f32 %v1014, 1.442695
      %v1065 = vpow.pop %v1064
      %v1066 = vmul.f32 %v1015, 1.442695
      %v1067 = vpow.pop %v1066
      %v1068 = vmul.f32 %v1016, 1.442695
      %v1069 = vpow.pop %v1068
      %v1070 = vmul.f32 %v1017, 1.442695
      %v1071 = vpow.pop %v1070
      %v1072 = vmul.f32 %v1018, 1.442695
      %v1073 = vpow.pop %v1072
      %v1074 = vmul.f32 %v1019, 1.442695
      %v1075 = vpow.pop %v1074
      %v1076 = vmul.f32 %v1020, 1.442695
      %v1077 = vpow.pop %v1076
      %v1078 = vmul.f32 %v1021, 1.442695
      %v1079 = vpow.pop %v1078
      %v1080 = vmul.f32 %v1022, 1.442695
      %v1081 = vpow.pop %v1080
      %v1082 = vmul.f32 %v1023, 1.442695
      %v1083 = vpow.pop %v1082
      %v1084 = vmul.f32 %v1024, 1.442695
      %v1085 = vpow.pop %v1084
      %v1086 = vmul.f32 %v1025, 1.442695
      %v1087 = vpow.pop %v1086
      %v1088 = vmul.f32 %v1026, 1.442695
      %v1089 = vpow.pop %v1088
      %v1090 = vmul.f32 %v1027, 1.442695
      %v1091 = vpow.pop %v1090
      %v1092 = vadd.f32 %v1029, 1.0
      %v1093 = vadd.f32 %v1031, 1.0
      %v1094 = vadd.f32 %v1033, 1.0
      %v1095 = vadd.f32 %v1035, 1.0
      %v1096 = vadd.f32 %v1037, 1.0
      %v1097 = vadd.f32 %v1039, 1.0
      %v1098 = vadd.f32 %v1041, 1.0
      %v1099 = vadd.f32 %v1043, 1.0
      %v1100 = vadd.f32 %v1045, 1.0
      %v1101 = vadd.f32 %v1047, 1.0
      %v1102 = vadd.f32 %v1049, 1.0
      %v1103 = vadd.f32 %v1051, 1.0
      %v1104 = vadd.f32 %v1053, 1.0
      %v1105 = vadd.f32 %v1055, 1.0
      %v1106 = vadd.f32 %v1057, 1.0
      %v1107 = vadd.f32 %v1059, 1.0
      %v1108 = vadd.f32 %v1061, 1.0
      %v1109 = vadd.f32 %v1063, 1.0
      %v1110 = vadd.f32 %v1065, 1.0
      %v1111 = vadd.f32 %v1067, 1.0
      %v1112 = vadd.f32 %v1069, 1.0
      %v1113 = vadd.f32 %v1071, 1.0
      %v1114 = vadd.f32 %v1073, 1.0
      %v1115 = vadd.f32 %v1075, 1.0
      %v1116 = vadd.f32 %v1077, 1.0
      %v1117 = vadd.f32 %v1079, 1.0
      %v1118 = vadd.f32 %v1081, 1.0
      %v1119 = vadd.f32 %v1083, 1.0
      %v1120 = vadd.f32 %v1085, 1.0
      %v1121 = vadd.f32 %v1087, 1.0
      %v1122 = vadd.f32 %v1089, 1.0
      %v1123 = vadd.f32 %v1091, 1.0
      %v1124 = vrcp.pop %v1092
      %v1125 = vmul.f32 1.0, %v1124
      %v1126 = vrcp.pop %v1093
      %v1127 = vmul.f32 1.0, %v1126
      %v1128 = vrcp.pop %v1094
      %v1129 = vmul.f32 1.0, %v1128
      %v1130 = vrcp.pop %v1095
      %v1131 = vmul.f32 1.0, %v1130
      %v1132 = vrcp.pop %v1096
      %v1133 = vmul.f32 1.0, %v1132
      %v1134 = vrcp.pop %v1097
      %v1135 = vmul.f32 1.0, %v1134
      %v1136 = vrcp.pop %v1098
      %v1137 = vmul.f32 1.0, %v1136
      %v1138 = vrcp.pop %v1099
      %v1139 = vmul.f32 1.0, %v1138
      %v1140 = vrcp.pop %v1100
      %v1141 = vmul.f32 1.0, %v1140
      %v1142 = vrcp.pop %v1101
      %v1143 = vmul.f32 1.0, %v1142
      %v1144 = vrcp.pop %v1102
      %v1145 = vmul.f32 1.0, %v1144
      %v1146 = vrcp.pop %v1103
      %v1147 = vmul.f32 1.0, %v1146
      %v1148 = vrcp.pop %v1104
      %v1149 = vmul.f32 1.0, %v1148
      %v1150 = vrcp.pop %v1105
      %v1151 = vmul.f32 1.0, %v1150
      %v1152 = vrcp.pop %v1106
      %v1153 = vmul.f32 1.0, %v1152
      %v1154 = vrcp.pop %v1107
      %v1155 = vmul.f32 1.0, %v1154
      %v1156 = vrcp.pop %v1108
      %v1157 = vmul.f32 1.0, %v1156
      %v1158 = vrcp.pop %v1109
      %v1159 = vmul.f32 1.0, %v1158
      %v1160 = vrcp.pop %v1110
      %v1161 = vmul.f32 1.0, %v1160
      %v1162 = vrcp.pop %v1111
      %v1163 = vmul.f32 1.0, %v1162
      %v1164 = vrcp.pop %v1112
      %v1165 = vmul.f32 1.0, %v1164
      %v1166 = vrcp.pop %v1113
      %v1167 = vmul.f32 1.0, %v1166
      %v1168 = vrcp.pop %v1114
      %v1169 = vmul.f32 1.0, %v1168
      %v1170 = vrcp.pop %v1115
      %v1171 = vmul.f32 1.0, %v1170
      %v1172 = vrcp.pop %v1116
      %v1173 = vmul.f32 1.0, %v1172
      %v1174 = vrcp.pop %v1117
      %v1175 = vmul.f32 1.0, %v1174
      %v1176 = vrcp.pop %v1118
      %v1177 = vmul.f32 1.0, %v1176
      %v1178 = vrcp.pop %v1119
      %v1179 = vmul.f32 1.0, %v1178
      %v1180 = vrcp.pop %v1120
      %v1181 = vmul.f32 1.0, %v1180
      %v1182 = vrcp.pop %v1121
      %v1183 = vmul.f32 1.0, %v1182
      %v1184 = vrcp.pop %v1122
      %v1185 = vmul.f32 1.0, %v1184
      %v1186 = vrcp.pop %v1123
      %v1187 = vmul.f32 1.0, %v1186
      %v1188 = vmul.f32 %v964, %v1125
      %v1189 = vmul.f32 %v965, %v1127
      %v1190 = vmul.f32 %v966, %v1129
      %v1191 = vmul.f32 %v967, %v1131
      %v1192 = vmul.f32 %v968, %v1133
      %v1193 = vmul.f32 %v969, %v1135
      %v1194 = vmul.f32 %v970, %v1137
      %v1195 = vmul.f32 %v971, %v1139
      %v1196 = vmul.f32 %v972, %v1141
      %v1197 = vmul.f32 %v973, %v1143
      %v1198 = vmul.f32 %v974, %v1145
      %v1199 = vmul.f32 %v975, %v1147
      %v1200 = vmul.f32 %v976, %v1149
      %v1201 = vmul.f32 %v977, %v1151
      %v1202 = vmul.f32 %v978, %v1153
      %v1203 = vmul.f32 %v979, %v1155
      %v1204 = vmul.f32 %v980, %v1157
      %v1205 = vmul.f32 %v981, %v1159
      %v1206 = vmul.f32 %v982, %v1161
      %v1207 = vmul.f32 %v983, %v1163
      %v1208 = vmul.f32 %v984, %v1165
      %v1209 = vmul.f32 %v985, %v1167
      %v1210 = vmul.f32 %v986, %v1169
      %v1211 = vmul.f32 %v987, %v1171
      %v1212 = vmul.f32 %v988, %v1173
      %v1213 = vmul.f32 %v989, %v1175
      %v1214 = vmul.f32 %v990, %v1177
      %v1215 = vmul.f32 %v991, %v1179
      %v1216 = vmul.f32 %v992, %v1181
      %v1217 = vmul.f32 %v993, %v1183
      %v1218 = vmul.f32 %v994, %v1185
      %v1219 = vmul.f32 %v995, %v1187
      %1220 = vst [vmem:[%s248] sm:$0xff] %v1188
      %1221 = vst [vmem:[%s248 + $0x8] sm:$0xff] %v1189
      %1222 = vst [vmem:[%s248 + $0x10] sm:$0xff] %v1190
      %1223 = vst [vmem:[%s248 + $0x18] sm:$0xff] %v1191
      %1224 = vst [vmem:[%s248 + $0x20] sm:$0xff] %v1192
      %1225 = vst [vmem:[%s248 + $0x28] sm:$0xff] %v1193
      %1226 = vst [vmem:[%s248 + $0x30] sm:$0xff] %v1194
      %1227 = vst [vmem:[%s248 + $0x38] sm:$0xff] %v1195
      %1228 = vst [vmem:[%s248 + $0x40] sm:$0xff] %v1196
      %1229 = vst [vmem:[%s248 + $0x48] sm:$0xff] %v1197
      %1230 = vst [vmem:[%s248 + $0x50] sm:$0xff] %v1198
      %1231 = vst [vmem:[%s248 + $0x58] sm:$0xff] %v1199
      %1232 = vst [vmem:[%s248 + $0x60] sm:$0xff] %v1200
      %1233 = vst [vmem:[%s248 + $0x68] sm:$0xff] %v1201
      %1234 = vst [vmem:[%s248 + $0x70] sm:$0xff] %v1202
      %1235 = vst [vmem:[%s248 + $0x78] sm:$0xff] %v1203
      %1236 = vst [vmem:[%s248 + $0x80] sm:$0xff] %v1204
      %1237 = vst [vmem:[%s248 + $0x88] sm:$0xff] %v1205
      %1238 = vst [vmem:[%s248 + $0x90] sm:$0xff] %v1206
      %1239 = vst [vmem:[%s248 + $0x98] sm:$0xff] %v1207
      %1240 = vst [vmem:[%s248 + $0xa0] sm:$0xff] %v1208
      %1241 = vst [vmem:[%s248 + $0xa8] sm:$0xff] %v1209
      %1242 = vst [vmem:[%s248 + $0xb0] sm:$0xff] %v1210
      %1243 = vst [vmem:[%s248 + $0xb8] sm:$0xff] %v1211
      %1244 = vst [vmem:[%s248 + $0xc0] sm:$0xff] %v1212
      %1245 = vst [vmem:[%s248 + $0xc8] sm:$0xff] %v1213
      %1246 = vst [vmem:[%s248 + $0xd0] sm:$0xff] %v1214
      %1247 = vst [vmem:[%s248 + $0xd8] sm:$0xff] %v1215
      %1248 = vst [vmem:[%s248 + $0xe0] sm:$0xff] %v1216
      %1249 = vst [vmem:[%s248 + $0xe8] sm:$0xff] %v1217
      %1250 = vst [vmem:[%s248 + $0xf0] sm:$0xff] %v1218
      %1251 = vst [vmem:[%s248 + $0xf8] sm:$0xff] %v1219
      %s1252 = smul.u32 32, %s16
      %p1253 = scmp.lt.s32.totalorder %s1252, 63
      %s1254 = scalar_select %p1253, %s1252, 63
      %s1255 = smul.addr %s1254, 8
      %s1256 = scalar_lea.vmem %s5, %s1255
      // Predicated region
      $region41: #{c3_forward.9} parent=39 // pred_check
        %p1257 = pneg %p149
      $region42: #{c3_forward.9} parent=39 // pred_check_branch
        %1259 = sbr.rel (%p1257) target = $region44
      $region43: #{c3_forward.9} parent=39 // pred_region
        %s1260 = smul.u32 32, %s16
      $region44: #{c3_forward.9} parent=39 // pred_fallthru
        _
    $region40: #{c3_forward.9} parent=5 // pred_fallthru
      _
    %p1261 = scmp.le.s32.totalorder 2, %s11
    // Predicated region
    $region45: #{c3_forward.9} parent=5 // pred_check
      %p1262 = pneg %p1261
    $region46: #{c3_forward.9} parent=5 // pred_check_branch
      %1264 = sbr.rel (%p1262) target = $region48
    $region47: #{c3_forward.9} parent=5 // pred_region
      %s1265 = ssub.s32 %s11, 2
      // Predicated region
      $region49: #{c3_forward.9} parent=47 // pred_check
        %p1266 = pneg %p155
      $region50: #{c3_forward.9} parent=47 // pred_check_branch
        %1268 = sbr.rel (%p1266) target = $region52
      $region51: #{c3_forward.9} parent=47 // pred_region
        %s1269 = smul.u32 32, %s17
        %p1270 = scmp.lt.s32.totalorder %s1269, 63
        %s1271 = scalar_select %p1270, %s1269, 63
        %s1272 = smul.addr %s1271, 8
        %s1273 = scalar_lea.vmem %s5, %s1272
      $region52: #{c3_forward.9} parent=47 // pred_fallthru
        _
    $region48: #{c3_forward.9} parent=5 // pred_fallthru
      _
  $region6: #{c3_forward.9} parent=0 // loop_footer
    %s15 = sadd.s32 1, %s11
  $region7: #{c3_forward.9} parent=0 // loop_footer_branch
    %10 = sbr.rel target = $region3
  $region8: #{c3_forward.9} parent=0 // loop_exit
    _

// kernel: c3_forward.8
$region0: #{c3_forward.8}
  #allocation0 [shape = 'u32[]', space=smem, size = 0x4, offset = 0x4, fixed_abs, tag = 'smem constant byte address 0x4 - core index']
  #allocation1 [shape = 'u32[144,128]{1,0:T(1,128)}', space=vmem, size = 0x12000, scoped, tag = 'internal scratch']
  %s0 = inlined_call_operand.vmem [shape: bf16[2,18,18,128], index: 0, kind: input, shape index: {}]
  %s1 = inlined_call_operand.vmem [shape: bf16[9,128,128], index: 1, kind: input, shape index: {}]
  %s2 = inlined_call_operand.vmem [shape: f32[1,128], index: 2, kind: input, shape index: {}]
  %s3 = inlined_call_operand.vmem [shape: bf16[512,128], index: 3, kind: input, shape index: {}]
  %s4 = inlined_call_operand.vmem [shape: bf16[512,128], index: 4, kind: output, shape index: {}]
  %s5 = sld [smem:[#allocation0]]
  $region49: #{c3_forward.8} parent=0
    _
  %s7 = ssub.s32 1, %s5
  %s8 = scalar_select 0, %s7, %s5
  loop: start=0, step=1, limit=4
  $region2: #{c3_forward.8} parent=0 // loop_pre_header
    _
  $region3: #{c3_forward.8} parent=0 // loop_header
    %s10 = sphi 0, %s14
    %p11 = scmp.ge.s32.totalorder %s10, 4
    %s20 = sphi 0, %s22
    %s23 = sphi 0, %s20
    %s24 = sphi 0, %s23
    %s40 = sphi 0, %s24
    %s44 = sphi 0, %s44
    %s46 = sphi 0, %s44
    %s47 = sphi 0, %s46
    %s61 = sphi 0, %s47
    %s65 = sphi 0, %s65
    %s67 = sphi 0, %s65
    %s68 = sphi 0, %s67
    %s82 = sphi 0, %s68
    %s88 = sphi 0, %s90
    %s91 = sphi 0, %s88
    %s92 = sphi 0, %s91
    %s108 = sphi 0, %s92
    %s114 = sphi 0, %s116
    %s117 = sphi 0, %s114
    %s118 = sphi 0, %s117
    %s134 = sphi 0, %s118
  $region4: #{c3_forward.8} parent=0 // loop_header_branch
    %13 = sbr.rel (%p11) target = $region8
  $region5: #{c3_forward.8} parent=0 // loop_body
    %s15 = ssub.s32 %s10, 1
    %s16 = ssub.s32 %s10, 2
    %s17 = sadd.s32 %s10, 1
    %s18 = ssub.s32 %s10, %s17
    %p19 = scmp.eq.s32.totalorder %s18, 0
    %s21 = sadd.s32 %s20, 1
    %s22 = scalar_select %p19, %s20, %s21
    %p25 = pneg %p19
    %p26 = scmp.eq.s32.totalorder %s10, 1
    %p27 = por %p25, %p26
    %p28 = scmp.ne.s32.totalorder %s20, %s23
    %p29 = scmp.eq.s32.totalorder %s10, 0
    %p30 = por %p28, %p29
    %p31 = scmp.ne.s32.totalorder %s20, %s23
    %p32 = scmp.eq.s32.totalorder %s15, 1
    %p33 = por %p31, %p32
    %p34 = scmp.ne.s32.totalorder %s23, %s24
    %p35 = scmp.eq.s32.totalorder %s15, 0
    %p36 = por %p34, %p35
    %p37 = scmp.ne.s32.totalorder %s23, %s24
    %p38 = scmp.eq.s32.totalorder %s16, 1
    %p39 = por %p37, %p38
    %p41 = scmp.ne.s32.totalorder %s24, %s40
    %p42 = scmp.eq.s32.totalorder %s16, 0
    %p43 = por %p41, %p42
    %s45 = sadd.s32 %s44, 1
    %p48 = scmp.eq.s32.totalorder %s10, 1
    %p49 = scmp.ne.s32.totalorder %s44, %s46
    %p50 = scmp.eq.s32.totalorder %s10, 0
    %p51 = por %p49, %p50
    %p52 = scmp.ne.s32.totalorder %s44, %s46
    %p53 = scmp.eq.s32.totalorder %s15, 1
    %p54 = por %p52, %p53
    %p55 = scmp.ne.s32.totalorder %s46, %s47
    %p56 = scmp.eq.s32.totalorder %s15, 0
    %p57 = por %p55, %p56
    %p58 = scmp.ne.s32.totalorder %s46, %s47
    %p59 = scmp.eq.s32.totalorder %s16, 1
    %p60 = por %p58, %p59
    %p62 = scmp.ne.s32.totalorder %s47, %s61
    %p63 = scmp.eq.s32.totalorder %s16, 0
    %p64 = por %p62, %p63
    %s66 = sadd.s32 %s65, 1
    %p69 = scmp.eq.s32.totalorder %s10, 1
    %p70 = scmp.ne.s32.totalorder %s65, %s67
    %p71 = scmp.eq.s32.totalorder %s10, 0
    %p72 = por %p70, %p71
    %p73 = scmp.ne.s32.totalorder %s65, %s67
    %p74 = scmp.eq.s32.totalorder %s15, 1
    %p75 = por %p73, %p74
    %p76 = scmp.ne.s32.totalorder %s67, %s68
    %p77 = scmp.eq.s32.totalorder %s15, 0
    %p78 = por %p76, %p77
    %p79 = scmp.ne.s32.totalorder %s67, %s68
    %p80 = scmp.eq.s32.totalorder %s16, 1
    %p81 = por %p79, %p80
    %p83 = scmp.ne.s32.totalorder %s68, %s82
    %p84 = scmp.eq.s32.totalorder %s16, 0
    %p85 = por %p83, %p84
    %s86 = ssub.s32 %s10, %s17
    %p87 = scmp.eq.s32.totalorder %s86, 0
    %s89 = sadd.s32 %s88, 1
    %s90 = scalar_select %p87, %s88, %s89
    %p93 = pneg %p87
    %p94 = scmp.eq.s32.totalorder %s10, 1
    %p95 = por %p93, %p94
    %p96 = scmp.ne.s32.totalorder %s88, %s91
    %p97 = scmp.eq.s32.totalorder %s10, 0
    %p98 = por %p96, %p97
    %p99 = scmp.ne.s32.totalorder %s88, %s91
    %p100 = scmp.eq.s32.totalorder %s15, 1
    %p101 = por %p99, %p100
    %p102 = scmp.ne.s32.totalorder %s91, %s92
    %p103 = scmp.eq.s32.totalorder %s15, 0
    %p104 = por %p102, %p103
    %p105 = scmp.ne.s32.totalorder %s91, %s92
    %p106 = scmp.eq.s32.totalorder %s16, 1
    %p107 = por %p105, %p106
    %p109 = scmp.ne.s32.totalorder %s92, %s108
    %p110 = scmp.eq.s32.totalorder %s16, 0
    %p111 = por %p109, %p110
    %s112 = ssub.s32 %s10, %s17
    %p113 = scmp.eq.s32.totalorder %s112, 0
    %s115 = sadd.s32 %s114, 1
    %s116 = scalar_select %p113, %s114, %s115
    %p119 = pneg %p113
    %p120 = scmp.eq.s32.totalorder %s10, 1
    %p121 = por %p119, %p120
    %p122 = scmp.ne.s32.totalorder %s114, %s117
    %p123 = scmp.eq.s32.totalorder %s10, 0
    %p124 = por %p122, %p123
    %p125 = scmp.ne.s32.totalorder %s114, %s117
    %p126 = scmp.eq.s32.totalorder %s15, 1
    %p127 = por %p125, %p126
    %p128 = scmp.ne.s32.totalorder %s117, %s118
    %p129 = scmp.eq.s32.totalorder %s15, 0
    %p130 = por %p128, %p129
    %p131 = scmp.ne.s32.totalorder %s117, %s118
    %p132 = scmp.eq.s32.totalorder %s16, 1
    %p133 = por %p131, %p132
    %p135 = scmp.ne.s32.totalorder %s118, %s134
    %p136 = scmp.eq.s32.totalorder %s16, 0
    %p137 = por %p135, %p136
    %p138 = scmp.le.s32.totalorder 1, %s10
    %p139 = scmp.lt.s32.totalorder %s10, 3
    %p140 = pnand %p138, %p139
    %p141 = pneg %p140
    // Predicated region
    $region9: #{c3_forward.8} parent=5 // pred_check
      _
    $region10: #{c3_forward.8} parent=5 // pred_check_branch
      %143 = sbr.rel (%p140) target = $region12
    $region11: #{c3_forward.8} parent=5 // pred_region
      %s144 = ssub.s32 %s10, 1
      // Predicated region
      $region13: #{c3_forward.8} parent=11 // pred_check
        %p145 = pneg %p57
      $region14: #{c3_forward.8} parent=11 // pred_check_branch
        %147 = sbr.rel (%p145) target = $region16
      $region15: #{c3_forward.8} parent=11 // pred_region
        _
      $region16: #{c3_forward.8} parent=11 // pred_fallthru
        _
      // Predicated region
      $region17: #{c3_forward.8} parent=11 // pred_check
        %p148 = pneg %p78
      $region18: #{c3_forward.8} parent=11 // pred_check_branch
        %150 = sbr.rel (%p148) target = $region20
      $region19: #{c3_forward.8} parent=11 // pred_region
        _
      $region20: #{c3_forward.8} parent=11 // pred_fallthru
        _
    $region12: #{c3_forward.8} parent=5 // pred_fallthru
      _
    %p151 = scmp.lt.s32.totalorder %s10, 2
    // Predicated region
    $region21: #{c3_forward.8} parent=5 // pred_check
      %p152 = pneg %p151
    $region22: #{c3_forward.8} parent=5 // pred_check_branch
      %154 = sbr.rel (%p152) target = $region24
    $region23: #{c3_forward.8} parent=5 // pred_region
      // Predicated region
      $region25: #{c3_forward.8} parent=23 // pred_check
        %p155 = pneg %p30
      $region26: #{c3_forward.8} parent=23 // pred_check_branch
        %157 = sbr.rel (%p155) target = $region28
      $region27: #{c3_forward.8} parent=23 // pred_region
        %p158 = scmp.lt.s32.totalorder %s10, 1
        %s159 = scalar_select %p158, %s10, 1
        %s160 = smul.addr %s159, 54
        %s161 = smul.addr %s160, 4
        %s162 = scalar_lea.vmem %s0, %s161
      $region28: #{c3_forward.8} parent=23 // pred_fallthru
        _
      // Predicated region
      $region29: #{c3_forward.8} parent=23 // pred_check
        %p163 = pneg %p98
      $region30: #{c3_forward.8} parent=23 // pred_check_branch
        %165 = sbr.rel (%p163) target = $region32
      $region31: #{c3_forward.8} parent=23 // pred_region
        %s166 = smul.u32 32, %s10
        %p167 = scmp.lt.s32.totalorder %s166, 63
        %s168 = scalar_select %p167, %s166, 63
        %s169 = smul.addr %s168, 4
        %s170 = scalar_lea.vmem %s3, %s169
        %s171 = smul.u32 32, %s10
      $region32: #{c3_forward.8} parent=23 // pred_fallthru
        _
    $region24: #{c3_forward.8} parent=5 // pred_fallthru
      _
    %p172 = scmp.le.s32.totalorder 1, %s10
    %p173 = scmp.lt.s32.totalorder %s10, 3
    %p174 = pnand %p172, %p173
    %p175 = pneg %p174
    // Predicated region
    $region33: #{c3_forward.8} parent=5 // pred_check
      _
    $region34: #{c3_forward.8} parent=5 // pred_check_branch
      %177 = sbr.rel (%p174) target = $region36
    $region35: #{c3_forward.8} parent=5 // pred_region
      %s178 = ssub.s32 %s10, 1
      %p179 = scmp.lt.s32.totalorder %s15, 1
      %s180 = scalar_select %p179, %s15, 1
      %s181 = smul.addr %s180, 54
      %s182 = smul.addr %s181, 4
      %s183 = scalar_lea.vmem %s0, %s182
      %p184 = pneg %p36
      %p185 = pneg %p33
      %p186 = pneg %p57
      %p187 = pneg %p54
      %p188 = pneg %p78
      %p189 = pneg %p75
      %s190 = smul.u32 32, %s15
      %p191 = scmp.lt.s32.totalorder %s190, 63
      %s192 = scalar_select %p191, %s190, 63
      %s193 = smul.addr %s192, 4
      %s194 = scalar_lea.vmem %s3, %s193
      %p195 = pneg %p104
      %p196 = pneg %p101
      %p197 = pneg %p130
      %p198 = pneg %p127
      %s199 = smul.u32 32, %s15
      %p200 = scmp.lt.s32.totalorder %s199, 63
      %s201 = scalar_select %p200, %s199, 63
      %s202 = smul.addr %s201, 4
      %s203 = scalar_lea.vmem %s4, %s202
      %p204 = scmp.lt.s32.totalorder %s15, 1
      %s205 = scalar_select %p204, %s15, 1
      %s206 = smul.addr %s205, 54
      %s207 = smul.addr %s206, 4
      %s208 = scalar_lea.vmem %s0, %s207
      %s209 = smul.u32 32, %s15
      %p210 = scmp.lt.s32.totalorder %s209, 63
      %s211 = scalar_select %p210, %s209, 63
      %s212 = smul.addr %s211, 4
      %s213 = scalar_lea.vmem %s3, %s212
      %s214 = smul.u32 32, %s15
      %s215 = smul.u32 32, %s15
      %p216 = scmp.lt.s32.totalorder %s215, 63
      %s217 = scalar_select %p216, %s215, 63
      %s218 = smul.addr %s217, 4
      %s219 = scalar_lea.vmem %s4, %s218
      %s220 = smul.u32 32, %s15
      %v222 = vld [vmem:[%s208] sm:$0xf]
      %v223 = vld [vmem:[%s208 + $0x4] sm:$0xf]
      %v224 = vld [vmem:[%s208 + $0xc] sm:$0xf]
      %v225 = vld [vmem:[%s208 + $0x10] sm:$0xf]
      %v226 = vld [vmem:[%s208 + $0x18] sm:$0xf]
      %v227 = vld [vmem:[%s208 + $0x1c] sm:$0xf]
      %v228 = vld [vmem:[%s208 + $0x24] sm:$0xf]
      %v229 = vld [vmem:[%s208 + $0x28] sm:$0xf]
      %v230 = vld [vmem:[%s208 + $0x30] sm:$0xf]
      %v231 = vld [vmem:[%s208 + $0x34] sm:$0xf]
      %v232 = vld [vmem:[%s208 + $0x3c] sm:$0xf]
      %v233 = vld [vmem:[%s208 + $0x40] sm:$0xf]
      %v234 = vld [vmem:[%s208 + $0x48] sm:$0xf]
      %v235 = vld [vmem:[%s208 + $0x4c] sm:$0xf]
      %v236 = vld [vmem:[%s208 + $0x54] sm:$0xf]
      %v237 = vld [vmem:[%s208 + $0x58] sm:$0xf]
      %v238 = vld [vmem:[%s208 + $0x60] sm:$0xf]
      %v239 = vld [vmem:[%s208 + $0x64] sm:$0xf]
      %v240 = vld [vmem:[%s208 + $0x6c] sm:$0xf]
      %v241 = vld [vmem:[%s208 + $0x70] sm:$0xf]
      %v242 = vld [vmem:[%s208 + $0x78] sm:$0xf]
      %v243 = vld [vmem:[%s208 + $0x7c] sm:$0xf]
      %v244 = vld [vmem:[%s208 + $0x84] sm:$0xf]
      %v245 = vld [vmem:[%s208 + $0x88] sm:$0xf]
      %v246 = vld [vmem:[%s208 + $0x90] sm:$0xf]
      %v247 = vld [vmem:[%s208 + $0x94] sm:$0xf]
      %v248 = vld [vmem:[%s208 + $0x9c] sm:$0xf]
      %v249 = vld [vmem:[%s208 + $0xa0] sm:$0xf]
      %v250 = vld [vmem:[%s208 + $0xa8] sm:$0xf]
      %v251 = vld [vmem:[%s208 + $0xac] sm:$0xf]
      %v252 = vld [vmem:[%s208 + $0xb4] sm:$0xf]
      %v253 = vld [vmem:[%s208 + $0xb8] sm:$0xf]
      %v254 = vld [vmem:[%s1] sm:$0xf]
      %v255 = vld [vmem:[%s1 + $0x4] sm:$0xf]
      %v256 = vld [vmem:[%s1 + $0x8] sm:$0xf]
      %v257 = vld [vmem:[%s1 + $0xc] sm:$0xf]
      %v258 = vld [vmem:[%s1 + $0x10] sm:$0xf]
      %v259 = vld [vmem:[%s1 + $0x14] sm:$0xf]
      %v260 = vld [vmem:[%s1 + $0x18] sm:$0xf]
      %v261 = vld [vmem:[%s1 + $0x1c] sm:$0xf]
      %v262 = vld [vmem:[%s1 + $0x20] sm:$0xf]
      %v263 = vld [vmem:[%s1 + $0x24] sm:$0xf]
      %v264 = vld [vmem:[%s1 + $0x28] sm:$0xf]
      %v265 = vld [vmem:[%s1 + $0x2c] sm:$0xf]
      %v266 = vld [vmem:[%s1 + $0x30] sm:$0xf]
      %v267 = vld [vmem:[%s1 + $0x34] sm:$0xf]
      %v268 = vld [vmem:[%s1 + $0x38] sm:$0xf]
      %v269 = vld [vmem:[%s1 + $0x3c] sm:$0xf]
      %v270 = vld [vmem:[%s208 + $0x8] sm:$0x1]
      %v271 = vld [vmem:[%s208 + $0x14] sm:$0x1]
      %v272 = vld [vmem:[%s208 + $0x20] sm:$0x1]
      %v273 = vld [vmem:[%s208 + $0x2c] sm:$0x1]
      %v274 = vld [vmem:[%s208 + $0x38] sm:$0x1]
      %v275 = vld [vmem:[%s208 + $0x44] sm:$0x1]
      %v276 = vld [vmem:[%s208 + $0x50] sm:$0x1]
      %v277 = vld [vmem:[%s208 + $0x5c] sm:$0x1]
      %v278 = vld [vmem:[%s208 + $0x68] sm:$0x1]
      %v279 = vld [vmem:[%s208 + $0x74] sm:$0x1]
      %v280 = vld [vmem:[%s208 + $0x80] sm:$0x1]
      %v281 = vld [vmem:[%s208 + $0x8c] sm:$0x1]
      %v282 = vld [vmem:[%s208 + $0x98] sm:$0x1]
      %v283 = vld [vmem:[%s208 + $0xa4] sm:$0x1]
      %v284 = vld [vmem:[%s208 + $0xb0] sm:$0x1]
      %v285 = vld [vmem:[%s208 + $0xbc] sm:$0x1]
      %vm286 = vsmask.f32 3328
      %vm287 = vsmask.f32 7440
      %vm288 = vmor %vm286, %vm287
      %v290 = vshrl.u32 %v222, 16
      %v292 = vrot.slane %v290, 4
      %v293 = vshll.u32 %v222, 16
      %v295 = vrot.slane %v293, 5
      %v296 = vor.u32 %v292, %v295
      %v297 = vrot.slane %v296, 4
      %v299 = vshll.u32 %v223, 16
      %v301 = vrot.slane %v299, 5
      %v302 = vsel %vm288, %v297, %v301
      %v303 = vshrl.u32 %v223, 16
      %v305 = vrot.slane %v303, 4
      %v306 = vor.u32 %v305, %v301
      %v307 = vrot.slane %v306, 4
      %v309 = vshll.u32 %v270, 16
      %v311 = vrot.slane %v309, 5
      %v312 = vsel %vm288, %v307, %v311
      %v314 = vshrl.u32 %v224, 16
      %v316 = vrot.slane %v314, 4
      %v317 = vshll.u32 %v224, 16
      %v319 = vrot.slane %v317, 5
      %v320 = vor.u32 %v316, %v319
      %v321 = vrot.slane %v320, 4
      %v323 = vshll.u32 %v225, 16
      %v325 = vrot.slane %v323, 5
      %v326 = vsel %vm288, %v321, %v325
      %v327 = vshrl.u32 %v225, 16
      %v329 = vrot.slane %v327, 4
      %v330 = vor.u32 %v329, %v325
      %v331 = vrot.slane %v330, 4
      %v333 = vshll.u32 %v271, 16
      %v335 = vrot.slane %v333, 5
      %v336 = vsel %vm288, %v331, %v335
      %v338 = vshrl.u32 %v226, 16
      %v340 = vrot.slane %v338, 4
      %v341 = vshll.u32 %v226, 16
      %v343 = vrot.slane %v341, 5
      %v344 = vor.u32 %v340, %v343
      %v345 = vrot.slane %v344, 4
      %v347 = vshll.u32 %v227, 16
      %v349 = vrot.slane %v347, 5
      %v350 = vsel %vm288, %v345, %v349
      %v351 = vshrl.u32 %v227, 16
      %v353 = vrot.slane %v351, 4
      %v354 = vor.u32 %v353, %v349
      %v355 = vrot.slane %v354, 4
      %v357 = vshll.u32 %v272, 16
      %v359 = vrot.slane %v357, 5
      %v360 = vsel %vm288, %v355, %v359
      %v362 = vshrl.u32 %v228, 16
      %v364 = vrot.slane %v362, 4
      %v365 = vshll.u32 %v228, 16
      %v367 = vrot.slane %v365, 5
      %v368 = vor.u32 %v364, %v367
      %v369 = vrot.slane %v368, 4
      %v371 = vshll.u32 %v229, 16
      %v373 = vrot.slane %v371, 5
      %v374 = vsel %vm288, %v369, %v373
      %v375 = vshrl.u32 %v229, 16
      %v377 = vrot.slane %v375, 4
      %v378 = vor.u32 %v377, %v373
      %v379 = vrot.slane %v378, 4
      %v381 = vshll.u32 %v273, 16
      %v383 = vrot.slane %v381, 5
      %v384 = vsel %vm288, %v379, %v383
      %v386 = vshrl.u32 %v230, 16
      %v388 = vrot.slane %v386, 4
      %v389 = vshll.u32 %v230, 16
      %v391 = vrot.slane %v389, 5
      %v392 = vor.u32 %v388, %v391
      %v393 = vrot.slane %v392, 4
      %v395 = vshll.u32 %v231, 16
      %v397 = vrot.slane %v395, 5
      %v398 = vsel %vm288, %v393, %v397
      %v399 = vshrl.u32 %v231, 16
      %v401 = vrot.slane %v399, 4
      %v402 = vor.u32 %v401, %v397
      %v403 = vrot.slane %v402, 4
      %v405 = vshll.u32 %v274, 16
      %v407 = vrot.slane %v405, 5
      %v408 = vsel %vm288, %v403, %v407
      %v410 = vshrl.u32 %v232, 16
      %v412 = vrot.slane %v410, 4
      %v413 = vshll.u32 %v232, 16
      %v415 = vrot.slane %v413, 5
      %v416 = vor.u32 %v412, %v415
      %v417 = vrot.slane %v416, 4
      %v419 = vshll.u32 %v233, 16
      %v421 = vrot.slane %v419, 5
      %v422 = vsel %vm288, %v417, %v421
      %v423 = vshrl.u32 %v233, 16
      %v425 = vrot.slane %v423, 4
      %v426 = vor.u32 %v425, %v421
      %v427 = vrot.slane %v426, 4
      %v429 = vshll.u32 %v275, 16
      %v431 = vrot.slane %v429, 5
      %v432 = vsel %vm288, %v427, %v431
      %v434 = vshrl.u32 %v234, 16
      %v436 = vrot.slane %v434, 4
      %v437 = vshll.u32 %v234, 16
      %v439 = vrot.slane %v437, 5
      %v440 = vor.u32 %v436, %v439
      %v441 = vrot.slane %v440, 4
      %v443 = vshll.u32 %v235, 16
      %v445 = vrot.slane %v443, 5
      %v446 = vsel %vm288, %v441, %v445
      %v447 = vshrl.u32 %v235, 16
      %v449 = vrot.slane %v447, 4
      %v450 = vor.u32 %v449, %v445
      %v451 = vrot.slane %v450, 4
      %v453 = vshll.u32 %v276, 16
      %v455 = vrot.slane %v453, 5
      %v456 = vsel %vm288, %v451, %v455
      %v458 = vshrl.u32 %v236, 16
      %v460 = vrot.slane %v458, 4
      %v461 = vshll.u32 %v236, 16
      %v463 = vrot.slane %v461, 5
      %v464 = vor.u32 %v460, %v463
      %v465 = vrot.slane %v464, 4
      %v467 = vshll.u32 %v237, 16
      %v469 = vrot.slane %v467, 5
      %v470 = vsel %vm288, %v465, %v469
      %v471 = vshrl.u32 %v237, 16
      %v473 = vrot.slane %v471, 4
      %v474 = vor.u32 %v473, %v469
      %v475 = vrot.slane %v474, 4
      %v477 = vshll.u32 %v277, 16
      %v479 = vrot.slane %v477, 5
      %v480 = vsel %vm288, %v475, %v479
      %v482 = vshrl.u32 %v238, 16
      %v484 = vrot.slane %v482, 4
      %v485 = vshll.u32 %v238, 16
      %v487 = vrot.slane %v485, 5
      %v488 = vor.u32 %v484, %v487
      %v489 = vrot.slane %v488, 4
      %v491 = vshll.u32 %v239, 16
      %v493 = vrot.slane %v491, 5
      %v494 = vsel %vm288, %v489, %v493
      %v495 = vshrl.u32 %v239, 16
      %v497 = vrot.slane %v495, 4
      %v498 = vor.u32 %v497, %v493
      %v499 = vrot.slane %v498, 4
      %v501 = vshll.u32 %v278, 16
      %v503 = vrot.slane %v501, 5
      %v504 = vsel %vm288, %v499, %v503
      %v506 = vshrl.u32 %v240, 16
      %v508 = vrot.slane %v506, 4
      %v509 = vshll.u32 %v240, 16
      %v511 = vrot.slane %v509, 5
      %v512 = vor.u32 %v508, %v511
      %v513 = vrot.slane %v512, 4
      %v515 = vshll.u32 %v241, 16
      %v517 = vrot.slane %v515, 5
      %v518 = vsel %vm288, %v513, %v517
      %v519 = vshrl.u32 %v241, 16
      %v521 = vrot.slane %v519, 4
      %v522 = vor.u32 %v521, %v517
      %v523 = vrot.slane %v522, 4
      %v525 = vshll.u32 %v279, 16
      %v527 = vrot.slane %v525, 5
      %v528 = vsel %vm288, %v523, %v527
      %v530 = vshrl.u32 %v242, 16
      %v532 = vrot.slane %v530, 4
      %v533 = vshll.u32 %v242, 16
      %v535 = vrot.slane %v533, 5
      %v536 = vor.u32 %v532, %v535
      %v537 = vrot.slane %v536, 4
      %v539 = vshll.u32 %v243, 16
      %v541 = vrot.slane %v539, 5
      %v542 = vsel %vm288, %v537, %v541
      %v543 = vshrl.u32 %v243, 16
      %v545 = vrot.slane %v543, 4
      %v546 = vor.u32 %v545, %v541
      %v547 = vrot.slane %v546, 4
      %v549 = vshll.u32 %v280, 16
      %v551 = vrot.slane %v549, 5
      %v552 = vsel %vm288, %v547, %v551
      %v554 = vshrl.u32 %v244, 16
      %v556 = vrot.slane %v554, 4
      %v557 = vshll.u32 %v244, 16
      %v559 = vrot.slane %v557, 5
      %v560 = vor.u32 %v556, %v559
      %v561 = vrot.slane %v560, 4
      %v563 = vshll.u32 %v245, 16
      %v565 = vrot.slane %v563, 5
      %v566 = vsel %vm288, %v561, %v565
      %v567 = vshrl.u32 %v245, 16
      %v569 = vrot.slane %v567, 4
      %v570 = vor.u32 %v569, %v565
      %v571 = vrot.slane %v570, 4
      %v573 = vshll.u32 %v281, 16
      %v575 = vrot.slane %v573, 5
      %v576 = vsel %vm288, %v571, %v575
      %v578 = vshrl.u32 %v246, 16
      %v580 = vrot.slane %v578, 4
      %v581 = vshll.u32 %v246, 16
      %v583 = vrot.slane %v581, 5
      %v584 = vor.u32 %v580, %v583
      %v585 = vrot.slane %v584, 4
      %v587 = vshll.u32 %v247, 16
      %v589 = vrot.slane %v587, 5
      %v590 = vsel %vm288, %v585, %v589
      %v591 = vshrl.u32 %v247, 16
      %v593 = vrot.slane %v591, 4
      %v594 = vor.u32 %v593, %v589
      %v595 = vrot.slane %v594, 4
      %v597 = vshll.u32 %v282, 16
      %v599 = vrot.slane %v597, 5
      %v600 = vsel %vm288, %v595, %v599
      %v602 = vshrl.u32 %v248, 16
      %v604 = vrot.slane %v602, 4
      %v605 = vshll.u32 %v248, 16
      %v607 = vrot.slane %v605, 5
      %v608 = vor.u32 %v604, %v607
      %v609 = vrot.slane %v608, 4
      %v611 = vshll.u32 %v249, 16
      %v613 = vrot.slane %v611, 5
      %v614 = vsel %vm288, %v609, %v613
      %v615 = vshrl.u32 %v249, 16
      %v617 = vrot.slane %v615, 4
      %v618 = vor.u32 %v617, %v613
      %v619 = vrot.slane %v618, 4
      %v621 = vshll.u32 %v283, 16
      %v623 = vrot.slane %v621, 5
      %v624 = vsel %vm288, %v619, %v623
      %v626 = vshrl.u32 %v250, 16
      %v628 = vrot.slane %v626, 4
      %v629 = vshll.u32 %v250, 16
      %v631 = vrot.slane %v629, 5
      %v632 = vor.u32 %v628, %v631
      %v633 = vrot.slane %v632, 4
      %v635 = vshll.u32 %v251, 16
      %v637 = vrot.slane %v635, 5
      %v638 = vsel %vm288, %v633, %v637
      %v639 = vshrl.u32 %v251, 16
      %v641 = vrot.slane %v639, 4
      %v642 = vor.u32 %v641, %v637
      %v643 = vrot.slane %v642, 4
      %v645 = vshll.u32 %v284, 16
      %v647 = vrot.slane %v645, 5
      %v648 = vsel %vm288, %v643, %v647
      %v650 = vshrl.u32 %v252, 16
      %v652 = vrot.slane %v650, 4
      %v653 = vshll.u32 %v252, 16
      %v655 = vrot.slane %v653, 5
      %v656 = vor.u32 %v652, %v655
      %v657 = vrot.slane %v656, 4
      %v659 = vshll.u32 %v253, 16
      %v661 = vrot.slane %v659, 5
      %v662 = vsel %vm288, %v657, %v661
      %v663 = vshrl.u32 %v253, 16
      %v665 = vrot.slane %v663, 4
      %v666 = vor.u32 %v665, %v661
      %v667 = vrot.slane %v666, 4
      %v669 = vshll.u32 %v285, 16
      %v671 = vrot.slane %v669, 5
      %v672 = vsel %vm288, %v667, %v671
      %s673 = scalar_lea.vmem %s1, 64
      %v674 = vld [vmem:[%s673] sm:$0xf]
      %v675 = vld [vmem:[%s673 + $0x4] sm:$0xf]
      %v676 = vld [vmem:[%s673 + $0x8] sm:$0xf]
      %v677 = vld [vmem:[%s673 + $0xc] sm:$0xf]
      %v678 = vld [vmem:[%s673 + $0x10] sm:$0xf]
      %v679 = vld [vmem:[%s673 + $0x14] sm:$0xf]
      %v680 = vld [vmem:[%s673 + $0x18] sm:$0xf]
      %v681 = vld [vmem:[%s673 + $0x1c] sm:$0xf]
      %v682 = vld [vmem:[%s673 + $0x20] sm:$0xf]
      %v683 = vld [vmem:[%s673 + $0x24] sm:$0xf]
      %v684 = vld [vmem:[%s673 + $0x28] sm:$0xf]
      %v685 = vld [vmem:[%s673 + $0x2c] sm:$0xf]
      %v686 = vld [vmem:[%s673 + $0x30] sm:$0xf]
      %v687 = vld [vmem:[%s673 + $0x34] sm:$0xf]
      %v688 = vld [vmem:[%s673 + $0x38] sm:$0xf]
      %v689 = vld [vmem:[%s673 + $0x3c] sm:$0xf]
      %v690 = vunpack.c.l.b16 %v302
      %v691 = vunpack.c.l.b16 %v312
      %v692 = vunpack.c.l.b16 %v326
      %v693 = vunpack.c.l.b16 %v336
      %v694 = vunpack.c.l.b16 %v350
      %v695 = vunpack.c.l.b16 %v360
      %v696 = vunpack.c.l.b16 %v374
      %v697 = vunpack.c.l.b16 %v384
      %v698 = vunpack.c.l.b16 %v398
      %v699 = vunpack.c.l.b16 %v408
      %v700 = vunpack.c.l.b16 %v422
      %v701 = vunpack.c.l.b16 %v432
      %v702 = vunpack.c.l.b16 %v446
      %v703 = vunpack.c.l.b16 %v456
      %v704 = vunpack.c.l.b16 %v470
      %v705 = vunpack.c.l.b16 %v480
      %v706 = vunpack.c.l.b16 %v494
      %v707 = vunpack.c.l.b16 %v504
      %v708 = vunpack.c.l.b16 %v518
      %v709 = vunpack.c.l.b16 %v528
      %v710 = vunpack.c.l.b16 %v542
      %v711 = vunpack.c.l.b16 %v552
      %v712 = vunpack.c.l.b16 %v566
      %v713 = vunpack.c.l.b16 %v576
      %v714 = vunpack.c.l.b16 %v590
      %v715 = vunpack.c.l.b16 %v600
      %v716 = vunpack.c.l.b16 %v614
      %v717 = vunpack.c.l.b16 %v624
      %v718 = vunpack.c.l.b16 %v638
      %v719 = vunpack.c.l.b16 %v648
      %v720 = vunpack.c.l.b16 %v662
      %v721 = vunpack.c.l.b16 %v672
      %v722 = vpack.c.b16 %v691, %v690
      %v723 = vpack.c.b16 %v693, %v692
      %v724 = vpack.c.b16 %v695, %v694
      %v725 = vpack.c.b16 %v697, %v696
      %v726 = vpack.c.b16 %v699, %v698
      %v727 = vpack.c.b16 %v701, %v700
      %v728 = vpack.c.b16 %v703, %v702
      %v729 = vpack.c.b16 %v705, %v704
      %v730 = vpack.c.b16 %v707, %v706
      %v731 = vpack.c.b16 %v709, %v708
      %v732 = vpack.c.b16 %v711, %v710
      %v733 = vpack.c.b16 %v713, %v712
      %v734 = vpack.c.b16 %v715, %v714
      %v735 = vpack.c.b16 %v717, %v716
      %v736 = vpack.c.b16 %v719, %v718
      %v737 = vpack.c.b16 %v721, %v720
      %v770 = vunpack.c.l.b16 %v674
      %v771 = vunpack.c.l.b16 %v675
      %v772 = vunpack.c.l.b16 %v676
      %v773 = vunpack.c.l.b16 %v677
      %v774 = vunpack.c.l.b16 %v678
      %v775 = vunpack.c.l.b16 %v679
      %v776 = vunpack.c.l.b16 %v680
      %v777 = vunpack.c.l.b16 %v681
      %v778 = vunpack.c.l.b16 %v682
      %v779 = vunpack.c.l.b16 %v683
      %v780 = vunpack.c.l.b16 %v684
      %v781 = vunpack.c.l.b16 %v685
      %v782 = vunpack.c.l.b16 %v686
      %v783 = vunpack.c.l.b16 %v687
      %v784 = vunpack.c.l.b16 %v688
      %v785 = vunpack.c.l.b16 %v689
      %v786 = vpack.c.b16 %v771, %v770
      %v787 = vpack.c.b16 %v773, %v772
      %v788 = vpack.c.b16 %v775, %v774
      %v789 = vpack.c.b16 %v777, %v776
      %v790 = vpack.c.b16 %v779, %v778
      %v791 = vpack.c.b16 %v781, %v780
      %v792 = vpack.c.b16 %v783, %v782
      %v793 = vpack.c.b16 %v785, %v784
      %802 = vmatprep.subr.bf16.mxu0 0
      %803 = vmatpush1.bf16.msra.mxu0 %v786
      %804 = vmatprep.subr.bf16.mxu0 0
      %805 = vmatpush1.bf16.msra.mxu0 %v787
      %806 = vmatprep.subr.bf16.mxu0 0
      %807 = vmatpush1.bf16.msra.mxu0 %v788
      %808 = vmatprep.subr.bf16.mxu0 0
      %809 = vmatpush1.bf16.msra.mxu0 %v789
      %810 = vmatprep.subr.bf16.mxu0 0
      %811 = vmatpush1.bf16.msra.mxu0 %v790
      %812 = vmatprep.subr.bf16.mxu0 0
      %813 = vmatpush1.bf16.msra.mxu0 %v791
      %814 = vmatprep.subr.bf16.mxu0 0
      %815 = vmatpush1.bf16.msra.mxu0 %v792
      %816 = vmatprep.subr.bf16.mxu0 0
      %817 = vmatpush1.bf16.msra.mxu0 %v793
      %818 = vmatprep.subr.bf16.mxu0 0
      %819 = vmatpush1.bf16.msra.mxu0 0
      %820 = vmatprep.subr.bf16.mxu0 0
      %821 = vmatpush1.bf16.msra.mxu0 0
      %822 = vmatprep.subr.bf16.mxu0 0
      %823 = vmatpush1.bf16.msra.mxu0 0
      %824 = vmatprep.subr.bf16.mxu0 0
      %825 = vmatpush1.bf16.msra.mxu0 0
      %826 = vmatprep.subr.bf16.mxu0 0
      %827 = vmatpush1.bf16.msra.mxu0 0
      %828 = vmatprep.subr.bf16.mxu0 0
      %829 = vmatpush1.bf16.msra.mxu0 0
      %830 = vmatprep.subr.bf16.mxu0 0
      %831 = vmatpush1.bf16.msra.mxu0 0
      %832 = vmatprep.subr.bf16.mxu0 0
      %833 = vmatpush1.bf16.msra.mxu0 0
      %834 = vmatprep.mubr.bf16.mxu0 0
      %835 = vmatmul.mubr.bf16.gmra.mrb[0].mxu0 %v722
      %v836 = vpop.f32.mrb[0].mxu0
      %v837 = vadd.f32 0.0, %v836
      %v838 = vpop.f32.mrb[0].mxu0
      %v839 = vpop.f32.mrb[0].mxu0
      %v840 = vadd.f32 0.0, %v839
      %v841 = vpop.f32.mrb[0].mxu0
      %842 = vmatprep.mubr.bf16.mxu0 0
      %843 = vmatmul.mubr.bf16.gmra.mrb[0].mxu0 %v723
      %v844 = vpop.f32.mrb[0].mxu0
      %v845 = vadd.f32 0.0, %v844
      %v846 = vpop.f32.mrb[0].mxu0
      %v847 = vpop.f32.mrb[0].mxu0
      %v848 = vadd.f32 0.0, %v847
      %v849 = vpop.f32.mrb[0].mxu0
      %850 = vmatprep.mubr.bf16.mxu0 0
      %851 = vmatmul.mubr.bf16.gmra.mrb[0].mxu0 %v724
      %v852 = vpop.f32.mrb[0].mxu0
      %v853 = vadd.f32 0.0, %v852
      %v854 = vpop.f32.mrb[0].mxu0
      %v855 = vpop.f32.mrb[0].mxu0
      %v856 = vadd.f32 0.0, %v855
      %v857 = vpop.f32.mrb[0].mxu0
      %858 = vmatprep.mubr.bf16.mxu0 0
      %859 = vmatmul.mubr.bf16.gmra.mrb[0].mxu0 %v725
      %v860 = vpop.f32.mrb[0].mxu0
      %v861 = vadd.f32 0.0, %v860
      %v862 = vpop.f32.mrb[0].mxu0
      %v863 = vpop.f32.mrb[0].mxu0
      %v864 = vadd.f32 0.0, %v863
      %v865 = vpop.f32.mrb[0].mxu0
      %866 = vmatprep.mubr.bf16.mxu0 0
      %867 = vmatmul.mubr.bf16.gmra.mrb[0].mxu0 %v726
      %v868 = vpop.f32.mrb[0].mxu0
      %v869 = vadd.f32 0.0, %v868
      %v870 = vpop.f32.mrb[0].mxu0
      %v871 = vpop.f32.mrb[0].mxu0
      %v872 = vadd.f32 0.0, %v871
      %v873 = vpop.f32.mrb[0].mxu0
      %874 = vmatprep.mubr.bf16.mxu0 0
      %875 = vmatmul.mubr.bf16.gmra.mrb[0].mxu0 %v727
      %v876 = vpop.f32.mrb[0].mxu0
      %v877 = vadd.f32 0.0, %v876
      %v878 = vpop.f32.mrb[0].mxu0
      %v879 = vpop.f32.mrb[0].mxu0
      %v880 = vadd.f32 0.0, %v879
      %v881 = vpop.f32.mrb[0].mxu0
      %882 = vmatprep.mubr.bf16.mxu0 0
      %883 = vmatmul.mubr.bf16.gmra.mrb[0].mxu0 %v728
      %v884 = vpop.f32.mrb[0].mxu0
      %v885 = vadd.f32 0.0, %v884
      %v886 = vpop.f32.mrb[0].mxu0
      %v887 = vpop.f32.mrb[0].mxu0
      %v888 = vadd.f32 0.0, %v887
      %v889 = vpop.f32.mrb[0].mxu0
      %890 = vmatprep.mubr.bf16.mxu0 0
      %891 = vmatmul.mubr.bf16.gmra.mrb[0].mxu0 %v729
      %v892 = vpop.f32.mrb[0].mxu0
      %v893 = vadd.f32 0.0, %v892
      %v894 = vpop.f32.mrb[0].mxu0
      %v895 = vpop.f32.mrb[0].mxu0
      %v896 = vadd.f32 0.0, %v895
      %v897 = vpop.f32.mrb[0].mxu0
      %898 = vmatprep.mubr.bf16.mxu0 0
      %899 = vmatmul.mubr.bf16.gmra.mrb[0].mxu0 %v730
      %v900 = vpop.f32.mrb[0].mxu0
      %v901 = vadd.f32 0.0, %v900
      %v902 = vpop.f32.mrb[0].mxu0
      %v903 = vpop.f32.mrb[0].mxu0
      %v904 = vadd.f32 0.0, %v903
      %v905 = vpop.f32.mrb[0].mxu0
      %906 = vmatprep.mubr.bf16.mxu0 0
      %907 = vmatmul.mubr.bf16.gmra.mrb[0].mxu0 %v731
      %v908 = vpop.f32.mrb[0].mxu0
      %v909 = vadd.f32 0.0, %v908
      %v910 = vpop.f32.mrb[0].mxu0
      %v911 = vpop.f32.mrb[0].mxu0
      %v912 = vadd.f32 0.0, %v911
      %v913 = vpop.f32.mrb[0].mxu0
      %914 = vmatprep.mubr.bf16.mxu0 0
      %915 = vmatmul.mubr.bf16.gmra.mrb[0].mxu0 %v732
      %v916 = vpop.f32.mrb[0].mxu0
      %v917 = vadd.f32 0.0, %v916
      %v918 = vpop.f32.mrb[0].mxu0
      %v919 = vpop.f32.mrb[0].mxu0
      %v920 = vadd.f32 0.0, %v919
      %v921 = vpop.f32.mrb[0].mxu0
      %922 = vmatprep.mubr.bf16.mxu0 0
      %923 = vmatmul.mubr.bf16.gmra.mrb[0].mxu0 %v733
      %v924 = vpop.f32.mrb[0].mxu0
      %v925 = vadd.f32 0.0, %v924
      %v926 = vpop.f32.mrb[0].mxu0
      %v927 = vpop.f32.mrb[0].mxu0
      %v928 = vadd.f32 0.0, %v927
      %v929 = vpop.f32.mrb[0].mxu0
      %930 = vmatprep.mubr.bf16.mxu0 0
      %931 = vmatmul.mubr.bf16.gmra.mrb[0].mxu0 %v734
      %v932 = vpop.f32.mrb[0].mxu0
      %v933 = vadd.f32 0.0, %v932
      %v934 = vpop.f32.mrb[0].mxu0
      %v935 = vpop.f32.mrb[0].mxu0
      %v936 = vadd.f32 0.0, %v935
      %v937 = vpop.f32.mrb[0].mxu0
      %938 = vmatprep.mubr.bf16.mxu0 0
      %939 = vmatmul.mubr.bf16.gmra.mrb[0].mxu0 %v735
      %v940 = vpop.f32.mrb[0].mxu0
      %v941 = vadd.f32 0.0, %v940
      %v942 = vpop.f32.mrb[0].mxu0
      %v943 = vpop.f32.mrb[0].mxu0
      %v944 = vadd.f32 0.0, %v943
      %v945 = vpop.f32.mrb[0].mxu0
      %946 = vmatprep.mubr.bf16.mxu0 0
      %947 = vmatmul.mubr.bf16.gmra.mrb[0].mxu0 %v736
      %v948 = vpop.f32.mrb[0].mxu0
      %v949 = vadd.f32 0.0, %v948
      %v950 = vpop.f32.mrb[0].mxu0
      %v951 = vpop.f32.mrb[0].mxu0
      %v952 = vadd.f32 0.0, %v951
      %v953 = vpop.f32.mrb[0].mxu0
      %954 = vmatprep.mubr.bf16.mxu0 0
      %955 = vmatmul.mubr.bf16.gmra.mrb[0].mxu0 %v737
      %v956 = vpop.f32.mrb[0].mxu0
      %v957 = vadd.f32 0.0, %v956
      %v958 = vpop.f32.mrb[0].mxu0
      %v959 = vpop.f32.mrb[0].mxu0
      %v960 = vadd.f32 0.0, %v959
      %v961 = vpop.f32.mrb[0].mxu0
      %962 = vdwg.mxu0
      %v995 = vunpack.c.l.b16 %v222
      %v996 = vunpack.c.l.b16 %v223
      %v997 = vunpack.c.l.b16 %v224
      %v998 = vunpack.c.l.b16 %v225
      %v999 = vunpack.c.l.b16 %v226
      %v1000 = vunpack.c.l.b16 %v227
      %v1001 = vunpack.c.l.b16 %v228
      %v1002 = vunpack.c.l.b16 %v229
      %v1003 = vunpack.c.l.b16 %v230
      %v1004 = vunpack.c.l.b16 %v231
      %v1005 = vunpack.c.l.b16 %v232
      %v1006 = vunpack.c.l.b16 %v233
      %v1007 = vunpack.c.l.b16 %v234
      %v1008 = vunpack.c.l.b16 %v235
      %v1009 = vunpack.c.l.b16 %v236
      %v1010 = vunpack.c.l.b16 %v237
      %v1011 = vunpack.c.l.b16 %v238
      %v1012 = vunpack.c.l.b16 %v239
      %v1013 = vunpack.c.l.b16 %v240
      %v1014 = vunpack.c.l.b16 %v241
      %v1015 = vunpack.c.l.b16 %v242
      %v1016 = vunpack.c.l.b16 %v243
      %v1017 = vunpack.c.l.b16 %v244
      %v1018 = vunpack.c.l.b16 %v245
      %v1019 = vunpack.c.l.b16 %v246
      %v1020 = vunpack.c.l.b16 %v247
      %v1021 = vunpack.c.l.b16 %v248
      %v1022 = vunpack.c.l.b16 %v249
      %v1023 = vunpack.c.l.b16 %v250
      %v1024 = vunpack.c.l.b16 %v251
      %v1025 = vunpack.c.l.b16 %v252
      %v1026 = vunpack.c.l.b16 %v253
      %v1027 = vpack.c.b16 %v996, %v995
      %v1028 = vpack.c.b16 %v998, %v997
      %v1029 = vpack.c.b16 %v1000, %v999
      %v1030 = vpack.c.b16 %v1002, %v1001
      %v1031 = vpack.c.b16 %v1004, %v1003
      %v1032 = vpack.c.b16 %v1006, %v1005
      %v1033 = vpack.c.b16 %v1008, %v1007
      %v1034 = vpack.c.b16 %v1010, %v1009
      %v1035 = vpack.c.b16 %v1012, %v1011
      %v1036 = vpack.c.b16 %v1014, %v1013
      %v1037 = vpack.c.b16 %v1016, %v1015
      %v1038 = vpack.c.b16 %v1018, %v1017
      %v1039 = vpack.c.b16 %v1020, %v1019
      %v1040 = vpack.c.b16 %v1022, %v1021
      %v1041 = vpack.c.b16 %v1024, %v1023
      %v1042 = vpack.c.b16 %v1026, %v1025
      %v1075 = vunpack.c.l.b16 %v254
      %v1076 = vunpack.c.l.b16 %v255
      %v1077 = vunpack.c.l.b16 %v256
      %v1078 = vunpack.c.l.b16 %v257
      %v1079 = vunpack.c.l.b16 %v258
      %v1080 = vunpack.c.l.b16 %v259
      %v1081 = vunpack.c.l.b16 %v260
      %v1082 = vunpack.c.l.b16 %v261
      %v1083 = vunpack.c.l.b16 %v262
      %v1084 = vunpack.c.l.b16 %v263
      %v1085 = vunpack.c.l.b16 %v264
      %v1086 = vunpack.c.l.b16 %v265
      %v1087 = vunpack.c.l.b16 %v266
      %v1088 = vunpack.c.l.b16 %v267
      %v1089 = vunpack.c.l.b16 %v268
      %v1090 = vunpack.c.l.b16 %v269
      %v1091 = vpack.c.b16 %v1076, %v1075
      %v1092 = vpack.c.b16 %v1078, %v1077
      %v1093 = vpack.c.b16 %v1080, %v1079
      %v1094 = vpack.c.b16 %v1082, %v1081
      %v1095 = vpack.c.b16 %v1084, %v1083
      %v1096 = vpack.c.b16 %v1086, %v1085
      %v1097 = vpack.c.b16 %v1088, %v1087
      %v1098 = vpack.c.b16 %v1090, %v1089
      %1107 = vmatprep.subr.bf16.mxu0 0
      %1108 = vmatpush1.bf16.msra.mxu0 %v1091
      %1109 = vmatprep.subr.bf16.mxu0 0
      %1110 = vmatpush1.bf16.msra.mxu0 %v1092
      %1111 = vmatprep.subr.bf16.mxu0 0
      %1112 = vmatpush1.bf16.msra.mxu0 %v1093
      %1113 = vmatprep.subr.bf16.mxu0 0
      %1114 = vmatpush1.bf16.msra.mxu0 %v1094
      %1115 = vmatprep.subr.bf16.mxu0 0
      %1116 = vmatpush1.bf16.msra.mxu0 %v1095
      %1117 = vmatprep.subr.bf16.mxu0 0
      %1118 = vmatpush1.bf16.msra.mxu0 %v1096
      %1119 = vmatprep.subr.bf16.mxu0 0
      %1120 = vmatpush1.bf16.msra.mxu0 %v1097
      %1121 = vmatprep.subr.bf16.mxu0 0
      %1122 = vmatpush1.bf16.msra.mxu0 %v1098
      %1123 = vmatprep.subr.bf16.mxu0 0
      %1124 = vmatpush1.bf16.msra.mxu0 0
      %1125 = vmatprep.subr.bf16.mxu0 0
      %1126 = vmatpush1.bf16.msra.mxu0 0
      %1127 = vmatprep.subr.bf16.mxu0 0
      %1128 = vmatpush1.bf16.msra.mxu0 0
      %1129 = vmatprep.subr.bf16.mxu0 0
      %1130 = vmatpush1.bf16.msra.mxu0 0
      %1131 = vmatprep.subr.bf16.mxu0 0
      %1132 = vmatpush1.bf16.msra.mxu0 0
      %1133 = vmatprep.subr.bf16.mxu0 0
      %1134 = vmatpush1.bf16.msra.mxu0 0
      %1135 = vmatprep.subr.bf16.mxu0 0
      %1136 = vmatpush1.bf16.msra.mxu0 0
      %1137 = vmatprep.subr.bf16.mxu0 0
      %1138 = vmatpush1.bf16.msra.mxu0 0
      %1139 = vmatprep.mubr.bf16.mxu0 0
      %1140 = vmatmul.mubr.bf16.gmra.mrb[0].mxu0 %v1027
      %v1141 = vpop.f32.mrb[0].mxu0
      %v1142 = vadd.f32 %v837, %v1141
      %v1143 = vpop.f32.mrb[0].mxu0
      %v1144 = vpop.f32.mrb[0].mxu0
      %v1145 = vadd.f32 %v840, %v1144
      %v1146 = vpop.f32.mrb[0].mxu0
      %1147 = vmatprep.mubr.bf16.mxu0 0
      %1148 = vmatmul.mubr.bf16.gmra.mrb[0].mxu0 %v1028
      %v1149 = vpop.f32.mrb[0].mxu0
      %v1150 = vadd.f32 %v845, %v1149
      %v1151 = vpop.f32.mrb[0].mxu0
      %v1152 = vpop.f32.mrb[0].mxu0
      %v1153 = vadd.f32 %v848, %v1152
      %v1154 = vpop.f32.mrb[0].mxu0
      %1155 = vmatprep.mubr.bf16.mxu0 0
      %1156 = vmatmul.mubr.bf16.gmra.mrb[0].mxu0 %v1029
      %v1157 = vpop.f32.mrb[0].mxu0
      %v1158 = vadd.f32 %v853, %v1157
      %v1159 = vpop.f32.mrb[0].mxu0
      %v1160 = vpop.f32.mrb[0].mxu0
      %v1161 = vadd.f32 %v856, %v1160
      %v1162 = vpop.f32.mrb[0].mxu0
      %1163 = vmatprep.mubr.bf16.mxu0 0
      %1164 = vmatmul.mubr.bf16.gmra.mrb[0].mxu0 %v1030
      %v1165 = vpop.f32.mrb[0].mxu0
      %v1166 = vadd.f32 %v861, %v1165
      %v1167 = vpop.f32.mrb[0].mxu0
      %v1168 = vpop.f32.mrb[0].mxu0
      %v1169 = vadd.f32 %v864, %v1168
      %v1170 = vpop.f32.mrb[0].mxu0
      %1171 = vmatprep.mubr.bf16.mxu0 0
      %1172 = vmatmul.mubr.bf16.gmra.mrb[0].mxu0 %v1031
      %v1173 = vpop.f32.mrb[0].mxu0
      %v1174 = vadd.f32 %v869, %v1173
      %v1175 = vpop.f32.mrb[0].mxu0
      %v1176 = vpop.f32.mrb[0].mxu0
      %v1177 = vadd.f32 %v872, %v1176
      %v1178 = vpop.f32.mrb[0].mxu0
      %1179 = vmatprep.mubr.bf16.mxu0 0
      %1180 = vmatmul.mubr.bf16.gmra.mrb[0].mxu0 %v1032
      %v1181 = vpop.f32.mrb[0].mxu0
      %v1182 = vadd.f32 %v877, %v1181
      %v1183 = vpop.f32.mrb[0].mxu0
      %v1184 = vpop.f32.mrb[0].mxu0
      %v1185 = vadd.f32 %v880, %v1184
      %v1186 = vpop.f32.mrb[0].mxu0
      %1187 = vmatprep.mubr.bf16.mxu0 0
      %1188 = vmatmul.mubr.bf16.gmra.mrb[0].mxu0 %v1033
      %v1189 = vpop.f32.mrb[0].mxu0
      %v1190 = vadd.f32 %v885, %v1189
      %v1191 = vpop.f32.mrb[0].mxu0
      %v1192 = vpop.f32.mrb[0].mxu0
      %v1193 = vadd.f32 %v888, %v1192
      %v1194 = vpop.f32.mrb[0].mxu0
      %1195 = vmatprep.mubr.bf16.mxu0 0
      %1196 = vmatmul.mubr.bf16.gmra.mrb[0].mxu0 %v1034
      %v1197 = vpop.f32.mrb[0].mxu0
      %v1198 = vadd.f32 %v893, %v1197
      %v1199 = vpop.f32.mrb[0].mxu0
      %v1200 = vpop.f32.mrb[0].mxu0
      %v1201 = vadd.f32 %v896, %v1200
      %v1202 = vpop.f32.mrb[0].mxu0
      %1203 = vmatprep.mubr.bf16.mxu0 0
      %1204 = vmatmul.mubr.bf16.gmra.mrb[0].mxu0 %v1035
      %v1205 = vpop.f32.mrb[0].mxu0
      %v1206 = vadd.f32 %v901, %v1205
      %v1207 = vpop.f32.mrb[0].mxu0
      %v1208 = vpop.f32.mrb[0].mxu0
      %v1209 = vadd.f32 %v904, %v1208
      %v1210 = vpop.f32.mrb[0].mxu0
      %1211 = vmatprep.mubr.bf16.mxu0 0
      %1212 = vmatmul.mubr.bf16.gmra.mrb[0].mxu0 %v1036
      %v1213 = vpop.f32.mrb[0].mxu0
      %v1214 = vadd.f32 %v909, %v1213
      %v1215 = vpop.f32.mrb[0].mxu0
      %v1216 = vpop.f32.mrb[0].mxu0
      %v1217 = vadd.f32 %v912, %v1216
      %v1218 = vpop.f32.mrb[0].mxu0
      %1219 = vmatprep.mubr.bf16.mxu0 0
      %1220 = vmatmul.mubr.bf16.gmra.mrb[0].mxu0 %v1037
      %v1221 = vpop.f32.mrb[0].mxu0
      %v1222 = vadd.f32 %v917, %v1221
      %v1223 = vpop.f32.mrb[0].mxu0
      %v1224 = vpop.f32.mrb[0].mxu0
      %v1225 = vadd.f32 %v920, %v1224
      %v1226 = vpop.f32.mrb[0].mxu0
      %1227 = vmatprep.mubr.bf16.mxu0 0
      %1228 = vmatmul.mubr.bf16.gmra.mrb[0].mxu0 %v1038
      %v1229 = vpop.f32.mrb[0].mxu0
      %v1230 = vadd.f32 %v925, %v1229
      %v1231 = vpop.f32.mrb[0].mxu0
      %v1232 = vpop.f32.mrb[0].mxu0
      %v1233 = vadd.f32 %v928, %v1232
      %v1234 = vpop.f32.mrb[0].mxu0
      %1235 = vmatprep.mubr.bf16.mxu0 0
      %1236 = vmatmul.mubr.bf16.gmra.mrb[0].mxu0 %v1039
      %v1237 = vpop.f32.mrb[0].mxu0
      %v1238 = vadd.f32 %v933, %v1237
      %v1239 = vpop.f32.mrb[0].mxu0
      %v1240 = vpop.f32.mrb[0].mxu0
      %v1241 = vadd.f32 %v936, %v1240
      %v1242 = vpop.f32.mrb[0].mxu0
      %1243 = vmatprep.mubr.bf16.mxu0 0
      %1244 = vmatmul.mubr.bf16.gmra.mrb[0].mxu0 %v1040
      %v1245 = vpop.f32.mrb[0].mxu0
      %v1246 = vadd.f32 %v941, %v1245
      %v1247 = vpop.f32.mrb[0].mxu0
      %v1248 = vpop.f32.mrb[0].mxu0
      %v1249 = vadd.f32 %v944, %v1248
      %v1250 = vpop.f32.mrb[0].mxu0
      %1251 = vmatprep.mubr.bf16.mxu0 0
      %1252 = vmatmul.mubr.bf16.gmra.mrb[0].mxu0 %v1041
      %v1253 = vpop.f32.mrb[0].mxu0
      %v1254 = vadd.f32 %v949, %v1253
      %v1255 = vpop.f32.mrb[0].mxu0
      %v1256 = vpop.f32.mrb[0].mxu0
      %v1257 = vadd.f32 %v952, %v1256
      %v1258 = vpop.f32.mrb[0].mxu0
      %1259 = vmatprep.mubr.bf16.mxu0 0
      %1260 = vmatmul.mubr.bf16.gmra.mrb[0].mxu0 %v1042
      %v1261 = vpop.f32.mrb[0].mxu0
      %v1262 = vadd.f32 %v957, %v1261
      %v1263 = vpop.f32.mrb[0].mxu0
      %v1264 = vpop.f32.mrb[0].mxu0
      %v1265 = vadd.f32 %v960, %v1264
      %v1266 = vpop.f32.mrb[0].mxu0
      %1267 = vdwg.mxu0
      %v1268 = vld [vmem:[%s208] sm:$0xe]
      %v1269 = vld [vmem:[%s208 + $0xc] sm:$0xe]
      %v1270 = vld [vmem:[%s208 + $0x18] sm:$0xe]
      %v1271 = vld [vmem:[%s208 + $0x24] sm:$0xe]
      %v1272 = vld [vmem:[%s208 + $0x30] sm:$0xe]
      %v1273 = vld [vmem:[%s208 + $0x3c] sm:$0xe]
      %v1274 = vld [vmem:[%s208 + $0x48] sm:$0xe]
      %v1275 = vld [vmem:[%s208 + $0x54] sm:$0xe]
      %v1276 = vld [vmem:[%s208 + $0x60] sm:$0xe]
      %v1277 = vld [vmem:[%s208 + $0x6c] sm:$0xe]
      %v1278 = vld [vmem:[%s208 + $0x78] sm:$0xe]
      %v1279 = vld [vmem:[%s208 + $0x84] sm:$0xe]
      %v1280 = vld [vmem:[%s208 + $0x90] sm:$0xe]
      %v1281 = vld [vmem:[%s208 + $0x9c] sm:$0xe]
      %v1282 = vld [vmem:[%s208 + $0xa8] sm:$0xe]
      %v1283 = vld [vmem:[%s208 + $0xb4] sm:$0xe]
      %vm1316 = vcmask 1042432
      %vm1317 = vcmask 1046532
      %vm1318 = vmor %vm1316, %vm1317
      %v1319 = vrot.slane %v1268, 5
      %v1320 = vrot.slane %v1319, 4
      %v1321 = vrot.slane %v223, 5
      %v1322 = vsel %vm1318, %v1320, %v1321
      %v1323 = vrot.slane %v1321, 4
      %v1324 = vrot.slane %v270, 5
      %v1325 = vsel %vm1318, %v1323, %v1324
      %v1326 = vrot.slane %v1269, 5
      %v1327 = vrot.slane %v1326, 4
      %v1328 = vrot.slane %v225, 5
      %v1329 = vsel %vm1318, %v1327, %v1328
      %v1330 = vrot.slane %v1328, 4
      %v1331 = vrot.slane %v271, 5
      %v1332 = vsel %vm1318, %v1330, %v1331
      %v1333 = vrot.slane %v1270, 5
      %v1334 = vrot.slane %v1333, 4
      %v1335 = vrot.slane %v227, 5
      %v1336 = vsel %vm1318, %v1334, %v1335
      %v1337 = vrot.slane %v1335, 4
      %v1338 = vrot.slane %v272, 5
      %v1339 = vsel %vm1318, %v1337, %v1338
      %v1340 = vrot.slane %v1271, 5
      %v1341 = vrot.slane %v1340, 4
      %v1342 = vrot.slane %v229, 5
      %v1343 = vsel %vm1318, %v1341, %v1342
      %v1344 = vrot.slane %v1342, 4
      %v1345 = vrot.slane %v273, 5
      %v1346 = vsel %vm1318, %v1344, %v1345
      %v1347 = vrot.slane %v1272, 5
      %v1348 = vrot.slane %v1347, 4
      %v1349 = vrot.slane %v231, 5
      %v1350 = vsel %vm1318, %v1348, %v1349
      %v1351 = vrot.slane %v1349, 4
      %v1352 = vrot.slane %v274, 5
      %v1353 = vsel %vm1318, %v1351, %v1352
      %v1354 = vrot.slane %v1273, 5
      %v1355 = vrot.slane %v1354, 4
      %v1356 = vrot.slane %v233, 5
      %v1357 = vsel %vm1318, %v1355, %v1356
      %v1358 = vrot.slane %v1356, 4
      %v1359 = vrot.slane %v275, 5
      %v1360 = vsel %vm1318, %v1358, %v1359
      %v1361 = vrot.slane %v1274, 5
      %v1362 = vrot.slane %v1361, 4
      %v1363 = vrot.slane %v235, 5
      %v1364 = vsel %vm1318, %v1362, %v1363
      %v1365 = vrot.slane %v1363, 4
      %v1366 = vrot.slane %v276, 5
      %v1367 = vsel %vm1318, %v1365, %v1366
      %v1368 = vrot.slane %v1275, 5
      %v1369 = vrot.slane %v1368, 4
      %v1370 = vrot.slane %v237, 5
      %v1371 = vsel %vm1318, %v1369, %v1370
      %v1372 = vrot.slane %v1370, 4
      %v1373 = vrot.slane %v277, 5
      %v1374 = vsel %vm1318, %v1372, %v1373
      %v1375 = vrot.slane %v1276, 5
      %v1376 = vrot.slane %v1375, 4
      %v1377 = vrot.slane %v239, 5
      %v1378 = vsel %vm1318, %v1376, %v1377
      %v1379 = vrot.slane %v1377, 4
      %v1380 = vrot.slane %v278, 5
      %v1381 = vsel %vm1318, %v1379, %v1380
      %v1382 = vrot.slane %v1277, 5
      %v1383 = vrot.slane %v1382, 4
      %v1384 = vrot.slane %v241, 5
      %v1385 = vsel %vm1318, %v1383, %v1384
      %v1386 = vrot.slane %v1384, 4
      %v1387 = vrot.slane %v279, 5
      %v1388 = vsel %vm1318, %v1386, %v1387
      %v1389 = vrot.slane %v1278, 5
      %v1390 = vrot.slane %v1389, 4
      %v1391 = vrot.slane %v243, 5
      %v1392 = vsel %vm1318, %v1390, %v1391
      %v1393 = vrot.slane %v1391, 4
      %v1394 = vrot.slane %v280, 5
      %v1395 = vsel %vm1318, %v1393, %v1394
      %v1396 = vrot.slane %v1279, 5
      %v1397 = vrot.slane %v1396, 4
      %v1398 = vrot.slane %v245, 5
      %v1399 = vsel %vm1318, %v1397, %v1398
      %v1400 = vrot.slane %v1398, 4
      %v1401 = vrot.slane %v281, 5
      %v1402 = vsel %vm1318, %v1400, %v1401
      %v1403 = vrot.slane %v1280, 5
      %v1404 = vrot.slane %v1403, 4
      %v1405 = vrot.slane %v247, 5
      %v1406 = vsel %vm1318, %v1404, %v1405
      %v1407 = vrot.slane %v1405, 4
      %v1408 = vrot.slane %v282, 5
      %v1409 = vsel %vm1318, %v1407, %v1408
      %v1410 = vrot.slane %v1281, 5
      %v1411 = vrot.slane %v1410, 4
      %v1412 = vrot.slane %v249, 5
      %v1413 = vsel %vm1318, %v1411, %v1412
      %v1414 = vrot.slane %v1412, 4
      %v1415 = vrot.slane %v283, 5
      %v1416 = vsel %vm1318, %v1414, %v1415
      %v1417 = vrot.slane %v1282, 5
      %v1418 = vrot.slane %v1417, 4
      %v1419 = vrot.slane %v251, 5
      %v1420 = vsel %vm1318, %v1418, %v1419
      %v1421 = vrot.slane %v1419, 4
      %v1422 = vrot.slane %v284, 5
      %v1423 = vsel %vm1318, %v1421, %v1422
      %v1424 = vrot.slane %v1283, 5
      %v1425 = vrot.slane %v1424, 4
      %v1426 = vrot.slane %v253, 5
      %v1427 = vsel %vm1318, %v1425, %v1426
      %v1428 = vrot.slane %v1426, 4
      %v1429 = vrot.slane %v285, 5
      %v1430 = vsel %vm1318, %v1428, %v1429
      %s1431 = scalar_lea.vmem %s1, 128
      %v1432 = vld [vmem:[%s1431] sm:$0xf]
      %v1433 = vld [vmem:[%s1431 + $0x4] sm:$0xf]
      %v1434 = vld [vmem:[%s1431 + $0x8] sm:$0xf]
      %v1435 = vld [vmem:[%s1431 + $0xc] sm:$0xf]
      %v1436 = vld [vmem:[%s1431 + $0x10] sm:$0xf]
      %v1437 = vld [vmem:[%s1431 + $0x14] sm:$0xf]
      %v1438 = vld [vmem:[%s1431 + $0x18] sm:$0xf]
      %v1439 = vld [vmem:[%s1431 + $0x1c] sm:$0xf]
      %v1440 = vld [vmem:[%s1431 + $0x20] sm:$0xf]
      %v1441 = vld [vmem:[%s1431 + $0x24] sm:$0xf]
      %v1442 = vld [vmem:[%s1431 + $0x28] sm:$0xf]
      %v1443 = vld [vmem:[%s1431 + $0x2c] sm:$0xf]
      %v1444 = vld [vmem:[%s1431 + $0x30] sm:$0xf]
      %v1445 = vld [vmem:[%s1431 + $0x34] sm:$0xf]
      %v1446 = vld [vmem:[%s1431 + $0x38] sm:$0xf]
      %v1447 = vld [vmem:[%s1431 + $0x3c] sm:$0xf]
      %v1448 = vunpack.c.l.b16 %v1322
      %v1449 = vunpack.c.l.b16 %v1325
      %v1450 = vunpack.c.l.b16 %v1329
      %v1451 = vunpack.c.l.b16 %v1332
      %v1452 = vunpack.c.l.b16 %v1336
      %v1453 = vunpack.c.l.b16 %v1339
      %v1454 = vunpack.c.l.b16 %v1343
      %v1455 = vunpack.c.l.b16 %v1346
      %v1456 = vunpack.c.l.b16 %v1350
      %v1457 = vunpack.c.l.b16 %v1353
      %v1458 = vunpack.c.l.b16 %v1357
      %v1459 = vunpack.c.l.b16 %v1360
      %v1460 = vunpack.c.l.b16 %v1364
      %v1461 = vunpack.c.l.b16 %v1367
      %v1462 = vunpack.c.l.b16 %v1371
      %v1463 = vunpack.c.l.b16 %v1374
      %v1464 = vunpack.c.l.b16 %v1378
      %v1465 = vunpack.c.l.b16 %v1381
      %v1466 = vunpack.c.l.b16 %v1385
      %v1467 = vunpack.c.l.b16 %v1388
      %v1468 = vunpack.c.l.b16 %v1392
      %v1469 = vunpack.c.l.b16 %v1395
      %v1470 = vunpack.c.l.b16 %v1399
      %v1471 = vunpack.c.l.b16 %v1402
      %v1472 = vunpack.c.l.b16 %v1406
      %v1473 = vunpack.c.l.b16 %v1409
      %v1474 = vunpack.c.l.b16 %v1413
      %v1475 = vunpack.c.l.b16 %v1416
      %v1476 = vunpack.c.l.b16 %v1420
      %v1477 = vunpack.c.l.b16 %v1423
      %v1478 = vunpack.c.l.b16 %v1427
      %v1479 = vunpack.c.l.b16 %v1430
      %v1480 = vpack.c.b16 %v1449, %v1448
      %v1481 = vpack.c.b16 %v1451, %v1450
      %v1482 = vpack.c.b16 %v1453, %v1452
      %v1483 = vpack.c.b16 %v1455, %v1454
      %v1484 = vpack.c.b16 %v1457, %v1456
      %v1485 = vpack.c.b16 %v1459, %v1458
      %v1486 = vpack.c.b16 %v1461, %v1460
      %v1487 = vpack.c.b16 %v1463, %v1462
      %v1488 = vpack.c.b16 %v1465, %v1464
      %v1489 = vpack.c.b16 %v1467, %v1466
      %v1490 = vpack.c.b16 %v1469, %v1468
      %v1491 = vpack.c.b16 %v1471, %v1470
      %v1492 = vpack.c.b16 %v1473, %v1472
      %v1493 = vpack.c.b16 %v1475, %v1474
      %v1494 = vpack.c.b16 %v1477, %v1476
      %v1495 = vpack.c.b16 %v1479, %v1478
      %v1528 = vunpack.c.l.b16 %v1432
      %v1529 = vunpack.c.l.b16 %v1433
      %v1530 = vunpack.c.l.b16 %v1434
      %v1531 = vunpack.c.l.b16 %v1435
      %v1532 = vunpack.c.l.b16 %v1436
      %v1533 = vunpack.c.l.b16 %v1437
      %v1534 = vunpack.c.l.b16 %v1438
      %v1535 = vunpack.c.l.b16 %v1439
      %v1536 = vunpack.c.l.b16 %v1440
      %v1537 = vunpack.c.l.b16 %v1441
      %v1538 = vunpack.c.l.b16 %v1442
      %v1539 = vunpack.c.l.b16 %v1443
      %v1540 = vunpack.c.l.b16 %v1444
      %v1541 = vunpack.c.l.b16 %v1445
      %v1542 = vunpack.c.l.b16 %v1446
      %v1543 = vunpack.c.l.b16 %v1447
      %v1544 = vpack.c.b16 %v1529, %v1528
      %v1545 = vpack.c.b16 %v1531, %v1530
      %v1546 = vpack.c.b16 %v1533, %v1532
      %v1547 = vpack.c.b16 %v1535, %v1534
      %v1548 = vpack.c.b16 %v1537, %v1536
      %v1549 = vpack.c.b16 %v1539, %v1538
      %v1550 = vpack.c.b16 %v1541, %v1540
      %v1551 = vpack.c.b16 %v1543, %v1542
      %1560 = vmatprep.subr.bf16.mxu0 0
      %1561 = vmatpush1.bf16.msra.mxu0 %v1544
      %1562 = vmatprep.subr.bf16.mxu0 0
      %1563 = vmatpush1.bf16.msra.mxu0 %v1545
      %1564 = vmatprep.subr.bf16.mxu0 0
      %1565 = vmatpush1.bf16.msra.mxu0 %v1546
      %1566 = vmatprep.subr.bf16.mxu0 0
      %1567 = vmatpush1.bf16.msra.mxu0 %v1547
      %1568 = vmatprep.subr.bf16.mxu0 0
      %1569 = vmatpush1.bf16.msra.mxu0 %v1548
      %1570 = vmatprep.subr.bf16.mxu0 0
      %1571 = vmatpush1.bf16.msra.mxu0 %v1549
      %1572 = vmatprep.subr.bf16.mxu0 0
      %1573 = vmatpush1.bf16.msra.mxu0 %v1550
      %1574 = vmatprep.subr.bf16.mxu0 0
      %1575 = vmatpush1.bf16.msra.mxu0 %v1551
      %1576 = vmatprep.subr.bf16.mxu0 0
      %1577 = vmatpush1.bf16.msra.mxu0 0
      %1578 = vmatprep.subr.bf16.mxu0 0
      %1579 = vmatpush1.bf16.msra.mxu0 0
      %1580 = vmatprep.subr.bf16.mxu0 0
      %1581 = vmatpush1.bf16.msra.mxu0 0
      %1582 = vmatprep.subr.bf16.mxu0 0
      %1583 = vmatpush1.bf16.msra.mxu0 0
      %1584 = vmatprep.subr.bf16.mxu0 0
      %1585 = vmatpush1.bf16.msra.mxu0 0
      %1586 = vmatprep.subr.bf16.mxu0 0
      %1587 = vmatpush1.bf16.msra.mxu0 0
      %1588 = vmatprep.subr.bf16.mxu0 0
      %1589 = vmatpush1.bf16.msra.mxu0 0
      %1590 = vmatprep.subr.bf16.mxu0 0
      %1591 = vmatpush1.bf16.msra.mxu0 0
      %1592 = vmatprep.mubr.bf16.mxu0 0
      %1593 = vmatmul.mubr.bf16.gmra.mrb[0].mxu0 %v1480
      %v1594 = vpop.f32.mrb[0].mxu0
      %v1595 = vadd.f32 0.0, %v1594
      %v1596 = vpop.f32.mrb[0].mxu0
      %v1597 = vpop.f32.mrb[0].mxu0
      %v1598 = vadd.f32 0.0, %v1597
      %v1599 = vpop.f32.mrb[0].mxu0
      %1600 = vmatprep.mubr.bf16.mxu0 0
      %1601 = vmatmul.mubr.bf16.gmra.mrb[0].mxu0 %v1481
      %v1602 = vpop.f32.mrb[0].mxu0
      %v1603 = vadd.f32 0.0, %v1602
      %v1604 = vpop.f32.mrb[0].mxu0
      %v1605 = vpop.f32.mrb[0].mxu0
      %v1606 = vadd.f32 0.0, %v1605
      %v1607 = vpop.f32.mrb[0].mxu0
      %1608 = vmatprep.mubr.bf16.mxu0 0
      %1609 = vmatmul.mubr.bf16.gmra.mrb[0].mxu0 %v1482
      %v1610 = vpop.f32.mrb[0].mxu0
      %v1611 = vadd.f32 0.0, %v1610
      %v1612 = vpop.f32.mrb[0].mxu0
      %v1613 = vpop.f32.mrb[0].mxu0
      %v1614 = vadd.f32 0.0, %v1613
      %v1615 = vpop.f32.mrb[0].mxu0
      %1616 = vmatprep.mubr.bf16.mxu0 0
      %1617 = vmatmul.mubr.bf16.gmra.mrb[0].mxu0 %v1483
      %v1618 = vpop.f32.mrb[0].mxu0
      %v1619 = vadd.f32 0.0, %v1618
      %v1620 = vpop.f32.mrb[0].mxu0
      %v1621 = vpop.f32.mrb[0].mxu0
      %v1622 = vadd.f32 0.0, %v1621
      %v1623 = vpop.f32.mrb[0].mxu0
      %1624 = vmatprep.mubr.bf16.mxu0 0
      %1625 = vmatmul.mubr.bf16.gmra.mrb[0].mxu0 %v1484
      %v1626 = vpop.f32.mrb[0].mxu0
      %v1627 = vadd.f32 0.0, %v1626
      %v1628 = vpop.f32.mrb[0].mxu0
      %v1629 = vpop.f32.mrb[0].mxu0
      %v1630 = vadd.f32 0.0, %v1629
      %v1631 = vpop.f32.mrb[0].mxu0
      %1632 = vmatprep.mubr.bf16.mxu0 0
      %1633 = vmatmul.mubr.bf16.gmra.mrb[0].mxu0 %v1485
      %v1634 = vpop.f32.mrb[0].mxu0
      %v1635 = vadd.f32 0.0, %v1634
      %v1636 = vpop.f32.mrb[0].mxu0
      %v1637 = vpop.f32.mrb[0].mxu0
      %v1638 = vadd.f32 0.0, %v1637
      %v1639 = vpop.f32.mrb[0].mxu0
      %1640 = vmatprep.mubr.bf16.mxu0 0
      %1641 = vmatmul.mubr.bf16.gmra.mrb[0].mxu0 %v1486
      %v1642 = vpop.f32.mrb[0].mxu0
      %v1643 = vadd.f32 0.0, %v1642
      %v1644 = vpop.f32.mrb[0].mxu0
      %v1645 = vpop.f32.mrb[0].mxu0
      %v1646 = vadd.f32 0.0, %v1645
      %v1647 = vpop.f32.mrb[0].mxu0
      %1648 = vmatprep.mubr.bf16.mxu0 0
      %1649 = vmatmul.mubr.bf16.gmra.mrb[0].mxu0 %v1487
      %v1650 = vpop.f32.mrb[0].mxu0
      %v1651 = vadd.f32 0.0, %v1650
      %v1652 = vpop.f32.mrb[0].mxu0
      %v1653 = vpop.f32.mrb[0].mxu0
      %v1654 = vadd.f32 0.0, %v1653
      %v1655 = vpop.f32.mrb[0].mxu0
      %1656 = vmatprep.mubr.bf16.mxu0 0
      %1657 = vmatmul.mubr.bf16.gmra.mrb[0].mxu0 %v1488
      %v1658 = vpop.f32.mrb[0].mxu0
      %v1659 = vadd.f32 0.0, %v1658
      %v1660 = vpop.f32.mrb[0].mxu0
      %v1661 = vpop.f32.mrb[0].mxu0
      %v1662 = vadd.f32 0.0, %v1661
      %v1663 = vpop.f32.mrb[0].mxu0
      %1664 = vmatprep.mubr.bf16.mxu0 0
      %1665 = vmatmul.mubr.bf16.gmra.mrb[0].mxu0 %v1489
      %v1666 = vpop.f32.mrb[0].mxu0
      %v1667 = vadd.f32 0.0, %v1666
      %v1668 = vpop.f32.mrb[0].mxu0
      %v1669 = vpop.f32.mrb[0].mxu0
      %v1670 = vadd.f32 0.0, %v1669
      %v1671 = vpop.f32.mrb[0].mxu0
      %1672 = vmatprep.mubr.bf16.mxu0 0
      %1673 = vmatmul.mubr.bf16.gmra.mrb[0].mxu0 %v1490
      %v1674 = vpop.f32.mrb[0].mxu0
      %v1675 = vadd.f32 0.0, %v1674
      %v1676 = vpop.f32.mrb[0].mxu0
      %v1677 = vpop.f32.mrb[0].mxu0
      %v1678 = vadd.f32 0.0, %v1677
      %v1679 = vpop.f32.mrb[0].mxu0
      %1680 = vmatprep.mubr.bf16.mxu0 0
      %1681 = vmatmul.mubr.bf16.gmra.mrb[0].mxu0 %v1491
      %v1682 = vpop.f32.mrb[0].mxu0
      %v1683 = vadd.f32 0.0, %v1682
      %v1684 = vpop.f32.mrb[0].mxu0
      %v1685 = vpop.f32.mrb[0].mxu0
      %v1686 = vadd.f32 0.0, %v1685
      %v1687 = vpop.f32.mrb[0].mxu0
      %1688 = vmatprep.mubr.bf16.mxu0 0
      %1689 = vmatmul.mubr.bf16.gmra.mrb[0].mxu0 %v1492
      %v1690 = vpop.f32.mrb[0].mxu0
      %v1691 = vadd.f32 0.0, %v1690
      %v1692 = vpop.f32.mrb[0].mxu0
      %v1693 = vpop.f32.mrb[0].mxu0
      %v1694 = vadd.f32 0.0, %v1693
      %v1695 = vpop.f32.mrb[0].mxu0
      %1696 = vmatprep.mubr.bf16.mxu0 0
      %1697 = vmatmul.mubr.bf16.gmra.mrb[0].mxu0 %v1493
      %v1698 = vpop.f32.mrb[0].mxu0
      %v1699 = vadd.f32 0.0, %v1698
      %v1700 = vpop.f32.mrb[0].mxu0
      %v1701 = vpop.f32.mrb[0].mxu0
      %v1702 = vadd.f32 0.0, %v1701
      %v1703 = vpop.f32.mrb[0].mxu0
      %1704 = vmatprep.mubr.bf16.mxu0 0
      %1705 = vmatmul.mubr.bf16.gmra.mrb[0].mxu0 %v1494
      %v1706 = vpop.f32.mrb[0].mxu0
      %v1707 = vadd.f32 0.0, %v1706
      %v1708 = vpop.f32.mrb[0].mxu0
      %v1709 = vpop.f32.mrb[0].mxu0
      %v1710 = vadd.f32 0.0, %v1709
      %v1711 = vpop.f32.mrb[0].mxu0
      %1712 = vmatprep.mubr.bf16.mxu0 0
      %1713 = vmatmul.mubr.bf16.gmra.mrb[0].mxu0 %v1495
      %v1714 = vpop.f32.mrb[0].mxu0
      %v1715 = vadd.f32 0.0, %v1714
      %v1716 = vpop.f32.mrb[0].mxu0
      %v1717 = vpop.f32.mrb[0].mxu0
      %v1718 = vadd.f32 0.0, %v1717
      %v1719 = vpop.f32.mrb[0].mxu0
      %1720 = vdwg.mxu0
      %v1721 = vadd.f32 %v1142, %v1595
      %v1722 = vadd.f32 %v1145, %v1598
      %v1723 = vadd.f32 %v1150, %v1603
      %v1724 = vadd.f32 %v1153, %v1606
      %v1725 = vadd.f32 %v1158, %v1611
      %v1726 = vadd.f32 %v1161, %v1614
      %v1727 = vadd.f32 %v1166, %v1619
      %v1728 = vadd.f32 %v1169, %v1622
      %v1729 = vadd.f32 %v1174, %v1627
      %v1730 = vadd.f32 %v1177, %v1630
      %v1731 = vadd.f32 %v1182, %v1635
      %v1732 = vadd.f32 %v1185, %v1638
      %v1733 = vadd.f32 %v1190, %v1643
      %v1734 = vadd.f32 %v1193, %v1646
      %v1735 = vadd.f32 %v1198, %v1651
      %v1736 = vadd.f32 %v1201, %v1654
      %v1737 = vadd.f32 %v1206, %v1659
      %v1738 = vadd.f32 %v1209, %v1662
      %v1739 = vadd.f32 %v1214, %v1667
      %v1740 = vadd.f32 %v1217, %v1670
      %v1741 = vadd.f32 %v1222, %v1675
      %v1742 = vadd.f32 %v1225, %v1678
      %v1743 = vadd.f32 %v1230, %v1683
      %v1744 = vadd.f32 %v1233, %v1686
      %v1745 = vadd.f32 %v1238, %v1691
      %v1746 = vadd.f32 %v1241, %v1694
      %v1747 = vadd.f32 %v1246, %v1699
      %v1748 = vadd.f32 %v1249, %v1702
      %v1749 = vadd.f32 %v1254, %v1707
      %v1750 = vadd.f32 %v1257, %v1710
      %v1751 = vadd.f32 %v1262, %v1715
      %v1752 = vadd.f32 %v1265, %v1718
      %s1753 = scalar_lea.vmem %s208, 12
      %v1754 = vld [vmem:[%s1753] sm:$0xf]
      %v1755 = vld [vmem:[%s1753 + $0x4] sm:$0xf]
      %v1756 = vld [vmem:[%s1753 + $0xc] sm:$0xf]
      %v1757 = vld [vmem:[%s1753 + $0x10] sm:$0xf]
      %v1758 = vld [vmem:[%s1753 + $0x18] sm:$0xf]
      %v1759 = vld [vmem:[%s1753 + $0x1c] sm:$0xf]
      %v1760 = vld [vmem:[%s1753 + $0x24] sm:$0xf]
      %v1761 = vld [vmem:[%s1753 + $0x28] sm:$0xf]
      %v1762 = vld [vmem:[%s1753 + $0x30] sm:$0xf]
      %v1763 = vld [vmem:[%s1753 + $0x34] sm:$0xf]
      %v1764 = vld [vmem:[%s1753 + $0x3c] sm:$0xf]
      %v1765 = vld [vmem:[%s1753 + $0x40] sm:$0xf]
      %v1766 = vld [vmem:[%s1753 + $0x48] sm:$0xf]
      %v1767 = vld [vmem:[%s1753 + $0x4c] sm:$0xf]
      %v1768 = vld [vmem:[%s1753 + $0x54] sm:$0xf]
      %v1769 = vld [vmem:[%s1753 + $0x58] sm:$0xf]
      %v1770 = vld [vmem:[%s1753 + $0x60] sm:$0xf]
      %v1771 = vld [vmem:[%s1753 + $0x64] sm:$0xf]
      %v1772 = vld [vmem:[%s1753 + $0x6c] sm:$0xf]
      %v1773 = vld [vmem:[%s1753 + $0x70] sm:$0xf]
      %v1774 = vld [vmem:[%s1753 + $0x78] sm:$0xf]
      %v1775 = vld [vmem:[%s1753 + $0x7c] sm:$0xf]
      %v1776 = vld [vmem:[%s1753 + $0x84] sm:$0xf]
      %v1777 = vld [vmem:[%s1753 + $0x88] sm:$0xf]
      %v1778 = vld [vmem:[%s1753 + $0x90] sm:$0xf]
      %v1779 = vld [vmem:[%s1753 + $0x94] sm:$0xf]
      %v1780 = vld [vmem:[%s1753 + $0x9c] sm:$0xf]
      %v1781 = vld [vmem:[%s1753 + $0xa0] sm:$0xf]
      %v1782 = vld [vmem:[%s1753 + $0xa8] sm:$0xf]
      %v1783 = vld [vmem:[%s1753 + $0xac] sm:$0xf]
      %v1784 = vld [vmem:[%s1753 + $0xb4] sm:$0xf]
      %v1785 = vld [vmem:[%s1753 + $0xb8] sm:$0xf]
      %s1786 = scalar_lea.vmem %s1, 192
      %v1787 = vld [vmem:[%s1786] sm:$0xf]
      %v1788 = vld [vmem:[%s1786 + $0x4] sm:$0xf]
      %v1789 = vld [vmem:[%s1786 + $0x8] sm:$0xf]
      %v1790 = vld [vmem:[%s1786 + $0xc] sm:$0xf]
      %v1791 = vld [vmem:[%s1786 + $0x10] sm:$0xf]
      %v1792 = vld [vmem:[%s1786 + $0x14] sm:$0xf]
      %v1793 = vld [vmem:[%s1786 + $0x18] sm:$0xf]
      %v1794 = vld [vmem:[%s1786 + $0x1c] sm:$0xf]
      %v1795 = vld [vmem:[%s1786 + $0x20] sm:$0xf]
      %v1796 = vld [vmem:[%s1786 + $0x24] sm:$0xf]
      %v1797 = vld [vmem:[%s1786 + $0x28] sm:$0xf]
      %v1798 = vld [vmem:[%s1786 + $0x2c] sm:$0xf]
      %v1799 = vld [vmem:[%s1786 + $0x30] sm:$0xf]
      %v1800 = vld [vmem:[%s1786 + $0x34] sm:$0xf]
      %v1801 = vld [vmem:[%s1786 + $0x38] sm:$0xf]
      %v1802 = vld [vmem:[%s1786 + $0x3c] sm:$0xf]
      %v1835 = vunpack.c.l.b16 %v1754
      %v1836 = vunpack.c.l.b16 %v1755
      %v1837 = vunpack.c.l.b16 %v1756
      %v1838 = vunpack.c.l.b16 %v1757
      %v1839 = vunpack.c.l.b16 %v1758
      %v1840 = vunpack.c.l.b16 %v1759
      %v1841 = vunpack.c.l.b16 %v1760
      %v1842 = vunpack.c.l.b16 %v1761
      %v1843 = vunpack.c.l.b16 %v1762
      %v1844 = vunpack.c.l.b16 %v1763
      %v1845 = vunpack.c.l.b16 %v1764
      %v1846 = vunpack.c.l.b16 %v1765
      %v1847 = vunpack.c.l.b16 %v1766
      %v1848 = vunpack.c.l.b16 %v1767
      %v1849 = vunpack.c.l.b16 %v1768
      %v1850 = vunpack.c.l.b16 %v1769
      %v1851 = vunpack.c.l.b16 %v1770
      %v1852 = vunpack.c.l.b16 %v1771
      %v1853 = vunpack.c.l.b16 %v1772
      %v1854 = vunpack.c.l.b16 %v1773
      %v1855 = vunpack.c.l.b16 %v1774
      %v1856 = vunpack.c.l.b16 %v1775
      %v1857 = vunpack.c.l.b16 %v1776
      %v1858 = vunpack.c.l.b16 %v1777
      %v1859 = vunpack.c.l.b16 %v1778
      %v1860 = vunpack.c.l.b16 %v1779
      %v1861 = vunpack.c.l.b16 %v1780
      %v1862 = vunpack.c.l.b16 %v1781
      %v1863 = vunpack.c.l.b16 %v1782
      %v1864 = vunpack.c.l.b16 %v1783
      %v1865 = vunpack.c.l.b16 %v1784
      %v1866 = vunpack.c.l.b16 %v1785
      %v1867 = vpack.c.b16 %v1836, %v1835
      %v1868 = vpack.c.b16 %v1838, %v1837
      %v1869 = vpack.c.b16 %v1840, %v1839
      %v1870 = vpack.c.b16 %v1842, %v1841
      %v1871 = vpack.c.b16 %v1844, %v1843
      %v1872 = vpack.c.b16 %v1846, %v1845
      %v1873 = vpack.c.b16 %v1848, %v1847
      %v1874 = vpack.c.b16 %v1850, %v1849
      %v1875 = vpack.c.b16 %v1852, %v1851
      %v1876 = vpack.c.b16 %v1854, %v1853
      %v1877 = vpack.c.b16 %v1856, %v1855
      %v1878 = vpack.c.b16 %v1858, %v1857
      %v1879 = vpack.c.b16 %v1860, %v1859
      %v1880 = vpack.c.b16 %v1862, %v1861
      %v1881 = vpack.c.b16 %v1864, %v1863
      %v1882 = vpack.c.b16 %v1866, %v1865
      %v1915 = vunpack.c.l.b16 %v1787
      %v1916 = vunpack.c.l.b16 %v1788
      %v1917 = vunpack.c.l.b16 %v1789
      %v1918 = vunpack.c.l.b16 %v1790
      %v1919 = vunpack.c.l.b16 %v1791
      %v1920 = vunpack.c.l.b16 %v1792
      %v1921 = vunpack.c.l.b16 %v1793
      %v1922 = vunpack.c.l.b16 %v1794
      %v1923 = vunpack.c.l.b16 %v1795
      %v1924 = vunpack.c.l.b16 %v1796
      %v1925 = vunpack.c.l.b16 %v1797
      %v1926 = vunpack.c.l.b16 %v1798
      %v1927 = vunpack.c.l.b16 %v1799
      %v1928 = vunpack.c.l.b16 %v1800
      %v1929 = vunpack.c.l.b16 %v1801
      %v1930 = vunpack.c.l.b16 %v1802
      %v1931 = vpack.c.b16 %v1916, %v1915
      %v1932 = vpack.c.b16 %v1918, %v1917
      %v1933 = vpack.c.b16 %v1920, %v1919
      %v1934 = vpack.c.b16 %v1922, %v1921
      %v1935 = vpack.c.b16 %v1924, %v1923
      %v1936 = vpack.c.b16 %v1926, %v1925
      %v1937 = vpack.c.b16 %v1928, %v1927
      %v1938 = vpack.c.b16 %v1930, %v1929
      %1947 = vmatprep.subr.bf16.mxu0 0
      %1948 = vmatpush1.bf16.msra.mxu0 %v1931
      %1949 = vmatprep.subr.bf16.mxu0 0
      %1950 = vmatpush1.bf16.msra.mxu0 %v1932
      %1951 = vmatprep.subr.bf16.mxu0 0
      %1952 = vmatpush1.bf16.msra.mxu0 %v1933
      %1953 = vmatprep.subr.bf16.mxu0 0
      %1954 = vmatpush1.bf16.msra.mxu0 %v1934
      %1955 = vmatprep.subr.bf16.mxu0 0
      %1956 = vmatpush1.bf16.msra.mxu0 %v1935
      %1957 = vmatprep.subr.bf16.mxu0 0
      %1958 = vmatpush1.bf16.msra.mxu0 %v1936
      %1959 = vmatprep.subr.bf16.mxu0 0
      %1960 = vmatpush1.bf16.msra.mxu0 %v1937
      %1961 = vmatprep.subr.bf16.mxu0 0
      %1962 = vmatpush1.bf16.msra.mxu0 %v1938
      %1963 = vmatprep.subr.bf16.mxu0 0
      %1964 = vmatpush1.bf16.msra.mxu0 0
      %1965 = vmatprep.subr.bf16.mxu0 0
      %1966 = vmatpush1.bf16.msra.mxu0 0
      %1967 = vmatprep.subr.bf16.mxu0 0
      %1968 = vmatpush1.bf16.msra.mxu0 0
      %1969 = vmatprep.subr.bf16.mxu0 0
      %1970 = vmatpush1.bf16.msra.mxu0 0
      %1971 = vmatprep.subr.bf16.mxu0 0
      %1972 = vmatpush1.bf16.msra.mxu0 0
      %1973 = vmatprep.subr.bf16.mxu0 0
      %1974 = vmatpush1.bf16.msra.mxu0 0
      %1975 = vmatprep.subr.bf16.mxu0 0
      %1976 = vmatpush1.bf16.msra.mxu0 0
      %1977 = vmatprep.subr.bf16.mxu0 0
      %1978 = vmatpush1.bf16.msra.mxu0 0
      %1979 = vmatprep.mubr.bf16.mxu0 0
      %1980 = vmatmul.mubr.bf16.gmra.mrb[0].mxu0 %v1867
      %v1981 = vpop.f32.mrb[0].mxu0
      %v1982 = vadd.f32 0.0, %v1981
      %v1983 = vpop.f32.mrb[0].mxu0
      %v1984 = vpop.f32.mrb[0].mxu0
      %v1985 = vadd.f32 0.0, %v1984
      %v1986 = vpop.f32.mrb[0].mxu0
      %1987 = vmatprep.mubr.bf16.mxu0 0
      %1988 = vmatmul.mubr.bf16.gmra.mrb[0].mxu0 %v1868
      %v1989 = vpop.f32.mrb[0].mxu0
      %v1990 = vadd.f32 0.0, %v1989
      %v1991 = vpop.f32.mrb[0].mxu0
      %v1992 = vpop.f32.mrb[0].mxu0
      %v1993 = vadd.f32 0.0, %v1992
      %v1994 = vpop.f32.mrb[0].mxu0
      %1995 = vmatprep.mubr.bf16.mxu0 0
      %1996 = vmatmul.mubr.bf16.gmra.mrb[0].mxu0 %v1869
      %v1997 = vpop.f32.mrb[0].mxu0
      %v1998 = vadd.f32 0.0, %v1997
      %v1999 = vpop.f32.mrb[0].mxu0
      %v2000 = vpop.f32.mrb[0].mxu0
      %v2001 = vadd.f32 0.0, %v2000
      %v2002 = vpop.f32.mrb[0].mxu0
      %2003 = vmatprep.mubr.bf16.mxu0 0
      %2004 = vmatmul.mubr.bf16.gmra.mrb[0].mxu0 %v1870
      %v2005 = vpop.f32.mrb[0].mxu0
      %v2006 = vadd.f32 0.0, %v2005
      %v2007 = vpop.f32.mrb[0].mxu0
      %v2008 = vpop.f32.mrb[0].mxu0
      %v2009 = vadd.f32 0.0, %v2008
      %v2010 = vpop.f32.mrb[0].mxu0
      %2011 = vmatprep.mubr.bf16.mxu0 0
      %2012 = vmatmul.mubr.bf16.gmra.mrb[0].mxu0 %v1871
      %v2013 = vpop.f32.mrb[0].mxu0
      %v2014 = vadd.f32 0.0, %v2013
      %v2015 = vpop.f32.mrb[0].mxu0
      %v2016 = vpop.f32.mrb[0].mxu0
      %v2017 = vadd.f32 0.0, %v2016
      %v2018 = vpop.f32.mrb[0].mxu0
      %2019 = vmatprep.mubr.bf16.mxu0 0
      %2020 = vmatmul.mubr.bf16.gmra.mrb[0].mxu0 %v1872
      %v2021 = vpop.f32.mrb[0].mxu0
      %v2022 = vadd.f32 0.0, %v2021
      %v2023 = vpop.f32.mrb[0].mxu0
      %v2024 = vpop.f32.mrb[0].mxu0
      %v2025 = vadd.f32 0.0, %v2024
      %v2026 = vpop.f32.mrb[0].mxu0
      %2027 = vmatprep.mubr.bf16.mxu0 0
      %2028 = vmatmul.mubr.bf16.gmra.mrb[0].mxu0 %v1873
      %v2029 = vpop.f32.mrb[0].mxu0
      %v2030 = vadd.f32 0.0, %v2029
      %v2031 = vpop.f32.mrb[0].mxu0
      %v2032 = vpop.f32.mrb[0].mxu0
      %v2033 = vadd.f32 0.0, %v2032
      %v2034 = vpop.f32.mrb[0].mxu0
      %2035 = vmatprep.mubr.bf16.mxu0 0
      %2036 = vmatmul.mubr.bf16.gmra.mrb[0].mxu0 %v1874
      %v2037 = vpop.f32.mrb[0].mxu0
      %v2038 = vadd.f32 0.0, %v2037
      %v2039 = vpop.f32.mrb[0].mxu0
      %v2040 = vpop.f32.mrb[0].mxu0
      %v2041 = vadd.f32 0.0, %v2040
      %v2042 = vpop.f32.mrb[0].mxu0
      %2043 = vmatprep.mubr.bf16.mxu0 0
      %2044 = vmatmul.mubr.bf16.gmra.mrb[0].mxu0 %v1875
      %v2045 = vpop.f32.mrb[0].mxu0
      %v2046 = vadd.f32 0.0, %v2045
      %v2047 = vpop.f32.mrb[0].mxu0
      %v2048 = vpop.f32.mrb[0].mxu0
      %v2049 = vadd.f32 0.0, %v2048
      %v2050 = vpop.f32.mrb[0].mxu0
      %2051 = vmatprep.mubr.bf16.mxu0 0
      %2052 = vmatmul.mubr.bf16.gmra.mrb[0].mxu0 %v1876
      %v2053 = vpop.f32.mrb[0].mxu0
      %v2054 = vadd.f32 0.0, %v2053
      %v2055 = vpop.f32.mrb[0].mxu0
      %v2056 = vpop.f32.mrb[0].mxu0
      %v2057 = vadd.f32 0.0, %v2056
      %v2058 = vpop.f32.mrb[0].mxu0
      %2059 = vmatprep.mubr.bf16.mxu0 0
      %2060 = vmatmul.mubr.bf16.gmra.mrb[0].mxu0 %v1877
      %v2061 = vpop.f32.mrb[0].mxu0
      %v2062 = vadd.f32 0.0, %v2061
      %v2063 = vpop.f32.mrb[0].mxu0
      %v2064 = vpop.f32.mrb[0].mxu0
      %v2065 = vadd.f32 0.0, %v2064
      %v2066 = vpop.f32.mrb[0].mxu0
      %2067 = vmatprep.mubr.bf16.mxu0 0
      %2068 = vmatmul.mubr.bf16.gmra.mrb[0].mxu0 %v1878
      %v2069 = vpop.f32.mrb[0].mxu0
      %v2070 = vadd.f32 0.0, %v2069
      %v2071 = vpop.f32.mrb[0].mxu0
      %v2072 = vpop.f32.mrb[0].mxu0
      %v2073 = vadd.f32 0.0, %v2072
      %v2074 = vpop.f32.mrb[0].mxu0
      %2075 = vmatprep.mubr.bf16.mxu0 0
      %2076 = vmatmul.mubr.bf16.gmra.mrb[0].mxu0 %v1879
      %v2077 = vpop.f32.mrb[0].mxu0
      %v2078 = vadd.f32 0.0, %v2077
      %v2079 = vpop.f32.mrb[0].mxu0
      %v2080 = vpop.f32.mrb[0].mxu0
      %v2081 = vadd.f32 0.0, %v2080
      %v2082 = vpop.f32.mrb[0].mxu0
      %2083 = vmatprep.mubr.bf16.mxu0 0
      %2084 = vmatmul.mubr.bf16.gmra.mrb[0].mxu0 %v1880
      %v2085 = vpop.f32.mrb[0].mxu0
      %v2086 = vadd.f32 0.0, %v2085
      %v2087 = vpop.f32.mrb[0].mxu0
      %v2088 = vpop.f32.mrb[0].mxu0
      %v2089 = vadd.f32 0.0, %v2088
      %v2090 = vpop.f32.mrb[0].mxu0
      %2091 = vmatprep.mubr.bf16.mxu0 0
      %2092 = vmatmul.mubr.bf16.gmra.mrb[0].mxu0 %v1881
      %v2093 = vpop.f32.mrb[0].mxu0
      %v2094 = vadd.f32 0.0, %v2093
      %v2095 = vpop.f32.mrb[0].mxu0
      %v2096 = vpop.f32.mrb[0].mxu0
      %v2097 = vadd.f32 0.0, %v2096
      %v2098 = vpop.f32.mrb[0].mxu0
      %2099 = vmatprep.mubr.bf16.mxu0 0
      %2100 = vmatmul.mubr.bf16.gmra.mrb[0].mxu0 %v1882
      %v2101 = vpop.f32.mrb[0].mxu0
      %v2102 = vadd.f32 0.0, %v2101
      %v2103 = vpop.f32.mrb[0].mxu0
      %v2104 = vpop.f32.mrb[0].mxu0
      %v2105 = vadd.f32 0.0, %v2104
      %v2106 = vpop.f32.mrb[0].mxu0
      %2107 = vdwg.mxu0
      %v2108 = vadd.f32 %v1721, %v1982
      %v2109 = vadd.f32 %v1722, %v1985
      %v2110 = vadd.f32 %v1723, %v1990
      %v2111 = vadd.f32 %v1724, %v1993
      %v2112 = vadd.f32 %v1725, %v1998
      %v2113 = vadd.f32 %v1726, %v2001
      %v2114 = vadd.f32 %v1727, %v2006
      %v2115 = vadd.f32 %v1728, %v2009
      %v2116 = vadd.f32 %v1729, %v2014
      %v2117 = vadd.f32 %v1730, %v2017
      %v2118 = vadd.f32 %v1731, %v2022
      %v2119 = vadd.f32 %v1732, %v2025
      %v2120 = vadd.f32 %v1733, %v2030
      %v2121 = vadd.f32 %v1734, %v2033
      %v2122 = vadd.f32 %v1735, %v2038
      %v2123 = vadd.f32 %v1736, %v2041
      %v2124 = vadd.f32 %v1737, %v2046
      %v2125 = vadd.f32 %v1738, %v2049
      %v2126 = vadd.f32 %v1739, %v2054
      %v2127 = vadd.f32 %v1740, %v2057
      %v2128 = vadd.f32 %v1741, %v2062
      %v2129 = vadd.f32 %v1742, %v2065
      %v2130 = vadd.f32 %v1743, %v2070
      %v2131 = vadd.f32 %v1744, %v2073
      %v2132 = vadd.f32 %v1745, %v2078
      %v2133 = vadd.f32 %v1746, %v2081
      %v2134 = vadd.f32 %v1747, %v2086
      %v2135 = vadd.f32 %v1748, %v2089
      %v2136 = vadd.f32 %v1749, %v2094
      %v2137 = vadd.f32 %v1750, %v2097
      %v2138 = vadd.f32 %v1751, %v2102
      %v2139 = vadd.f32 %v1752, %v2105
      %v2140 = vld [vmem:[%s1753] sm:$0xf]
      %v2141 = vld [vmem:[%s1753 + $0x4] sm:$0xf]
      %v2142 = vld [vmem:[%s1753 + $0x8] sm:$0x1]
      %v2143 = vld [vmem:[%s1753 + $0xc] sm:$0xf]
      %v2144 = vld [vmem:[%s1753 + $0x10] sm:$0xf]
      %v2145 = vld [vmem:[%s1753 + $0x14] sm:$0x1]
      %v2146 = vld [vmem:[%s1753 + $0x18] sm:$0xf]
      %v2147 = vld [vmem:[%s1753 + $0x1c] sm:$0xf]
      %v2148 = vld [vmem:[%s1753 + $0x20] sm:$0x1]
      %v2149 = vld [vmem:[%s1753 + $0x24] sm:$0xf]
      %v2150 = vld [vmem:[%s1753 + $0x28] sm:$0xf]
      %v2151 = vld [vmem:[%s1753 + $0x2c] sm:$0x1]
      %v2152 = vld [vmem:[%s1753 + $0x30] sm:$0xf]
      %v2153 = vld [vmem:[%s1753 + $0x34] sm:$0xf]
      %v2154 = vld [vmem:[%s1753 + $0x38] sm:$0x1]
      %v2155 = vld [vmem:[%s1753 + $0x3c] sm:$0xf]
      %v2156 = vld [vmem:[%s1753 + $0x40] sm:$0xf]
      %v2157 = vld [vmem:[%s1753 + $0x44] sm:$0x1]
      %v2158 = vld [vmem:[%s1753 + $0x48] sm:$0xf]
      %v2159 = vld [vmem:[%s1753 + $0x4c] sm:$0xf]
      %v2160 = vld [vmem:[%s1753 + $0x50] sm:$0x1]
      %v2161 = vld [vmem:[%s1753 + $0x54] sm:$0xf]
      %v2162 = vld [vmem:[%s1753 + $0x58] sm:$0xf]
      %v2163 = vld [vmem:[%s1753 + $0x5c] sm:$0x1]
      %v2164 = vld [vmem:[%s1753 + $0x60] sm:$0xf]
      %v2165 = vld [vmem:[%s1753 + $0x64] sm:$0xf]
      %v2166 = vld [vmem:[%s1753 + $0x68] sm:$0x1]
      %v2167 = vld [vmem:[%s1753 + $0x6c] sm:$0xf]
      %v2168 = vld [vmem:[%s1753 + $0x70] sm:$0xf]
      %v2169 = vld [vmem:[%s1753 + $0x74] sm:$0x1]
      %v2170 = vld [vmem:[%s1753 + $0x78] sm:$0xf]
      %v2171 = vld [vmem:[%s1753 + $0x7c] sm:$0xf]
      %v2172 = vld [vmem:[%s1753 + $0x80] sm:$0x1]
      %v2173 = vld [vmem:[%s1753 + $0x84] sm:$0xf]
      %v2174 = vld [vmem:[%s1753 + $0x88] sm:$0xf]
      %v2175 = vld [vmem:[%s1753 + $0x8c] sm:$0x1]
      %v2176 = vld [vmem:[%s1753 + $0x90] sm:$0xf]
      %v2177 = vld [vmem:[%s1753 + $0x94] sm:$0xf]
      %v2178 = vld [vmem:[%s1753 + $0x98] sm:$0x1]
      %v2179 = vld [vmem:[%s1753 + $0x9c] sm:$0xf]
      %v2180 = vld [vmem:[%s1753 + $0xa0] sm:$0xf]
      %v2181 = vld [vmem:[%s1753 + $0xa4] sm:$0x1]
      %v2182 = vld [vmem:[%s1753 + $0xa8] sm:$0xf]
      %v2183 = vld [vmem:[%s1753 + $0xac] sm:$0xf]
      %v2184 = vld [vmem:[%s1753 + $0xb0] sm:$0x1]
      %v2185 = vld [vmem:[%s1753 + $0xb4] sm:$0xf]
      %v2186 = vld [vmem:[%s1753 + $0xb8] sm:$0xf]
      %v2187 = vld [vmem:[%s1753 + $0xbc] sm:$0x1]
      %v2189 = vshrl.u32 %v2140, 16
      %v2191 = vrot.slane %v2189, 4
      %v2192 = vshll.u32 %v2140, 16
      %v2194 = vrot.slane %v2192, 5
      %v2195 = vor.u32 %v2191, %v2194
      %v2196 = vrot.slane %v2195, 4
      %v2198 = vshll.u32 %v2141, 16
      %v2200 = vrot.slane %v2198, 5
      %v2201 = vsel %vm288, %v2196, %v2200
      %v2202 = vshrl.u32 %v2141, 16
      %v2204 = vrot.slane %v2202, 4
      %v2205 = vor.u32 %v2204, %v2200
      %v2206 = vrot.slane %v2205, 4
      %v2208 = vshll.u32 %v2142, 16
      %v2210 = vrot.slane %v2208, 5
      %v2211 = vsel %vm288, %v2206, %v2210
      %v2213 = vshrl.u32 %v2143, 16
      %v2215 = vrot.slane %v2213, 4
      %v2216 = vshll.u32 %v2143, 16
      %v2218 = vrot.slane %v2216, 5
      %v2219 = vor.u32 %v2215, %v2218
      %v2220 = vrot.slane %v2219, 4
      %v2222 = vshll.u32 %v2144, 16
      %v2224 = vrot.slane %v2222, 5
      %v2225 = vsel %vm288, %v2220, %v2224
      %v2226 = vshrl.u32 %v2144, 16
      %v2228 = vrot.slane %v2226, 4
      %v2229 = vor.u32 %v2228, %v2224
      %v2230 = vrot.slane %v2229, 4
      %v2232 = vshll.u32 %v2145, 16
      %v2234 = vrot.slane %v2232, 5
      %v2235 = vsel %vm288, %v2230, %v2234
      %v2237 = vshrl.u32 %v2146, 16
      %v2239 = vrot.slane %v2237, 4
      %v2240 = vshll.u32 %v2146, 16
      %v2242 = vrot.slane %v2240, 5
      %v2243 = vor.u32 %v2239, %v2242
      %v2244 = vrot.slane %v2243, 4
      %v2246 = vshll.u32 %v2147, 16
      %v2248 = vrot.slane %v2246, 5
      %v2249 = vsel %vm288, %v2244, %v2248
      %v2250 = vshrl.u32 %v2147, 16
      %v2252 = vrot.slane %v2250, 4
      %v2253 = vor.u32 %v2252, %v2248
      %v2254 = vrot.slane %v2253, 4
      %v2256 = vshll.u32 %v2148, 16
      %v2258 = vrot.slane %v2256, 5
      %v2259 = vsel %vm288, %v2254, %v2258
      %v2261 = vshrl.u32 %v2149, 16
      %v2263 = vrot.slane %v2261, 4
      %v2264 = vshll.u32 %v2149, 16
      %v2266 = vrot.slane %v2264, 5
      %v2267 = vor.u32 %v2263, %v2266
      %v2268 = vrot.slane %v2267, 4
      %v2270 = vshll.u32 %v2150, 16
      %v2272 = vrot.slane %v2270, 5
      %v2273 = vsel %vm288, %v2268, %v2272
      %v2274 = vshrl.u32 %v2150, 16
      %v2276 = vrot.slane %v2274, 4
      %v2277 = vor.u32 %v2276, %v2272
      %v2278 = vrot.slane %v2277, 4
      %v2280 = vshll.u32 %v2151, 16
      %v2282 = vrot.slane %v2280, 5
      %v2283 = vsel %vm288, %v2278, %v2282
      %v2285 = vshrl.u32 %v2152, 16
      %v2287 = vrot.slane %v2285, 4
      %v2288 = vshll.u32 %v2152, 16
      %v2290 = vrot.slane %v2288, 5
      %v2291 = vor.u32 %v2287, %v2290
      %v2292 = vrot.slane %v2291, 4
      %v2294 = vshll.u32 %v2153, 16
      %v2296 = vrot.slane %v2294, 5
      %v2297 = vsel %vm288, %v2292, %v2296
      %v2298 = vshrl.u32 %v2153, 16
      %v2300 = vrot.slane %v2298, 4
      %v2301 = vor.u32 %v2300, %v2296
      %v2302 = vrot.slane %v2301, 4
      %v2304 = vshll.u32 %v2154, 16
      %v2306 = vrot.slane %v2304, 5
      %v2307 = vsel %vm288, %v2302, %v2306
      %v2309 = vshrl.u32 %v2155, 16
      %v2311 = vrot.slane %v2309, 4
      %v2312 = vshll.u32 %v2155, 16
      %v2314 = vrot.slane %v2312, 5
      %v2315 = vor.u32 %v2311, %v2314
      %v2316 = vrot.slane %v2315, 4
      %v2318 = vshll.u32 %v2156, 16
      %v2320 = vrot.slane %v2318, 5
      %v2321 = vsel %vm288, %v2316, %v2320
      %v2322 = vshrl.u32 %v2156, 16
      %v2324 = vrot.slane %v2322, 4
      %v2325 = vor.u32 %v2324, %v2320
      %v2326 = vrot.slane %v2325, 4
      %v2328 = vshll.u32 %v2157, 16
      %v2330 = vrot.slane %v2328, 5
      %v2331 = vsel %vm288, %v2326, %v2330
      %v2333 = vshrl.u32 %v2158, 16
      %v2335 = vrot.slane %v2333, 4
      %v2336 = vshll.u32 %v2158, 16
      %v2338 = vrot.slane %v2336, 5
      %v2339 = vor.u32 %v2335, %v2338
      %v2340 = vrot.slane %v2339, 4
      %v2342 = vshll.u32 %v2159, 16
      %v2344 = vrot.slane %v2342, 5
      %v2345 = vsel %vm288, %v2340, %v2344
      %v2346 = vshrl.u32 %v2159, 16
      %v2348 = vrot.slane %v2346, 4
      %v2349 = vor.u32 %v2348, %v2344
      %v2350 = vrot.slane %v2349, 4
      %v2352 = vshll.u32 %v2160, 16
      %v2354 = vrot.slane %v2352, 5
      %v2355 = vsel %vm288, %v2350, %v2354
      %v2357 = vshrl.u32 %v2161, 16
      %v2359 = vrot.slane %v2357, 4
      %v2360 = vshll.u32 %v2161, 16
      %v2362 = vrot.slane %v2360, 5
      %v2363 = vor.u32 %v2359, %v2362
      %v2364 = vrot.slane %v2363, 4
      %v2366 = vshll.u32 %v2162, 16
      %v2368 = vrot.slane %v2366, 5
      %v2369 = vsel %vm288, %v2364, %v2368
      %v2370 = vshrl.u32 %v2162, 16
      %v2372 = vrot.slane %v2370, 4
      %v2373 = vor.u32 %v2372, %v2368
      %v2374 = vrot.slane %v2373, 4
      %v2376 = vshll.u32 %v2163, 16
      %v2378 = vrot.slane %v2376, 5
      %v2379 = vsel %vm288, %v2374, %v2378
      %v2381 = vshrl.u32 %v2164, 16
      %v2383 = vrot.slane %v2381, 4
      %v2384 = vshll.u32 %v2164, 16
      %v2386 = vrot.slane %v2384, 5
      %v2387 = vor.u32 %v2383, %v2386
      %v2388 = vrot.slane %v2387, 4
      %v2390 = vshll.u32 %v2165, 16
      %v2392 = vrot.slane %v2390, 5
      %v2393 = vsel %vm288, %v2388, %v2392
      %v2394 = vshrl.u32 %v2165, 16
      %v2396 = vrot.slane %v2394, 4
      %v2397 = vor.u32 %v2396, %v2392
      %v2398 = vrot.slane %v2397, 4
      %v2400 = vshll.u32 %v2166, 16
      %v2402 = vrot.slane %v2400, 5
      %v2403 = vsel %vm288, %v2398, %v2402
      %v2405 = vshrl.u32 %v2167, 16
      %v2407 = vrot.slane %v2405, 4
      %v2408 = vshll.u32 %v2167, 16
      %v2410 = vrot.slane %v2408, 5
      %v2411 = vor.u32 %v2407, %v2410
      %v2412 = vrot.slane %v2411, 4
      %v2414 = vshll.u32 %v2168, 16
      %v2416 = vrot.slane %v2414, 5
      %v2417 = vsel %vm288, %v2412, %v2416
      %v2418 = vshrl.u32 %v2168, 16
      %v2420 = vrot.slane %v2418, 4
      %v2421 = vor.u32 %v2420, %v2416
      %v2422 = vrot.slane %v2421, 4
      %v2424 = vshll.u32 %v2169, 16
      %v2426 = vrot.slane %v2424, 5
      %v2427 = vsel %vm288, %v2422, %v2426
      %v2429 = vshrl.u32 %v2170, 16
      %v2431 = vrot.slane %v2429, 4
      %v2432 = vshll.u32 %v2170, 16
      %v2434 = vrot.slane %v2432, 5
      %v2435 = vor.u32 %v2431, %v2434
      %v2436 = vrot.slane %v2435, 4
      %v2438 = vshll.u32 %v2171, 16
      %v2440 = vrot.slane %v2438, 5
      %v2441 = vsel %vm288, %v2436, %v2440
      %v2442 = vshrl.u32 %v2171, 16
      %v2444 = vrot.slane %v2442, 4
      %v2445 = vor.u32 %v2444, %v2440
      %v2446 = vrot.slane %v2445, 4
      %v2448 = vshll.u32 %v2172, 16
      %v2450 = vrot.slane %v2448, 5
      %v2451 = vsel %vm288, %v2446, %v2450
      %v2453 = vshrl.u32 %v2173, 16
      %v2455 = vrot.slane %v2453, 4
      %v2456 = vshll.u32 %v2173, 16
      %v2458 = vrot.slane %v2456, 5
      %v2459 = vor.u32 %v2455, %v2458
      %v2460 = vrot.slane %v2459, 4
      %v2462 = vshll.u32 %v2174, 16
      %v2464 = vrot.slane %v2462, 5
      %v2465 = vsel %vm288, %v2460, %v2464
      %v2466 = vshrl.u32 %v2174, 16
      %v2468 = vrot.slane %v2466, 4
      %v2469 = vor.u32 %v2468, %v2464
      %v2470 = vrot.slane %v2469, 4
      %v2472 = vshll.u32 %v2175, 16
      %v2474 = vrot.slane %v2472, 5
      %v2475 = vsel %vm288, %v2470, %v2474
      %v2477 = vshrl.u32 %v2176, 16
      %v2479 = vrot.slane %v2477, 4
      %v2480 = vshll.u32 %v2176, 16
      %v2482 = vrot.slane %v2480, 5
      %v2483 = vor.u32 %v2479, %v2482
      %v2484 = vrot.slane %v2483, 4
      %v2486 = vshll.u32 %v2177, 16
      %v2488 = vrot.slane %v2486, 5
      %v2489 = vsel %vm288, %v2484, %v2488
      %v2490 = vshrl.u32 %v2177, 16
      %v2492 = vrot.slane %v2490, 4
      %v2493 = vor.u32 %v2492, %v2488
      %v2494 = vrot.slane %v2493, 4
      %v2496 = vshll.u32 %v2178, 16
      %v2498 = vrot.slane %v2496, 5
      %v2499 = vsel %vm288, %v2494, %v2498
      %v2501 = vshrl.u32 %v2179, 16
      %v2503 = vrot.slane %v2501, 4
      %v2504 = vshll.u32 %v2179, 16
      %v2506 = vrot.slane %v2504, 5
      %v2507 = vor.u32 %v2503, %v2506
      %v2508 = vrot.slane %v2507, 4
      %v2510 = vshll.u32 %v2180, 16
      %v2512 = vrot.slane %v2510, 5
      %v2513 = vsel %vm288, %v2508, %v2512
      %v2514 = vshrl.u32 %v2180, 16
      %v2516 = vrot.slane %v2514, 4
      %v2517 = vor.u32 %v2516, %v2512
      %v2518 = vrot.slane %v2517, 4
      %v2520 = vshll.u32 %v2181, 16
      %v2522 = vrot.slane %v2520, 5
      %v2523 = vsel %vm288, %v2518, %v2522
      %v2525 = vshrl.u32 %v2182, 16
      %v2527 = vrot.slane %v2525, 4
      %v2528 = vshll.u32 %v2182, 16
      %v2530 = vrot.slane %v2528, 5
      %v2531 = vor.u32 %v2527, %v2530
      %v2532 = vrot.slane %v2531, 4
      %v2534 = vshll.u32 %v2183, 16
      %v2536 = vrot.slane %v2534, 5
      %v2537 = vsel %vm288, %v2532, %v2536
      %v2538 = vshrl.u32 %v2183, 16
      %v2540 = vrot.slane %v2538, 4
      %v2541 = vor.u32 %v2540, %v2536
      %v2542 = vrot.slane %v2541, 4
      %v2544 = vshll.u32 %v2184, 16
      %v2546 = vrot.slane %v2544, 5
      %v2547 = vsel %vm288, %v2542, %v2546
      %v2549 = vshrl.u32 %v2185, 16
      %v2551 = vrot.slane %v2549, 4
      %v2552 = vshll.u32 %v2185, 16
      %v2554 = vrot.slane %v2552, 5
      %v2555 = vor.u32 %v2551, %v2554
      %v2556 = vrot.slane %v2555, 4
      %v2558 = vshll.u32 %v2186, 16
      %v2560 = vrot.slane %v2558, 5
      %v2561 = vsel %vm288, %v2556, %v2560
      %v2562 = vshrl.u32 %v2186, 16
      %v2564 = vrot.slane %v2562, 4
      %v2565 = vor.u32 %v2564, %v2560
      %v2566 = vrot.slane %v2565, 4
      %v2568 = vshll.u32 %v2187, 16
      %v2570 = vrot.slane %v2568, 5
      %v2571 = vsel %vm288, %v2566, %v2570
      %s2572 = scalar_lea.vmem %s1, 256
      %v2573 = vld [vmem:[%s2572] sm:$0xf]
      %v2574 = vld [vmem:[%s2572 + $0x4] sm:$0xf]
      %v2575 = vld [vmem:[%s2572 + $0x8] sm:$0xf]
      %v2576 = vld [vmem:[%s2572 + $0xc] sm:$0xf]
      %v2577 = vld [vmem:[%s2572 + $0x10] sm:$0xf]
      %v2578 = vld [vmem:[%s2572 + $0x14] sm:$0xf]
      %v2579 = vld [vmem:[%s2572 + $0x18] sm:$0xf]
      %v2580 = vld [vmem:[%s2572 + $0x1c] sm:$0xf]
      %v2581 = vld [vmem:[%s2572 + $0x20] sm:$0xf]
      %v2582 = vld [vmem:[%s2572 + $0x24] sm:$0xf]
      %v2583 = vld [vmem:[%s2572 + $0x28] sm:$0xf]
      %v2584 = vld [vmem:[%s2572 + $0x2c] sm:$0xf]
      %v2585 = vld [vmem:[%s2572 + $0x30] sm:$0xf]
      %v2586 = vld [vmem:[%s2572 + $0x34] sm:$0xf]
      %v2587 = vld [vmem:[%s2572 + $0x38] sm:$0xf]
      %v2588 = vld [vmem:[%s2572 + $0x3c] sm:$0xf]
      %v2589 = vunpack.c.l.b16 %v2201
      %v2590 = vunpack.c.l.b16 %v2211
      %v2591 = vunpack.c.l.b16 %v2225
      %v2592 = vunpack.c.l.b16 %v2235
      %v2593 = vunpack.c.l.b16 %v2249
      %v2594 = vunpack.c.l.b16 %v2259
      %v2595 = vunpack.c.l.b16 %v2273
      %v2596 = vunpack.c.l.b16 %v2283
      %v2597 = vunpack.c.l.b16 %v2297
      %v2598 = vunpack.c.l.b16 %v2307
      %v2599 = vunpack.c.l.b16 %v2321
      %v2600 = vunpack.c.l.b16 %v2331
      %v2601 = vunpack.c.l.b16 %v2345
      %v2602 = vunpack.c.l.b16 %v2355
      %v2603 = vunpack.c.l.b16 %v2369
      %v2604 = vunpack.c.l.b16 %v2379
      %v2605 = vunpack.c.l.b16 %v2393
      %v2606 = vunpack.c.l.b16 %v2403
      %v2607 = vunpack.c.l.b16 %v2417
      %v2608 = vunpack.c.l.b16 %v2427
      %v2609 = vunpack.c.l.b16 %v2441
      %v2610 = vunpack.c.l.b16 %v2451
      %v2611 = vunpack.c.l.b16 %v2465
      %v2612 = vunpack.c.l.b16 %v2475
      %v2613 = vunpack.c.l.b16 %v2489
      %v2614 = vunpack.c.l.b16 %v2499
      %v2615 = vunpack.c.l.b16 %v2513
      %v2616 = vunpack.c.l.b16 %v2523
      %v2617 = vunpack.c.l.b16 %v2537
      %v2618 = vunpack.c.l.b16 %v2547
      %v2619 = vunpack.c.l.b16 %v2561
      %v2620 = vunpack.c.l.b16 %v2571
      %v2621 = vpack.c.b16 %v2590, %v2589
      %v2622 = vpack.c.b16 %v2592, %v2591
      %v2623 = vpack.c.b16 %v2594, %v2593
      %v2624 = vpack.c.b16 %v2596, %v2595
      %v2625 = vpack.c.b16 %v2598, %v2597
      %v2626 = vpack.c.b16 %v2600, %v2599
      %v2627 = vpack.c.b16 %v2602, %v2601
      %v2628 = vpack.c.b16 %v2604, %v2603
      %v2629 = vpack.c.b16 %v2606, %v2605
      %v2630 = vpack.c.b16 %v2608, %v2607
      %v2631 = vpack.c.b16 %v2610, %v2609
      %v2632 = vpack.c.b16 %v2612, %v2611
      %v2633 = vpack.c.b16 %v2614, %v2613
      %v2634 = vpack.c.b16 %v2616, %v2615
      %v2635 = vpack.c.b16 %v2618, %v2617
      %v2636 = vpack.c.b16 %v2620, %v2619
      %v2669 = vunpack.c.l.b16 %v2573
      %v2670 = vunpack.c.l.b16 %v2574
      %v2671 = vunpack.c.l.b16 %v2575
      %v2672 = vunpack.c.l.b16 %v2576
      %v2673 = vunpack.c.l.b16 %v2577
      %v2674 = vunpack.c.l.b16 %v2578
      %v2675 = vunpack.c.l.b16 %v2579
      %v2676 = vunpack.c.l.b16 %v2580
      %v2677 = vunpack.c.l.b16 %v2581
      %v2678 = vunpack.c.l.b16 %v2582
      %v2679 = vunpack.c.l.b16 %v2583
      %v2680 = vunpack.c.l.b16 %v2584
      %v2681 = vunpack.c.l.b16 %v2585
      %v2682 = vunpack.c.l.b16 %v2586
      %v2683 = vunpack.c.l.b16 %v2587
      %v2684 = vunpack.c.l.b16 %v2588
      %v2685 = vpack.c.b16 %v2670, %v2669
      %v2686 = vpack.c.b16 %v2672, %v2671
      %v2687 = vpack.c.b16 %v2674, %v2673
      %v2688 = vpack.c.b16 %v2676, %v2675
      %v2689 = vpack.c.b16 %v2678, %v2677
      %v2690 = vpack.c.b16 %v2680, %v2679
      %v2691 = vpack.c.b16 %v2682, %v2681
      %v2692 = vpack.c.b16 %v2684, %v2683
      %2701 = vmatprep.subr.bf16.mxu0 0
      %2702 = vmatpush1.bf16.msra.mxu0 %v2685
      %2703 = vmatprep.subr.bf16.mxu0 0
      %2704 = vmatpush1.bf16.msra.mxu0 %v2686
      %2705 = vmatprep.subr.bf16.mxu0 0
      %2706 = vmatpush1.bf16.msra.mxu0 %v2687
      %2707 = vmatprep.subr.bf16.mxu0 0
      %2708 = vmatpush1.bf16.msra.mxu0 %v2688
      %2709 = vmatprep.subr.bf16.mxu0 0
      %2710 = vmatpush1.bf16.msra.mxu0 %v2689
      %2711 = vmatprep.subr.bf16.mxu0 0
      %2712 = vmatpush1.bf16.msra.mxu0 %v2690
      %2713 = vmatprep.subr.bf16.mxu0 0
      %2714 = vmatpush1.bf16.msra.mxu0 %v2691
      %2715 = vmatprep.subr.bf16.mxu0 0
      %2716 = vmatpush1.bf16.msra.mxu0 %v2692
      %2717 = vmatprep.subr.bf16.mxu0 0
      %2718 = vmatpush1.bf16.msra.mxu0 0
      %2719 = vmatprep.subr.bf16.mxu0 0
      %2720 = vmatpush1.bf16.msra.mxu0 0
      %2721 = vmatprep.subr.bf16.mxu0 0
      %2722 = vmatpush1.bf16.msra.mxu0 0
      %2723 = vmatprep.subr.bf16.mxu0 0
      %2724 = vmatpush1.bf16.msra.mxu0 0
      %2725 = vmatprep.subr.bf16.mxu0 0
      %2726 = vmatpush1.bf16.msra.mxu0 0
      %2727 = vmatprep.subr.bf16.mxu0 0
      %2728 = vmatpush1.bf16.msra.mxu0 0
      %2729 = vmatprep.subr.bf16.mxu0 0
      %2730 = vmatpush1.bf16.msra.mxu0 0
      %2731 = vmatprep.subr.bf16.mxu0 0
      %2732 = vmatpush1.bf16.msra.mxu0 0
      %2733 = vmatprep.mubr.bf16.mxu0 0
      %2734 = vmatmul.mubr.bf16.gmra.mrb[0].mxu0 %v2621
      %v2735 = vpop.f32.mrb[0].mxu0
      %v2736 = vadd.f32 0.0, %v2735
      %v2737 = vpop.f32.mrb[0].mxu0
      %v2738 = vpop.f32.mrb[0].mxu0
      %v2739 = vadd.f32 0.0, %v2738
      %v2740 = vpop.f32.mrb[0].mxu0
      %2741 = vmatprep.mubr.bf16.mxu0 0
      %2742 = vmatmul.mubr.bf16.gmra.mrb[0].mxu0 %v2622
      %v2743 = vpop.f32.mrb[0].mxu0
      %v2744 = vadd.f32 0.0, %v2743
      %v2745 = vpop.f32.mrb[0].mxu0
      %v2746 = vpop.f32.mrb[0].mxu0
      %v2747 = vadd.f32 0.0, %v2746
      %v2748 = vpop.f32.mrb[0].mxu0
      %2749 = vmatprep.mubr.bf16.mxu0 0
      %2750 = vmatmul.mubr.bf16.gmra.mrb[0].mxu0 %v2623
      %v2751 = vpop.f32.mrb[0].mxu0
      %v2752 = vadd.f32 0.0, %v2751
      %v2753 = vpop.f32.mrb[0].mxu0
      %v2754 = vpop.f32.mrb[0].mxu0
      %v2755 = vadd.f32 0.0, %v2754
      %v2756 = vpop.f32.mrb[0].mxu0
      %2757 = vmatprep.mubr.bf16.mxu0 0
      %2758 = vmatmul.mubr.bf16.gmra.mrb[0].mxu0 %v2624
      %v2759 = vpop.f32.mrb[0].mxu0
      %v2760 = vadd.f32 0.0, %v2759
      %v2761 = vpop.f32.mrb[0].mxu0
      %v2762 = vpop.f32.mrb[0].mxu0
      %v2763 = vadd.f32 0.0, %v2762
      %v2764 = vpop.f32.mrb[0].mxu0
      %2765 = vmatprep.mubr.bf16.mxu0 0
      %2766 = vmatmul.mubr.bf16.gmra.mrb[0].mxu0 %v2625
      %v2767 = vpop.f32.mrb[0].mxu0
      %v2768 = vadd.f32 0.0, %v2767
      %v2769 = vpop.f32.mrb[0].mxu0
      %v2770 = vpop.f32.mrb[0].mxu0
      %v2771 = vadd.f32 0.0, %v2770
      %v2772 = vpop.f32.mrb[0].mxu0
      %2773 = vmatprep.mubr.bf16.mxu0 0
      %2774 = vmatmul.mubr.bf16.gmra.mrb[0].mxu0 %v2626
      %v2775 = vpop.f32.mrb[0].mxu0
      %v2776 = vadd.f32 0.0, %v2775
      %v2777 = vpop.f32.mrb[0].mxu0
      %v2778 = vpop.f32.mrb[0].mxu0
      %v2779 = vadd.f32 0.0, %v2778
      %v2780 = vpop.f32.mrb[0].mxu0
      %2781 = vmatprep.mubr.bf16.mxu0 0
      %2782 = vmatmul.mubr.bf16.gmra.mrb[0].mxu0 %v2627
      %v2783 = vpop.f32.mrb[0].mxu0
      %v2784 = vadd.f32 0.0, %v2783
      %v2785 = vpop.f32.mrb[0].mxu0
      %v2786 = vpop.f32.mrb[0].mxu0
      %v2787 = vadd.f32 0.0, %v2786
      %v2788 = vpop.f32.mrb[0].mxu0
      %2789 = vmatprep.mubr.bf16.mxu0 0
      %2790 = vmatmul.mubr.bf16.gmra.mrb[0].mxu0 %v2628
      %v2791 = vpop.f32.mrb[0].mxu0
      %v2792 = vadd.f32 0.0, %v2791
      %v2793 = vpop.f32.mrb[0].mxu0
      %v2794 = vpop.f32.mrb[0].mxu0
      %v2795 = vadd.f32 0.0, %v2794
      %v2796 = vpop.f32.mrb[0].mxu0
      %2797 = vmatprep.mubr.bf16.mxu0 0
      %2798 = vmatmul.mubr.bf16.gmra.mrb[0].mxu0 %v2629
      %v2799 = vpop.f32.mrb[0].mxu0
      %v2800 = vadd.f32 0.0, %v2799
      %v2801 = vpop.f32.mrb[0].mxu0
      %v2802 = vpop.f32.mrb[0].mxu0
      %v2803 = vadd.f32 0.0, %v2802
      %v2804 = vpop.f32.mrb[0].mxu0
      %2805 = vmatprep.mubr.bf16.mxu0 0
      %2806 = vmatmul.mubr.bf16.gmra.mrb[0].mxu0 %v2630
      %v2807 = vpop.f32.mrb[0].mxu0
      %v2808 = vadd.f32 0.0, %v2807
      %v2809 = vpop.f32.mrb[0].mxu0
      %v2810 = vpop.f32.mrb[0].mxu0
      %v2811 = vadd.f32 0.0, %v2810
      %v2812 = vpop.f32.mrb[0].mxu0
      %2813 = vmatprep.mubr.bf16.mxu0 0
      %2814 = vmatmul.mubr.bf16.gmra.mrb[0].mxu0 %v2631
      %v2815 = vpop.f32.mrb[0].mxu0
      %v2816 = vadd.f32 0.0, %v2815
      %v2817 = vpop.f32.mrb[0].mxu0
      %v2818 = vpop.f32.mrb[0].mxu0
      %v2819 = vadd.f32 0.0, %v2818
      %v2820 = vpop.f32.mrb[0].mxu0
      %2821 = vmatprep.mubr.bf16.mxu0 0
      %2822 = vmatmul.mubr.bf16.gmra.mrb[0].mxu0 %v2632
      %v2823 = vpop.f32.mrb[0].mxu0
      %v2824 = vadd.f32 0.0, %v2823
      %v2825 = vpop.f32.mrb[0].mxu0
      %v2826 = vpop.f32.mrb[0].mxu0
      %v2827 = vadd.f32 0.0, %v2826
      %v2828 = vpop.f32.mrb[0].mxu0
      %2829 = vmatprep.mubr.bf16.mxu0 0
      %2830 = vmatmul.mubr.bf16.gmra.mrb[0].mxu0 %v2633
      %v2831 = vpop.f32.mrb[0].mxu0
      %v2832 = vadd.f32 0.0, %v2831
      %v2833 = vpop.f32.mrb[0].mxu0
      %v2834 = vpop.f32.mrb[0].mxu0
      %v2835 = vadd.f32 0.0, %v2834
      %v2836 = vpop.f32.mrb[0].mxu0
      %2837 = vmatprep.mubr.bf16.mxu0 0
      %2838 = vmatmul.mubr.bf16.gmra.mrb[0].mxu0 %v2634
      %v2839 = vpop.f32.mrb[0].mxu0
      %v2840 = vadd.f32 0.0, %v2839
      %v2841 = vpop.f32.mrb[0].mxu0
      %v2842 = vpop.f32.mrb[0].mxu0
      %v2843 = vadd.f32 0.0, %v2842
      %v2844 = vpop.f32.mrb[0].mxu0
      %2845 = vmatprep.mubr.bf16.mxu0 0
      %2846 = vmatmul.mubr.bf16.gmra.mrb[0].mxu0 %v2635
      %v2847 = vpop.f32.mrb[0].mxu0
      %v2848 = vadd.f32 0.0, %v2847
      %v2849 = vpop.f32.mrb[0].mxu0
      %v2850 = vpop.f32.mrb[0].mxu0
      %v2851 = vadd.f32 0.0, %v2850
      %v2852 = vpop.f32.mrb[0].mxu0
      %2853 = vmatprep.mubr.bf16.mxu0 0
      %2854 = vmatmul.mubr.bf16.gmra.mrb[0].mxu0 %v2636
      %v2855 = vpop.f32.mrb[0].mxu0
      %v2856 = vadd.f32 0.0, %v2855
      %v2857 = vpop.f32.mrb[0].mxu0
      %v2858 = vpop.f32.mrb[0].mxu0
      %v2859 = vadd.f32 0.0, %v2858
      %v2860 = vpop.f32.mrb[0].mxu0
      %2861 = vdwg.mxu0
      %v2862 = vadd.f32 %v2108, %v2736
      %v2863 = vadd.f32 %v2109, %v2739
      %v2864 = vadd.f32 %v2110, %v2744
      %v2865 = vadd.f32 %v2111, %v2747
      %v2866 = vadd.f32 %v2112, %v2752
      %v2867 = vadd.f32 %v2113, %v2755
      %v2868 = vadd.f32 %v2114, %v2760
      %v2869 = vadd.f32 %v2115, %v2763
      %v2870 = vadd.f32 %v2116, %v2768
      %v2871 = vadd.f32 %v2117, %v2771
      %v2872 = vadd.f32 %v2118, %v2776
      %v2873 = vadd.f32 %v2119, %v2779
      %v2874 = vadd.f32 %v2120, %v2784
      %v2875 = vadd.f32 %v2121, %v2787
      %v2876 = vadd.f32 %v2122, %v2792
      %v2877 = vadd.f32 %v2123, %v2795
      %v2878 = vadd.f32 %v2124, %v2800
      %v2879 = vadd.f32 %v2125, %v2803
      %v2880 = vadd.f32 %v2126, %v2808
      %v2881 = vadd.f32 %v2127, %v2811
      %v2882 = vadd.f32 %v2128, %v2816
      %v2883 = vadd.f32 %v2129, %v2819
      %v2884 = vadd.f32 %v2130, %v2824
      %v2885 = vadd.f32 %v2131, %v2827
      %v2886 = vadd.f32 %v2132, %v2832
      %v2887 = vadd.f32 %v2133, %v2835
      %v2888 = vadd.f32 %v2134, %v2840
      %v2889 = vadd.f32 %v2135, %v2843
      %v2890 = vadd.f32 %v2136, %v2848
      %v2891 = vadd.f32 %v2137, %v2851
      %v2892 = vadd.f32 %v2138, %v2856
      %v2893 = vadd.f32 %v2139, %v2859
      %v2894 = vld [vmem:[%s1753] sm:$0xe]
      %v2895 = vld [vmem:[%s1753 + $0xc] sm:$0xe]
      %v2896 = vld [vmem:[%s1753 + $0x18] sm:$0xe]
      %v2897 = vld [vmem:[%s1753 + $0x24] sm:$0xe]
      %v2898 = vld [vmem:[%s1753 + $0x30] sm:$0xe]
      %v2899 = vld [vmem:[%s1753 + $0x3c] sm:$0xe]
      %v2900 = vld [vmem:[%s1753 + $0x48] sm:$0xe]
      %v2901 = vld [vmem:[%s1753 + $0x54] sm:$0xe]
      %v2902 = vld [vmem:[%s1753 + $0x60] sm:$0xe]
      %v2903 = vld [vmem:[%s1753 + $0x6c] sm:$0xe]
      %v2904 = vld [vmem:[%s1753 + $0x78] sm:$0xe]
      %v2905 = vld [vmem:[%s1753 + $0x84] sm:$0xe]
      %v2906 = vld [vmem:[%s1753 + $0x90] sm:$0xe]
      %v2907 = vld [vmem:[%s1753 + $0x9c] sm:$0xe]
      %v2908 = vld [vmem:[%s1753 + $0xa8] sm:$0xe]
      %v2909 = vld [vmem:[%s1753 + $0xb4] sm:$0xe]
      %v2958 = vrot.slane %v2894, 5
      %v2959 = vrot.slane %v2958, 4
      %v2960 = vrot.slane %v2141, 5
      %v2961 = vsel %vm1318, %v2959, %v2960
      %v2962 = vrot.slane %v2960, 4
      %v2963 = vrot.slane %v2142, 5
      %v2964 = vsel %vm1318, %v2962, %v2963
      %v2965 = vrot.slane %v2895, 5
      %v2966 = vrot.slane %v2965, 4
      %v2967 = vrot.slane %v2144, 5
      %v2968 = vsel %vm1318, %v2966, %v2967
      %v2969 = vrot.slane %v2967, 4
      %v2970 = vrot.slane %v2145, 5
      %v2971 = vsel %vm1318, %v2969, %v2970
      %v2972 = vrot.slane %v2896, 5
      %v2973 = vrot.slane %v2972, 4
      %v2974 = vrot.slane %v2147, 5
      %v2975 = vsel %vm1318, %v2973, %v2974
      %v2976 = vrot.slane %v2974, 4
      %v2977 = vrot.slane %v2148, 5
      %v2978 = vsel %vm1318, %v2976, %v2977
      %v2979 = vrot.slane %v2897, 5
      %v2980 = vrot.slane %v2979, 4
      %v2981 = vrot.slane %v2150, 5
      %v2982 = vsel %vm1318, %v2980, %v2981
      %v2983 = vrot.slane %v2981, 4
      %v2984 = vrot.slane %v2151, 5
      %v2985 = vsel %vm1318, %v2983, %v2984
      %v2986 = vrot.slane %v2898, 5
      %v2987 = vrot.slane %v2986, 4
      %v2988 = vrot.slane %v2153, 5
      %v2989 = vsel %vm1318, %v2987, %v2988
      %v2990 = vrot.slane %v2988, 4
      %v2991 = vrot.slane %v2154, 5
      %v2992 = vsel %vm1318, %v2990, %v2991
      %v2993 = vrot.slane %v2899, 5
      %v2994 = vrot.slane %v2993, 4
      %v2995 = vrot.slane %v2156, 5
      %v2996 = vsel %vm1318, %v2994, %v2995
      %v2997 = vrot.slane %v2995, 4
      %v2998 = vrot.slane %v2157, 5
      %v2999 = vsel %vm1318, %v2997, %v2998
      %v3000 = vrot.slane %v2900, 5
      %v3001 = vrot.slane %v3000, 4
      %v3002 = vrot.slane %v2159, 5
      %v3003 = vsel %vm1318, %v3001, %v3002
      %v3004 = vrot.slane %v3002, 4
      %v3005 = vrot.slane %v2160, 5
      %v3006 = vsel %vm1318, %v3004, %v3005
      %v3007 = vrot.slane %v2901, 5
      %v3008 = vrot.slane %v3007, 4
      %v3009 = vrot.slane %v2162, 5
      %v3010 = vsel %vm1318, %v3008, %v3009
      %v3011 = vrot.slane %v3009, 4
      %v3012 = vrot.slane %v2163, 5
      %v3013 = vsel %vm1318, %v3011, %v3012
      %v3014 = vrot.slane %v2902, 5
      %v3015 = vrot.slane %v3014, 4
      %v3016 = vrot.slane %v2165, 5
      %v3017 = vsel %vm1318, %v3015, %v3016
      %v3018 = vrot.slane %v3016, 4
      %v3019 = vrot.slane %v2166, 5
      %v3020 = vsel %vm1318, %v3018, %v3019
      %v3021 = vrot.slane %v2903, 5
      %v3022 = vrot.slane %v3021, 4
      %v3023 = vrot.slane %v2168, 5
      %v3024 = vsel %vm1318, %v3022, %v3023
      %v3025 = vrot.slane %v3023, 4
      %v3026 = vrot.slane %v2169, 5
      %v3027 = vsel %vm1318, %v3025, %v3026
      %v3028 = vrot.slane %v2904, 5
      %v3029 = vrot.slane %v3028, 4
      %v3030 = vrot.slane %v2171, 5
      %v3031 = vsel %vm1318, %v3029, %v3030
      %v3032 = vrot.slane %v3030, 4
      %v3033 = vrot.slane %v2172, 5
      %v3034 = vsel %vm1318, %v3032, %v3033
      %v3035 = vrot.slane %v2905, 5
      %v3036 = vrot.slane %v3035, 4
      %v3037 = vrot.slane %v2174, 5
      %v3038 = vsel %vm1318, %v3036, %v3037
      %v3039 = vrot.slane %v3037, 4
      %v3040 = vrot.slane %v2175, 5
      %v3041 = vsel %vm1318, %v3039, %v3040
      %v3042 = vrot.slane %v2906, 5
      %v3043 = vrot.slane %v3042, 4
      %v3044 = vrot.slane %v2177, 5
      %v3045 = vsel %vm1318, %v3043, %v3044
      %v3046 = vrot.slane %v3044, 4
      %v3047 = vrot.slane %v2178, 5
      %v3048 = vsel %vm1318, %v3046, %v3047
      %v3049 = vrot.slane %v2907, 5
      %v3050 = vrot.slane %v3049, 4
      %v3051 = vrot.slane %v2180, 5
      %v3052 = vsel %vm1318, %v3050, %v3051
      %v3053 = vrot.slane %v3051, 4
      %v3054 = vrot.slane %v2181, 5
      %v3055 = vsel %vm1318, %v3053, %v3054
      %v3056 = vrot.slane %v2908, 5
      %v3057 = vrot.slane %v3056, 4
      %v3058 = vrot.slane %v2183, 5
      %v3059 = vsel %vm1318, %v3057, %v3058
      %v3060 = vrot.slane %v3058, 4
      %v3061 = vrot.slane %v2184, 5
      %v3062 = vsel %vm1318, %v3060, %v3061
      %v3063 = vrot.slane %v2909, 5
      %v3064 = vrot.slane %v3063, 4
      %v3065 = vrot.slane %v2186, 5
      %v3066 = vsel %vm1318, %v3064, %v3065
      %v3067 = vrot.slane %v3065, 4
      %v3068 = vrot.slane %v2187, 5
      %v3069 = vsel %vm1318, %v3067, %v3068
      %s3070 = scalar_lea.vmem %s1, 320
      %v3071 = vld [vmem:[%s3070] sm:$0xf]
      %v3072 = vld [vmem:[%s3070 + $0x4] sm:$0xf]
      %v3073 = vld [vmem:[%s3070 + $0x8] sm:$0xf]
      %v3074 = vld [vmem:[%s3070 + $0xc] sm:$0xf]
      %v3075 = vld [vmem:[%s3070 + $0x10] sm:$0xf]
      %v3076 = vld [vmem:[%s3070 + $0x14] sm:$0xf]
      %v3077 = vld [vmem:[%s3070 + $0x18] sm:$0xf]
      %v3078 = vld [vmem:[%s3070 + $0x1c] sm:$0xf]
      %v3079 = vld [vmem:[%s3070 + $0x20] sm:$0xf]
      %v3080 = vld [vmem:[%s3070 + $0x24] sm:$0xf]
      %v3081 = vld [vmem:[%s3070 + $0x28] sm:$0xf]
      %v3082 = vld [vmem:[%s3070 + $0x2c] sm:$0xf]
      %v3083 = vld [vmem:[%s3070 + $0x30] sm:$0xf]
      %v3084 = vld [vmem:[%s3070 + $0x34] sm:$0xf]
      %v3085 = vld [vmem:[%s3070 + $0x38] sm:$0xf]
      %v3086 = vld [vmem:[%s3070 + $0x3c] sm:$0xf]
      %v3087 = vunpack.c.l.b16 %v2961
      %v3088 = vunpack.c.l.b16 %v2964
      %v3089 = vunpack.c.l.b16 %v2968
      %v3090 = vunpack.c.l.b16 %v2971
      %v3091 = vunpack.c.l.b16 %v2975
      %v3092 = vunpack.c.l.b16 %v2978
      %v3093 = vunpack.c.l.b16 %v2982
      %v3094 = vunpack.c.l.b16 %v2985
      %v3095 = vunpack.c.l.b16 %v2989
      %v3096 = vunpack.c.l.b16 %v2992
      %v3097 = vunpack.c.l.b16 %v2996
      %v3098 = vunpack.c.l.b16 %v2999
      %v3099 = vunpack.c.l.b16 %v3003
      %v3100 = vunpack.c.l.b16 %v3006
      %v3101 = vunpack.c.l.b16 %v3010
      %v3102 = vunpack.c.l.b16 %v3013
      %v3103 = vunpack.c.l.b16 %v3017
      %v3104 = vunpack.c.l.b16 %v3020
      %v3105 = vunpack.c.l.b16 %v3024
      %v3106 = vunpack.c.l.b16 %v3027
      %v3107 = vunpack.c.l.b16 %v3031
      %v3108 = vunpack.c.l.b16 %v3034
      %v3109 = vunpack.c.l.b16 %v3038
      %v3110 = vunpack.c.l.b16 %v3041
      %v3111 = vunpack.c.l.b16 %v3045
      %v3112 = vunpack.c.l.b16 %v3048
      %v3113 = vunpack.c.l.b16 %v3052
      %v3114 = vunpack.c.l.b16 %v3055
      %v3115 = vunpack.c.l.b16 %v3059
      %v3116 = vunpack.c.l.b16 %v3062
      %v3117 = vunpack.c.l.b16 %v3066
      %v3118 = vunpack.c.l.b16 %v3069
      %v3119 = vpack.c.b16 %v3088, %v3087
      %v3120 = vpack.c.b16 %v3090, %v3089
      %v3121 = vpack.c.b16 %v3092, %v3091
      %v3122 = vpack.c.b16 %v3094, %v3093
      %v3123 = vpack.c.b16 %v3096, %v3095
      %v3124 = vpack.c.b16 %v3098, %v3097
      %v3125 = vpack.c.b16 %v3100, %v3099
      %v3126 = vpack.c.b16 %v3102, %v3101
      %v3127 = vpack.c.b16 %v3104, %v3103
      %v3128 = vpack.c.b16 %v3106, %v3105
      %v3129 = vpack.c.b16 %v3108, %v3107
      %v3130 = vpack.c.b16 %v3110, %v3109
      %v3131 = vpack.c.b16 %v3112, %v3111
      %v3132 = vpack.c.b16 %v3114, %v3113
      %v3133 = vpack.c.b16 %v3116, %v3115
      %v3134 = vpack.c.b16 %v3118, %v3117
      %v3167 = vunpack.c.l.b16 %v3071
      %v3168 = vunpack.c.l.b16 %v3072
      %v3169 = vunpack.c.l.b16 %v3073
      %v3170 = vunpack.c.l.b16 %v3074
      %v3171 = vunpack.c.l.b16 %v3075
      %v3172 = vunpack.c.l.b16 %v3076
      %v3173 = vunpack.c.l.b16 %v3077
      %v3174 = vunpack.c.l.b16 %v3078
      %v3175 = vunpack.c.l.b16 %v3079
      %v3176 = vunpack.c.l.b16 %v3080
      %v3177 = vunpack.c.l.b16 %v3081
      %v3178 = vunpack.c.l.b16 %v3082
      %v3179 = vunpack.c.l.b16 %v3083
      %v3180 = vunpack.c.l.b16 %v3084
      %v3181 = vunpack.c.l.b16 %v3085
      %v3182 = vunpack.c.l.b16 %v3086
      %v3183 = vpack.c.b16 %v3168, %v3167
      %v3184 = vpack.c.b16 %v3170, %v3169
      %v3185 = vpack.c.b16 %v3172, %v3171
      %v3186 = vpack.c.b16 %v3174, %v3173
      %v3187 = vpack.c.b16 %v3176, %v3175
      %v3188 = vpack.c.b16 %v3178, %v3177
      %v3189 = vpack.c.b16 %v3180, %v3179
      %v3190 = vpack.c.b16 %v3182, %v3181
      %3199 = vmatprep.subr.bf16.mxu0 0
      %3200 = vmatpush1.bf16.msra.mxu0 %v3183
      %3201 = vmatprep.subr.bf16.mxu0 0
      %3202 = vmatpush1.bf16.msra.mxu0 %v3184
      %3203 = vmatprep.subr.bf16.mxu0 0
      %3204 = vmatpush1.bf16.msra.mxu0 %v3185
      %3205 = vmatprep.subr.bf16.mxu0 0
      %3206 = vmatpush1.bf16.msra.mxu0 %v3186
      %3207 = vmatprep.subr.bf16.mxu0 0
      %3208 = vmatpush1.bf16.msra.mxu0 %v3187
      %3209 = vmatprep.subr.bf16.mxu0 0
      %3210 = vmatpush1.bf16.msra.mxu0 %v3188
      %3211 = vmatprep.subr.bf16.mxu0 0
      %3212 = vmatpush1.bf16.msra.mxu0 %v3189
      %3213 = vmatprep.subr.bf16.mxu0 0
      %3214 = vmatpush1.bf16.msra.mxu0 %v3190
      %3215 = vmatprep.subr.bf16.mxu0 0
      %3216 = vmatpush1.bf16.msra.mxu0 0
      %3217 = vmatprep.subr.bf16.mxu0 0
      %3218 = vmatpush1.bf16.msra.mxu0 0
      %3219 = vmatprep.subr.bf16.mxu0 0
      %3220 = vmatpush1.bf16.msra.mxu0 0
      %3221 = vmatprep.subr.bf16.mxu0 0
      %3222 = vmatpush1.bf16.msra.mxu0 0
      %3223 = vmatprep.subr.bf16.mxu0 0
      %3224 = vmatpush1.bf16.msra.mxu0 0
      %3225 = vmatprep.subr.bf16.mxu0 0
      %3226 = vmatpush1.bf16.msra.mxu0 0
      %3227 = vmatprep.subr.bf16.mxu0 0
      %3228 = vmatpush1.bf16.msra.mxu0 0
      %3229 = vmatprep.subr.bf16.mxu0 0
      %3230 = vmatpush1.bf16.msra.mxu0 0
      %3231 = vmatprep.mubr.bf16.mxu0 0
      %3232 = vmatmul.mubr.bf16.gmra.mrb[0].mxu0 %v3119
      %v3233 = vpop.f32.mrb[0].mxu0
      %v3234 = vadd.f32 0.0, %v3233
      %v3235 = vpop.f32.mrb[0].mxu0
      %v3236 = vpop.f32.mrb[0].mxu0
      %v3237 = vadd.f32 0.0, %v3236
      %v3238 = vpop.f32.mrb[0].mxu0
      %3239 = vmatprep.mubr.bf16.mxu0 0
      %3240 = vmatmul.mubr.bf16.gmra.mrb[0].mxu0 %v3120
      %v3241 = vpop.f32.mrb[0].mxu0
      %v3242 = vadd.f32 0.0, %v3241
      %v3243 = vpop.f32.mrb[0].mxu0
      %v3244 = vpop.f32.mrb[0].mxu0
      %v3245 = vadd.f32 0.0, %v3244
      %v3246 = vpop.f32.mrb[0].mxu0
      %3247 = vmatprep.mubr.bf16.mxu0 0
      %3248 = vmatmul.mubr.bf16.gmra.mrb[0].mxu0 %v3121
      %v3249 = vpop.f32.mrb[0].mxu0
      %v3250 = vadd.f32 0.0, %v3249
      %v3251 = vpop.f32.mrb[0].mxu0
      %v3252 = vpop.f32.mrb[0].mxu0
      %v3253 = vadd.f32 0.0, %v3252
      %v3254 = vpop.f32.mrb[0].mxu0
      %3255 = vmatprep.mubr.bf16.mxu0 0
      %3256 = vmatmul.mubr.bf16.gmra.mrb[0].mxu0 %v3122
      %v3257 = vpop.f32.mrb[0].mxu0
      %v3258 = vadd.f32 0.0, %v3257
      %v3259 = vpop.f32.mrb[0].mxu0
      %v3260 = vpop.f32.mrb[0].mxu0
      %v3261 = vadd.f32 0.0, %v3260
      %v3262 = vpop.f32.mrb[0].mxu0
      %3263 = vmatprep.mubr.bf16.mxu0 0
      %3264 = vmatmul.mubr.bf16.gmra.mrb[0].mxu0 %v3123
      %v3265 = vpop.f32.mrb[0].mxu0
      %v3266 = vadd.f32 0.0, %v3265
      %v3267 = vpop.f32.mrb[0].mxu0
      %v3268 = vpop.f32.mrb[0].mxu0
      %v3269 = vadd.f32 0.0, %v3268
      %v3270 = vpop.f32.mrb[0].mxu0
      %3271 = vmatprep.mubr.bf16.mxu0 0
      %3272 = vmatmul.mubr.bf16.gmra.mrb[0].mxu0 %v3124
      %v3273 = vpop.f32.mrb[0].mxu0
      %v3274 = vadd.f32 0.0, %v3273
      %v3275 = vpop.f32.mrb[0].mxu0
      %v3276 = vpop.f32.mrb[0].mxu0
      %v3277 = vadd.f32 0.0, %v3276
      %v3278 = vpop.f32.mrb[0].mxu0
      %3279 = vmatprep.mubr.bf16.mxu0 0
      %3280 = vmatmul.mubr.bf16.gmra.mrb[0].mxu0 %v3125
      %v3281 = vpop.f32.mrb[0].mxu0
      %v3282 = vadd.f32 0.0, %v3281
      %v3283 = vpop.f32.mrb[0].mxu0
      %v3284 = vpop.f32.mrb[0].mxu0
      %v3285 = vadd.f32 0.0, %v3284
      %v3286 = vpop.f32.mrb[0].mxu0
      %3287 = vmatprep.mubr.bf16.mxu0 0
      %3288 = vmatmul.mubr.bf16.gmra.mrb[0].mxu0 %v3126
      %v3289 = vpop.f32.mrb[0].mxu0
      %v3290 = vadd.f32 0.0, %v3289
      %v3291 = vpop.f32.mrb[0].mxu0
      %v3292 = vpop.f32.mrb[0].mxu0
      %v3293 = vadd.f32 0.0, %v3292
      %v3294 = vpop.f32.mrb[0].mxu0
      %3295 = vmatprep.mubr.bf16.mxu0 0
      %3296 = vmatmul.mubr.bf16.gmra.mrb[0].mxu0 %v3127
      %v3297 = vpop.f32.mrb[0].mxu0
      %v3298 = vadd.f32 0.0, %v3297
      %v3299 = vpop.f32.mrb[0].mxu0
      %v3300 = vpop.f32.mrb[0].mxu0
      %v3301 = vadd.f32 0.0, %v3300
      %v3302 = vpop.f32.mrb[0].mxu0
      %3303 = vmatprep.mubr.bf16.mxu0 0
      %3304 = vmatmul.mubr.bf16.gmra.mrb[0].mxu0 %v3128
      %v3305 = vpop.f32.mrb[0].mxu0
      %v3306 = vadd.f32 0.0, %v3305
      %v3307 = vpop.f32.mrb[0].mxu0
      %v3308 = vpop.f32.mrb[0].mxu0
      %v3309 = vadd.f32 0.0, %v3308
      %v3310 = vpop.f32.mrb[0].mxu0
      %3311 = vmatprep.mubr.bf16.mxu0 0
      %3312 = vmatmul.mubr.bf16.gmra.mrb[0].mxu0 %v3129
      %v3313 = vpop.f32.mrb[0].mxu0
      %v3314 = vadd.f32 0.0, %v3313
      %v3315 = vpop.f32.mrb[0].mxu0
      %v3316 = vpop.f32.mrb[0].mxu0
      %v3317 = vadd.f32 0.0, %v3316
      %v3318 = vpop.f32.mrb[0].mxu0
      %3319 = vmatprep.mubr.bf16.mxu0 0
      %3320 = vmatmul.mubr.bf16.gmra.mrb[0].mxu0 %v3130
      %v3321 = vpop.f32.mrb[0].mxu0
      %v3322 = vadd.f32 0.0, %v3321
      %v3323 = vpop.f32.mrb[0].mxu0
      %v3324 = vpop.f32.mrb[0].mxu0
      %v3325 = vadd.f32 0.0, %v3324
      %v3326 = vpop.f32.mrb[0].mxu0
      %3327 = vmatprep.mubr.bf16.mxu0 0
      %3328 = vmatmul.mubr.bf16.gmra.mrb[0].mxu0 %v3131
      %v3329 = vpop.f32.mrb[0].mxu0
      %v3330 = vadd.f32 0.0, %v3329
      %v3331 = vpop.f32.mrb[0].mxu0
      %v3332 = vpop.f32.mrb[0].mxu0
      %v3333 = vadd.f32 0.0, %v3332
      %v3334 = vpop.f32.mrb[0].mxu0
      %3335 = vmatprep.mubr.bf16.mxu0 0
      %3336 = vmatmul.mubr.bf16.gmra.mrb[0].mxu0 %v3132
      %v3337 = vpop.f32.mrb[0].mxu0
      %v3338 = vadd.f32 0.0, %v3337
      %v3339 = vpop.f32.mrb[0].mxu0
      %v3340 = vpop.f32.mrb[0].mxu0
      %v3341 = vadd.f32 0.0, %v3340
      %v3342 = vpop.f32.mrb[0].mxu0
      %3343 = vmatprep.mubr.bf16.mxu0 0
      %3344 = vmatmul.mubr.bf16.gmra.mrb[0].mxu0 %v3133
      %v3345 = vpop.f32.mrb[0].mxu0
      %v3346 = vadd.f32 0.0, %v3345
      %v3347 = vpop.f32.mrb[0].mxu0
      %v3348 = vpop.f32.mrb[0].mxu0
      %v3349 = vadd.f32 0.0, %v3348
      %v3350 = vpop.f32.mrb[0].mxu0
      %3351 = vmatprep.mubr.bf16.mxu0 0
      %3352 = vmatmul.mubr.bf16.gmra.mrb[0].mxu0 %v3134
      %v3353 = vpop.f32.mrb[0].mxu0
      %v3354 = vadd.f32 0.0, %v3353
      %v3355 = vpop.f32.mrb[0].mxu0
      %v3356 = vpop.f32.mrb[0].mxu0
      %v3357 = vadd.f32 0.0, %v3356
      %v3358 = vpop.f32.mrb[0].mxu0
      %3359 = vdwg.mxu0
      %v3360 = vadd.f32 %v2862, %v3234
      %v3361 = vadd.f32 %v2863, %v3237
      %v3362 = vadd.f32 %v2864, %v3242
      %v3363 = vadd.f32 %v2865, %v3245
      %v3364 = vadd.f32 %v2866, %v3250
      %v3365 = vadd.f32 %v2867, %v3253
      %v3366 = vadd.f32 %v2868, %v3258
      %v3367 = vadd.f32 %v2869, %v3261
      %v3368 = vadd.f32 %v2870, %v3266
      %v3369 = vadd.f32 %v2871, %v3269
      %v3370 = vadd.f32 %v2872, %v3274
      %v3371 = vadd.f32 %v2873, %v3277
      %v3372 = vadd.f32 %v2874, %v3282
      %v3373 = vadd.f32 %v2875, %v3285
      %v3374 = vadd.f32 %v2876, %v3290
      %v3375 = vadd.f32 %v2877, %v3293
      %v3376 = vadd.f32 %v2878, %v3298
      %v3377 = vadd.f32 %v2879, %v3301
      %v3378 = vadd.f32 %v2880, %v3306
      %v3379 = vadd.f32 %v2881, %v3309
      %v3380 = vadd.f32 %v2882, %v3314
      %v3381 = vadd.f32 %v2883, %v3317
      %v3382 = vadd.f32 %v2884, %v3322
      %v3383 = vadd.f32 %v2885, %v3325
      %v3384 = vadd.f32 %v2886, %v3330
      %v3385 = vadd.f32 %v2887, %v3333
      %v3386 = vadd.f32 %v2888, %v3338
      %v3387 = vadd.f32 %v2889, %v3341
      %v3388 = vadd.f32 %v2890, %v3346
      %v3389 = vadd.f32 %v2891, %v3349
      %v3390 = vadd.f32 %v2892, %v3354
      %v3391 = vadd.f32 %v2893, %v3357
      %s3392 = scalar_lea.vmem %s208, 24
      %v3393 = vld [vmem:[%s3392] sm:$0xf]
      %v3394 = vld [vmem:[%s3392 + $0x4] sm:$0xf]
      %v3395 = vld [vmem:[%s3392 + $0xc] sm:$0xf]
      %v3396 = vld [vmem:[%s3392 + $0x10] sm:$0xf]
      %v3397 = vld [vmem:[%s3392 + $0x18] sm:$0xf]
      %v3398 = vld [vmem:[%s3392 + $0x1c] sm:$0xf]
      %v3399 = vld [vmem:[%s3392 + $0x24] sm:$0xf]
      %v3400 = vld [vmem:[%s3392 + $0x28] sm:$0xf]
      %v3401 = vld [vmem:[%s3392 + $0x30] sm:$0xf]
      %v3402 = vld [vmem:[%s3392 + $0x34] sm:$0xf]
      %v3403 = vld [vmem:[%s3392 + $0x3c] sm:$0xf]
      %v3404 = vld [vmem:[%s3392 + $0x40] sm:$0xf]
      %v3405 = vld [vmem:[%s3392 + $0x48] sm:$0xf]
      %v3406 = vld [vmem:[%s3392 + $0x4c] sm:$0xf]
      %v3407 = vld [vmem:[%s3392 + $0x54] sm:$0xf]
      %v3408 = vld [vmem:[%s3392 + $0x58] sm:$0xf]
      %v3409 = vld [vmem:[%s3392 + $0x60] sm:$0xf]
      %v3410 = vld [vmem:[%s3392 + $0x64] sm:$0xf]
      %v3411 = vld [vmem:[%s3392 + $0x6c] sm:$0xf]
      %v3412 = vld [vmem:[%s3392 + $0x70] sm:$0xf]
      %v3413 = vld [vmem:[%s3392 + $0x78] sm:$0xf]
      %v3414 = vld [vmem:[%s3392 + $0x7c] sm:$0xf]
      %v3415 = vld [vmem:[%s3392 + $0x84] sm:$0xf]
      %v3416 = vld [vmem:[%s3392 + $0x88] sm:$0xf]
      %v3417 = vld [vmem:[%s3392 + $0x90] sm:$0xf]
      %v3418 = vld [vmem:[%s3392 + $0x94] sm:$0xf]
      %v3419 = vld [vmem:[%s3392 + $0x9c] sm:$0xf]
      %v3420 = vld [vmem:[%s3392 + $0xa0] sm:$0xf]
      %v3421 = vld [vmem:[%s3392 + $0xa8] sm:$0xf]
      %v3422 = vld [vmem:[%s3392 + $0xac] sm:$0xf]
      %v3423 = vld [vmem:[%s3392 + $0xb4] sm:$0xf]
      %v3424 = vld [vmem:[%s3392 + $0xb8] sm:$0xf]
      %s3425 = scalar_lea.vmem %s1, 384
      %v3426 = vld [vmem:[%s3425] sm:$0xf]
      %v3427 = vld [vmem:[%s3425 + $0x4] sm:$0xf]
      %v3428 = vld [vmem:[%s3425 + $0x8] sm:$0xf]
      %v3429 = vld [vmem:[%s3425 + $0xc] sm:$0xf]
      %v3430 = vld [vmem:[%s3425 + $0x10] sm:$0xf]
      %v3431 = vld [vmem:[%s3425 + $0x14] sm:$0xf]
      %v3432 = vld [vmem:[%s3425 + $0x18] sm:$0xf]
      %v3433 = vld [vmem:[%s3425 + $0x1c] sm:$0xf]
      %v3434 = vld [vmem:[%s3425 + $0x20] sm:$0xf]
      %v3435 = vld [vmem:[%s3425 + $0x24] sm:$0xf]
      %v3436 = vld [vmem:[%s3425 + $0x28] sm:$0xf]
      %v3437 = vld [vmem:[%s3425 + $0x2c] sm:$0xf]
      %v3438 = vld [vmem:[%s3425 + $0x30] sm:$0xf]
      %v3439 = vld [vmem:[%s3425 + $0x34] sm:$0xf]
      %v3440 = vld [vmem:[%s3425 + $0x38] sm:$0xf]
      %v3441 = vld [vmem:[%s3425 + $0x3c] sm:$0xf]
      %v3474 = vunpack.c.l.b16 %v3393
      %v3475 = vunpack.c.l.b16 %v3394
      %v3476 = vunpack.c.l.b16 %v3395
      %v3477 = vunpack.c.l.b16 %v3396
      %v3478 = vunpack.c.l.b16 %v3397
      %v3479 = vunpack.c.l.b16 %v3398
      %v3480 = vunpack.c.l.b16 %v3399
      %v3481 = vunpack.c.l.b16 %v3400
      %v3482 = vunpack.c.l.b16 %v3401
      %v3483 = vunpack.c.l.b16 %v3402
      %v3484 = vunpack.c.l.b16 %v3403
      %v3485 = vunpack.c.l.b16 %v3404
      %v3486 = vunpack.c.l.b16 %v3405
      %v3487 = vunpack.c.l.b16 %v3406
      %v3488 = vunpack.c.l.b16 %v3407
      %v3489 = vunpack.c.l.b16 %v3408
      %v3490 = vunpack.c.l.b16 %v3409
      %v3491 = vunpack.c.l.b16 %v3410
      %v3492 = vunpack.c.l.b16 %v3411
      %v3493 = vunpack.c.l.b16 %v3412
      %v3494 = vunpack.c.l.b16 %v3413
      %v3495 = vunpack.c.l.b16 %v3414
      %v3496 = vunpack.c.l.b16 %v3415
      %v3497 = vunpack.c.l.b16 %v3416
      %v3498 = vunpack.c.l.b16 %v3417
      %v3499 = vunpack.c.l.b16 %v3418
      %v3500 = vunpack.c.l.b16 %v3419
      %v3501 = vunpack.c.l.b16 %v3420
      %v3502 = vunpack.c.l.b16 %v3421
      %v3503 = vunpack.c.l.b16 %v3422
      %v3504 = vunpack.c.l.b16 %v3423
      %v3505 = vunpack.c.l.b16 %v3424
      %v3506 = vpack.c.b16 %v3475, %v3474
      %v3507 = vpack.c.b16 %v3477, %v3476
      %v3508 = vpack.c.b16 %v3479, %v3478
      %v3509 = vpack.c.b16 %v3481, %v3480
      %v3510 = vpack.c.b16 %v3483, %v3482
      %v3511 = vpack.c.b16 %v3485, %v3484
      %v3512 = vpack.c.b16 %v3487, %v3486
      %v3513 = vpack.c.b16 %v3489, %v3488
      %v3514 = vpack.c.b16 %v3491, %v3490
      %v3515 = vpack.c.b16 %v3493, %v3492
      %v3516 = vpack.c.b16 %v3495, %v3494
      %v3517 = vpack.c.b16 %v3497, %v3496
      %v3518 = vpack.c.b16 %v3499, %v3498
      %v3519 = vpack.c.b16 %v3501, %v3500
      %v3520 = vpack.c.b16 %v3503, %v3502
      %v3521 = vpack.c.b16 %v3505, %v3504
      %v3554 = vunpack.c.l.b16 %v3426
      %v3555 = vunpack.c.l.b16 %v3427
      %v3556 = vunpack.c.l.b16 %v3428
      %v3557 = vunpack.c.l.b16 %v3429
      %v3558 = vunpack.c.l.b16 %v3430
      %v3559 = vunpack.c.l.b16 %v3431
      %v3560 = vunpack.c.l.b16 %v3432
      %v3561 = vunpack.c.l.b16 %v3433
      %v3562 = vunpack.c.l.b16 %v3434
      %v3563 = vunpack.c.l.b16 %v3435
      %v3564 = vunpack.c.l.b16 %v3436
      %v3565 = vunpack.c.l.b16 %v3437
      %v3566 = vunpack.c.l.b16 %v3438
      %v3567 = vunpack.c.l.b16 %v3439
      %v3568 = vunpack.c.l.b16 %v3440
      %v3569 = vunpack.c.l.b16 %v3441
      %v3570 = vpack.c.b16 %v3555, %v3554
      %v3571 = vpack.c.b16 %v3557, %v3556
      %v3572 = vpack.c.b16 %v3559, %v3558
      %v3573 = vpack.c.b16 %v3561, %v3560
      %v3574 = vpack.c.b16 %v3563, %v3562
      %v3575 = vpack.c.b16 %v3565, %v3564
      %v3576 = vpack.c.b16 %v3567, %v3566
      %v3577 = vpack.c.b16 %v3569, %v3568
      %3586 = vmatprep.subr.bf16.mxu0 0
      %3587 = vmatpush1.bf16.msra.mxu0 %v3570
      %3588 = vmatprep.subr.bf16.mxu0 0
      %3589 = vmatpush1.bf16.msra.mxu0 %v3571
      %3590 = vmatprep.subr.bf16.mxu0 0
      %3591 = vmatpush1.bf16.msra.mxu0 %v3572
      %3592 = vmatprep.subr.bf16.mxu0 0
      %3593 = vmatpush1.bf16.msra.mxu0 %v3573
      %3594 = vmatprep.subr.bf16.mxu0 0
      %3595 = vmatpush1.bf16.msra.mxu0 %v3574
      %3596 = vmatprep.subr.bf16.mxu0 0
      %3597 = vmatpush1.bf16.msra.mxu0 %v3575
      %3598 = vmatprep.subr.bf16.mxu0 0
      %3599 = vmatpush1.bf16.msra.mxu0 %v3576
      %3600 = vmatprep.subr.bf16.mxu0 0
      %3601 = vmatpush1.bf16.msra.mxu0 %v3577
      %3602 = vmatprep.subr.bf16.mxu0 0
      %3603 = vmatpush1.bf16.msra.mxu0 0
      %3604 = vmatprep.subr.bf16.mxu0 0
      %3605 = vmatpush1.bf16.msra.mxu0 0
      %3606 = vmatprep.subr.bf16.mxu0 0
      %3607 = vmatpush1.bf16.msra.mxu0 0
      %3608 = vmatprep.subr.bf16.mxu0 0
      %3609 = vmatpush1.bf16.msra.mxu0 0
      %3610 = vmatprep.subr.bf16.mxu0 0
      %3611 = vmatpush1.bf16.msra.mxu0 0
      %3612 = vmatprep.subr.bf16.mxu0 0
      %3613 = vmatpush1.bf16.msra.mxu0 0
      %3614 = vmatprep.subr.bf16.mxu0 0
      %3615 = vmatpush1.bf16.msra.mxu0 0
      %3616 = vmatprep.subr.bf16.mxu0 0
      %3617 = vmatpush1.bf16.msra.mxu0 0
      %3618 = vmatprep.mubr.bf16.mxu0 0
      %3619 = vmatmul.mubr.bf16.gmra.mrb[0].mxu0 %v3506
      %v3620 = vpop.f32.mrb[0].mxu0
      %v3621 = vadd.f32 0.0, %v3620
      %v3622 = vpop.f32.mrb[0].mxu0
      %v3623 = vpop.f32.mrb[0].mxu0
      %v3624 = vadd.f32 0.0, %v3623
      %v3625 = vpop.f32.mrb[0].mxu0
      %3626 = vmatprep.mubr.bf16.mxu0 0
      %3627 = vmatmul.mubr.bf16.gmra.mrb[0].mxu0 %v3507
      %v3628 = vpop.f32.mrb[0].mxu0
      %v3629 = vadd.f32 0.0, %v3628
      %v3630 = vpop.f32.mrb[0].mxu0
      %v3631 = vpop.f32.mrb[0].mxu0
      %v3632 = vadd.f32 0.0, %v3631
      %v3633 = vpop.f32.mrb[0].mxu0
      %3634 = vmatprep.mubr.bf16.mxu0 0
      %3635 = vmatmul.mubr.bf16.gmra.mrb[0].mxu0 %v3508
      %v3636 = vpop.f32.mrb[0].mxu0
      %v3637 = vadd.f32 0.0, %v3636
      %v3638 = vpop.f32.mrb[0].mxu0
      %v3639 = vpop.f32.mrb[0].mxu0
      %v3640 = vadd.f32 0.0, %v3639
      %v3641 = vpop.f32.mrb[0].mxu0
      %3642 = vmatprep.mubr.bf16.mxu0 0
      %3643 = vmatmul.mubr.bf16.gmra.mrb[0].mxu0 %v3509
      %v3644 = vpop.f32.mrb[0].mxu0
      %v3645 = vadd.f32 0.0, %v3644
      %v3646 = vpop.f32.mrb[0].mxu0
      %v3647 = vpop.f32.mrb[0].mxu0
      %v3648 = vadd.f32 0.0, %v3647
      %v3649 = vpop.f32.mrb[0].mxu0
      %3650 = vmatprep.mubr.bf16.mxu0 0
      %3651 = vmatmul.mubr.bf16.gmra.mrb[0].mxu0 %v3510
      %v3652 = vpop.f32.mrb[0].mxu0
      %v3653 = vadd.f32 0.0, %v3652
      %v3654 = vpop.f32.mrb[0].mxu0
      %v3655 = vpop.f32.mrb[0].mxu0
      %v3656 = vadd.f32 0.0, %v3655
      %v3657 = vpop.f32.mrb[0].mxu0
      %3658 = vmatprep.mubr.bf16.mxu0 0
      %3659 = vmatmul.mubr.bf16.gmra.mrb[0].mxu0 %v3511
      %v3660 = vpop.f32.mrb[0].mxu0
      %v3661 = vadd.f32 0.0, %v3660
      %v3662 = vpop.f32.mrb[0].mxu0
      %v3663 = vpop.f32.mrb[0].mxu0
      %v3664 = vadd.f32 0.0, %v3663
      %v3665 = vpop.f32.mrb[0].mxu0
      %3666 = vmatprep.mubr.bf16.mxu0 0
      %3667 = vmatmul.mubr.bf16.gmra.mrb[0].mxu0 %v3512
      %v3668 = vpop.f32.mrb[0].mxu0
      %v3669 = vadd.f32 0.0, %v3668
      %v3670 = vpop.f32.mrb[0].mxu0
      %v3671 = vpop.f32.mrb[0].mxu0
      %v3672 = vadd.f32 0.0, %v3671
      %v3673 = vpop.f32.mrb[0].mxu0
      %3674 = vmatprep.mubr.bf16.mxu0 0
      %3675 = vmatmul.mubr.bf16.gmra.mrb[0].mxu0 %v3513
      %v3676 = vpop.f32.mrb[0].mxu0
      %v3677 = vadd.f32 0.0, %v3676
      %v3678 = vpop.f32.mrb[0].mxu0
      %v3679 = vpop.f32.mrb[0].mxu0
      %v3680 = vadd.f32 0.0, %v3679
      %v3681 = vpop.f32.mrb[0].mxu0
      %3682 = vmatprep.mubr.bf16.mxu0 0
      %3683 = vmatmul.mubr.bf16.gmra.mrb[0].mxu0 %v3514
      %v3684 = vpop.f32.mrb[0].mxu0
      %v3685 = vadd.f32 0.0, %v3684
      %v3686 = vpop.f32.mrb[0].mxu0
      %v3687 = vpop.f32.mrb[0].mxu0
      %v3688 = vadd.f32 0.0, %v3687
      %v3689 = vpop.f32.mrb[0].mxu0
      %3690 = vmatprep.mubr.bf16.mxu0 0
      %3691 = vmatmul.mubr.bf16.gmra.mrb[0].mxu0 %v3515
      %v3692 = vpop.f32.mrb[0].mxu0
      %v3693 = vadd.f32 0.0, %v3692
      %v3694 = vpop.f32.mrb[0].mxu0
      %v3695 = vpop.f32.mrb[0].mxu0
      %v3696 = vadd.f32 0.0, %v3695
      %v3697 = vpop.f32.mrb[0].mxu0
      %3698 = vmatprep.mubr.bf16.mxu0 0
      %3699 = vmatmul.mubr.bf16.gmra.mrb[0].mxu0 %v3516
      %v3700 = vpop.f32.mrb[0].mxu0
      %v3701 = vadd.f32 0.0, %v3700
      %v3702 = vpop.f32.mrb[0].mxu0
      %v3703 = vpop.f32.mrb[0].mxu0
      %v3704 = vadd.f32 0.0, %v3703
      %v3705 = vpop.f32.mrb[0].mxu0
      %3706 = vmatprep.mubr.bf16.mxu0 0
      %3707 = vmatmul.mubr.bf16.gmra.mrb[0].mxu0 %v3517
      %v3708 = vpop.f32.mrb[0].mxu0
      %v3709 = vadd.f32 0.0, %v3708
      %v3710 = vpop.f32.mrb[0].mxu0
      %v3711 = vpop.f32.mrb[0].mxu0
      %v3712 = vadd.f32 0.0, %v3711
      %v3713 = vpop.f32.mrb[0].mxu0
      %3714 = vmatprep.mubr.bf16.mxu0 0
      %3715 = vmatmul.mubr.bf16.gmra.mrb[0].mxu0 %v3518
      %v3716 = vpop.f32.mrb[0].mxu0
      %v3717 = vadd.f32 0.0, %v3716
      %v3718 = vpop.f32.mrb[0].mxu0
      %v3719 = vpop.f32.mrb[0].mxu0
      %v3720 = vadd.f32 0.0, %v3719
      %v3721 = vpop.f32.mrb[0].mxu0
      %3722 = vmatprep.mubr.bf16.mxu0 0
      %3723 = vmatmul.mubr.bf16.gmra.mrb[0].mxu0 %v3519
      %v3724 = vpop.f32.mrb[0].mxu0
      %v3725 = vadd.f32 0.0, %v3724
      %v3726 = vpop.f32.mrb[0].mxu0
      %v3727 = vpop.f32.mrb[0].mxu0
      %v3728 = vadd.f32 0.0, %v3727
      %v3729 = vpop.f32.mrb[0].mxu0
      %3730 = vmatprep.mubr.bf16.mxu0 0
      %3731 = vmatmul.mubr.bf16.gmra.mrb[0].mxu0 %v3520
      %v3732 = vpop.f32.mrb[0].mxu0
      %v3733 = vadd.f32 0.0, %v3732
      %v3734 = vpop.f32.mrb[0].mxu0
      %v3735 = vpop.f32.mrb[0].mxu0
      %v3736 = vadd.f32 0.0, %v3735
      %v3737 = vpop.f32.mrb[0].mxu0
      %3738 = vmatprep.mubr.bf16.mxu0 0
      %3739 = vmatmul.mubr.bf16.gmra.mrb[0].mxu0 %v3521
      %v3740 = vpop.f32.mrb[0].mxu0
      %v3741 = vadd.f32 0.0, %v3740
      %v3742 = vpop.f32.mrb[0].mxu0
      %v3743 = vpop.f32.mrb[0].mxu0
      %v3744 = vadd.f32 0.0, %v3743
      %v3745 = vpop.f32.mrb[0].mxu0
      %3746 = vdwg.mxu0
      %v3747 = vadd.f32 %v3360, %v3621
      %v3748 = vadd.f32 %v3361, %v3624
      %v3749 = vadd.f32 %v3362, %v3629
      %v3750 = vadd.f32 %v3363, %v3632
      %v3751 = vadd.f32 %v3364, %v3637
      %v3752 = vadd.f32 %v3365, %v3640
      %v3753 = vadd.f32 %v3366, %v3645
      %v3754 = vadd.f32 %v3367, %v3648
      %v3755 = vadd.f32 %v3368, %v3653
      %v3756 = vadd.f32 %v3369, %v3656
      %v3757 = vadd.f32 %v3370, %v3661
      %v3758 = vadd.f32 %v3371, %v3664
      %v3759 = vadd.f32 %v3372, %v3669
      %v3760 = vadd.f32 %v3373, %v3672
      %v3761 = vadd.f32 %v3374, %v3677
      %v3762 = vadd.f32 %v3375, %v3680
      %v3763 = vadd.f32 %v3376, %v3685
      %v3764 = vadd.f32 %v3377, %v3688
      %v3765 = vadd.f32 %v3378, %v3693
      %v3766 = vadd.f32 %v3379, %v3696
      %v3767 = vadd.f32 %v3380, %v3701
      %v3768 = vadd.f32 %v3381, %v3704
      %v3769 = vadd.f32 %v3382, %v3709
      %v3770 = vadd.f32 %v3383, %v3712
      %v3771 = vadd.f32 %v3384, %v3717
      %v3772 = vadd.f32 %v3385, %v3720
      %v3773 = vadd.f32 %v3386, %v3725
      %v3774 = vadd.f32 %v3387, %v3728
      %v3775 = vadd.f32 %v3388, %v3733
      %v3776 = vadd.f32 %v3389, %v3736
      %v3777 = vadd.f32 %v3390, %v3741
      %v3778 = vadd.f32 %v3391, %v3744
      %v3779 = vld [vmem:[%s3392] sm:$0xf]
      %v3780 = vld [vmem:[%s3392 + $0x4] sm:$0xf]
      %v3781 = vld [vmem:[%s3392 + $0x8] sm:$0x1]
      %v3782 = vld [vmem:[%s3392 + $0xc] sm:$0xf]
      %v3783 = vld [vmem:[%s3392 + $0x10] sm:$0xf]
      %v3784 = vld [vmem:[%s3392 + $0x14] sm:$0x1]
      %v3785 = vld [vmem:[%s3392 + $0x18] sm:$0xf]
      %v3786 = vld [vmem:[%s3392 + $0x1c] sm:$0xf]
      %v3787 = vld [vmem:[%s3392 + $0x20] sm:$0x1]
      %v3788 = vld [vmem:[%s3392 + $0x24] sm:$0xf]
      %v3789 = vld [vmem:[%s3392 + $0x28] sm:$0xf]
      %v3790 = vld [vmem:[%s3392 + $0x2c] sm:$0x1]
      %v3791 = vld [vmem:[%s3392 + $0x30] sm:$0xf]
      %v3792 = vld [vmem:[%s3392 + $0x34] sm:$0xf]
      %v3793 = vld [vmem:[%s3392 + $0x38] sm:$0x1]
      %v3794 = vld [vmem:[%s3392 + $0x3c] sm:$0xf]
      %v3795 = vld [vmem:[%s3392 + $0x40] sm:$0xf]
      %v3796 = vld [vmem:[%s3392 + $0x44] sm:$0x1]
      %v3797 = vld [vmem:[%s3392 + $0x48] sm:$0xf]
      %v3798 = vld [vmem:[%s3392 + $0x4c] sm:$0xf]
      %v3799 = vld [vmem:[%s3392 + $0x50] sm:$0x1]
      %v3800 = vld [vmem:[%s3392 + $0x54] sm:$0xf]
      %v3801 = vld [vmem:[%s3392 + $0x58] sm:$0xf]
      %v3802 = vld [vmem:[%s3392 + $0x5c] sm:$0x1]
      %v3803 = vld [vmem:[%s3392 + $0x60] sm:$0xf]
      %v3804 = vld [vmem:[%s3392 + $0x64] sm:$0xf]
      %v3805 = vld [vmem:[%s3392 + $0x68] sm:$0x1]
      %v3806 = vld [vmem:[%s3392 + $0x6c] sm:$0xf]
      %v3807 = vld [vmem:[%s3392 + $0x70] sm:$0xf]
      %v3808 = vld [vmem:[%s3392 + $0x74] sm:$0x1]
      %v3809 = vld [vmem:[%s3392 + $0x78] sm:$0xf]
      %v3810 = vld [vmem:[%s3392 + $0x7c] sm:$0xf]
      %v3811 = vld [vmem:[%s3392 + $0x80] sm:$0x1]
      %v3812 = vld [vmem:[%s3392 + $0x84] sm:$0xf]
      %v3813 = vld [vmem:[%s3392 + $0x88] sm:$0xf]
      %v3814 = vld [vmem:[%s3392 + $0x8c] sm:$0x1]
      %v3815 = vld [vmem:[%s3392 + $0x90] sm:$0xf]
      %v3816 = vld [vmem:[%s3392 + $0x94] sm:$0xf]
      %v3817 = vld [vmem:[%s3392 + $0x98] sm:$0x1]
      %v3818 = vld [vmem:[%s3392 + $0x9c] sm:$0xf]
      %v3819 = vld [vmem:[%s3392 + $0xa0] sm:$0xf]
      %v3820 = vld [vmem:[%s3392 + $0xa4] sm:$0x1]
      %v3821 = vld [vmem:[%s3392 + $0xa8] sm:$0xf]
      %v3822 = vld [vmem:[%s3392 + $0xac] sm:$0xf]
      %v3823 = vld [vmem:[%s3392 + $0xb0] sm:$0x1]
      %v3824 = vld [vmem:[%s3392 + $0xb4] sm:$0xf]
      %v3825 = vld [vmem:[%s3392 + $0xb8] sm:$0xf]
      %v3826 = vld [vmem:[%s3392 + $0xbc] sm:$0x1]
      %v3828 = vshrl.u32 %v3779, 16
      %v3830 = vrot.slane %v3828, 4
      %v3831 = vshll.u32 %v3779, 16
      %v3833 = vrot.slane %v3831, 5
      %v3834 = vor.u32 %v3830, %v3833
      %v3835 = vrot.slane %v3834, 4
      %v3837 = vshll.u32 %v3780, 16
      %v3839 = vrot.slane %v3837, 5
      %v3840 = vsel %vm288, %v3835, %v3839
      %v3841 = vshrl.u32 %v3780, 16
      %v3843 = vrot.slane %v3841, 4
      %v3844 = vor.u32 %v3843, %v3839
      %v3845 = vrot.slane %v3844, 4
      %v3847 = vshll.u32 %v3781, 16
      %v3849 = vrot.slane %v3847, 5
      %v3850 = vsel %vm288, %v3845, %v3849
      %v3852 = vshrl.u32 %v3782, 16
      %v3854 = vrot.slane %v3852, 4
      %v3855 = vshll.u32 %v3782, 16
      %v3857 = vrot.slane %v3855, 5
      %v3858 = vor.u32 %v3854, %v3857
      %v3859 = vrot.slane %v3858, 4
      %v3861 = vshll.u32 %v3783, 16
      %v3863 = vrot.slane %v3861, 5
      %v3864 = vsel %vm288, %v3859, %v3863
      %v3865 = vshrl.u32 %v3783, 16
      %v3867 = vrot.slane %v3865, 4
      %v3868 = vor.u32 %v3867, %v3863
      %v3869 = vrot.slane %v3868, 4
      %v3871 = vshll.u32 %v3784, 16
      %v3873 = vrot.slane %v3871, 5
      %v3874 = vsel %vm288, %v3869, %v3873
      %v3876 = vshrl.u32 %v3785, 16
      %v3878 = vrot.slane %v3876, 4
      %v3879 = vshll.u32 %v3785, 16
      %v3881 = vrot.slane %v3879, 5
      %v3882 = vor.u32 %v3878, %v3881
      %v3883 = vrot.slane %v3882, 4
      %v3885 = vshll.u32 %v3786, 16
      %v3887 = vrot.slane %v3885, 5
      %v3888 = vsel %vm288, %v3883, %v3887
      %v3889 = vshrl.u32 %v3786, 16
      %v3891 = vrot.slane %v3889, 4
      %v3892 = vor.u32 %v3891, %v3887
      %v3893 = vrot.slane %v3892, 4
      %v3895 = vshll.u32 %v3787, 16
      %v3897 = vrot.slane %v3895, 5
      %v3898 = vsel %vm288, %v3893, %v3897
      %v3900 = vshrl.u32 %v3788, 16
      %v3902 = vrot.slane %v3900, 4
      %v3903 = vshll.u32 %v3788, 16
      %v3905 = vrot.slane %v3903, 5
      %v3906 = vor.u32 %v3902, %v3905
      %v3907 = vrot.slane %v3906, 4
      %v3909 = vshll.u32 %v3789, 16
      %v3911 = vrot.slane %v3909, 5
      %v3912 = vsel %vm288, %v3907, %v3911
      %v3913 = vshrl.u32 %v3789, 16
      %v3915 = vrot.slane %v3913, 4
      %v3916 = vor.u32 %v3915, %v3911
      %v3917 = vrot.slane %v3916, 4
      %v3919 = vshll.u32 %v3790, 16
      %v3921 = vrot.slane %v3919, 5
      %v3922 = vsel %vm288, %v3917, %v3921
      %v3924 = vshrl.u32 %v3791, 16
      %v3926 = vrot.slane %v3924, 4
      %v3927 = vshll.u32 %v3791, 16
      %v3929 = vrot.slane %v3927, 5
      %v3930 = vor.u32 %v3926, %v3929
      %v3931 = vrot.slane %v3930, 4
      %v3933 = vshll.u32 %v3792, 16
      %v3935 = vrot.slane %v3933, 5
      %v3936 = vsel %vm288, %v3931, %v3935
      %v3937 = vshrl.u32 %v3792, 16
      %v3939 = vrot.slane %v3937, 4
      %v3940 = vor.u32 %v3939, %v3935
      %v3941 = vrot.slane %v3940, 4
      %v3943 = vshll.u32 %v3793, 16
      %v3945 = vrot.slane %v3943, 5
      %v3946 = vsel %vm288, %v3941, %v3945
      %v3948 = vshrl.u32 %v3794, 16
      %v3950 = vrot.slane %v3948, 4
      %v3951 = vshll.u32 %v3794, 16
      %v3953 = vrot.slane %v3951, 5
      %v3954 = vor.u32 %v3950, %v3953
      %v3955 = vrot.slane %v3954, 4
      %v3957 = vshll.u32 %v3795, 16
      %v3959 = vrot.slane %v3957, 5
      %v3960 = vsel %vm288, %v3955, %v3959
      %v3961 = vshrl.u32 %v3795, 16
      %v3963 = vrot.slane %v3961, 4
      %v3964 = vor.u32 %v3963, %v3959
      %v3965 = vrot.slane %v3964, 4
      %v3967 = vshll.u32 %v3796, 16
      %v3969 = vrot.slane %v3967, 5
      %v3970 = vsel %vm288, %v3965, %v3969
      %v3972 = vshrl.u32 %v3797, 16
      %v3974 = vrot.slane %v3972, 4
      %v3975 = vshll.u32 %v3797, 16
      %v3977 = vrot.slane %v3975, 5
      %v3978 = vor.u32 %v3974, %v3977
      %v3979 = vrot.slane %v3978, 4
      %v3981 = vshll.u32 %v3798, 16
      %v3983 = vrot.slane %v3981, 5
      %v3984 = vsel %vm288, %v3979, %v3983
      %v3985 = vshrl.u32 %v3798, 16
      %v3987 = vrot.slane %v3985, 4
      %v3988 = vor.u32 %v3987, %v3983
      %v3989 = vrot.slane %v3988, 4
      %v3991 = vshll.u32 %v3799, 16
      %v3993 = vrot.slane %v3991, 5
      %v3994 = vsel %vm288, %v3989, %v3993
      %v3996 = vshrl.u32 %v3800, 16
      %v3998 = vrot.slane %v3996, 4
      %v3999 = vshll.u32 %v3800, 16
      %v4001 = vrot.slane %v3999, 5
      %v4002 = vor.u32 %v3998, %v4001
      %v4003 = vrot.slane %v4002, 4
      %v4005 = vshll.u32 %v3801, 16
      %v4007 = vrot.slane %v4005, 5
      %v4008 = vsel %vm288, %v4003, %v4007
      %v4009 = vshrl.u32 %v3801, 16
      %v4011 = vrot.slane %v4009, 4
      %v4012 = vor.u32 %v4011, %v4007
      %v4013 = vrot.slane %v4012, 4
      %v4015 = vshll.u32 %v3802, 16
      %v4017 = vrot.slane %v4015, 5
      %v4018 = vsel %vm288, %v4013, %v4017
      %v4020 = vshrl.u32 %v3803, 16
      %v4022 = vrot.slane %v4020, 4
      %v4023 = vshll.u32 %v3803, 16
      %v4025 = vrot.slane %v4023, 5
      %v4026 = vor.u32 %v4022, %v4025
      %v4027 = vrot.slane %v4026, 4
      %v4029 = vshll.u32 %v3804, 16
      %v4031 = vrot.slane %v4029, 5
      %v4032 = vsel %vm288, %v4027, %v4031
      %v4033 = vshrl.u32 %v3804, 16
      %v4035 = vrot.slane %v4033, 4
      %v4036 = vor.u32 %v4035, %v4031
      %v4037 = vrot.slane %v4036, 4
      %v4039 = vshll.u32 %v3805, 16
      %v4041 = vrot.slane %v4039, 5
      %v4042 = vsel %vm288, %v4037, %v4041
      %v4044 = vshrl.u32 %v3806, 16
      %v4046 = vrot.slane %v4044, 4
      %v4047 = vshll.u32 %v3806, 16
      %v4049 = vrot.slane %v4047, 5
      %v4050 = vor.u32 %v4046, %v4049
      %v4051 = vrot.slane %v4050, 4
      %v4053 = vshll.u32 %v3807, 16
      %v4055 = vrot.slane %v4053, 5
      %v4056 = vsel %vm288, %v4051, %v4055
      %v4057 = vshrl.u32 %v3807, 16
      %v4059 = vrot.slane %v4057, 4
      %v4060 = vor.u32 %v4059, %v4055
      %v4061 = vrot.slane %v4060, 4
      %v4063 = vshll.u32 %v3808, 16
      %v4065 = vrot.slane %v4063, 5
      %v4066 = vsel %vm288, %v4061, %v4065
      %v4068 = vshrl.u32 %v3809, 16
      %v4070 = vrot.slane %v4068, 4
      %v4071 = vshll.u32 %v3809, 16
      %v4073 = vrot.slane %v4071, 5
      %v4074 = vor.u32 %v4070, %v4073
      %v4075 = vrot.slane %v4074, 4
      %v4077 = vshll.u32 %v3810, 16
      %v4079 = vrot.slane %v4077, 5
      %v4080 = vsel %vm288, %v4075, %v4079
      %v4081 = vshrl.u32 %v3810, 16
      %v4083 = vrot.slane %v4081, 4
      %v4084 = vor.u32 %v4083, %v4079
      %v4085 = vrot.slane %v4084, 4
      %v4087 = vshll.u32 %v3811, 16
      %v4089 = vrot.slane %v4087, 5
      %v4090 = vsel %vm288, %v4085, %v4089
      %v4092 = vshrl.u32 %v3812, 16
      %v4094 = vrot.slane %v4092, 4
      %v4095 = vshll.u32 %v3812, 16
      %v4097 = vrot.slane %v4095, 5
      %v4098 = vor.u32 %v4094, %v4097
      %v4099 = vrot.slane %v4098, 4
      %v4101 = vshll.u32 %v3813, 16
      %v4103 = vrot.slane %v4101, 5
      %v4104 = vsel %vm288, %v4099, %v4103
      %v4105 = vshrl.u32 %v3813, 16
      %v4107 = vrot.slane %v4105, 4
      %v4108 = vor.u32 %v4107, %v4103
      %v4109 = vrot.slane %v4108, 4
      %v4111 = vshll.u32 %v3814, 16
      %v4113 = vrot.slane %v4111, 5
      %v4114 = vsel %vm288, %v4109, %v4113
      %v4116 = vshrl.u32 %v3815, 16
      %v4118 = vrot.slane %v4116, 4
      %v4119 = vshll.u32 %v3815, 16
      %v4121 = vrot.slane %v4119, 5
      %v4122 = vor.u32 %v4118, %v4121
      %v4123 = vrot.slane %v4122, 4
      %v4125 = vshll.u32 %v3816, 16
      %v4127 = vrot.slane %v4125, 5
      %v4128 = vsel %vm288, %v4123, %v4127
      %v4129 = vshrl.u32 %v3816, 16
      %v4131 = vrot.slane %v4129, 4
      %v4132 = vor.u32 %v4131, %v4127
      %v4133 = vrot.slane %v4132, 4
      %v4135 = vshll.u32 %v3817, 16
      %v4137 = vrot.slane %v4135, 5
      %v4138 = vsel %vm288, %v4133, %v4137
      %v4140 = vshrl.u32 %v3818, 16
      %v4142 = vrot.slane %v4140, 4
      %v4143 = vshll.u32 %v3818, 16
      %v4145 = vrot.slane %v4143, 5
      %v4146 = vor.u32 %v4142, %v4145
      %v4147 = vrot.slane %v4146, 4
      %v4149 = vshll.u32 %v3819, 16
      %v4151 = vrot.slane %v4149, 5
      %v4152 = vsel %vm288, %v4147, %v4151
      %v4153 = vshrl.u32 %v3819, 16
      %v4155 = vrot.slane %v4153, 4
      %v4156 = vor.u32 %v4155, %v4151
      %v4157 = vrot.slane %v4156, 4
      %v4159 = vshll.u32 %v3820, 16
      %v4161 = vrot.slane %v4159, 5
      %v4162 = vsel %vm288, %v4157, %v4161
      %v4164 = vshrl.u32 %v3821, 16
      %v4166 = vrot.slane %v4164, 4
      %v4167 = vshll.u32 %v3821, 16
      %v4169 = vrot.slane %v4167, 5
      %v4170 = vor.u32 %v4166, %v4169
      %v4171 = vrot.slane %v4170, 4
      %v4173 = vshll.u32 %v3822, 16
      %v4175 = vrot.slane %v4173, 5
      %v4176 = vsel %vm288, %v4171, %v4175
      %v4177 = vshrl.u32 %v3822, 16
      %v4179 = vrot.slane %v4177, 4
      %v4180 = vor.u32 %v4179, %v4175
      %v4181 = vrot.slane %v4180, 4
      %v4183 = vshll.u32 %v3823, 16
      %v4185 = vrot.slane %v4183, 5
      %v4186 = vsel %vm288, %v4181, %v4185
      %v4188 = vshrl.u32 %v3824, 16
      %v4190 = vrot.slane %v4188, 4
      %v4191 = vshll.u32 %v3824, 16
      %v4193 = vrot.slane %v4191, 5
      %v4194 = vor.u32 %v4190, %v4193
      %v4195 = vrot.slane %v4194, 4
      %v4197 = vshll.u32 %v3825, 16
      %v4199 = vrot.slane %v4197, 5
      %v4200 = vsel %vm288, %v4195, %v4199
      %v4201 = vshrl.u32 %v3825, 16
      %v4203 = vrot.slane %v4201, 4
      %v4204 = vor.u32 %v4203, %v4199
      %v4205 = vrot.slane %v4204, 4
      %v4207 = vshll.u32 %v3826, 16
      %v4209 = vrot.slane %v4207, 5
      %v4210 = vsel %vm288, %v4205, %v4209
      %s4211 = scalar_lea.vmem %s1, 448
      %v4212 = vld [vmem:[%s4211] sm:$0xf]
      %v4213 = vld [vmem:[%s4211 + $0x4] sm:$0xf]
      %v4214 = vld [vmem:[%s4211 + $0x8] sm:$0xf]
      %v4215 = vld [vmem:[%s4211 + $0xc] sm:$0xf]
      %v4216 = vld [vmem:[%s4211 + $0x10] sm:$0xf]
      %v4217 = vld [vmem:[%s4211 + $0x14] sm:$0xf]
      %v4218 = vld [vmem:[%s4211 + $0x18] sm:$0xf]
      %v4219 = vld [vmem:[%s4211 + $0x1c] sm:$0xf]
      %v4220 = vld [vmem:[%s4211 + $0x20] sm:$0xf]
      %v4221 = vld [vmem:[%s4211 + $0x24] sm:$0xf]
      %v4222 = vld [vmem:[%s4211 + $0x28] sm:$0xf]
      %v4223 = vld [vmem:[%s4211 + $0x2c] sm:$0xf]
      %v4224 = vld [vmem:[%s4211 + $0x30] sm:$0xf]
      %v4225 = vld [vmem:[%s4211 + $0x34] sm:$0xf]
      %v4226 = vld [vmem:[%s4211 + $0x38] sm:$0xf]
      %v4227 = vld [vmem:[%s4211 + $0x3c] sm:$0xf]
      %v4228 = vunpack.c.l.b16 %v3840
      %v4229 = vunpack.c.l.b16 %v3850
      %v4230 = vunpack.c.l.b16 %v3864
      %v4231 = vunpack.c.l.b16 %v3874
      %v4232 = vunpack.c.l.b16 %v3888
      %v4233 = vunpack.c.l.b16 %v3898
      %v4234 = vunpack.c.l.b16 %v3912
      %v4235 = vunpack.c.l.b16 %v3922
      %v4236 = vunpack.c.l.b16 %v3936
      %v4237 = vunpack.c.l.b16 %v3946
      %v4238 = vunpack.c.l.b16 %v3960
      %v4239 = vunpack.c.l.b16 %v3970
      %v4240 = vunpack.c.l.b16 %v3984
      %v4241 = vunpack.c.l.b16 %v3994
      %v4242 = vunpack.c.l.b16 %v4008
      %v4243 = vunpack.c.l.b16 %v4018
      %v4244 = vunpack.c.l.b16 %v4032
      %v4245 = vunpack.c.l.b16 %v4042
      %v4246 = vunpack.c.l.b16 %v4056
      %v4247 = vunpack.c.l.b16 %v4066
      %v4248 = vunpack.c.l.b16 %v4080
      %v4249 = vunpack.c.l.b16 %v4090
      %v4250 = vunpack.c.l.b16 %v4104
      %v4251 = vunpack.c.l.b16 %v4114
      %v4252 = vunpack.c.l.b16 %v4128
      %v4253 = vunpack.c.l.b16 %v4138
      %v4254 = vunpack.c.l.b16 %v4152
      %v4255 = vunpack.c.l.b16 %v4162
      %v4256 = vunpack.c.l.b16 %v4176
      %v4257 = vunpack.c.l.b16 %v4186
      %v4258 = vunpack.c.l.b16 %v4200
      %v4259 = vunpack.c.l.b16 %v4210
      %v4260 = vpack.c.b16 %v4229, %v4228
      %v4261 = vpack.c.b16 %v4231, %v4230
      %v4262 = vpack.c.b16 %v4233, %v4232
      %v4263 = vpack.c.b16 %v4235, %v4234
      %v4264 = vpack.c.b16 %v4237, %v4236
      %v4265 = vpack.c.b16 %v4239, %v4238
      %v4266 = vpack.c.b16 %v4241, %v4240
      %v4267 = vpack.c.b16 %v4243, %v4242
      %v4268 = vpack.c.b16 %v4245, %v4244
      %v4269 = vpack.c.b16 %v4247, %v4246
      %v4270 = vpack.c.b16 %v4249, %v4248
      %v4271 = vpack.c.b16 %v4251, %v4250
      %v4272 = vpack.c.b16 %v4253, %v4252
      %v4273 = vpack.c.b16 %v4255, %v4254
      %v4274 = vpack.c.b16 %v4257, %v4256
      %v4275 = vpack.c.b16 %v4259, %v4258
      %v4308 = vunpack.c.l.b16 %v4212
      %v4309 = vunpack.c.l.b16 %v4213
      %v4310 = vunpack.c.l.b16 %v4214
      %v4311 = vunpack.c.l.b16 %v4215
      %v4312 = vunpack.c.l.b16 %v4216
      %v4313 = vunpack.c.l.b16 %v4217
      %v4314 = vunpack.c.l.b16 %v4218
      %v4315 = vunpack.c.l.b16 %v4219
      %v4316 = vunpack.c.l.b16 %v4220
      %v4317 = vunpack.c.l.b16 %v4221
      %v4318 = vunpack.c.l.b16 %v4222
      %v4319 = vunpack.c.l.b16 %v4223
      %v4320 = vunpack.c.l.b16 %v4224
      %v4321 = vunpack.c.l.b16 %v4225
      %v4322 = vunpack.c.l.b16 %v4226
      %v4323 = vunpack.c.l.b16 %v4227
      %v4324 = vpack.c.b16 %v4309, %v4308
      %v4325 = vpack.c.b16 %v4311, %v4310
      %v4326 = vpack.c.b16 %v4313, %v4312
      %v4327 = vpack.c.b16 %v4315, %v4314
      %v4328 = vpack.c.b16 %v4317, %v4316
      %v4329 = vpack.c.b16 %v4319, %v4318
      %v4330 = vpack.c.b16 %v4321, %v4320
      %v4331 = vpack.c.b16 %v4323, %v4322
      %4340 = vmatprep.subr.bf16.mxu0 0
      %4341 = vmatpush1.bf16.msra.mxu0 %v4324
      %4342 = vmatprep.subr.bf16.mxu0 0
      %4343 = vmatpush1.bf16.msra.mxu0 %v4325
      %4344 = vmatprep.subr.bf16.mxu0 0
      %4345 = vmatpush1.bf16.msra.mxu0 %v4326
      %4346 = vmatprep.subr.bf16.mxu0 0
      %4347 = vmatpush1.bf16.msra.mxu0 %v4327
      %4348 = vmatprep.subr.bf16.mxu0 0
      %4349 = vmatpush1.bf16.msra.mxu0 %v4328
      %4350 = vmatprep.subr.bf16.mxu0 0
      %4351 = vmatpush1.bf16.msra.mxu0 %v4329
      %4352 = vmatprep.subr.bf16.mxu0 0
      %4353 = vmatpush1.bf16.msra.mxu0 %v4330
      %4354 = vmatprep.subr.bf16.mxu0 0
      %4355 = vmatpush1.bf16.msra.mxu0 %v4331
      %4356 = vmatprep.subr.bf16.mxu0 0
      %4357 = vmatpush1.bf16.msra.mxu0 0
      %4358 = vmatprep.subr.bf16.mxu0 0
      %4359 = vmatpush1.bf16.msra.mxu0 0
      %4360 = vmatprep.subr.bf16.mxu0 0
      %4361 = vmatpush1.bf16.msra.mxu0 0
      %4362 = vmatprep.subr.bf16.mxu0 0
      %4363 = vmatpush1.bf16.msra.mxu0 0
      %4364 = vmatprep.subr.bf16.mxu0 0
      %4365 = vmatpush1.bf16.msra.mxu0 0
      %4366 = vmatprep.subr.bf16.mxu0 0
      %4367 = vmatpush1.bf16.msra.mxu0 0
      %4368 = vmatprep.subr.bf16.mxu0 0
      %4369 = vmatpush1.bf16.msra.mxu0 0
      %4370 = vmatprep.subr.bf16.mxu0 0
      %4371 = vmatpush1.bf16.msra.mxu0 0
      %4372 = vmatprep.mubr.bf16.mxu0 0
      %4373 = vmatmul.mubr.bf16.gmra.mrb[0].mxu0 %v4260
      %v4374 = vpop.f32.mrb[0].mxu0
      %v4375 = vadd.f32 0.0, %v4374
      %v4376 = vpop.f32.mrb[0].mxu0
      %v4377 = vpop.f32.mrb[0].mxu0
      %v4378 = vadd.f32 0.0, %v4377
      %v4379 = vpop.f32.mrb[0].mxu0
      %4380 = vmatprep.mubr.bf16.mxu0 0
      %4381 = vmatmul.mubr.bf16.gmra.mrb[0].mxu0 %v4261
      %v4382 = vpop.f32.mrb[0].mxu0
      %v4383 = vadd.f32 0.0, %v4382
      %v4384 = vpop.f32.mrb[0].mxu0
      %v4385 = vpop.f32.mrb[0].mxu0
      %v4386 = vadd.f32 0.0, %v4385
      %v4387 = vpop.f32.mrb[0].mxu0
      %4388 = vmatprep.mubr.bf16.mxu0 0
      %4389 = vmatmul.mubr.bf16.gmra.mrb[0].mxu0 %v4262
      %v4390 = vpop.f32.mrb[0].mxu0
      %v4391 = vadd.f32 0.0, %v4390
      %v4392 = vpop.f32.mrb[0].mxu0
      %v4393 = vpop.f32.mrb[0].mxu0
      %v4394 = vadd.f32 0.0, %v4393
      %v4395 = vpop.f32.mrb[0].mxu0
      %4396 = vmatprep.mubr.bf16.mxu0 0
      %4397 = vmatmul.mubr.bf16.gmra.mrb[0].mxu0 %v4263
      %v4398 = vpop.f32.mrb[0].mxu0
      %v4399 = vadd.f32 0.0, %v4398
      %v4400 = vpop.f32.mrb[0].mxu0
      %v4401 = vpop.f32.mrb[0].mxu0
      %v4402 = vadd.f32 0.0, %v4401
      %v4403 = vpop.f32.mrb[0].mxu0
      %4404 = vmatprep.mubr.bf16.mxu0 0
      %4405 = vmatmul.mubr.bf16.gmra.mrb[0].mxu0 %v4264
      %v4406 = vpop.f32.mrb[0].mxu0
      %v4407 = vadd.f32 0.0, %v4406
      %v4408 = vpop.f32.mrb[0].mxu0
      %v4409 = vpop.f32.mrb[0].mxu0
      %v4410 = vadd.f32 0.0, %v4409
      %v4411 = vpop.f32.mrb[0].mxu0
      %4412 = vmatprep.mubr.bf16.mxu0 0
      %4413 = vmatmul.mubr.bf16.gmra.mrb[0].mxu0 %v4265
      %v4414 = vpop.f32.mrb[0].mxu0
      %v4415 = vadd.f32 0.0, %v4414
      %v4416 = vpop.f32.mrb[0].mxu0
      %v4417 = vpop.f32.mrb[0].mxu0
      %v4418 = vadd.f32 0.0, %v4417
      %v4419 = vpop.f32.mrb[0].mxu0
      %4420 = vmatprep.mubr.bf16.mxu0 0
      %4421 = vmatmul.mubr.bf16.gmra.mrb[0].mxu0 %v4266
      %v4422 = vpop.f32.mrb[0].mxu0
      %v4423 = vadd.f32 0.0, %v4422
      %v4424 = vpop.f32.mrb[0].mxu0
      %v4425 = vpop.f32.mrb[0].mxu0
      %v4426 = vadd.f32 0.0, %v4425
      %v4427 = vpop.f32.mrb[0].mxu0
      %4428 = vmatprep.mubr.bf16.mxu0 0
      %4429 = vmatmul.mubr.bf16.gmra.mrb[0].mxu0 %v4267
      %v4430 = vpop.f32.mrb[0].mxu0
      %v4431 = vadd.f32 0.0, %v4430
      %v4432 = vpop.f32.mrb[0].mxu0
      %v4433 = vpop.f32.mrb[0].mxu0
      %v4434 = vadd.f32 0.0, %v4433
      %v4435 = vpop.f32.mrb[0].mxu0
      %4436 = vmatprep.mubr.bf16.mxu0 0
      %4437 = vmatmul.mubr.bf16.gmra.mrb[0].mxu0 %v4268
      %v4438 = vpop.f32.mrb[0].mxu0
      %v4439 = vadd.f32 0.0, %v4438
      %v4440 = vpop.f32.mrb[0].mxu0
      %v4441 = vpop.f32.mrb[0].mxu0
      %v4442 = vadd.f32 0.0, %v4441
      %v4443 = vpop.f32.mrb[0].mxu0
      %4444 = vmatprep.mubr.bf16.mxu0 0
      %4445 = vmatmul.mubr.bf16.gmra.mrb[0].mxu0 %v4269
      %v4446 = vpop.f32.mrb[0].mxu0
      %v4447 = vadd.f32 0.0, %v4446
      %v4448 = vpop.f32.mrb[0].mxu0
      %v4449 = vpop.f32.mrb[0].mxu0
      %v4450 = vadd.f32 0.0, %v4449
      %v4451 = vpop.f32.mrb[0].mxu0
      %4452 = vmatprep.mubr.bf16.mxu0 0
      %4453 = vmatmul.mubr.bf16.gmra.mrb[0].mxu0 %v4270
      %v4454 = vpop.f32.mrb[0].mxu0
      %v4455 = vadd.f32 0.0, %v4454
      %v4456 = vpop.f32.mrb[0].mxu0
      %v4457 = vpop.f32.mrb[0].mxu0
      %v4458 = vadd.f32 0.0, %v4457
      %v4459 = vpop.f32.mrb[0].mxu0
      %4460 = vmatprep.mubr.bf16.mxu0 0
      %4461 = vmatmul.mubr.bf16.gmra.mrb[0].mxu0 %v4271
      %v4462 = vpop.f32.mrb[0].mxu0
      %v4463 = vadd.f32 0.0, %v4462
      %v4464 = vpop.f32.mrb[0].mxu0
      %v4465 = vpop.f32.mrb[0].mxu0
      %v4466 = vadd.f32 0.0, %v4465
      %v4467 = vpop.f32.mrb[0].mxu0
      %4468 = vmatprep.mubr.bf16.mxu0 0
      %4469 = vmatmul.mubr.bf16.gmra.mrb[0].mxu0 %v4272
      %v4470 = vpop.f32.mrb[0].mxu0
      %v4471 = vadd.f32 0.0, %v4470
      %v4472 = vpop.f32.mrb[0].mxu0
      %v4473 = vpop.f32.mrb[0].mxu0
      %v4474 = vadd.f32 0.0, %v4473
      %v4475 = vpop.f32.mrb[0].mxu0
      %4476 = vmatprep.mubr.bf16.mxu0 0
      %4477 = vmatmul.mubr.bf16.gmra.mrb[0].mxu0 %v4273
      %v4478 = vpop.f32.mrb[0].mxu0
      %v4479 = vadd.f32 0.0, %v4478
      %v4480 = vpop.f32.mrb[0].mxu0
      %v4481 = vpop.f32.mrb[0].mxu0
      %v4482 = vadd.f32 0.0, %v4481
      %v4483 = vpop.f32.mrb[0].mxu0
      %4484 = vmatprep.mubr.bf16.mxu0 0
      %4485 = vmatmul.mubr.bf16.gmra.mrb[0].mxu0 %v4274
      %v4486 = vpop.f32.mrb[0].mxu0
      %v4487 = vadd.f32 0.0, %v4486
      %v4488 = vpop.f32.mrb[0].mxu0
      %v4489 = vpop.f32.mrb[0].mxu0
      %v4490 = vadd.f32 0.0, %v4489
      %v4491 = vpop.f32.mrb[0].mxu0
      %4492 = vmatprep.mubr.bf16.mxu0 0
      %4493 = vmatmul.mubr.bf16.gmra.mrb[0].mxu0 %v4275
      %v4494 = vpop.f32.mrb[0].mxu0
      %v4495 = vadd.f32 0.0, %v4494
      %v4496 = vpop.f32.mrb[0].mxu0
      %v4497 = vpop.f32.mrb[0].mxu0
      %v4498 = vadd.f32 0.0, %v4497
      %v4499 = vpop.f32.mrb[0].mxu0
      %4500 = vdwg.mxu0
      %v4501 = vadd.f32 %v3747, %v4375
      %v4502 = vadd.f32 %v3748, %v4378
      %v4503 = vadd.f32 %v3749, %v4383
      %v4504 = vadd.f32 %v3750, %v4386
      %v4505 = vadd.f32 %v3751, %v4391
      %v4506 = vadd.f32 %v3752, %v4394
      %v4507 = vadd.f32 %v3753, %v4399
      %v4508 = vadd.f32 %v3754, %v4402
      %v4509 = vadd.f32 %v3755, %v4407
      %v4510 = vadd.f32 %v3756, %v4410
      %v4511 = vadd.f32 %v3757, %v4415
      %v4512 = vadd.f32 %v3758, %v4418
      %v4513 = vadd.f32 %v3759, %v4423
      %v4514 = vadd.f32 %v3760, %v4426
      %v4515 = vadd.f32 %v3761, %v4431
      %v4516 = vadd.f32 %v3762, %v4434
      %v4517 = vadd.f32 %v3763, %v4439
      %v4518 = vadd.f32 %v3764, %v4442
      %v4519 = vadd.f32 %v3765, %v4447
      %v4520 = vadd.f32 %v3766, %v4450
      %v4521 = vadd.f32 %v3767, %v4455
      %v4522 = vadd.f32 %v3768, %v4458
      %v4523 = vadd.f32 %v3769, %v4463
      %v4524 = vadd.f32 %v3770, %v4466
      %v4525 = vadd.f32 %v3771, %v4471
      %v4526 = vadd.f32 %v3772, %v4474
      %v4527 = vadd.f32 %v3773, %v4479
      %v4528 = vadd.f32 %v3774, %v4482
      %v4529 = vadd.f32 %v3775, %v4487
      %v4530 = vadd.f32 %v3776, %v4490
      %v4531 = vadd.f32 %v3777, %v4495
      %v4532 = vadd.f32 %v3778, %v4498
      %v4533 = vld [vmem:[%s3392] sm:$0xe]
      %v4534 = vld [vmem:[%s3392 + $0xc] sm:$0xe]
      %v4535 = vld [vmem:[%s3392 + $0x18] sm:$0xe]
      %v4536 = vld [vmem:[%s3392 + $0x24] sm:$0xe]
      %v4537 = vld [vmem:[%s3392 + $0x30] sm:$0xe]
      %v4538 = vld [vmem:[%s3392 + $0x3c] sm:$0xe]
      %v4539 = vld [vmem:[%s3392 + $0x48] sm:$0xe]
      %v4540 = vld [vmem:[%s3392 + $0x54] sm:$0xe]
      %v4541 = vld [vmem:[%s3392 + $0x60] sm:$0xe]
      %v4542 = vld [vmem:[%s3392 + $0x6c] sm:$0xe]
      %v4543 = vld [vmem:[%s3392 + $0x78] sm:$0xe]
      %v4544 = vld [vmem:[%s3392 + $0x84] sm:$0xe]
      %v4545 = vld [vmem:[%s3392 + $0x90] sm:$0xe]
      %v4546 = vld [vmem:[%s3392 + $0x9c] sm:$0xe]
      %v4547 = vld [vmem:[%s3392 + $0xa8] sm:$0xe]
      %v4548 = vld [vmem:[%s3392 + $0xb4] sm:$0xe]
      %v4597 = vrot.slane %v4533, 5
      %v4598 = vrot.slane %v4597, 4
      %v4599 = vrot.slane %v3780, 5
      %v4600 = vsel %vm1318, %v4598, %v4599
      %v4601 = vrot.slane %v4599, 4
      %v4602 = vrot.slane %v3781, 5
      %v4603 = vsel %vm1318, %v4601, %v4602
      %v4604 = vrot.slane %v4534, 5
      %v4605 = vrot.slane %v4604, 4
      %v4606 = vrot.slane %v3783, 5
      %v4607 = vsel %vm1318, %v4605, %v4606
      %v4608 = vrot.slane %v4606, 4
      %v4609 = vrot.slane %v3784, 5
      %v4610 = vsel %vm1318, %v4608, %v4609
      %v4611 = vrot.slane %v4535, 5
      %v4612 = vrot.slane %v4611, 4
      %v4613 = vrot.slane %v3786, 5
      %v4614 = vsel %vm1318, %v4612, %v4613
      %v4615 = vrot.slane %v4613, 4
      %v4616 = vrot.slane %v3787, 5
      %v4617 = vsel %vm1318, %v4615, %v4616
      %v4618 = vrot.slane %v4536, 5
      %v4619 = vrot.slane %v4618, 4
      %v4620 = vrot.slane %v3789, 5
      %v4621 = vsel %vm1318, %v4619, %v4620
      %v4622 = vrot.slane %v4620, 4
      %v4623 = vrot.slane %v3790, 5
      %v4624 = vsel %vm1318, %v4622, %v4623
      %v4625 = vrot.slane %v4537, 5
      %v4626 = vrot.slane %v4625, 4
      %v4627 = vrot.slane %v3792, 5
      %v4628 = vsel %vm1318, %v4626, %v4627
      %v4629 = vrot.slane %v4627, 4
      %v4630 = vrot.slane %v3793, 5
      %v4631 = vsel %vm1318, %v4629, %v4630
      %v4632 = vrot.slane %v4538, 5
      %v4633 = vrot.slane %v4632, 4
      %v4634 = vrot.slane %v3795, 5
      %v4635 = vsel %vm1318, %v4633, %v4634
      %v4636 = vrot.slane %v4634, 4
      %v4637 = vrot.slane %v3796, 5
      %v4638 = vsel %vm1318, %v4636, %v4637
      %v4639 = vrot.slane %v4539, 5
      %v4640 = vrot.slane %v4639, 4
      %v4641 = vrot.slane %v3798, 5
      %v4642 = vsel %vm1318, %v4640, %v4641
      %v4643 = vrot.slane %v4641, 4
      %v4644 = vrot.slane %v3799, 5
      %v4645 = vsel %vm1318, %v4643, %v4644
      %v4646 = vrot.slane %v4540, 5
      %v4647 = vrot.slane %v4646, 4
      %v4648 = vrot.slane %v3801, 5
      %v4649 = vsel %vm1318, %v4647, %v4648
      %v4650 = vrot.slane %v4648, 4
      %v4651 = vrot.slane %v3802, 5
      %v4652 = vsel %vm1318, %v4650, %v4651
      %v4653 = vrot.slane %v4541, 5
      %v4654 = vrot.slane %v4653, 4
      %v4655 = vrot.slane %v3804, 5
      %v4656 = vsel %vm1318, %v4654, %v4655
      %v4657 = vrot.slane %v4655, 4
      %v4658 = vrot.slane %v3805, 5
      %v4659 = vsel %vm1318, %v4657, %v4658
      %v4660 = vrot.slane %v4542, 5
      %v4661 = vrot.slane %v4660, 4
      %v4662 = vrot.slane %v3807, 5
      %v4663 = vsel %vm1318, %v4661, %v4662
      %v4664 = vrot.slane %v4662, 4
      %v4665 = vrot.slane %v3808, 5
      %v4666 = vsel %vm1318, %v4664, %v4665
      %v4667 = vrot.slane %v4543, 5
      %v4668 = vrot.slane %v4667, 4
      %v4669 = vrot.slane %v3810, 5
      %v4670 = vsel %vm1318, %v4668, %v4669
      %v4671 = vrot.slane %v4669, 4
      %v4672 = vrot.slane %v3811, 5
      %v4673 = vsel %vm1318, %v4671, %v4672
      %v4674 = vrot.slane %v4544, 5
      %v4675 = vrot.slane %v4674, 4
      %v4676 = vrot.slane %v3813, 5
      %v4677 = vsel %vm1318, %v4675, %v4676
      %v4678 = vrot.slane %v4676, 4
      %v4679 = vrot.slane %v3814, 5
      %v4680 = vsel %vm1318, %v4678, %v4679
      %v4681 = vrot.slane %v4545, 5
      %v4682 = vrot.slane %v4681, 4
      %v4683 = vrot.slane %v3816, 5
      %v4684 = vsel %vm1318, %v4682, %v4683
      %v4685 = vrot.slane %v4683, 4
      %v4686 = vrot.slane %v3817, 5
      %v4687 = vsel %vm1318, %v4685, %v4686
      %v4688 = vrot.slane %v4546, 5
      %v4689 = vrot.slane %v4688, 4
      %v4690 = vrot.slane %v3819, 5
      %v4691 = vsel %vm1318, %v4689, %v4690
      %v4692 = vrot.slane %v4690, 4
      %v4693 = vrot.slane %v3820, 5
      %v4694 = vsel %vm1318, %v4692, %v4693
      %v4695 = vrot.slane %v4547, 5
      %v4696 = vrot.slane %v4695, 4
      %v4697 = vrot.slane %v3822, 5
      %v4698 = vsel %vm1318, %v4696, %v4697
      %v4699 = vrot.slane %v4697, 4
      %v4700 = vrot.slane %v3823, 5
      %v4701 = vsel %vm1318, %v4699, %v4700
      %v4702 = vrot.slane %v4548, 5
      %v4703 = vrot.slane %v4702, 4
      %v4704 = vrot.slane %v3825, 5
      %v4705 = vsel %vm1318, %v4703, %v4704
      %v4706 = vrot.slane %v4704, 4
      %v4707 = vrot.slane %v3826, 5
      %v4708 = vsel %vm1318, %v4706, %v4707
      %s4709 = scalar_lea.vmem %s1, 512
      %v4710 = vld [vmem:[%s4709] sm:$0xf]
      %v4711 = vld [vmem:[%s4709 + $0x4] sm:$0xf]
      %v4712 = vld [vmem:[%s4709 + $0x8] sm:$0xf]
      %v4713 = vld [vmem:[%s4709 + $0xc] sm:$0xf]
      %v4714 = vld [vmem:[%s4709 + $0x10] sm:$0xf]
      %v4715 = vld [vmem:[%s4709 + $0x14] sm:$0xf]
      %v4716 = vld [vmem:[%s4709 + $0x18] sm:$0xf]
      %v4717 = vld [vmem:[%s4709 + $0x1c] sm:$0xf]
      %v4718 = vld [vmem:[%s4709 + $0x20] sm:$0xf]
      %v4719 = vld [vmem:[%s4709 + $0x24] sm:$0xf]
      %v4720 = vld [vmem:[%s4709 + $0x28] sm:$0xf]
      %v4721 = vld [vmem:[%s4709 + $0x2c] sm:$0xf]
      %v4722 = vld [vmem:[%s4709 + $0x30] sm:$0xf]
      %v4723 = vld [vmem:[%s4709 + $0x34] sm:$0xf]
      %v4724 = vld [vmem:[%s4709 + $0x38] sm:$0xf]
      %v4725 = vld [vmem:[%s4709 + $0x3c] sm:$0xf]
      %v4726 = vunpack.c.l.b16 %v4600
      %v4727 = vunpack.c.l.b16 %v4603
      %v4728 = vunpack.c.l.b16 %v4607
      %v4729 = vunpack.c.l.b16 %v4610
      %v4730 = vunpack.c.l.b16 %v4614
      %v4731 = vunpack.c.l.b16 %v4617
      %v4732 = vunpack.c.l.b16 %v4621
      %v4733 = vunpack.c.l.b16 %v4624
      %v4734 = vunpack.c.l.b16 %v4628
      %v4735 = vunpack.c.l.b16 %v4631
      %v4736 = vunpack.c.l.b16 %v4635
      %v4737 = vunpack.c.l.b16 %v4638
      %v4738 = vunpack.c.l.b16 %v4642
      %v4739 = vunpack.c.l.b16 %v4645
      %v4740 = vunpack.c.l.b16 %v4649
      %v4741 = vunpack.c.l.b16 %v4652
      %v4742 = vunpack.c.l.b16 %v4656
      %v4743 = vunpack.c.l.b16 %v4659
      %v4744 = vunpack.c.l.b16 %v4663
      %v4745 = vunpack.c.l.b16 %v4666
      %v4746 = vunpack.c.l.b16 %v4670
      %v4747 = vunpack.c.l.b16 %v4673
      %v4748 = vunpack.c.l.b16 %v4677
      %v4749 = vunpack.c.l.b16 %v4680
      %v4750 = vunpack.c.l.b16 %v4684
      %v4751 = vunpack.c.l.b16 %v4687
      %v4752 = vunpack.c.l.b16 %v4691
      %v4753 = vunpack.c.l.b16 %v4694
      %v4754 = vunpack.c.l.b16 %v4698
      %v4755 = vunpack.c.l.b16 %v4701
      %v4756 = vunpack.c.l.b16 %v4705
      %v4757 = vunpack.c.l.b16 %v4708
      %v4758 = vpack.c.b16 %v4727, %v4726
      %v4759 = vpack.c.b16 %v4729, %v4728
      %v4760 = vpack.c.b16 %v4731, %v4730
      %v4761 = vpack.c.b16 %v4733, %v4732
      %v4762 = vpack.c.b16 %v4735, %v4734
      %v4763 = vpack.c.b16 %v4737, %v4736
      %v4764 = vpack.c.b16 %v4739, %v4738
      %v4765 = vpack.c.b16 %v4741, %v4740
      %v4766 = vpack.c.b16 %v4743, %v4742
      %v4767 = vpack.c.b16 %v4745, %v4744
      %v4768 = vpack.c.b16 %v4747, %v4746
      %v4769 = vpack.c.b16 %v4749, %v4748
      %v4770 = vpack.c.b16 %v4751, %v4750
      %v4771 = vpack.c.b16 %v4753, %v4752
      %v4772 = vpack.c.b16 %v4755, %v4754
      %v4773 = vpack.c.b16 %v4757, %v4756
      %v4806 = vunpack.c.l.b16 %v4710
      %v4807 = vunpack.c.l.b16 %v4711
      %v4808 = vunpack.c.l.b16 %v4712
      %v4809 = vunpack.c.l.b16 %v4713
      %v4810 = vunpack.c.l.b16 %v4714
      %v4811 = vunpack.c.l.b16 %v4715
      %v4812 = vunpack.c.l.b16 %v4716
      %v4813 = vunpack.c.l.b16 %v4717
      %v4814 = vunpack.c.l.b16 %v4718
      %v4815 = vunpack.c.l.b16 %v4719
      %v4816 = vunpack.c.l.b16 %v4720
      %v4817 = vunpack.c.l.b16 %v4721
      %v4818 = vunpack.c.l.b16 %v4722
      %v4819 = vunpack.c.l.b16 %v4723
      %v4820 = vunpack.c.l.b16 %v4724
      %v4821 = vunpack.c.l.b16 %v4725
      %v4822 = vpack.c.b16 %v4807, %v4806
      %v4823 = vpack.c.b16 %v4809, %v4808
      %v4824 = vpack.c.b16 %v4811, %v4810
      %v4825 = vpack.c.b16 %v4813, %v4812
      %v4826 = vpack.c.b16 %v4815, %v4814
      %v4827 = vpack.c.b16 %v4817, %v4816
      %v4828 = vpack.c.b16 %v4819, %v4818
      %v4829 = vpack.c.b16 %v4821, %v4820
      %4838 = vmatprep.subr.bf16.mxu0 0
      %4839 = vmatpush1.bf16.msra.mxu0 %v4822
      %4840 = vmatprep.subr.bf16.mxu0 0
      %4841 = vmatpush1.bf16.msra.mxu0 %v4823
      %4842 = vmatprep.subr.bf16.mxu0 0
      %4843 = vmatpush1.bf16.msra.mxu0 %v4824
      %4844 = vmatprep.subr.bf16.mxu0 0
      %4845 = vmatpush1.bf16.msra.mxu0 %v4825
      %4846 = vmatprep.subr.bf16.mxu0 0
      %4847 = vmatpush1.bf16.msra.mxu0 %v4826
      %4848 = vmatprep.subr.bf16.mxu0 0
      %4849 = vmatpush1.bf16.msra.mxu0 %v4827
      %4850 = vmatprep.subr.bf16.mxu0 0
      %4851 = vmatpush1.bf16.msra.mxu0 %v4828
      %4852 = vmatprep.subr.bf16.mxu0 0
      %4853 = vmatpush1.bf16.msra.mxu0 %v4829
      %4854 = vmatprep.subr.bf16.mxu0 0
      %4855 = vmatpush1.bf16.msra.mxu0 0
      %4856 = vmatprep.subr.bf16.mxu0 0
      %4857 = vmatpush1.bf16.msra.mxu0 0
      %4858 = vmatprep.subr.bf16.mxu0 0
      %4859 = vmatpush1.bf16.msra.mxu0 0
      %4860 = vmatprep.subr.bf16.mxu0 0
      %4861 = vmatpush1.bf16.msra.mxu0 0
      %4862 = vmatprep.subr.bf16.mxu0 0
      %4863 = vmatpush1.bf16.msra.mxu0 0
      %4864 = vmatprep.subr.bf16.mxu0 0
      %4865 = vmatpush1.bf16.msra.mxu0 0
      %4866 = vmatprep.subr.bf16.mxu0 0
      %4867 = vmatpush1.bf16.msra.mxu0 0
      %4868 = vmatprep.subr.bf16.mxu0 0
      %4869 = vmatpush1.bf16.msra.mxu0 0
      %4870 = vmatprep.mubr.bf16.mxu0 0
      %4871 = vmatmul.mubr.bf16.gmra.mrb[0].mxu0 %v4758
      %v4872 = vpop.f32.mrb[0].mxu0
      %v4873 = vadd.f32 0.0, %v4872
      %v4874 = vpop.f32.mrb[0].mxu0
      %v4875 = vpop.f32.mrb[0].mxu0
      %v4876 = vadd.f32 0.0, %v4875
      %v4877 = vpop.f32.mrb[0].mxu0
      %4878 = vmatprep.mubr.bf16.mxu0 0
      %4879 = vmatmul.mubr.bf16.gmra.mrb[0].mxu0 %v4759
      %v4880 = vpop.f32.mrb[0].mxu0
      %v4881 = vadd.f32 0.0, %v4880
      %v4882 = vpop.f32.mrb[0].mxu0
      %v4883 = vpop.f32.mrb[0].mxu0
      %v4884 = vadd.f32 0.0, %v4883
      %v4885 = vpop.f32.mrb[0].mxu0
      %4886 = vmatprep.mubr.bf16.mxu0 0
      %4887 = vmatmul.mubr.bf16.gmra.mrb[0].mxu0 %v4760
      %v4888 = vpop.f32.mrb[0].mxu0
      %v4889 = vadd.f32 0.0, %v4888
      %v4890 = vpop.f32.mrb[0].mxu0
      %v4891 = vpop.f32.mrb[0].mxu0
      %v4892 = vadd.f32 0.0, %v4891
      %v4893 = vpop.f32.mrb[0].mxu0
      %4894 = vmatprep.mubr.bf16.mxu0 0
      %4895 = vmatmul.mubr.bf16.gmra.mrb[0].mxu0 %v4761
      %v4896 = vpop.f32.mrb[0].mxu0
      %v4897 = vadd.f32 0.0, %v4896
      %v4898 = vpop.f32.mrb[0].mxu0
      %v4899 = vpop.f32.mrb[0].mxu0
      %v4900 = vadd.f32 0.0, %v4899
      %v4901 = vpop.f32.mrb[0].mxu0
      %4902 = vmatprep.mubr.bf16.mxu0 0
      %4903 = vmatmul.mubr.bf16.gmra.mrb[0].mxu0 %v4762
      %v4904 = vpop.f32.mrb[0].mxu0
      %v4905 = vadd.f32 0.0, %v4904
      %v4906 = vpop.f32.mrb[0].mxu0
      %v4907 = vpop.f32.mrb[0].mxu0
      %v4908 = vadd.f32 0.0, %v4907
      %v4909 = vpop.f32.mrb[0].mxu0
      %4910 = vmatprep.mubr.bf16.mxu0 0
      %4911 = vmatmul.mubr.bf16.gmra.mrb[0].mxu0 %v4763
      %v4912 = vpop.f32.mrb[0].mxu0
      %v4913 = vadd.f32 0.0, %v4912
      %v4914 = vpop.f32.mrb[0].mxu0
      %v4915 = vpop.f32.mrb[0].mxu0
      %v4916 = vadd.f32 0.0, %v4915
      %v4917 = vpop.f32.mrb[0].mxu0
      %4918 = vmatprep.mubr.bf16.mxu0 0
      %4919 = vmatmul.mubr.bf16.gmra.mrb[0].mxu0 %v4764
      %v4920 = vpop.f32.mrb[0].mxu0
      %v4921 = vadd.f32 0.0, %v4920
      %v4922 = vpop.f32.mrb[0].mxu0
      %v4923 = vpop.f32.mrb[0].mxu0
      %v4924 = vadd.f32 0.0, %v4923
      %v4925 = vpop.f32.mrb[0].mxu0
      %4926 = vmatprep.mubr.bf16.mxu0 0
      %4927 = vmatmul.mubr.bf16.gmra.mrb[0].mxu0 %v4765
      %v4928 = vpop.f32.mrb[0].mxu0
      %v4929 = vadd.f32 0.0, %v4928
      %v4930 = vpop.f32.mrb[0].mxu0
      %v4931 = vpop.f32.mrb[0].mxu0
      %v4932 = vadd.f32 0.0, %v4931
      %v4933 = vpop.f32.mrb[0].mxu0
      %4934 = vmatprep.mubr.bf16.mxu0 0
      %4935 = vmatmul.mubr.bf16.gmra.mrb[0].mxu0 %v4766
      %v4936 = vpop.f32.mrb[0].mxu0
      %v4937 = vadd.f32 0.0, %v4936
      %v4938 = vpop.f32.mrb[0].mxu0
      %v4939 = vpop.f32.mrb[0].mxu0
      %v4940 = vadd.f32 0.0, %v4939
      %v4941 = vpop.f32.mrb[0].mxu0
      %4942 = vmatprep.mubr.bf16.mxu0 0
      %4943 = vmatmul.mubr.bf16.gmra.mrb[0].mxu0 %v4767
      %v4944 = vpop.f32.mrb[0].mxu0
      %v4945 = vadd.f32 0.0, %v4944
      %v4946 = vpop.f32.mrb[0].mxu0
      %v4947 = vpop.f32.mrb[0].mxu0
      %v4948 = vadd.f32 0.0, %v4947
      %v4949 = vpop.f32.mrb[0].mxu0
      %4950 = vmatprep.mubr.bf16.mxu0 0
      %4951 = vmatmul.mubr.bf16.gmra.mrb[0].mxu0 %v4768
      %v4952 = vpop.f32.mrb[0].mxu0
      %v4953 = vadd.f32 0.0, %v4952
      %v4954 = vpop.f32.mrb[0].mxu0
      %v4955 = vpop.f32.mrb[0].mxu0
      %v4956 = vadd.f32 0.0, %v4955
      %v4957 = vpop.f32.mrb[0].mxu0
      %4958 = vmatprep.mubr.bf16.mxu0 0
      %4959 = vmatmul.mubr.bf16.gmra.mrb[0].mxu0 %v4769
      %v4960 = vpop.f32.mrb[0].mxu0
      %v4961 = vadd.f32 0.0, %v4960
      %v4962 = vpop.f32.mrb[0].mxu0
      %v4963 = vpop.f32.mrb[0].mxu0
      %v4964 = vadd.f32 0.0, %v4963
      %v4965 = vpop.f32.mrb[0].mxu0
      %4966 = vmatprep.mubr.bf16.mxu0 0
      %4967 = vmatmul.mubr.bf16.gmra.mrb[0].mxu0 %v4770
      %v4968 = vpop.f32.mrb[0].mxu0
      %v4969 = vadd.f32 0.0, %v4968
      %v4970 = vpop.f32.mrb[0].mxu0
      %v4971 = vpop.f32.mrb[0].mxu0
      %v4972 = vadd.f32 0.0, %v4971
      %v4973 = vpop.f32.mrb[0].mxu0
      %4974 = vmatprep.mubr.bf16.mxu0 0
      %4975 = vmatmul.mubr.bf16.gmra.mrb[0].mxu0 %v4771
      %v4976 = vpop.f32.mrb[0].mxu0
      %v4977 = vadd.f32 0.0, %v4976
      %v4978 = vpop.f32.mrb[0].mxu0
      %v4979 = vpop.f32.mrb[0].mxu0
      %v4980 = vadd.f32 0.0, %v4979
      %v4981 = vpop.f32.mrb[0].mxu0
      %4982 = vmatprep.mubr.bf16.mxu0 0
      %4983 = vmatmul.mubr.bf16.gmra.mrb[0].mxu0 %v4772
      %v4984 = vpop.f32.mrb[0].mxu0
      %v4985 = vadd.f32 0.0, %v4984
      %v4986 = vpop.f32.mrb[0].mxu0
      %v4987 = vpop.f32.mrb[0].mxu0
      %v4988 = vadd.f32 0.0, %v4987
      %v4989 = vpop.f32.mrb[0].mxu0
      %4990 = vmatprep.mubr.bf16.mxu0 0
      %4991 = vmatmul.mubr.bf16.gmra.mrb[0].mxu0 %v4773
      %v4992 = vpop.f32.mrb[0].mxu0
      %v4993 = vadd.f32 0.0, %v4992
      %v4994 = vpop.f32.mrb[0].mxu0
      %v4995 = vpop.f32.mrb[0].mxu0
      %v4996 = vadd.f32 0.0, %v4995
      %v4997 = vpop.f32.mrb[0].mxu0
      %4998 = vdwg.mxu0
      %v4999 = vadd.f32 %v4501, %v4873
      %v5000 = vadd.f32 %v4502, %v4876
      %v5001 = vadd.f32 %v4503, %v4881
      %v5002 = vadd.f32 %v4504, %v4884
      %v5003 = vadd.f32 %v4505, %v4889
      %v5004 = vadd.f32 %v4506, %v4892
      %v5005 = vadd.f32 %v4507, %v4897
      %v5006 = vadd.f32 %v4508, %v4900
      %v5007 = vadd.f32 %v4509, %v4905
      %v5008 = vadd.f32 %v4510, %v4908
      %v5009 = vadd.f32 %v4511, %v4913
      %v5010 = vadd.f32 %v4512, %v4916
      %v5011 = vadd.f32 %v4513, %v4921
      %v5012 = vadd.f32 %v4514, %v4924
      %v5013 = vadd.f32 %v4515, %v4929
      %v5014 = vadd.f32 %v4516, %v4932
      %v5015 = vadd.f32 %v4517, %v4937
      %v5016 = vadd.f32 %v4518, %v4940
      %v5017 = vadd.f32 %v4519, %v4945
      %v5018 = vadd.f32 %v4520, %v4948
      %v5019 = vadd.f32 %v4521, %v4953
      %v5020 = vadd.f32 %v4522, %v4956
      %v5021 = vadd.f32 %v4523, %v4961
      %v5022 = vadd.f32 %v4524, %v4964
      %v5023 = vadd.f32 %v4525, %v4969
      %v5024 = vadd.f32 %v4526, %v4972
      %v5025 = vadd.f32 %v4527, %v4977
      %v5026 = vadd.f32 %v4528, %v4980
      %v5027 = vadd.f32 %v4529, %v4985
      %v5028 = vadd.f32 %v4530, %v4988
      %v5029 = vadd.f32 %v4531, %v4993
      %v5030 = vadd.f32 %v4532, %v4996
      %v5031 = vld [vmem:[%s2] sm:$0x1]
      %v5033 = vlaneseq
      %v5034 = vshrl.u32 %v5033, 7
      %v5035 = vsub.s32 0, %v5034
      %v5036 = vrot.slane %v5031, %v5035
      %v5038 = vadd.f32 %v4999, %v5036
      %v5039 = vadd.f32 %v5000, %v5036
      %v5040 = vadd.f32 %v5001, %v5036
      %v5041 = vadd.f32 %v5002, %v5036
      %v5042 = vadd.f32 %v5003, %v5036
      %v5043 = vadd.f32 %v5004, %v5036
      %v5044 = vadd.f32 %v5005, %v5036
      %v5045 = vadd.f32 %v5006, %v5036
      %v5046 = vadd.f32 %v5007, %v5036
      %v5047 = vadd.f32 %v5008, %v5036
      %v5048 = vadd.f32 %v5009, %v5036
      %v5049 = vadd.f32 %v5010, %v5036
      %v5050 = vadd.f32 %v5011, %v5036
      %v5051 = vadd.f32 %v5012, %v5036
      %v5052 = vadd.f32 %v5013, %v5036
      %v5053 = vadd.f32 %v5014, %v5036
      %v5054 = vadd.f32 %v5015, %v5036
      %v5055 = vadd.f32 %v5016, %v5036
      %v5056 = vadd.f32 %v5017, %v5036
      %v5057 = vadd.f32 %v5018, %v5036
      %v5058 = vadd.f32 %v5019, %v5036
      %v5059 = vadd.f32 %v5020, %v5036
      %v5060 = vadd.f32 %v5021, %v5036
      %v5061 = vadd.f32 %v5022, %v5036
      %v5062 = vadd.f32 %v5023, %v5036
      %v5063 = vadd.f32 %v5024, %v5036
      %v5064 = vadd.f32 %v5025, %v5036
      %v5065 = vadd.f32 %v5026, %v5036
      %v5066 = vadd.f32 %v5027, %v5036
      %v5067 = vadd.f32 %v5028, %v5036
      %v5068 = vadd.f32 %v5029, %v5036
      %v5069 = vadd.f32 %v5030, %v5036
      %v5070 = vxor.u32 %v5038, 2147483648
      %v5071 = vxor.u32 %v5039, 2147483648
      %v5072 = vxor.u32 %v5040, 2147483648
      %v5073 = vxor.u32 %v5041, 2147483648
      %v5074 = vxor.u32 %v5042, 2147483648
      %v5075 = vxor.u32 %v5043, 2147483648
      %v5076 = vxor.u32 %v5044, 2147483648
      %v5077 = vxor.u32 %v5045, 2147483648
      %v5078 = vxor.u32 %v5046, 2147483648
      %v5079 = vxor.u32 %v5047, 2147483648
      %v5080 = vxor.u32 %v5048, 2147483648
      %v5081 = vxor.u32 %v5049, 2147483648
      %v5082 = vxor.u32 %v5050, 2147483648
      %v5083 = vxor.u32 %v5051, 2147483648
      %v5084 = vxor.u32 %v5052, 2147483648
      %v5085 = vxor.u32 %v5053, 2147483648
      %v5086 = vxor.u32 %v5054, 2147483648
      %v5087 = vxor.u32 %v5055, 2147483648
      %v5088 = vxor.u32 %v5056, 2147483648
      %v5089 = vxor.u32 %v5057, 2147483648
      %v5090 = vxor.u32 %v5058, 2147483648
      %v5091 = vxor.u32 %v5059, 2147483648
      %v5092 = vxor.u32 %v5060, 2147483648
      %v5093 = vxor.u32 %v5061, 2147483648
      %v5094 = vxor.u32 %v5062, 2147483648
      %v5095 = vxor.u32 %v5063, 2147483648
      %v5096 = vxor.u32 %v5064, 2147483648
      %v5097 = vxor.u32 %v5065, 2147483648
      %v5098 = vxor.u32 %v5066, 2147483648
      %v5099 = vxor.u32 %v5067, 2147483648
      %v5100 = vxor.u32 %v5068, 2147483648
      %v5101 = vxor.u32 %v5069, 2147483648
      %v5102 = vmul.f32 %v5070, 1.442695
      %v5103 = vpow.pop %v5102
      %v5104 = vmul.f32 %v5071, 1.442695
      %v5105 = vpow.pop %v5104
      %v5106 = vmul.f32 %v5072, 1.442695
      %v5107 = vpow.pop %v5106
      %v5108 = vmul.f32 %v5073, 1.442695
      %v5109 = vpow.pop %v5108
      %v5110 = vmul.f32 %v5074, 1.442695
      %v5111 = vpow.pop %v5110
      %v5112 = vmul.f32 %v5075, 1.442695
      %v5113 = vpow.pop %v5112
      %v5114 = vmul.f32 %v5076, 1.442695
      %v5115 = vpow.pop %v5114
      %v5116 = vmul.f32 %v5077, 1.442695
      %v5117 = vpow.pop %v5116
      %v5118 = vmul.f32 %v5078, 1.442695
      %v5119 = vpow.pop %v5118
      %v5120 = vmul.f32 %v5079, 1.442695
      %v5121 = vpow.pop %v5120
      %v5122 = vmul.f32 %v5080, 1.442695
      %v5123 = vpow.pop %v5122
      %v5124 = vmul.f32 %v5081, 1.442695
      %v5125 = vpow.pop %v5124
      %v5126 = vmul.f32 %v5082, 1.442695
      %v5127 = vpow.pop %v5126
      %v5128 = vmul.f32 %v5083, 1.442695
      %v5129 = vpow.pop %v5128
      %v5130 = vmul.f32 %v5084, 1.442695
      %v5131 = vpow.pop %v5130
      %v5132 = vmul.f32 %v5085, 1.442695
      %v5133 = vpow.pop %v5132
      %v5134 = vmul.f32 %v5086, 1.442695
      %v5135 = vpow.pop %v5134
      %v5136 = vmul.f32 %v5087, 1.442695
      %v5137 = vpow.pop %v5136
      %v5138 = vmul.f32 %v5088, 1.442695
      %v5139 = vpow.pop %v5138
      %v5140 = vmul.f32 %v5089, 1.442695
      %v5141 = vpow.pop %v5140
      %v5142 = vmul.f32 %v5090, 1.442695
      %v5143 = vpow.pop %v5142
      %v5144 = vmul.f32 %v5091, 1.442695
      %v5145 = vpow.pop %v5144
      %v5146 = vmul.f32 %v5092, 1.442695
      %v5147 = vpow.pop %v5146
      %v5148 = vmul.f32 %v5093, 1.442695
      %v5149 = vpow.pop %v5148
      %v5150 = vmul.f32 %v5094, 1.442695
      %v5151 = vpow.pop %v5150
      %v5152 = vmul.f32 %v5095, 1.442695
      %v5153 = vpow.pop %v5152
      %v5154 = vmul.f32 %v5096, 1.442695
      %v5155 = vpow.pop %v5154
      %v5156 = vmul.f32 %v5097, 1.442695
      %v5157 = vpow.pop %v5156
      %v5158 = vmul.f32 %v5098, 1.442695
      %v5159 = vpow.pop %v5158
      %v5160 = vmul.f32 %v5099, 1.442695
      %v5161 = vpow.pop %v5160
      %v5162 = vmul.f32 %v5100, 1.442695
      %v5163 = vpow.pop %v5162
      %v5164 = vmul.f32 %v5101, 1.442695
      %v5165 = vpow.pop %v5164
      %v5166 = vadd.f32 %v5103, 1.0
      %v5167 = vadd.f32 %v5105, 1.0
      %v5168 = vadd.f32 %v5107, 1.0
      %v5169 = vadd.f32 %v5109, 1.0
      %v5170 = vadd.f32 %v5111, 1.0
      %v5171 = vadd.f32 %v5113, 1.0
      %v5172 = vadd.f32 %v5115, 1.0
      %v5173 = vadd.f32 %v5117, 1.0
      %v5174 = vadd.f32 %v5119, 1.0
      %v5175 = vadd.f32 %v5121, 1.0
      %v5176 = vadd.f32 %v5123, 1.0
      %v5177 = vadd.f32 %v5125, 1.0
      %v5178 = vadd.f32 %v5127, 1.0
      %v5179 = vadd.f32 %v5129, 1.0
      %v5180 = vadd.f32 %v5131, 1.0
      %v5181 = vadd.f32 %v5133, 1.0
      %v5182 = vadd.f32 %v5135, 1.0
      %v5183 = vadd.f32 %v5137, 1.0
      %v5184 = vadd.f32 %v5139, 1.0
      %v5185 = vadd.f32 %v5141, 1.0
      %v5186 = vadd.f32 %v5143, 1.0
      %v5187 = vadd.f32 %v5145, 1.0
      %v5188 = vadd.f32 %v5147, 1.0
      %v5189 = vadd.f32 %v5149, 1.0
      %v5190 = vadd.f32 %v5151, 1.0
      %v5191 = vadd.f32 %v5153, 1.0
      %v5192 = vadd.f32 %v5155, 1.0
      %v5193 = vadd.f32 %v5157, 1.0
      %v5194 = vadd.f32 %v5159, 1.0
      %v5195 = vadd.f32 %v5161, 1.0
      %v5196 = vadd.f32 %v5163, 1.0
      %v5197 = vadd.f32 %v5165, 1.0
      %v5198 = vrcp.pop %v5166
      %v5199 = vmul.f32 1.0, %v5198
      %v5200 = vrcp.pop %v5167
      %v5201 = vmul.f32 1.0, %v5200
      %v5202 = vrcp.pop %v5168
      %v5203 = vmul.f32 1.0, %v5202
      %v5204 = vrcp.pop %v5169
      %v5205 = vmul.f32 1.0, %v5204
      %v5206 = vrcp.pop %v5170
      %v5207 = vmul.f32 1.0, %v5206
      %v5208 = vrcp.pop %v5171
      %v5209 = vmul.f32 1.0, %v5208
      %v5210 = vrcp.pop %v5172
      %v5211 = vmul.f32 1.0, %v5210
      %v5212 = vrcp.pop %v5173
      %v5213 = vmul.f32 1.0, %v5212
      %v5214 = vrcp.pop %v5174
      %v5215 = vmul.f32 1.0, %v5214
      %v5216 = vrcp.pop %v5175
      %v5217 = vmul.f32 1.0, %v5216
      %v5218 = vrcp.pop %v5176
      %v5219 = vmul.f32 1.0, %v5218
      %v5220 = vrcp.pop %v5177
      %v5221 = vmul.f32 1.0, %v5220
      %v5222 = vrcp.pop %v5178
      %v5223 = vmul.f32 1.0, %v5222
      %v5224 = vrcp.pop %v5179
      %v5225 = vmul.f32 1.0, %v5224
      %v5226 = vrcp.pop %v5180
      %v5227 = vmul.f32 1.0, %v5226
      %v5228 = vrcp.pop %v5181
      %v5229 = vmul.f32 1.0, %v5228
      %v5230 = vrcp.pop %v5182
      %v5231 = vmul.f32 1.0, %v5230
      %v5232 = vrcp.pop %v5183
      %v5233 = vmul.f32 1.0, %v5232
      %v5234 = vrcp.pop %v5184
      %v5235 = vmul.f32 1.0, %v5234
      %v5236 = vrcp.pop %v5185
      %v5237 = vmul.f32 1.0, %v5236
      %v5238 = vrcp.pop %v5186
      %v5239 = vmul.f32 1.0, %v5238
      %v5240 = vrcp.pop %v5187
      %v5241 = vmul.f32 1.0, %v5240
      %v5242 = vrcp.pop %v5188
      %v5243 = vmul.f32 1.0, %v5242
      %v5244 = vrcp.pop %v5189
      %v5245 = vmul.f32 1.0, %v5244
      %v5246 = vrcp.pop %v5190
      %v5247 = vmul.f32 1.0, %v5246
      %v5248 = vrcp.pop %v5191
      %v5249 = vmul.f32 1.0, %v5248
      %v5250 = vrcp.pop %v5192
      %v5251 = vmul.f32 1.0, %v5250
      %v5252 = vrcp.pop %v5193
      %v5253 = vmul.f32 1.0, %v5252
      %v5254 = vrcp.pop %v5194
      %v5255 = vmul.f32 1.0, %v5254
      %v5256 = vrcp.pop %v5195
      %v5257 = vmul.f32 1.0, %v5256
      %v5258 = vrcp.pop %v5196
      %v5259 = vmul.f32 1.0, %v5258
      %v5260 = vrcp.pop %v5197
      %v5261 = vmul.f32 1.0, %v5260
      %v5262 = vmul.f32 %v5038, %v5199
      %v5263 = vmul.f32 %v5039, %v5201
      %v5264 = vmul.f32 %v5040, %v5203
      %v5265 = vmul.f32 %v5041, %v5205
      %v5266 = vmul.f32 %v5042, %v5207
      %v5267 = vmul.f32 %v5043, %v5209
      %v5268 = vmul.f32 %v5044, %v5211
      %v5269 = vmul.f32 %v5045, %v5213
      %v5270 = vmul.f32 %v5046, %v5215
      %v5271 = vmul.f32 %v5047, %v5217
      %v5272 = vmul.f32 %v5048, %v5219
      %v5273 = vmul.f32 %v5049, %v5221
      %v5274 = vmul.f32 %v5050, %v5223
      %v5275 = vmul.f32 %v5051, %v5225
      %v5276 = vmul.f32 %v5052, %v5227
      %v5277 = vmul.f32 %v5053, %v5229
      %v5278 = vmul.f32 %v5054, %v5231
      %v5279 = vmul.f32 %v5055, %v5233
      %v5280 = vmul.f32 %v5056, %v5235
      %v5281 = vmul.f32 %v5057, %v5237
      %v5282 = vmul.f32 %v5058, %v5239
      %v5283 = vmul.f32 %v5059, %v5241
      %v5284 = vmul.f32 %v5060, %v5243
      %v5285 = vmul.f32 %v5061, %v5245
      %v5286 = vmul.f32 %v5062, %v5247
      %v5287 = vmul.f32 %v5063, %v5249
      %v5288 = vmul.f32 %v5064, %v5251
      %v5289 = vmul.f32 %v5065, %v5253
      %v5290 = vmul.f32 %v5066, %v5255
      %v5291 = vmul.f32 %v5067, %v5257
      %v5292 = vmul.f32 %v5068, %v5259
      %v5293 = vmul.f32 %v5069, %v5261
      %v5294 = vld [vmem:[%s213] sm:$0xf]
      %v5295 = vld [vmem:[%s213 + $0x4] sm:$0xf]
      %v5296 = vld [vmem:[%s213 + $0x8] sm:$0xf]
      %v5297 = vld [vmem:[%s213 + $0xc] sm:$0xf]
      %v5298 = vld [vmem:[%s213 + $0x10] sm:$0xf]
      %v5299 = vld [vmem:[%s213 + $0x14] sm:$0xf]
      %v5300 = vld [vmem:[%s213 + $0x18] sm:$0xf]
      %v5301 = vld [vmem:[%s213 + $0x1c] sm:$0xf]
      %v5302 = vld [vmem:[%s213 + $0x20] sm:$0xf]
      %v5303 = vld [vmem:[%s213 + $0x24] sm:$0xf]
      %v5304 = vld [vmem:[%s213 + $0x28] sm:$0xf]
      %v5305 = vld [vmem:[%s213 + $0x2c] sm:$0xf]
      %v5306 = vld [vmem:[%s213 + $0x30] sm:$0xf]
      %v5307 = vld [vmem:[%s213 + $0x34] sm:$0xf]
      %v5308 = vld [vmem:[%s213 + $0x38] sm:$0xf]
      %v5309 = vld [vmem:[%s213 + $0x3c] sm:$0xf]
      %v5310 = vld [vmem:[%s213 + $0x40] sm:$0xf]
      %v5311 = vld [vmem:[%s213 + $0x44] sm:$0xf]
      %v5312 = vld [vmem:[%s213 + $0x48] sm:$0xf]
      %v5313 = vld [vmem:[%s213 + $0x4c] sm:$0xf]
      %v5314 = vld [vmem:[%s213 + $0x50] sm:$0xf]
      %v5315 = vld [vmem:[%s213 + $0x54] sm:$0xf]
      %v5316 = vld [vmem:[%s213 + $0x58] sm:$0xf]
      %v5317 = vld [vmem:[%s213 + $0x5c] sm:$0xf]
      %v5318 = vld [vmem:[%s213 + $0x60] sm:$0xf]
      %v5319 = vld [vmem:[%s213 + $0x64] sm:$0xf]
      %v5320 = vld [vmem:[%s213 + $0x68] sm:$0xf]
      %v5321 = vld [vmem:[%s213 + $0x6c] sm:$0xf]
      %v5322 = vld [vmem:[%s213 + $0x70] sm:$0xf]
      %v5323 = vld [vmem:[%s213 + $0x74] sm:$0xf]
      %v5324 = vld [vmem:[%s213 + $0x78] sm:$0xf]
      %v5325 = vld [vmem:[%s213 + $0x7c] sm:$0xf]
      %v5326 = vunpack.c.l.bf16 %v5294
      %v5327 = vunpack.c.l.bf16 %v5295
      %v5328 = vunpack.c.l.bf16 %v5296
      %v5329 = vunpack.c.l.bf16 %v5297
      %v5330 = vunpack.c.l.bf16 %v5298
      %v5331 = vunpack.c.l.bf16 %v5299
      %v5332 = vunpack.c.l.bf16 %v5300
      %v5333 = vunpack.c.l.bf16 %v5301
      %v5334 = vunpack.c.l.bf16 %v5302
      %v5335 = vunpack.c.l.bf16 %v5303
      %v5336 = vunpack.c.l.bf16 %v5304
      %v5337 = vunpack.c.l.bf16 %v5305
      %v5338 = vunpack.c.l.bf16 %v5306
      %v5339 = vunpack.c.l.bf16 %v5307
      %v5340 = vunpack.c.l.bf16 %v5308
      %v5341 = vunpack.c.l.bf16 %v5309
      %v5342 = vunpack.c.l.bf16 %v5310
      %v5343 = vunpack.c.l.bf16 %v5311
      %v5344 = vunpack.c.l.bf16 %v5312
      %v5345 = vunpack.c.l.bf16 %v5313
      %v5346 = vunpack.c.l.bf16 %v5314
      %v5347 = vunpack.c.l.bf16 %v5315
      %v5348 = vunpack.c.l.bf16 %v5316
      %v5349 = vunpack.c.l.bf16 %v5317
      %v5350 = vunpack.c.l.bf16 %v5318
      %v5351 = vunpack.c.l.bf16 %v5319
      %v5352 = vunpack.c.l.bf16 %v5320
      %v5353 = vunpack.c.l.bf16 %v5321
      %v5354 = vunpack.c.l.bf16 %v5322
      %v5355 = vunpack.c.l.bf16 %v5323
      %v5356 = vunpack.c.l.bf16 %v5324
      %v5357 = vunpack.c.l.bf16 %v5325
      %v5358 = vadd.f32 %v5262, %v5326
      %v5359 = vadd.f32 %v5263, %v5327
      %v5360 = vadd.f32 %v5264, %v5328
      %v5361 = vadd.f32 %v5265, %v5329
      %v5362 = vadd.f32 %v5266, %v5330
      %v5363 = vadd.f32 %v5267, %v5331
      %v5364 = vadd.f32 %v5268, %v5332
      %v5365 = vadd.f32 %v5269, %v5333
      %v5366 = vadd.f32 %v5270, %v5334
      %v5367 = vadd.f32 %v5271, %v5335
      %v5368 = vadd.f32 %v5272, %v5336
      %v5369 = vadd.f32 %v5273, %v5337
      %v5370 = vadd.f32 %v5274, %v5338
      %v5371 = vadd.f32 %v5275, %v5339
      %v5372 = vadd.f32 %v5276, %v5340
      %v5373 = vadd.f32 %v5277, %v5341
      %v5374 = vadd.f32 %v5278, %v5342
      %v5375 = vadd.f32 %v5279, %v5343
      %v5376 = vadd.f32 %v5280, %v5344
      %v5377 = vadd.f32 %v5281, %v5345
      %v5378 = vadd.f32 %v5282, %v5346
      %v5379 = vadd.f32 %v5283, %v5347
      %v5380 = vadd.f32 %v5284, %v5348
      %v5381 = vadd.f32 %v5285, %v5349
      %v5382 = vadd.f32 %v5286, %v5350
      %v5383 = vadd.f32 %v5287, %v5351
      %v5384 = vadd.f32 %v5288, %v5352
      %v5385 = vadd.f32 %v5289, %v5353
      %v5386 = vadd.f32 %v5290, %v5354
      %v5387 = vadd.f32 %v5291, %v5355
      %v5388 = vadd.f32 %v5292, %v5356
      %v5389 = vadd.f32 %v5293, %v5357
      %v5390 = vpack.c.bf16 %v5359, %v5358
      %v5391 = vpack.c.bf16 %v5361, %v5360
      %v5392 = vpack.c.bf16 %v5363, %v5362
      %v5393 = vpack.c.bf16 %v5365, %v5364
      %v5394 = vpack.c.bf16 %v5367, %v5366
      %v5395 = vpack.c.bf16 %v5369, %v5368
      %v5396 = vpack.c.bf16 %v5371, %v5370
      %v5397 = vpack.c.bf16 %v5373, %v5372
      %v5398 = vpack.c.bf16 %v5375, %v5374
      %v5399 = vpack.c.bf16 %v5377, %v5376
      %v5400 = vpack.c.bf16 %v5379, %v5378
      %v5401 = vpack.c.bf16 %v5381, %v5380
      %v5402 = vpack.c.bf16 %v5383, %v5382
      %v5403 = vpack.c.bf16 %v5385, %v5384
      %v5404 = vpack.c.bf16 %v5387, %v5386
      %v5405 = vpack.c.bf16 %v5389, %v5388
      %v5422 = vunpack.c.l.b16 %v5390
      %v5423 = vunpack.c.h.b16 %v5390
      %v5424 = vunpack.c.l.b16 %v5391
      %v5425 = vunpack.c.h.b16 %v5391
      %v5426 = vunpack.c.l.b16 %v5392
      %v5427 = vunpack.c.h.b16 %v5392
      %v5428 = vunpack.c.l.b16 %v5393
      %v5429 = vunpack.c.h.b16 %v5393
      %v5430 = vunpack.c.l.b16 %v5394
      %v5431 = vunpack.c.h.b16 %v5394
      %v5432 = vunpack.c.l.b16 %v5395
      %v5433 = vunpack.c.h.b16 %v5395
      %v5434 = vunpack.c.l.b16 %v5396
      %v5435 = vunpack.c.h.b16 %v5396
      %v5436 = vunpack.c.l.b16 %v5397
      %v5437 = vunpack.c.h.b16 %v5397
      %v5438 = vunpack.c.l.b16 %v5398
      %v5439 = vunpack.c.h.b16 %v5398
      %v5440 = vunpack.c.l.b16 %v5399
      %v5441 = vunpack.c.h.b16 %v5399
      %v5442 = vunpack.c.l.b16 %v5400
      %v5443 = vunpack.c.h.b16 %v5400
      %v5444 = vunpack.c.l.b16 %v5401
      %v5445 = vunpack.c.h.b16 %v5401
      %v5446 = vunpack.c.l.b16 %v5402
      %v5447 = vunpack.c.h.b16 %v5402
      %v5448 = vunpack.c.l.b16 %v5403
      %v5449 = vunpack.c.h.b16 %v5403
      %v5450 = vunpack.c.l.b16 %v5404
      %v5451 = vunpack.c.h.b16 %v5404
      %v5452 = vunpack.c.l.b16 %v5405
      %v5453 = vunpack.c.h.b16 %v5405
      %v5454 = vpack.c.b16 %v5422, %v5422
      %v5455 = vpack.c.b16 %v5423, %v5423
      %v5456 = vpack.c.b16 %v5424, %v5424
      %v5457 = vpack.c.b16 %v5425, %v5425
      %v5458 = vpack.c.b16 %v5426, %v5426
      %v5459 = vpack.c.b16 %v5427, %v5427
      %v5460 = vpack.c.b16 %v5428, %v5428
      %v5461 = vpack.c.b16 %v5429, %v5429
      %v5462 = vpack.c.b16 %v5430, %v5430
      %v5463 = vpack.c.b16 %v5431, %v5431
      %v5464 = vpack.c.b16 %v5432, %v5432
      %v5465 = vpack.c.b16 %v5433, %v5433
      %v5466 = vpack.c.b16 %v5434, %v5434
      %v5467 = vpack.c.b16 %v5435, %v5435
      %v5468 = vpack.c.b16 %v5436, %v5436
      %v5469 = vpack.c.b16 %v5437, %v5437
      %v5470 = vpack.c.b16 %v5438, %v5438
      %v5471 = vpack.c.b16 %v5439, %v5439
      %v5472 = vpack.c.b16 %v5440, %v5440
      %v5473 = vpack.c.b16 %v5441, %v5441
      %v5474 = vpack.c.b16 %v5442, %v5442
      %v5475 = vpack.c.b16 %v5443, %v5443
      %v5476 = vpack.c.b16 %v5444, %v5444
      %v5477 = vpack.c.b16 %v5445, %v5445
      %v5478 = vpack.c.b16 %v5446, %v5446
      %v5479 = vpack.c.b16 %v5447, %v5447
      %v5480 = vpack.c.b16 %v5448, %v5448
      %v5481 = vpack.c.b16 %v5449, %v5449
      %v5482 = vpack.c.b16 %v5450, %v5450
      %v5483 = vpack.c.b16 %v5451, %v5451
      %v5484 = vpack.c.b16 %v5452, %v5452
      %v5485 = vpack.c.b16 %v5453, %v5453
      %5518 = vst [vmem:[%s219] sm:$0xf] %v5454
      %5519 = vst [vmem:[%s219 + $0x4] sm:$0xf] %v5455
      %5520 = vst [vmem:[%s219 + $0x8] sm:$0xf] %v5456
      %5521 = vst [vmem:[%s219 + $0xc] sm:$0xf] %v5457
      %5522 = vst [vmem:[%s219 + $0x10] sm:$0xf] %v5458
      %5523 = vst [vmem:[%s219 + $0x14] sm:$0xf] %v5459
      %5524 = vst [vmem:[%s219 + $0x18] sm:$0xf] %v5460
      %5525 = vst [vmem:[%s219 + $0x1c] sm:$0xf] %v5461
      %5526 = vst [vmem:[%s219 + $0x20] sm:$0xf] %v5462
      %5527 = vst [vmem:[%s219 + $0x24] sm:$0xf] %v5463
      %5528 = vst [vmem:[%s219 + $0x28] sm:$0xf] %v5464
      %5529 = vst [vmem:[%s219 + $0x2c] sm:$0xf] %v5465
      %5530 = vst [vmem:[%s219 + $0x30] sm:$0xf] %v5466
      %5531 = vst [vmem:[%s219 + $0x34] sm:$0xf] %v5467
      %5532 = vst [vmem:[%s219 + $0x38] sm:$0xf] %v5468
      %5533 = vst [vmem:[%s219 + $0x3c] sm:$0xf] %v5469
      %5534 = vst [vmem:[%s219 + $0x40] sm:$0xf] %v5470
      %5535 = vst [vmem:[%s219 + $0x44] sm:$0xf] %v5471
      %5536 = vst [vmem:[%s219 + $0x48] sm:$0xf] %v5472
      %5537 = vst [vmem:[%s219 + $0x4c] sm:$0xf] %v5473
      %5538 = vst [vmem:[%s219 + $0x50] sm:$0xf] %v5474
      %5539 = vst [vmem:[%s219 + $0x54] sm:$0xf] %v5475
      %5540 = vst [vmem:[%s219 + $0x58] sm:$0xf] %v5476
      %5541 = vst [vmem:[%s219 + $0x5c] sm:$0xf] %v5477
      %5542 = vst [vmem:[%s219 + $0x60] sm:$0xf] %v5478
      %5543 = vst [vmem:[%s219 + $0x64] sm:$0xf] %v5479
      %5544 = vst [vmem:[%s219 + $0x68] sm:$0xf] %v5480
      %5545 = vst [vmem:[%s219 + $0x6c] sm:$0xf] %v5481
      %5546 = vst [vmem:[%s219 + $0x70] sm:$0xf] %v5482
      %5547 = vst [vmem:[%s219 + $0x74] sm:$0xf] %v5483
      %5548 = vst [vmem:[%s219 + $0x78] sm:$0xf] %v5484
      %5549 = vst [vmem:[%s219 + $0x7c] sm:$0xf] %v5485
      %s5550 = smul.u32 32, %s15
      %p5551 = scmp.lt.s32.totalorder %s5550, 63
      %s5552 = scalar_select %p5551, %s5550, 63
      %s5553 = smul.addr %s5552, 4
      %s5554 = scalar_lea.vmem %s4, %s5553
      // Predicated region
      $region37: #{c3_forward.8} parent=35 // pred_check
        %p5555 = pneg %p127
      $region38: #{c3_forward.8} parent=35 // pred_check_branch
        %5557 = sbr.rel (%p5555) target = $region40
      $region39: #{c3_forward.8} parent=35 // pred_region
        %s5558 = smul.u32 32, %s15
      $region40: #{c3_forward.8} parent=35 // pred_fallthru
        _
    $region36: #{c3_forward.8} parent=5 // pred_fallthru
      _
    %p5559 = scmp.le.s32.totalorder 2, %s10
    // Predicated region
    $region41: #{c3_forward.8} parent=5 // pred_check
      %p5560 = pneg %p5559
    $region42: #{c3_forward.8} parent=5 // pred_check_branch
      %5562 = sbr.rel (%p5560) target = $region44
    $region43: #{c3_forward.8} parent=5 // pred_region
      %s5563 = ssub.s32 %s10, 2
      // Predicated region
      $region45: #{c3_forward.8} parent=43 // pred_check
        %p5564 = pneg %p133
      $region46: #{c3_forward.8} parent=43 // pred_check_branch
        %5566 = sbr.rel (%p5564) target = $region48
      $region47: #{c3_forward.8} parent=43 // pred_region
        %s5567 = smul.u32 32, %s16
        %p5568 = scmp.lt.s32.totalorder %s5567, 63
        %s5569 = scalar_select %p5568, %s5567, 63
        %s5570 = smul.addr %s5569, 4
        %s5571 = scalar_lea.vmem %s4, %s5570
      $region48: #{c3_forward.8} parent=43 // pred_fallthru
        _
    $region44: #{c3_forward.8} parent=5 // pred_fallthru
      _
  $region6: #{c3_forward.8} parent=0 // loop_footer
    %s14 = sadd.s32 1, %s10
  $region7: #{c3_forward.8} parent=0 // loop_footer_branch
    %9 = sbr.rel target = $region3
  $region8: #{c3_forward.8} parent=0 // loop_exit
    _

</llo_original>
